<compile_context>
chip_gen: v6e
topology: v6e:2x2x1
jax: 0.10.0
libtpu: 0.0.40
codegen_flags: <defaults>
</compile_context>

<pallas_src>
import functools
import math

import jax
import jax.numpy as jnp
from jax.experimental import pallas as pl
from jax.experimental.pallas import tpu as pltpu


# ----------------------------------------------------------------------------
# In-kernel helpers
# ----------------------------------------------------------------------------
def _layernorm(x, g, b, eps=1e-5):
    mu = jnp.mean(x, axis=-1, keepdims=True)
    var = jnp.mean((x - mu) ** 2, axis=-1, keepdims=True)
    return (x - mu) * jax.lax.rsqrt(var + eps) * g + b


def _mha(q, k, v, bt, sq, sk, nhead):
    """Multi-head attention core (before the output projection).

    q: (bt*sq, D) f32, k/v: (bt*sk, D) f32 -> (bt*sq, D) f32 context.
    Score / context matmuls use bf16 operands with f32 accumulation; the softmax
    (max-subtract, exp, exact divide) stays in f32.
    """
    D = q.shape[-1]
    hd = D // nhead
    scale = 1.0 / math.sqrt(hd)

    def split_heads(x, s):
        # (bt*s, D) -> (bt*nhead, s, hd).  The permutation keeps the lane dim (hd)
        # fixed, so it is a sublane-side shuffle only.
        x = x.reshape(bt, s, nhead, hd)
        x = jnp.transpose(x, (0, 2, 1, 3))
        return x.reshape(bt * nhead, s, hd)

    qh = split_heads(q, sq).astype(jnp.bfloat16)
    kh = split_heads(k, sk).astype(jnp.bfloat16)
    vh = split_heads(v, sk).astype(jnp.bfloat16)

    s = jnp.einsum('bqd,bkd->bqk', qh, kh,
                   preferred_element_type=jnp.float32) * scale
    s = s - jnp.max(s, axis=-1, keepdims=True)
    p = jnp.exp(s)
    p = p / jnp.sum(p, axis=-1, keepdims=True)          # exact division (parity)

    ctx = jnp.einsum('bqk,bkd->bqd', p.astype(jnp.bfloat16), vh,
                     preferred_element_type=jnp.float32)  # (bt*H, sq, hd)
    ctx = ctx.reshape(bt, nhead, sq, hd)
    return jnp.transpose(ctx, (0, 2, 1, 3)).reshape(bt * sq, D)


# ----------------------------------------------------------------------------
# Fused decoder kernel: grid = (batch_blocks, layer); layer innermost ("arbitrary").
# ----------------------------------------------------------------------------
def decoder_kernel(tgt_ref, tpos_ref, mem_ref, mempe_ref,
                   wbig_ref, w2_ref, bias_ref, b1_ref, fn_ref,
                   out_ref, act_ref, *, nhead):
    layer = pl.program_id(1)
    nlayers = pl.num_programs(1)

    bt, St, D = tgt_ref.shape
    Sm = mem_ref.shape[1]
    M = bt * St

    # Load this batch block's tgt into the resident activation at the first layer.
    @pl.when(layer == 0)
    def _():
        act_ref[...] = tgt_ref[...].reshape(M, D)

    x = act_ref[...]                                  # (M, D) f32 running activation
    tpos = tpos_ref[...].reshape(M, D)                # f32
    mem = mem_ref[...].reshape(bt * Sm, D)            # f32
    mempe = mempe_ref[...].reshape(bt * Sm, D)        # memory + memory_pos (hoisted)
    bias = bias_ref[...]                              # (16, D) f32, see row map below

    def mm(a, w):                                     # bf16 x bf16 -> f32 MXU matmul
        return jnp.dot(a.astype(jnp.bfloat16), w, preferred_element_type=jnp.float32)

    # Fused weight block column layout (all K = D, lane-aligned static slices):
    #   [0:2D) sa W_q|W_k   [2D:3D) sa W_v   [3D:4D) sa W_out
    #   [4D:5D) ca W_q      [5D:6D) ca W_k   [6D:7D) ca W_v   [7D:8D) ca W_out
    #   [8D:8D+FF) FFN W1
    # Bias/LN block row layout:
    #   0-2 sa_in_b(q,k,v)  3 sa_out_b   4-6 ca_in_b(q,k,v)  7 ca_out_b
    #   8 FFN b2   9-10 LN1(g,b)  11-12 LN2(g,b)  13-14 LN3(g,b)  15 pad

    # ----- self-attention (q = k = x + tgt_pos, v = x) -----------------------
    qk = mm(x + tpos, wbig_ref[:, 0:2 * D])           # fused Q/K projection
    q = qk[:, :D] + bias[0:1]
    k = qk[:, D:] + bias[1:2]
    v = mm(x, wbig_ref[:, 2 * D:3 * D]) + bias[2:3]
    sa = mm(_mha(q, k, v, bt, St, St, nhead), wbig_ref[:, 3 * D:4 * D]) + bias[3:4]
    x = _layernorm(x + sa, bias[9:10], bias[10:11])

    # ----- cross-attention (q = x + tgt_pos, k = mem + mem_pos, v = mem) -----
    q = mm(x + tpos, wbig_ref[:, 4 * D:5 * D]) + bias[4:5]
    k = mm(mempe, wbig_ref[:, 5 * D:6 * D]) + bias[5:6]
    v = mm(mem, wbig_ref[:, 6 * D:7 * D]) + bias[6:7]
    ca = mm(_mha(q, k, v, bt, St, Sm, nhead), wbig_ref[:, 7 * D:8 * D]) + bias[7:8]
    x = _layernorm(x + ca, bias[11:12], bias[12:13])

    # ----- FFN: linear1 -> relu -> linear2 -----------------------------------
    h = jnp.maximum(mm(x, wbig_ref[:, 8 * D:]) + b1_ref[...], 0.0)
    x = _layernorm(x + mm(h, w2_ref[...]) + bias[8:9], bias[13:14], bias[14:15])

    act_ref[...] = x                                  # stays resident for next layer

    # Final decoder LayerNorm + single HBM write-back at the last layer.
    @pl.when(layer == nlayers - 1)
    def _():
        fn = fn_ref[...]                              # (2, D): gamma, beta
        out_ref[...] = _layernorm(x, fn[0:1], fn[1:2]).reshape(bt, St, D) \
                                                      .astype(out_ref.dtype)


# ----------------------------------------------------------------------------
# Wrapper
# ----------------------------------------------------------------------------
def run_decoder(tgt, tgt_pos, memory, memory_pos, kparams, final_norm, nhead,
                num_batch_blocks=1):
    """num_batch_blocks: set >1 (e.g. 2 on v7x) to expose a parallel axis of extent >=2
    for the two TensorCores; this re-fetches the per-layer weight block once per batch
    block, so the default of 1 is best for the DMA-bound small-batch regime here."""
    B, St, D = tgt.shape
    Sm = memory.shape[1]
    L, _, W = kparams['w_big'].shape
    FF = kparams['w2'].shape[1]

    assert D % 128 == 0, "d_model must be a multiple of 128 (lane-aligned slices)"
    assert D % nhead == 0
    assert B % num_batch_blocks == 0
    bt = B // num_batch_blocks

    mem_pe = memory + memory_pos            # hoisted: added once, not once per layer

    args = (tgt, tgt_pos, memory, mem_pe,
            kparams['w_big'], kparams['w2'], kparams['bias'], kparams['b1'],
            final_norm)

    in_specs = [
        pl.BlockSpec((bt, St, D), lambda b, l: (b, 0, 0)),     # tgt
        pl.BlockSpec((bt, St, D), lambda b, l: (b, 0, 0)),     # tgt_pos
        pl.BlockSpec((bt, Sm, D), lambda b, l: (b, 0, 0)),     # memory
        pl.BlockSpec((bt, Sm, D), lambda b, l: (b, 0, 0)),     # memory + memory_pos
        pl.BlockSpec((None, D, W), lambda b, l: (l, 0, 0)),    # fused weights (bf16)
        pl.BlockSpec((None, FF, D), lambda b, l: (l, 0, 0)),   # FFN W2 (bf16)
        pl.BlockSpec((None, 16, D), lambda b, l: (l, 0, 0)),   # biases + LN params
        pl.BlockSpec((None, 1, FF), lambda b, l: (l, 0, 0)),   # FFN b1
        pl.BlockSpec((2, D), lambda b, l: (0, 0)),             # final LayerNorm
    ]
    out_specs = pl.BlockSpec((bt, St, D), lambda b, l: (b, 0, 0))
    out_shape = jax.ShapeDtypeStruct((B, St, D), jnp.float32)

    return pl.pallas_call(
        functools.partial(decoder_kernel, nhead=nhead),
        grid=(num_batch_blocks, L),
        in_specs=in_specs,
        out_specs=out_specs,
        out_shape=out_shape,
        scratch_shapes=[pltpu.VMEM((bt * St, D), jnp.float32)],
        compiler_params=pltpu.CompilerParams(
            dimension_semantics=("parallel", "arbitrary")),
    )(*args)


def transformer_decoder_forward(tgt, memory, tgt_pos, memory_pos,
                                kparams, final_norm, nhead, num_batch_blocks=1):
    """Mirrors Transformer_Decoder.forward (batch-first in/out).

    Returns (hs (B, St, D), list_attn_maps) where list_attn_maps is [] exactly as the
    PyTorch TransformerDecoder returns it (never populated)."""
    hs = run_decoder(tgt, tgt_pos, memory, memory_pos, kparams, final_norm, nhead,
                     num_batch_blocks=num_batch_blocks)
    return hs, []


# ----------------------------------------------------------------------------
# Parameter init (PyTorch layout), mirroring _reset_parameters.
# ----------------------------------------------------------------------------
def xavier_uniform(key, shape):
    fan_out, fan_in = shape
    bound = math.sqrt(6.0 / (fan_in + fan_out))
    return jax.random.uniform(key, shape, jnp.float32, -bound, bound)


def init_torch_layer_params(key, d_model, dim_ff):
    D, FF = d_model, dim_ff
    ks = jax.random.split(key, 8)
    return {
        'sa_in_w':  xavier_uniform(ks[0], (3 * D, D)),
        'sa_in_b':  jnp.zeros((3 * D,), jnp.float32),
        'sa_out_w': xavier_uniform(ks[1], (D, D)),
        'sa_out_b': jnp.zeros((D,), jnp.float32),
        'ca_in_w':  xavier_uniform(ks[2], (3 * D, D)),
        'ca_in_b':  jnp.zeros((3 * D,), jnp.float32),
        'ca_out_w': xavier_uniform(ks[3], (D, D)),
        'ca_out_b': jnp.zeros((D,), jnp.float32),
        'w1': xavier_uniform(ks[4], (FF, D)),
        'b1': jax.random.uniform(ks[5], (FF,), jnp.float32,
                                 -1.0 / math.sqrt(D), 1.0 / math.sqrt(D)),
        'w2': xavier_uniform(ks[6], (D, FF)),
        'b2': jax.random.uniform(ks[7], (D,), jnp.float32,
                                 -1.0 / math.sqrt(FF), 1.0 / math.sqrt(FF)),
        'g1': jnp.ones((D,), jnp.float32),  'be1': jnp.zeros((D,), jnp.float32),
        'g2': jnp.ones((D,), jnp.float32),  'be2': jnp.zeros((D,), jnp.float32),
        'g3': jnp.ones((D,), jnp.float32),  'be3': jnp.zeros((D,), jnp.float32),
    }


def pack_kernel_params(layers, weight_dtype=jnp.bfloat16):
    """Stack per-layer PyTorch-layout params into the kernel layout:
       * one fused, pre-transposed (L, D, 8D+FF) bf16 weight block per layer,
       * one (L, FF, D) bf16 W2,
       * one (L, 16, D) f32 bias + LayerNorm block,
       * one (L, 1, FF) f32 b1."""
    D = layers[0]['sa_out_w'].shape[0]
    FF = layers[0]['w1'].shape[0]

    def wbig(p):
        cols = [p['sa_in_w'][:D].T, p['sa_in_w'][D:2 * D].T, p['sa_in_w'][2 * D:].T,
                p['sa_out_w'].T,
                p['ca_in_w'][:D].T, p['ca_in_w'][D:2 * D].T, p['ca_in_w'][2 * D:].T,
                p['ca_out_w'].T,
                p['w1'].T]
        return jnp.concatenate(cols, axis=1)           # (D, 8D + FF)

    def biases(p):
        rows = [p['sa_in_b'].reshape(3, D), p['sa_out_b'].reshape(1, D),
                p['ca_in_b'].reshape(3, D), p['ca_out_b'].reshape(1, D),
                p['b2'].reshape(1, D),
                jnp.stack([p['g1'], p['be1'], p['g2'], p['be2'], p['g3'], p['be3']]),
                jnp.zeros((1, D), jnp.float32)]
        return jnp.concatenate(rows, axis=0)            # (16, D)

    return {
        'w_big': jnp.stack([wbig(p) for p in layers]).astype(weight_dtype),
        'w2':    jnp.stack([p['w2'].T for p in layers]).astype(weight_dtype),
        'bias':  jnp.stack([biases(p) for p in layers]),                    # f32
        'b1':    jnp.stack([p['b1'].reshape(1, FF) for p in layers]),       # f32
    }


# ----------------------------------------------------------------------------
# Pure-JAX reference (same math as the PyTorch module, batch-first).
# matmul_dtype=bfloat16 mirrors the kernel's precision policy (bf16 operands,
# f32 accumulation, f32 LayerNorm/softmax); float32 is the PyTorch-faithful path.
# ----------------------------------------------------------------------------
def reference_decoder(tgt, memory, tgt_pos, memory_pos, layers,
                      final_g, final_b, nhead, matmul_dtype=jnp.float32):
    def mm(a, w_t):                                    # w_t already (K, N)
        return jnp.dot(a.astype(matmul_dtype), w_t.astype(matmul_dtype),
                       preferred_element_type=jnp.float32)

    def layernorm(x, g, b, eps=1e-5):
        mu = x.mean(-1, keepdims=True)
        var = ((x - mu) ** 2).mean(-1, keepdims=True)
        return (x - mu) * jax.lax.rsqrt(var + eps) * g + b

    def mha(q_in, k_in, v_in, in_w, in_b, out_w, out_b):
        D = q_in.shape[-1]
        hd = D // nhead
        scale = 1.0 / math.sqrt(hd)
        q = mm(q_in, in_w[:D].T) + in_b[:D]
        k = mm(k_in, in_w[D:2 * D].T) + in_b[D:2 * D]
        v = mm(v_in, in_w[2 * D:].T) + in_b[2 * D:]
        B, Sq, _ = q.shape
        Sk = k.shape[1]
        qh = q.reshape(B, Sq, nhead, hd).transpose(0, 2, 1, 3).astype(matmul_dtype)
        kh = k.reshape(B, Sk, nhead, hd).transpose(0, 2, 1, 3).astype(matmul_dtype)
        vh = v.reshape(B, Sk, nhead, hd).transpose(0, 2, 1, 3).astype(matmul_dtype)
        s = jnp.einsum('bhqd,bhkd->bhqk', qh, kh,
                       preferred_element_type=jnp.float32) * scale
        s = s - jnp.max(s, axis=-1, keepdims=True)
        p = jnp.exp(s)
        p = p / jnp.sum(p, axis=-1, keepdims=True)
        ctx = jnp.einsum('bhqk,bhkd->bhqd', p.astype(matmul_dtype), vh,
                         preferred_element_type=jnp.float32)
        ctx = ctx.transpose(0, 2, 1, 3).reshape(B, Sq, D)
        return mm(ctx, out_w.T) + out_b

    x = tgt
    for p_ in layers:
        qk = x + tgt_pos
        sa = mha(qk, qk, x, p_['sa_in_w'], p_['sa_in_b'], p_['sa_out_w'], p_['sa_out_b'])
        x = layernorm(x + sa, p_['g1'], p_['be1'])
        ca = mha(x + tgt_pos, memory + memory_pos, memory,
                 p_['ca_in_w'], p_['ca_in_b'], p_['ca_out_w'], p_['ca_out_b'])
        x = layernorm(x + ca, p_['g2'], p_['be2'])
        h = jnp.maximum(mm(x, p_['w1'].T) + p_['b1'], 0.0)
        f = mm(h, p_['w2'].T) + p_['b2']
        x = layernorm(x + f, p_['g3'], p_['be3'])
    return layernorm(x, final_g, final_b)


# ----------------------------------------------------------------------------
if __name__ == "__main__":
    # Small shapes consistent with the module (d_model multiple of nhead; D lane-dense).
    B, St, Sm, D = 2, 8, 16, 128       # batch, tgt seq, memory seq, d_model
    NHEAD, FF, NLAYERS = 8, 256, 2

    root = jax.random.PRNGKey(0)
    k_tgt, k_tpos, k_mem, k_mpos, k_par = jax.random.split(root, 5)
    tgt = jax.random.normal(k_tgt, (B, St, D), jnp.float32)
    tgt_pos = jax.random.normal(k_tpos, (B, St, D), jnp.float32)
    memory = jax.random.normal(k_mem, (B, Sm, D), jnp.float32)
    memory_pos = jax.random.normal(k_mpos, (B, Sm, D), jnp.float32)

    layer_keys = jax.random.split(k_par, NLAYERS)
    torch_layers = [init_torch_layer_params(k, D, FF) for k in layer_keys]
    final_g = jnp.ones((D,), jnp.float32)          # decoder_norm params (dim 1 ->
    final_b = jnp.zeros((D,), jnp.float32)         # untouched by _reset_parameters)

    kparams = pack_kernel_params(torch_layers)
    final_norm = jnp.stack([final_g, final_b])     # (2, D)

    hs, list_attn_maps = transformer_decoder_forward(
        tgt, memory, tgt_pos, memory_pos, kparams, final_norm, NHEAD)
    hs = jax.block_until_ready(hs)

    assert hs.shape == (B, St, D)
    assert list_attn_maps == []                    # module never populates it

    # Correctness gate: reference with the SAME precision policy as the kernel
    # (bf16 matmul operands / f32 accumulation, f32 LayerNorm & softmax).
    ref_bf16 = jax.block_until_ready(reference_decoder(
        tgt, memory, tgt_pos, memory_pos, torch_layers,
        final_g, final_b, NHEAD, matmul_dtype=jnp.bfloat16))
    max_err = float(jnp.max(jnp.abs(hs - ref_bf16)))
    assert jnp.allclose(hs, ref_bf16, atol=5e-3, rtol=5e-3), f"max_err={max_err}"

    # Sanity vs. the full-f32 PyTorch-faithful math: the gap (~1e-2) is the documented
    # cost of storing weights / running matmuls in bf16 (review item 3).
    ref_f32 = jax.block_until_ready(reference_decoder(
        tgt, memory, tgt_pos, memory_pos, torch_layers,
        final_g, final_b, NHEAD, matmul_dtype=jnp.float32))
    max_err_f32 = float(jnp.max(jnp.abs(hs - ref_f32)))
    assert max_err_f32 < 0.2, f"bf16 deviation unexpectedly large: {max_err_f32}"

    print("KERNEL_OK")
</pallas_src>

<mosaic_0001>
module attributes {stable_mosaic.version = 11 : i64} {
  func.func @decoder_kernel(%arg0: i32, %arg1: i32, %arg2: memref<2x8x128xf32, #tpu.memory_space<vmem>>, %arg3: memref<2x8x128xf32, #tpu.memory_space<vmem>>, %arg4: memref<2x16x128xf32, #tpu.memory_space<vmem>>, %arg5: memref<2x16x128xf32, #tpu.memory_space<vmem>>, %arg6: memref<1x128x1280xbf16, #tpu.memory_space<vmem>>, %arg7: memref<1x256x128xbf16, #tpu.memory_space<vmem>>, %arg8: memref<1x16x128xf32, #tpu.memory_space<vmem>>, %arg9: memref<1x1x256xf32, #tpu.memory_space<vmem>>, %arg10: memref<2x128xf32, #tpu.memory_space<vmem>>, %arg11: memref<2x8x128xf32, #tpu.memory_space<vmem>>, %arg12: memref<16x128xf32, #tpu.memory_space<vmem>>) attributes {dimension_semantics = [#tpu.dimension_semantics<parallel>, #tpu.dimension_semantics<arbitrary>], iteration_bounds = array<i64: 1, 2>, scalar_prefetch = 0 : i64, scratch_operands = 1 : i64, tpu.core_type = #tpu.core_type<tc>, window_params = [{transform_indices = @transform_0, window_bounds = array<i64: 2, 8, 128>}, {transform_indices = @transform_1, window_bounds = array<i64: 2, 8, 128>}, {transform_indices = @transform_2, window_bounds = array<i64: 2, 16, 128>}, {transform_indices = @transform_3, window_bounds = array<i64: 2, 16, 128>}, {transform_indices = @transform_4, window_bounds = array<i64: 1, 128, 1280>}, {transform_indices = @transform_5, window_bounds = array<i64: 1, 256, 128>}, {transform_indices = @transform_6, window_bounds = array<i64: 1, 16, 128>}, {transform_indices = @transform_7, window_bounds = array<i64: 1, 1, 256>}, {pipeline_mode = #tpu.pipeline_mode<synchronous>, transform_indices = @transform_8, window_bounds = array<i64: 2, 128>}, {transform_indices = @transform_9, window_bounds = array<i64: 2, 8, 128>}]} {
    %c0_i32 = arith.constant 0 : i32
    %0 = arith.cmpi eq, %arg1, %c0_i32 : i32
    %1 = arith.extui %0 : i1 to i32
    %c0_i32_0 = arith.constant 0 : i32
    %2 = arith.cmpi ne, %1, %c0_i32_0 : i32
    scf.if %2 {
      %c0_74 = arith.constant 0 : index
      %c0_75 = arith.constant 0 : index
      %c0_76 = arith.constant 0 : index
      %222 = vector.load %arg2[%c0_74, %c0_75, %c0_76] : memref<2x8x128xf32, #tpu.memory_space<vmem>>, vector<2x8x128xf32>
      %223 = vector.shape_cast %222 : vector<2x8x128xf32> to vector<16x128xf32>
      %c0_77 = arith.constant 0 : index
      %c0_78 = arith.constant 0 : index
      %224 = vector.load %arg12[%c0_77, %c0_78] : memref<16x128xf32, #tpu.memory_space<vmem>>, vector<16x128xf32>
      tpu.vector_store %arg12[%c0_77, %c0_78], %223 {strides = array<i32>} : memref<16x128xf32, #tpu.memory_space<vmem>>, vector<16x128xf32>,
    } else {
    }
    %c0 = arith.constant 0 : index
    %c0_1 = arith.constant 0 : index
    %3 = vector.load %arg12[%c0, %c0_1] : memref<16x128xf32, #tpu.memory_space<vmem>>, vector<16x128xf32>
    %c0_2 = arith.constant 0 : index
    %c0_3 = arith.constant 0 : index
    %c0_4 = arith.constant 0 : index
    %4 = vector.load %arg3[%c0_2, %c0_3, %c0_4] : memref<2x8x128xf32, #tpu.memory_space<vmem>>, vector<2x8x128xf32>
    %5 = vector.shape_cast %4 : vector<2x8x128xf32> to vector<16x128xf32>
    %c0_5 = arith.constant 0 : index
    %c0_6 = arith.constant 0 : index
    %c0_7 = arith.constant 0 : index
    %6 = vector.load %arg4[%c0_5, %c0_6, %c0_7] : memref<2x16x128xf32, #tpu.memory_space<vmem>>, vector<2x16x128xf32>
    %7 = vector.shape_cast %6 : vector<2x16x128xf32> to vector<32x128xf32>
    %c0_8 = arith.constant 0 : index
    %c0_9 = arith.constant 0 : index
    %c0_10 = arith.constant 0 : index
    %8 = vector.load %arg5[%c0_8, %c0_9, %c0_10] : memref<2x16x128xf32, #tpu.memory_space<vmem>>, vector<2x16x128xf32>
    %9 = vector.shape_cast %8 : vector<2x16x128xf32> to vector<32x128xf32>
    %c0_11 = arith.constant 0 : index
    %c0_12 = arith.constant 0 : index
    %c0_13 = arith.constant 0 : index
    %10 = vector.load %arg8[%c0_11, %c0_12, %c0_13] : memref<1x16x128xf32, #tpu.memory_space<vmem>>, vector<1x16x128xf32>
    %11 = vector.shape_cast %10 : vector<1x16x128xf32> to vector<16x128xf32>
    %12 = arith.addf %3, %5 : vector<16x128xf32>
    %c0_14 = arith.constant 0 : index
    %c0_15 = arith.constant 0 : index
    %c0_16 = arith.constant 0 : index
    %13 = vector.load %arg6[%c0_14, %c0_15, %c0_16] : memref<1x128x1280xbf16, #tpu.memory_space<vmem>>, vector<1x128x256xbf16>
    %14 = vector.shape_cast %13 : vector<1x128x256xbf16> to vector<128x256xbf16>
    %15 = arith.truncf %12 : vector<16x128xf32> to vector<16x128xbf16>
    %cst = arith.constant dense<0.000000e+00> : vector<16x256xf32>
    %16 = tpu.matmul %15, %14, %cst {dimension_numbers = #tpu.dot_dimension_numbers<[1], [0], [0], [1], [0, 0, 1, 1], [], []>} : vector<16x128xbf16>, vector<128x256xbf16>, vector<16x256xf32> -> vector<16x256xf32>
    %17 = vector.extract_strided_slice %16 {offsets = [0, 0], sizes = [16, 128], strides = [1, 1]} : vector<16x256xf32> to vector<16x128xf32>
    %18 = vector.extract_strided_slice %11 {offsets = [0, 0], sizes = [1, 128], strides = [1, 1]} : vector<16x128xf32> to vector<1x128xf32>
    %19 = vector.broadcast %18 : vector<1x128xf32> to vector<16x128xf32>
    %20 = arith.addf %17, %19 : vector<16x128xf32>
    %21 = vector.extract_strided_slice %16 {offsets = [0, 128], sizes = [16, 128], strides = [1, 1]} : vector<16x256xf32> to vector<16x128xf32>
    %22 = vector.extract_strided_slice %11 {offsets = [1, 0], sizes = [1, 128], strides = [1, 1]} : vector<16x128xf32> to vector<1x128xf32>
    %23 = vector.broadcast %22 : vector<1x128xf32> to vector<16x128xf32>
    %24 = arith.addf %21, %23 : vector<16x128xf32>
    %c0_17 = arith.constant 0 : index
    %c0_18 = arith.constant 0 : index
    %c256 = arith.constant 256 : index
    %25 = vector.load %arg6[%c0_17, %c0_18, %c256] : memref<1x128x1280xbf16, #tpu.memory_space<vmem>>, vector<1x128x128xbf16>
    %26 = vector.shape_cast %25 : vector<1x128x128xbf16> to vector<128x128xbf16>
    %27 = arith.truncf %3 : vector<16x128xf32> to vector<16x128xbf16>
    %cst_19 = arith.constant dense<0.000000e+00> : vector<16x128xf32>
    %28 = tpu.matmul %27, %26, %cst_19 {dimension_numbers = #tpu.dot_dimension_numbers<[1], [0], [0], [1], [0, 0, 1, 1], [], []>} : vector<16x128xbf16>, vector<128x128xbf16>, vector<16x128xf32> -> vector<16x128xf32>
    %29 = vector.extract_strided_slice %11 {offsets = [2, 0], sizes = [1, 128], strides = [1, 1]} : vector<16x128xf32> to vector<1x128xf32>
    %30 = vector.broadcast %29 : vector<1x128xf32> to vector<16x128xf32>
    %31 = arith.addf %28, %30 : vector<16x128xf32>
    %32 = vector.shape_cast %20 : vector<16x128xf32> to vector<2x8x8x16xf32>
    %33 = tpu.transpose %32, [0, 2, 1, 3] : vector<2x8x8x16xf32> -> vector<2x8x8x16xf32>
    %34 = vector.shape_cast %33 : vector<2x8x8x16xf32> to vector<16x8x16xf32>
    %35 = arith.truncf %34 : vector<16x8x16xf32> to vector<16x8x16xbf16>
    %36 = vector.shape_cast %24 : vector<16x128xf32> to vector<2x8x8x16xf32>
    %37 = tpu.transpose %36, [0, 2, 1, 3] : vector<2x8x8x16xf32> -> vector<2x8x8x16xf32>
    %38 = vector.shape_cast %37 : vector<2x8x8x16xf32> to vector<16x8x16xf32>
    %39 = arith.truncf %38 : vector<16x8x16xf32> to vector<16x8x16xbf16>
    %40 = vector.shape_cast %31 : vector<16x128xf32> to vector<2x8x8x16xf32>
    %41 = tpu.transpose %40, [0, 2, 1, 3] : vector<2x8x8x16xf32> -> vector<2x8x8x16xf32>
    %42 = vector.shape_cast %41 : vector<2x8x8x16xf32> to vector<16x8x16xf32>
    %43 = arith.truncf %42 : vector<16x8x16xf32> to vector<16x8x16xbf16>
    "tpu.trace_start"() <{level = 10 : i32, message = "bqd,bkd->bqk"}> : () -> ()
    %cst_20 = arith.constant dense<0.000000e+00> : vector<16x8x8xf32>
    %44 = tpu.matmul %35, %39, %cst_20 {dimension_numbers = #tpu.dot_dimension_numbers<[2], [2], [1], [1], [0, 0, 0, 1, 1, 1], [0], [0]>} : vector<16x8x16xbf16>, vector<16x8x16xbf16>, vector<16x8x8xf32> -> vector<16x8x8xf32>
    "tpu.trace_stop"() : () -> ()
    %cst_21 = arith.constant 2.500000e-01 : f32
    %45 = vector.broadcast %cst_21 : f32 to vector<16x8x8xf32>
    %46 = arith.mulf %44, %45 : vector<16x8x8xf32>
    %cst_22 = arith.constant dense<0xFF800000> : vector<16x8xf32>
    %47 = vector.multi_reduction <maximumf>, %46, %cst_22 [2] : vector<16x8x8xf32> to vector<16x8xf32>
    %48 = vector.shape_cast %47 : vector<16x8xf32> to vector<16x8x1xf32>
    %49 = vector.broadcast %48 : vector<16x8x1xf32> to vector<16x8x8xf32>
    %50 = arith.subf %46, %49 : vector<16x8x8xf32>
    %51 = math.exp %50 : vector<16x8x8xf32>
    %cst_23 = arith.constant dense<0.000000e+00> : vector<16x8xf32>
    %52 = vector.multi_reduction <add>, %51, %cst_23 [2] : vector<16x8x8xf32> to vector<16x8xf32>
    %53 = vector.shape_cast %52 : vector<16x8xf32> to vector<16x8x1xf32>
    %54 = vector.broadcast %53 : vector<16x8x1xf32> to vector<16x8x8xf32>
    %55 = arith.divf %51, %54 : vector<16x8x8xf32>
    %56 = arith.truncf %55 : vector<16x8x8xf32> to vector<16x8x8xbf16>
    "tpu.trace_start"() <{level = 10 : i32, message = "bqk,bkd->bqd"}> : () -> ()
    %cst_24 = arith.constant dense<0.000000e+00> : vector<16x8x16xf32>
    %57 = tpu.matmul %56, %43, %cst_24 {dimension_numbers = #tpu.dot_dimension_numbers<[2], [1], [1], [2], [0, 0, 0, 1, 1, 2], [0], [0]>} : vector<16x8x8xbf16>, vector<16x8x16xbf16>, vector<16x8x16xf32> -> vector<16x8x16xf32>
    "tpu.trace_stop"() : () -> ()
    %58 = vector.shape_cast %57 : vector<16x8x16xf32> to vector<2x8x8x16xf32>
    %59 = tpu.transpose %58, [0, 2, 1, 3] : vector<2x8x8x16xf32> -> vector<2x8x8x16xf32>
    %60 = vector.shape_cast %59 : vector<2x8x8x16xf32> to vector<16x128xf32>
    %c0_25 = arith.constant 0 : index
    %c0_26 = arith.constant 0 : index
    %c384 = arith.constant 384 : index
    %61 = vector.load %arg6[%c0_25, %c0_26, %c384] : memref<1x128x1280xbf16, #tpu.memory_space<vmem>>, vector<1x128x128xbf16>
    %62 = vector.shape_cast %61 : vector<1x128x128xbf16> to vector<128x128xbf16>
    %63 = arith.truncf %60 : vector<16x128xf32> to vector<16x128xbf16>
    %cst_27 = arith.constant dense<0.000000e+00> : vector<16x128xf32>
    %64 = tpu.matmul %63, %62, %cst_27 {dimension_numbers = #tpu.dot_dimension_numbers<[1], [0], [0], [1], [0, 0, 1, 1], [], []>} : vector<16x128xbf16>, vector<128x128xbf16>, vector<16x128xf32> -> vector<16x128xf32>
    %65 = vector.extract_strided_slice %11 {offsets = [3, 0], sizes = [1, 128], strides = [1, 1]} : vector<16x128xf32> to vector<1x128xf32>
    %66 = vector.broadcast %65 : vector<1x128xf32> to vector<16x128xf32>
    %67 = arith.addf %64, %66 : vector<16x128xf32>
    %68 = arith.addf %3, %67 : vector<16x128xf32>
    %69 = vector.extract_strided_slice %11 {offsets = [9, 0], sizes = [1, 128], strides = [1, 1]} : vector<16x128xf32> to vector<1x128xf32>
    %70 = vector.extract_strided_slice %11 {offsets = [10, 0], sizes = [1, 128], strides = [1, 1]} : vector<16x128xf32> to vector<1x128xf32>
    %cst_28 = arith.constant dense<0.000000e+00> : vector<16xf32>
    %71 = vector.multi_reduction <add>, %68, %cst_28 [1] : vector<16x128xf32> to vector<16xf32>
    %72 = vector.shape_cast %71 : vector<16xf32> to vector<16x1xf32>
    %cst_29 = arith.constant 1.280000e+02 : f32
    %73 = vector.broadcast %cst_29 : f32 to vector<16x1xf32>
    %74 = arith.divf %72, %73 : vector<16x1xf32>
    %75 = vector.broadcast %74 : vector<16x1xf32> to vector<16x128xf32>
    %76 = arith.subf %68, %75 : vector<16x128xf32>
    %77 = arith.mulf %76, %76 : vector<16x128xf32>
    %cst_30 = arith.constant dense<0.000000e+00> : vector<16xf32>
    %78 = vector.multi_reduction <add>, %77, %cst_30 [1] : vector<16x128xf32> to vector<16xf32>
    %79 = vector.shape_cast %78 : vector<16xf32> to vector<16x1xf32>
    %cst_31 = arith.constant 1.280000e+02 : f32
    %80 = vector.broadcast %cst_31 : f32 to vector<16x1xf32>
    %81 = arith.divf %79, %80 : vector<16x1xf32>
    %82 = vector.broadcast %74 : vector<16x1xf32> to vector<16x128xf32>
    %83 = arith.subf %68, %82 : vector<16x128xf32>
    %cst_32 = arith.constant 9.99999974E-6 : f32
    %84 = vector.broadcast %cst_32 : f32 to vector<16x1xf32>
    %85 = arith.addf %81, %84 : vector<16x1xf32>
    %86 = math.rsqrt %85 : vector<16x1xf32>
    %87 = vector.broadcast %86 : vector<16x1xf32> to vector<16x128xf32>
    %88 = arith.mulf %83, %87 : vector<16x128xf32>
    %89 = vector.broadcast %69 : vector<1x128xf32> to vector<16x128xf32>
    %90 = arith.mulf %88, %89 : vector<16x128xf32>
    %91 = vector.broadcast %70 : vector<1x128xf32> to vector<16x128xf32>
    %92 = arith.addf %90, %91 : vector<16x128xf32>
    %93 = arith.addf %92, %5 : vector<16x128xf32>
    %c0_33 = arith.constant 0 : index
    %c0_34 = arith.constant 0 : index
    %c512 = arith.constant 512 : index
    %94 = vector.load %arg6[%c0_33, %c0_34, %c512] : memref<1x128x1280xbf16, #tpu.memory_space<vmem>>, vector<1x128x128xbf16>
    %95 = vector.shape_cast %94 : vector<1x128x128xbf16> to vector<128x128xbf16>
    %96 = arith.truncf %93 : vector<16x128xf32> to vector<16x128xbf16>
    %cst_35 = arith.constant dense<0.000000e+00> : vector<16x128xf32>
    %97 = tpu.matmul %96, %95, %cst_35 {dimension_numbers = #tpu.dot_dimension_numbers<[1], [0], [0], [1], [0, 0, 1, 1], [], []>} : vector<16x128xbf16>, vector<128x128xbf16>, vector<16x128xf32> -> vector<16x128xf32>
    %98 = vector.extract_strided_slice %11 {offsets = [4, 0], sizes = [1, 128], strides = [1, 1]} : vector<16x128xf32> to vector<1x128xf32>
    %99 = vector.broadcast %98 : vector<1x128xf32> to vector<16x128xf32>
    %100 = arith.addf %97, %99 : vector<16x128xf32>
    %c0_36 = arith.constant 0 : index
    %c0_37 = arith.constant 0 : index
    %c640 = arith.constant 640 : index
    %101 = vector.load %arg6[%c0_36, %c0_37, %c640] : memref<1x128x1280xbf16, #tpu.memory_space<vmem>>, vector<1x128x128xbf16>
    %102 = vector.shape_cast %101 : vector<1x128x128xbf16> to vector<128x128xbf16>
    %103 = arith.truncf %9 : vector<32x128xf32> to vector<32x128xbf16>
    %cst_38 = arith.constant dense<0.000000e+00> : vector<32x128xf32>
    %104 = tpu.matmul %103, %102, %cst_38 {dimension_numbers = #tpu.dot_dimension_numbers<[1], [0], [0], [1], [0, 0, 1, 1], [], []>} : vector<32x128xbf16>, vector<128x128xbf16>, vector<32x128xf32> -> vector<32x128xf32>
    %105 = vector.extract_strided_slice %11 {offsets = [5, 0], sizes = [1, 128], strides = [1, 1]} : vector<16x128xf32> to vector<1x128xf32>
    %106 = vector.broadcast %105 : vector<1x128xf32> to vector<32x128xf32>
    %107 = arith.addf %104, %106 : vector<32x128xf32>
    %c0_39 = arith.constant 0 : index
    %c0_40 = arith.constant 0 : index
    %c768 = arith.constant 768 : index
    %108 = vector.load %arg6[%c0_39, %c0_40, %c768] : memref<1x128x1280xbf16, #tpu.memory_space<vmem>>, vector<1x128x128xbf16>
    %109 = vector.shape_cast %108 : vector<1x128x128xbf16> to vector<128x128xbf16>
    %110 = arith.truncf %7 : vector<32x128xf32> to vector<32x128xbf16>
    %cst_41 = arith.constant dense<0.000000e+00> : vector<32x128xf32>
    %111 = tpu.matmul %110, %109, %cst_41 {dimension_numbers = #tpu.dot_dimension_numbers<[1], [0], [0], [1], [0, 0, 1, 1], [], []>} : vector<32x128xbf16>, vector<128x128xbf16>, vector<32x128xf32> -> vector<32x128xf32>
    %112 = vector.extract_strided_slice %11 {offsets = [6, 0], sizes = [1, 128], strides = [1, 1]} : vector<16x128xf32> to vector<1x128xf32>
    %113 = vector.broadcast %112 : vector<1x128xf32> to vector<32x128xf32>
    %114 = arith.addf %111, %113 : vector<32x128xf32>
    %115 = vector.shape_cast %100 : vector<16x128xf32> to vector<2x8x8x16xf32>
    %116 = tpu.transpose %115, [0, 2, 1, 3] : vector<2x8x8x16xf32> -> vector<2x8x8x16xf32>
    %117 = vector.shape_cast %116 : vector<2x8x8x16xf32> to vector<16x8x16xf32>
    %118 = arith.truncf %117 : vector<16x8x16xf32> to vector<16x8x16xbf16>
    %119 = vector.shape_cast %107 : vector<32x128xf32> to vector<2x16x8x16xf32>
    %120 = tpu.transpose %119, [0, 2, 1, 3] : vector<2x16x8x16xf32> -> vector<2x8x16x16xf32>
    %121 = vector.shape_cast %120 : vector<2x8x16x16xf32> to vector<16x16x16xf32>
    %122 = arith.truncf %121 : vector<16x16x16xf32> to vector<16x16x16xbf16>
    %123 = vector.shape_cast %114 : vector<32x128xf32> to vector<2x16x8x16xf32>
    %124 = tpu.transpose %123, [0, 2, 1, 3] : vector<2x16x8x16xf32> -> vector<2x8x16x16xf32>
    %125 = vector.shape_cast %124 : vector<2x8x16x16xf32> to vector<16x16x16xf32>
    %126 = arith.truncf %125 : vector<16x16x16xf32> to vector<16x16x16xbf16>
    "tpu.trace_start"() <{level = 10 : i32, message = "bqd,bkd->bqk"}> : () -> ()
    %cst_42 = arith.constant dense<0.000000e+00> : vector<16x8x16xf32>
    %127 = tpu.matmul %118, %122, %cst_42 {dimension_numbers = #tpu.dot_dimension_numbers<[2], [2], [1], [1], [0, 0, 0, 1, 1, 1], [0], [0]>} : vector<16x8x16xbf16>, vector<16x16x16xbf16>, vector<16x8x16xf32> -> vector<16x8x16xf32>
    "tpu.trace_stop"() : () -> ()
    %cst_43 = arith.constant 2.500000e-01 : f32
    %128 = vector.broadcast %cst_43 : f32 to vector<16x8x16xf32>
    %129 = arith.mulf %127, %128 : vector<16x8x16xf32>
    %cst_44 = arith.constant dense<0xFF800000> : vector<16x8xf32>
    %130 = vector.multi_reduction <maximumf>, %129, %cst_44 [2] : vector<16x8x16xf32> to vector<16x8xf32>
    %131 = vector.shape_cast %130 : vector<16x8xf32> to vector<16x8x1xf32>
    %132 = vector.broadcast %131 : vector<16x8x1xf32> to vector<16x8x16xf32>
    %133 = arith.subf %129, %132 : vector<16x8x16xf32>
    %134 = math.exp %133 : vector<16x8x16xf32>
    %cst_45 = arith.constant dense<0.000000e+00> : vector<16x8xf32>
    %135 = vector.multi_reduction <add>, %134, %cst_45 [2] : vector<16x8x16xf32> to vector<16x8xf32>
    %136 = vector.shape_cast %135 : vector<16x8xf32> to vector<16x8x1xf32>
    %137 = vector.broadcast %136 : vector<16x8x1xf32> to vector<16x8x16xf32>
    %138 = arith.divf %134, %137 : vector<16x8x16xf32>
    %139 = arith.truncf %138 : vector<16x8x16xf32> to vector<16x8x16xbf16>
    "tpu.trace_start"() <{level = 10 : i32, message = "bqk,bkd->bqd"}> : () -> ()
    %cst_46 = arith.constant dense<0.000000e+00> : vector<16x8x16xf32>
    %140 = tpu.matmul %139, %126, %cst_46 {dimension_numbers = #tpu.dot_dimension_numbers<[2], [1], [1], [2], [0, 0, 0, 1, 1, 2], [0], [0]>} : vector<16x8x16xbf16>, vector<16x16x16xbf16>, vector<16x8x16xf32> -> vector<16x8x16xf32>
    "tpu.trace_stop"() : () -> ()
    %141 = vector.shape_cast %140 : vector<16x8x16xf32> to vector<2x8x8x16xf32>
    %142 = tpu.transpose %141, [0, 2, 1, 3] : vector<2x8x8x16xf32> -> vector<2x8x8x16xf32>
    %143 = vector.shape_cast %142 : vector<2x8x8x16xf32> to vector<16x128xf32>
    %c0_47 = arith.constant 0 : index
    %c0_48 = arith.constant 0 : index
    %c896 = arith.constant 896 : index
    %144 = vector.load %arg6[%c0_47, %c0_48, %c896] : memref<1x128x1280xbf16, #tpu.memory_space<vmem>>, vector<1x128x128xbf16>
    %145 = vector.shape_cast %144 : vector<1x128x128xbf16> to vector<128x128xbf16>
    %146 = arith.truncf %143 : vector<16x128xf32> to vector<16x128xbf16>
    %cst_49 = arith.constant dense<0.000000e+00> : vector<16x128xf32>
    %147 = tpu.matmul %146, %145, %cst_49 {dimension_numbers = #tpu.dot_dimension_numbers<[1], [0], [0], [1], [0, 0, 1, 1], [], []>} : vector<16x128xbf16>, vector<128x128xbf16>, vector<16x128xf32> -> vector<16x128xf32>
    %148 = vector.extract_strided_slice %11 {offsets = [7, 0], sizes = [1, 128], strides = [1, 1]} : vector<16x128xf32> to vector<1x128xf32>
    %149 = vector.broadcast %148 : vector<1x128xf32> to vector<16x128xf32>
    %150 = arith.addf %147, %149 : vector<16x128xf32>
    %151 = arith.addf %92, %150 : vector<16x128xf32>
    %152 = vector.extract_strided_slice %11 {offsets = [11, 0], sizes = [1, 128], strides = [1, 1]} : vector<16x128xf32> to vector<1x128xf32>
    %153 = vector.extract_strided_slice %11 {offsets = [12, 0], sizes = [1, 128], strides = [1, 1]} : vector<16x128xf32> to vector<1x128xf32>
    %cst_50 = arith.constant dense<0.000000e+00> : vector<16xf32>
    %154 = vector.multi_reduction <add>, %151, %cst_50 [1] : vector<16x128xf32> to vector<16xf32>
    %155 = vector.shape_cast %154 : vector<16xf32> to vector<16x1xf32>
    %cst_51 = arith.constant 1.280000e+02 : f32
    %156 = vector.broadcast %cst_51 : f32 to vector<16x1xf32>
    %157 = arith.divf %155, %156 : vector<16x1xf32>
    %158 = vector.broadcast %157 : vector<16x1xf32> to vector<16x128xf32>
    %159 = arith.subf %151, %158 : vector<16x128xf32>
    %160 = arith.mulf %159, %159 : vector<16x128xf32>
    %cst_52 = arith.constant dense<0.000000e+00> : vector<16xf32>
    %161 = vector.multi_reduction <add>, %160, %cst_52 [1] : vector<16x128xf32> to vector<16xf32>
    %162 = vector.shape_cast %161 : vector<16xf32> to vector<16x1xf32>
    %cst_53 = arith.constant 1.280000e+02 : f32
    %163 = vector.broadcast %cst_53 : f32 to vector<16x1xf32>
    %164 = arith.divf %162, %163 : vector<16x1xf32>
    %165 = vector.broadcast %157 : vector<16x1xf32> to vector<16x128xf32>
    %166 = arith.subf %151, %165 : vector<16x128xf32>
    %cst_54 = arith.constant 9.99999974E-6 : f32
    %167 = vector.broadcast %cst_54 : f32 to vector<16x1xf32>
    %168 = arith.addf %164, %167 : vector<16x1xf32>
    %169 = math.rsqrt %168 : vector<16x1xf32>
    %170 = vector.broadcast %169 : vector<16x1xf32> to vector<16x128xf32>
    %171 = arith.mulf %166, %170 : vector<16x128xf32>
    %172 = vector.broadcast %152 : vector<1x128xf32> to vector<16x128xf32>
    %173 = arith.mulf %171, %172 : vector<16x128xf32>
    %174 = vector.broadcast %153 : vector<1x128xf32> to vector<16x128xf32>
    %175 = arith.addf %173, %174 : vector<16x128xf32>
    %c0_55 = arith.constant 0 : index
    %c0_56 = arith.constant 0 : index
    %c1024 = arith.constant 1024 : index
    %176 = vector.load %arg6[%c0_55, %c0_56, %c1024] : memref<1x128x1280xbf16, #tpu.memory_space<vmem>>, vector<1x128x256xbf16>
    %177 = vector.shape_cast %176 : vector<1x128x256xbf16> to vector<128x256xbf16>
    %178 = arith.truncf %175 : vector<16x128xf32> to vector<16x128xbf16>
    %cst_57 = arith.constant dense<0.000000e+00> : vector<16x256xf32>
    %179 = tpu.matmul %178, %177, %cst_57 {dimension_numbers = #tpu.dot_dimension_numbers<[1], [0], [0], [1], [0, 0, 1, 1], [], []>} : vector<16x128xbf16>, vector<128x256xbf16>, vector<16x256xf32> -> vector<16x256xf32>
    %c0_58 = arith.constant 0 : index
    %c0_59 = arith.constant 0 : index
    %c0_60 = arith.constant 0 : index
    %180 = vector.load %arg9[%c0_58, %c0_59, %c0_60] : memref<1x1x256xf32, #tpu.memory_space<vmem>>, vector<1x1x256xf32>
    %181 = vector.shape_cast %180 : vector<1x1x256xf32> to vector<1x256xf32>
    %182 = vector.broadcast %181 : vector<1x256xf32> to vector<16x256xf32>
    %183 = arith.addf %179, %182 : vector<16x256xf32>
    %cst_61 = arith.constant 0.000000e+00 : f32
    %184 = vector.broadcast %cst_61 : f32 to vector<16x256xf32>
    %185 = arith.maximumf %183, %184 : vector<16x256xf32>
    %c0_62 = arith.constant 0 : index
    %c0_63 = arith.constant 0 : index
    %c0_64 = arith.constant 0 : index
    %186 = vector.load %arg7[%c0_62, %c0_63, %c0_64] : memref<1x256x128xbf16, #tpu.memory_space<vmem>>, vector<1x256x128xbf16>
    %187 = vector.shape_cast %186 : vector<1x256x128xbf16> to vector<256x128xbf16>
    %188 = arith.truncf %185 : vector<16x256xf32> to vector<16x256xbf16>
    %cst_65 = arith.constant dense<0.000000e+00> : vector<16x128xf32>
    %189 = tpu.matmul %188, %187, %cst_65 {dimension_numbers = #tpu.dot_dimension_numbers<[1], [0], [0], [1], [0, 0, 1, 1], [], []>} : vector<16x256xbf16>, vector<256x128xbf16>, vector<16x128xf32> -> vector<16x128xf32>
    %190 = arith.addf %175, %189 : vector<16x128xf32>
    %191 = vector.extract_strided_slice %11 {offsets = [8, 0], sizes = [1, 128], strides = [1, 1]} : vector<16x128xf32> to vector<1x128xf32>
    %192 = vector.broadcast %191 : vector<1x128xf32> to vector<16x128xf32>
    %193 = arith.addf %190, %192 : vector<16x128xf32>
    %194 = vector.extract_strided_slice %11 {offsets = [13, 0], sizes = [1, 128], strides = [1, 1]} : vector<16x128xf32> to vector<1x128xf32>
    %195 = vector.extract_strided_slice %11 {offsets = [14, 0], sizes = [1, 128], strides = [1, 1]} : vector<16x128xf32> to vector<1x128xf32>
    %cst_66 = arith.constant dense<0.000000e+00> : vector<16xf32>
    %196 = vector.multi_reduction <add>, %193, %cst_66 [1] : vector<16x128xf32> to vector<16xf32>
    %197 = vector.shape_cast %196 : vector<16xf32> to vector<16x1xf32>
    %cst_67 = arith.constant 1.280000e+02 : f32
    %198 = vector.broadcast %cst_67 : f32 to vector<16x1xf32>
    %199 = arith.divf %197, %198 : vector<16x1xf32>
    %200 = vector.broadcast %199 : vector<16x1xf32> to vector<16x128xf32>
    %201 = arith.subf %193, %200 : vector<16x128xf32>
    %202 = arith.mulf %201, %201 : vector<16x128xf32>
    %cst_68 = arith.constant dense<0.000000e+00> : vector<16xf32>
    %203 = vector.multi_reduction <add>, %202, %cst_68 [1] : vector<16x128xf32> to vector<16xf32>
    %204 = vector.shape_cast %203 : vector<16xf32> to vector<16x1xf32>
    %cst_69 = arith.constant 1.280000e+02 : f32
    %205 = vector.broadcast %cst_69 : f32 to vector<16x1xf32>
    %206 = arith.divf %204, %205 : vector<16x1xf32>
    %207 = vector.broadcast %199 : vector<16x1xf32> to vector<16x128xf32>
    %208 = arith.subf %193, %207 : vector<16x128xf32>
    %cst_70 = arith.constant 9.99999974E-6 : f32
    %209 = vector.broadcast %cst_70 : f32 to vector<16x1xf32>
    %210 = arith.addf %206, %209 : vector<16x1xf32>
    %211 = math.rsqrt %210 : vector<16x1xf32>
    %212 = vector.broadcast %211 : vector<16x1xf32> to vector<16x128xf32>
    %213 = arith.mulf %208, %212 : vector<16x128xf32>
    %214 = vector.broadcast %194 : vector<1x128xf32> to vector<16x128xf32>
    %215 = arith.mulf %213, %214 : vector<16x128xf32>
    %216 = vector.broadcast %195 : vector<1x128xf32> to vector<16x128xf32>
    %217 = arith.addf %215, %216 : vector<16x128xf32>
    %c0_71 = arith.constant 0 : index
    %c0_72 = arith.constant 0 : index
    %218 = vector.load %arg12[%c0_71, %c0_72] : memref<16x128xf32, #tpu.memory_space<vmem>>, vector<16x128xf32>
    tpu.vector_store %arg12[%c0_71, %c0_72], %217 {strides = array<i32>} : memref<16x128xf32, #tpu.memory_space<vmem>>, vector<16x128xf32>,
    %c1_i32 = arith.constant 1 : i32
    %219 = arith.cmpi eq, %arg1, %c1_i32 : i32
    %220 = arith.extui %219 : i1 to i32
    %c0_i32_73 = arith.constant 0 : i32
    %221 = arith.cmpi ne, %220, %c0_i32_73 : i32
    scf.if %221 {
      %c0_74 = arith.constant 0 : index
      %c0_75 = arith.constant 0 : index
      %222 = vector.load %arg10[%c0_74, %c0_75] : memref<2x128xf32, #tpu.memory_space<vmem>>, vector<2x128xf32>
      %223 = vector.extract_strided_slice %222 {offsets = [0, 0], sizes = [1, 128], strides = [1, 1]} : vector<2x128xf32> to vector<1x128xf32>
      %224 = vector.extract_strided_slice %222 {offsets = [1, 0], sizes = [1, 128], strides = [1, 1]} : vector<2x128xf32> to vector<1x128xf32>
      %cst_76 = arith.constant dense<0.000000e+00> : vector<16xf32>
      %225 = vector.multi_reduction <add>, %217, %cst_76 [1] : vector<16x128xf32> to vector<16xf32>
      %226 = vector.shape_cast %225 : vector<16xf32> to vector<16x1xf32>
      %cst_77 = arith.constant 1.280000e+02 : f32
      %227 = vector.broadcast %cst_77 : f32 to vector<16x1xf32>
      %228 = arith.divf %226, %227 : vector<16x1xf32>
      %229 = vector.broadcast %228 : vector<16x1xf32> to vector<16x128xf32>
      %230 = arith.subf %217, %229 : vector<16x128xf32>
      %231 = arith.mulf %230, %230 : vector<16x128xf32>
      %cst_78 = arith.constant dense<0.000000e+00> : vector<16xf32>
      %232 = vector.multi_reduction <add>, %231, %cst_78 [1] : vector<16x128xf32> to vector<16xf32>
      %233 = vector.shape_cast %232 : vector<16xf32> to vector<16x1xf32>
      %cst_79 = arith.constant 1.280000e+02 : f32
      %234 = vector.broadcast %cst_79 : f32 to vector<16x1xf32>
      %235 = arith.divf %233, %234 : vector<16x1xf32>
      %236 = vector.broadcast %228 : vector<16x1xf32> to vector<16x128xf32>
      %237 = arith.subf %217, %236 : vector<16x128xf32>
      %cst_80 = arith.constant 9.99999974E-6 : f32
      %238 = vector.broadcast %cst_80 : f32 to vector<16x1xf32>
      %239 = arith.addf %235, %238 : vector<16x1xf32>
      %240 = math.rsqrt %239 : vector<16x1xf32>
      %241 = vector.broadcast %240 : vector<16x1xf32> to vector<16x128xf32>
      %242 = arith.mulf %237, %241 : vector<16x128xf32>
      %243 = vector.broadcast %223 : vector<1x128xf32> to vector<16x128xf32>
      %244 = arith.mulf %242, %243 : vector<16x128xf32>
      %245 = vector.broadcast %224 : vector<1x128xf32> to vector<16x128xf32>
      %246 = arith.addf %244, %245 : vector<16x128xf32>
      %247 = vector.shape_cast %246 : vector<16x128xf32> to vector<2x8x128xf32>
      %c0_81 = arith.constant 0 : index
      %c0_82 = arith.constant 0 : index
      %c0_83 = arith.constant 0 : index
      %248 = vector.load %arg11[%c0_81, %c0_82, %c0_83] : memref<2x8x128xf32, #tpu.memory_space<vmem>>, vector<2x8x128xf32>
      tpu.vector_store %arg11[%c0_81, %c0_82, %c0_83], %247 {strides = array<i32>} : memref<2x8x128xf32, #tpu.memory_space<vmem>>, vector<2x8x128xf32>,
    } else {
    }
    return
  }
  func.func @transform_0(%arg0: i32, %arg1: i32) -> (i32, i32, i32) {
    %c0_i32 = arith.constant 0 : i32
    %c0_i32_0 = arith.constant 0 : i32
    %c0_i32_1 = arith.constant 0 : i32
    return %arg0, %c0_i32, %c0_i32_0 : i32, i32, i32
  }
  func.func @transform_1(%arg0: i32, %arg1: i32) -> (i32, i32, i32) {
    %c0_i32 = arith.constant 0 : i32
    %c0_i32_0 = arith.constant 0 : i32
    %c0_i32_1 = arith.constant 0 : i32
    return %arg0, %c0_i32, %c0_i32_0 : i32, i32, i32
  }
  func.func @transform_2(%arg0: i32, %arg1: i32) -> (i32, i32, i32) {
    %c0_i32 = arith.constant 0 : i32
    %c0_i32_0 = arith.constant 0 : i32
    %c0_i32_1 = arith.constant 0 : i32
    return %arg0, %c0_i32, %c0_i32_0 : i32, i32, i32
  }
  func.func @transform_3(%arg0: i32, %arg1: i32) -> (i32, i32, i32) {
    %c0_i32 = arith.constant 0 : i32
    %c0_i32_0 = arith.constant 0 : i32
    %c0_i32_1 = arith.constant 0 : i32
    return %arg0, %c0_i32, %c0_i32_0 : i32, i32, i32
  }
  func.func @transform_4(%arg0: i32, %arg1: i32) -> (i32, i32, i32) {
    %c0_i32 = arith.constant 0 : i32
    %c0_i32_0 = arith.constant 0 : i32
    %c0_i32_1 = arith.constant 0 : i32
    return %arg1, %c0_i32, %c0_i32_0 : i32, i32, i32
  }
  func.func @transform_5(%arg0: i32, %arg1: i32) -> (i32, i32, i32) {
    %c0_i32 = arith.constant 0 : i32
    %c0_i32_0 = arith.constant 0 : i32
    %c0_i32_1 = arith.constant 0 : i32
    return %arg1, %c0_i32, %c0_i32_0 : i32, i32, i32
  }
  func.func @transform_6(%arg0: i32, %arg1: i32) -> (i32, i32, i32) {
    %c0_i32 = arith.constant 0 : i32
    %c0_i32_0 = arith.constant 0 : i32
    %c0_i32_1 = arith.constant 0 : i32
    return %arg1, %c0_i32, %c0_i32_0 : i32, i32, i32
  }
  func.func @transform_7(%arg0: i32, %arg1: i32) -> (i32, i32, i32) {
    %c0_i32 = arith.constant 0 : i32
    %c0_i32_0 = arith.constant 0 : i32
    %c0_i32_1 = arith.constant 0 : i32
    return %arg1, %c0_i32, %c0_i32_0 : i32, i32, i32
  }
  func.func @transform_8(%arg0: i32, %arg1: i32) -> (i32, i32) {
    %c0_i32 = arith.constant 0 : i32
    %c0_i32_0 = arith.constant 0 : i32
    %c0_i32_1 = arith.constant 0 : i32
    return %c0_i32, %c0_i32_0 : i32, i32
  }
  func.func @transform_9(%arg0: i32, %arg1: i32) -> (i32, i32, i32) {
    %c0_i32 = arith.constant 0 : i32
    %c0_i32_0 = arith.constant 0 : i32
    %c0_i32_1 = arith.constant 0 : i32
    return %arg0, %c0_i32, %c0_i32_0 : i32, i32, i32
  }
}

</mosaic_0001>

<llo_original>
// kernel: tpu_custom_call.1
$region0: #{tpu_custom_call.1}
  #allocation0 [shape = 'u32[]', space=smem, size = 0x4, offset = 0x4, fixed_abs, tag = 'smem constant byte address 0x4 - core index']
  #allocation1 [shape = 'u32[144,128]{1,0:T(1,128)}', space=vmem, size = 0x12000, scoped, tag = 'internal scratch']
  #allocation2 [shape = 'f32[16,128]{1,0:T(8,128)}', space=vmem, size = 0x2000, scoped, tag = 'scratch operand']
  %s0 = inlined_call_operand.hbm [shape: f32[2,8,128], index: 0, kind: input, shape index: {}]
  %s1 = inlined_call_operand.hbm [shape: f32[2,8,128], index: 1, kind: input, shape index: {}]
  %s2 = inlined_call_operand.hbm [shape: f32[2,16,128], index: 2, kind: input, shape index: {}]
  %s3 = inlined_call_operand.hbm [shape: f32[2,16,128], index: 3, kind: input, shape index: {}]
  %s4 = inlined_call_operand.hbm [shape: bf16[2,128,1280], index: 4, kind: input, shape index: {}]
  %s5 = inlined_call_operand.hbm [shape: bf16[2,256,128], index: 5, kind: input, shape index: {}]
  %s6 = inlined_call_operand.hbm [shape: f32[2,16,128], index: 6, kind: input, shape index: {}]
  %s7 = inlined_call_operand.vmem [shape: f32[2,1,256], index: 7, kind: input, shape index: {}]
  %s8 = inlined_call_operand.vmem [shape: f32[2,128], index: 8, kind: input, shape index: {}]
  %s9 = inlined_call_operand.hbm [shape: f32[2,8,128], index: 9, kind: output, shape index: {}]
  %s10 = sld [smem:[#allocation0]]
  $region105: #{tpu_custom_call.1} parent=0
    _
  %s12 = ssub.s32 1, %s10
  %s13 = scalar_select 0, %s12, %s10
  $region1: #{tpu_custom_call.1} parent=0
    #allocation3 [shape = 'u8[8192]{0}', space=vmem, size = 0x2000, scoped, tag = 'input window, operand 0, single buffered']
    #allocation4 [shape = 's32[2]{0}', space=sflag, size = 0x8, scoped, tag = 'scoped memory for tpu_custom_call.1']
    #allocation5 [shape = 's32[2]{0}', space=sflag, size = 0x8, scoped, tag = 'scoped memory for tpu_custom_call.1']
    #allocation6 [shape = 'u8[8192]{0}', space=vmem, size = 0x2000, scoped, tag = 'input window, operand 1, single buffered']
    #allocation7 [shape = 's32[1]{0}', space=sflag, size = 0x4, scoped, tag = 'scoped memory for tpu_custom_call.1']
    #allocation8 [shape = 'u8[16384]{0}', space=vmem, size = 0x4000, scoped, tag = 'input window, operand 2, single buffered']
    #allocation9 [shape = 'u8[16384]{0}', space=vmem, size = 0x4000, scoped, tag = 'input window, operand 3, single buffered']
    #allocation10 [shape = 's32[1]{0}', space=sflag, size = 0x4, scoped, tag = 'scoped memory for tpu_custom_call.1']
    #allocation11 [shape = 'u8[655360]{0}', space=vmem, size = 0xa0000, scoped, tag = 'input window, operand 4']
    #allocation12 [shape = 'u8[131072]{0}', space=vmem, size = 0x20000, scoped, tag = 'input window, operand 5']
    #allocation13 [shape = 'u8[16384]{0}', space=vmem, size = 0x4000, scoped, tag = 'input window, operand 6']
    #allocation14 [shape = 'u8[8192]{0}', space=vmem, size = 0x2000, scoped, tag = 'output window, operand 0, single buffered']
    %14 = vsyncpa [#allocation4], 0
    %15 = vsyncpa [#allocation7], 0
    %16 = vsyncpa [#allocation10], 0
    %17 = vsyncpa [#allocation5], 0
    loop: start=0, step=1, limit=4
    $region2: #{tpu_custom_call.1} parent=1 // loop_pre_header
      _
    $region3: #{tpu_custom_call.1} parent=1 // loop_header
      %s19 = sphi 0, %s23
      %p20 = scmp.ge.s32.totalorder %s19, 4
      %s26 = sphi 0, %s38
      %s27 = sphi 0, %s34
      %s28 = sphi 0, %s26
      %s29 = sphi 0, %s27
      %s30 = sphi 0, %s28
      %s31 = sphi 0, %s29
      %s41 = sphi 0, %s43
      %s44 = sphi 0, %s41
      %s45 = sphi 0, %s44
      %s61 = sphi 0, %s45
      %s67 = sphi 0, %s69
      %s70 = sphi 0, %s67
      %s71 = sphi 0, %s70
      %s87 = sphi 0, %s71
      %s93 = sphi 0, %s95
      %s96 = sphi 0, %s93
      %s97 = sphi 0, %s96
      %s113 = sphi 0, %s97
      %s119 = sphi 0, %s121
      %s122 = sphi 0, %s119
      %s123 = sphi 0, %s122
      %s139 = sphi 0, %s123
      %s145 = sphi 0, %s147
      %s148 = sphi 0, %s145
      %s149 = sphi 0, %s148
      %s165 = sphi 0, %s149
      %s171 = sphi 0, %s173
      %s174 = sphi 0, %s171
      %s175 = sphi 0, %s174
      %s191 = sphi 0, %s175
      %s197 = sphi 0, %s199
      %s200 = sphi 0, %s197
      %s201 = sphi 0, %s200
      %s217 = sphi 0, %s201
      %s223 = sphi 0, %s225
      %s226 = sphi 0, %s223
      %s227 = sphi 0, %s226
      %s243 = sphi 0, %s227
      %s247 = sphi 0, %s247
      %s249 = sphi 0, %s247
      %s250 = sphi 0, %s249
      %s264 = sphi 0, %s250
      %s270 = sphi 0, %s272
      %s273 = sphi 0, %s270
      %s274 = sphi 0, %s273
      %s290 = sphi 0, %s274
    $region4: #{tpu_custom_call.1} parent=1 // loop_header_branch
      %22 = sbr.rel (%p20) target = $region8
    $region5: #{tpu_custom_call.1} parent=1 // loop_body
      %s24 = ssub.s32 %s19, 1
      %s25 = ssub.s32 %s19, 2
      %s32 = sadd.s32 1, %s27
      %p33 = scmp.ge.s32.totalorder %s32, 2
      %s34 = scalar_select %p33, 0, %s32
      %s35 = sadd.s32 1, %s26
      %s36 = scalar_select %p33, %s35, %s26
      %p37 = scmp.ge.s32.totalorder %s36, 1
      %s38 = scalar_select %p37, 0, %s36
      %s39 = ssub.s32 %s26, %s38
      %p40 = scmp.eq.s32.totalorder %s39, 0
      %s42 = sadd.s32 %s41, 1
      %s43 = scalar_select %p40, %s41, %s42
      %p46 = pneg %p40
      %p47 = scmp.eq.s32.totalorder %s19, 1
      %p48 = por %p46, %p47
      %p49 = scmp.ne.s32.totalorder %s41, %s44
      %p50 = scmp.eq.s32.totalorder %s19, 0
      %p51 = por %p49, %p50
      %p52 = scmp.ne.s32.totalorder %s41, %s44
      %p53 = scmp.eq.s32.totalorder %s24, 1
      %p54 = por %p52, %p53
      %p55 = scmp.ne.s32.totalorder %s44, %s45
      %p56 = scmp.eq.s32.totalorder %s24, 0
      %p57 = por %p55, %p56
      %p58 = scmp.ne.s32.totalorder %s44, %s45
      %p59 = scmp.eq.s32.totalorder %s25, 1
      %p60 = por %p58, %p59
      %p62 = scmp.ne.s32.totalorder %s45, %s61
      %p63 = scmp.eq.s32.totalorder %s25, 0
      %p64 = por %p62, %p63
      %s65 = ssub.s32 %s26, %s38
      %p66 = scmp.eq.s32.totalorder %s65, 0
      %s68 = sadd.s32 %s67, 1
      %s69 = scalar_select %p66, %s67, %s68
      %p72 = pneg %p66
      %p73 = scmp.eq.s32.totalorder %s19, 1
      %p74 = por %p72, %p73
      %p75 = scmp.ne.s32.totalorder %s67, %s70
      %p76 = scmp.eq.s32.totalorder %s19, 0
      %p77 = por %p75, %p76
      %p78 = scmp.ne.s32.totalorder %s67, %s70
      %p79 = scmp.eq.s32.totalorder %s24, 1
      %p80 = por %p78, %p79
      %p81 = scmp.ne.s32.totalorder %s70, %s71
      %p82 = scmp.eq.s32.totalorder %s24, 0
      %p83 = por %p81, %p82
      %p84 = scmp.ne.s32.totalorder %s70, %s71
      %p85 = scmp.eq.s32.totalorder %s25, 1
      %p86 = por %p84, %p85
      %p88 = scmp.ne.s32.totalorder %s71, %s87
      %p89 = scmp.eq.s32.totalorder %s25, 0
      %p90 = por %p88, %p89
      %s91 = ssub.s32 %s26, %s38
      %p92 = scmp.eq.s32.totalorder %s91, 0
      %s94 = sadd.s32 %s93, 1
      %s95 = scalar_select %p92, %s93, %s94
      %p98 = pneg %p92
      %p99 = scmp.eq.s32.totalorder %s19, 1
      %p100 = por %p98, %p99
      %p101 = scmp.ne.s32.totalorder %s93, %s96
      %p102 = scmp.eq.s32.totalorder %s19, 0
      %p103 = por %p101, %p102
      %p104 = scmp.ne.s32.totalorder %s93, %s96
      %p105 = scmp.eq.s32.totalorder %s24, 1
      %p106 = por %p104, %p105
      %p107 = scmp.ne.s32.totalorder %s96, %s97
      %p108 = scmp.eq.s32.totalorder %s24, 0
      %p109 = por %p107, %p108
      %p110 = scmp.ne.s32.totalorder %s96, %s97
      %p111 = scmp.eq.s32.totalorder %s25, 1
      %p112 = por %p110, %p111
      %p114 = scmp.ne.s32.totalorder %s97, %s113
      %p115 = scmp.eq.s32.totalorder %s25, 0
      %p116 = por %p114, %p115
      %s117 = ssub.s32 %s26, %s38
      %p118 = scmp.eq.s32.totalorder %s117, 0
      %s120 = sadd.s32 %s119, 1
      %s121 = scalar_select %p118, %s119, %s120
      %p124 = pneg %p118
      %p125 = scmp.eq.s32.totalorder %s19, 1
      %p126 = por %p124, %p125
      %p127 = scmp.ne.s32.totalorder %s119, %s122
      %p128 = scmp.eq.s32.totalorder %s19, 0
      %p129 = por %p127, %p128
      %p130 = scmp.ne.s32.totalorder %s119, %s122
      %p131 = scmp.eq.s32.totalorder %s24, 1
      %p132 = por %p130, %p131
      %p133 = scmp.ne.s32.totalorder %s122, %s123
      %p134 = scmp.eq.s32.totalorder %s24, 0
      %p135 = por %p133, %p134
      %p136 = scmp.ne.s32.totalorder %s122, %s123
      %p137 = scmp.eq.s32.totalorder %s25, 1
      %p138 = por %p136, %p137
      %p140 = scmp.ne.s32.totalorder %s123, %s139
      %p141 = scmp.eq.s32.totalorder %s25, 0
      %p142 = por %p140, %p141
      %s143 = ssub.s32 %s27, %s34
      %p144 = scmp.eq.s32.totalorder %s143, 0
      %s146 = sadd.s32 %s145, 1
      %s147 = scalar_select %p144, %s145, %s146
      %p150 = pneg %p144
      %p151 = scmp.eq.s32.totalorder %s19, 1
      %p152 = por %p150, %p151
      %p153 = scmp.ne.s32.totalorder %s145, %s148
      %p154 = scmp.eq.s32.totalorder %s19, 0
      %p155 = por %p153, %p154
      %p156 = scmp.ne.s32.totalorder %s145, %s148
      %p157 = scmp.eq.s32.totalorder %s24, 1
      %p158 = por %p156, %p157
      %p159 = scmp.ne.s32.totalorder %s148, %s149
      %p160 = scmp.eq.s32.totalorder %s24, 0
      %p161 = por %p159, %p160
      %p162 = scmp.ne.s32.totalorder %s148, %s149
      %p163 = scmp.eq.s32.totalorder %s25, 1
      %p164 = por %p162, %p163
      %p166 = scmp.ne.s32.totalorder %s149, %s165
      %p167 = scmp.eq.s32.totalorder %s25, 0
      %p168 = por %p166, %p167
      %s169 = ssub.s32 %s27, %s34
      %p170 = scmp.eq.s32.totalorder %s169, 0
      %s172 = sadd.s32 %s171, 1
      %s173 = scalar_select %p170, %s171, %s172
      %p176 = pneg %p170
      %p177 = scmp.eq.s32.totalorder %s19, 1
      %p178 = por %p176, %p177
      %p179 = scmp.ne.s32.totalorder %s171, %s174
      %p180 = scmp.eq.s32.totalorder %s19, 0
      %p181 = por %p179, %p180
      %p182 = scmp.ne.s32.totalorder %s171, %s174
      %p183 = scmp.eq.s32.totalorder %s24, 1
      %p184 = por %p182, %p183
      %p185 = scmp.ne.s32.totalorder %s174, %s175
      %p186 = scmp.eq.s32.totalorder %s24, 0
      %p187 = por %p185, %p186
      %p188 = scmp.ne.s32.totalorder %s174, %s175
      %p189 = scmp.eq.s32.totalorder %s25, 1
      %p190 = por %p188, %p189
      %p192 = scmp.ne.s32.totalorder %s175, %s191
      %p193 = scmp.eq.s32.totalorder %s25, 0
      %p194 = por %p192, %p193
      %s195 = ssub.s32 %s27, %s34
      %p196 = scmp.eq.s32.totalorder %s195, 0
      %s198 = sadd.s32 %s197, 1
      %s199 = scalar_select %p196, %s197, %s198
      %p202 = pneg %p196
      %p203 = scmp.eq.s32.totalorder %s19, 1
      %p204 = por %p202, %p203
      %p205 = scmp.ne.s32.totalorder %s197, %s200
      %p206 = scmp.eq.s32.totalorder %s19, 0
      %p207 = por %p205, %p206
      %p208 = scmp.ne.s32.totalorder %s197, %s200
      %p209 = scmp.eq.s32.totalorder %s24, 1
      %p210 = por %p208, %p209
      %p211 = scmp.ne.s32.totalorder %s200, %s201
      %p212 = scmp.eq.s32.totalorder %s24, 0
      %p213 = por %p211, %p212
      %p214 = scmp.ne.s32.totalorder %s200, %s201
      %p215 = scmp.eq.s32.totalorder %s25, 1
      %p216 = por %p214, %p215
      %p218 = scmp.ne.s32.totalorder %s201, %s217
      %p219 = scmp.eq.s32.totalorder %s25, 0
      %p220 = por %p218, %p219
      %s221 = ssub.s32 %s27, %s34
      %p222 = scmp.eq.s32.totalorder %s221, 0
      %s224 = sadd.s32 %s223, 1
      %s225 = scalar_select %p222, %s223, %s224
      %p228 = pneg %p222
      %p229 = scmp.eq.s32.totalorder %s19, 1
      %p230 = por %p228, %p229
      %p231 = scmp.ne.s32.totalorder %s223, %s226
      %p232 = scmp.eq.s32.totalorder %s19, 0
      %p233 = por %p231, %p232
      %p234 = scmp.ne.s32.totalorder %s223, %s226
      %p235 = scmp.eq.s32.totalorder %s24, 1
      %p236 = por %p234, %p235
      %p237 = scmp.ne.s32.totalorder %s226, %s227
      %p238 = scmp.eq.s32.totalorder %s24, 0
      %p239 = por %p237, %p238
      %p240 = scmp.ne.s32.totalorder %s226, %s227
      %p241 = scmp.eq.s32.totalorder %s25, 1
      %p242 = por %p240, %p241
      %p244 = scmp.ne.s32.totalorder %s227, %s243
      %p245 = scmp.eq.s32.totalorder %s25, 0
      %p246 = por %p244, %p245
      %s248 = sadd.s32 %s247, 1
      %p251 = scmp.eq.s32.totalorder %s19, 1
      %p252 = scmp.ne.s32.totalorder %s247, %s249
      %p253 = scmp.eq.s32.totalorder %s19, 0
      %p254 = por %p252, %p253
      %p255 = scmp.ne.s32.totalorder %s247, %s249
      %p256 = scmp.eq.s32.totalorder %s24, 1
      %p257 = por %p255, %p256
      %p258 = scmp.ne.s32.totalorder %s249, %s250
      %p259 = scmp.eq.s32.totalorder %s24, 0
      %p260 = por %p258, %p259
      %p261 = scmp.ne.s32.totalorder %s249, %s250
      %p262 = scmp.eq.s32.totalorder %s25, 1
      %p263 = por %p261, %p262
      %p265 = scmp.ne.s32.totalorder %s250, %s264
      %p266 = scmp.eq.s32.totalorder %s25, 0
      %p267 = por %p265, %p266
      %s268 = ssub.s32 %s26, %s38
      %p269 = scmp.eq.s32.totalorder %s268, 0
      %s271 = sadd.s32 %s270, 1
      %s272 = scalar_select %p269, %s270, %s271
      %p275 = pneg %p269
      %p276 = scmp.eq.s32.totalorder %s19, 1
      %p277 = por %p275, %p276
      %p278 = scmp.ne.s32.totalorder %s270, %s273
      %p279 = scmp.eq.s32.totalorder %s19, 0
      %p280 = por %p278, %p279
      %p281 = scmp.ne.s32.totalorder %s270, %s273
      %p282 = scmp.eq.s32.totalorder %s24, 1
      %p283 = por %p281, %p282
      %p284 = scmp.ne.s32.totalorder %s273, %s274
      %p285 = scmp.eq.s32.totalorder %s24, 0
      %p286 = por %p284, %p285
      %p287 = scmp.ne.s32.totalorder %s273, %s274
      %p288 = scmp.eq.s32.totalorder %s25, 1
      %p289 = por %p287, %p288
      %p291 = scmp.ne.s32.totalorder %s274, %s290
      %p292 = scmp.eq.s32.totalorder %s25, 0
      %p293 = por %p291, %p292
      %p294 = scmp.le.s32.totalorder 1, %s19
      %p295 = scmp.lt.s32.totalorder %s19, 3
      %p296 = pnand %p294, %p295
      %p297 = pneg %p296
      // Predicated region
      $region9: #{tpu_custom_call.1} parent=5 // pred_check
        _
      $region10: #{tpu_custom_call.1} parent=5 // pred_check_branch
        %299 = sbr.rel (%p296) target = $region12
      $region11: #{tpu_custom_call.1} parent=5 // pred_region
        %s300 = ssub.s32 %s19, 1
        // Predicated region
        $region13: #{tpu_custom_call.1} parent=11 // pred_check
          %p301 = pneg %p57
        $region14: #{tpu_custom_call.1} parent=11 // pred_check_branch
          %303 = sbr.rel (%p301) target = $region16
        $region15: #{tpu_custom_call.1} parent=11 // pred_region
          %s304 = smul.u32 2, %s28
          %s306 = ssub.s32 256, 256
          %307 = vsyncadd [#allocation4], %s306
          %s308 = smul.addr %s304, 128
          %s309 = scalar_lea.hbm %s0, %s308
          %s310 = sshll.u32 [#allocation3], 4
          %s311 = int_to_ptr.vmem [resolvable:$true] %s310
          %316 = dma.hbm_to_vmem [thread:$0]  %s309, 256, %s311, [#allocation4], 128, 128, 8
        $region16: #{tpu_custom_call.1} parent=11 // pred_fallthru
          _
        // Predicated region
        $region17: #{tpu_custom_call.1} parent=11 // pred_check
          %p317 = pneg %p83
        $region18: #{tpu_custom_call.1} parent=11 // pred_check_branch
          %319 = sbr.rel (%p317) target = $region20
        $region19: #{tpu_custom_call.1} parent=11 // pred_region
          %s320 = smul.u32 2, %s28
          %s322 = ssub.s32 256, 256
          %323 = vsyncadd [#allocation7], %s322
          %s324 = smul.addr %s320, 128
          %s325 = scalar_lea.hbm %s1, %s324
          %s326 = sshll.u32 [#allocation6], 4
          %s327 = int_to_ptr.vmem [resolvable:$true] %s326
          %332 = dma.hbm_to_vmem [thread:$0]  %s325, 256, %s327, [#allocation7], 128, 128, 8
        $region20: #{tpu_custom_call.1} parent=11 // pred_fallthru
          _
        // Predicated region
        $region21: #{tpu_custom_call.1} parent=11 // pred_check
          %p333 = pneg %p109
        $region22: #{tpu_custom_call.1} parent=11 // pred_check_branch
          %335 = sbr.rel (%p333) target = $region24
        $region23: #{tpu_custom_call.1} parent=11 // pred_region
          %s336 = smul.u32 2, %s28
          %s338 = ssub.s32 512, 512
          %339 = vsyncadd [#allocation7], %s338
          %s340 = smul.addr %s336, 2
          %s341 = smul.addr %s340, 128
          %s342 = scalar_lea.hbm %s2, %s341
          %s343 = sshll.u32 [#allocation8], 4
          %s344 = int_to_ptr.vmem [resolvable:$true] %s343
          %349 = dma.hbm_to_vmem [thread:$0]  %s342, 512, %s344, [#allocation7], 128, 128, 8
        $region24: #{tpu_custom_call.1} parent=11 // pred_fallthru
          _
        // Predicated region
        $region25: #{tpu_custom_call.1} parent=11 // pred_check
          %p350 = pneg %p135
        $region26: #{tpu_custom_call.1} parent=11 // pred_check_branch
          %352 = sbr.rel (%p350) target = $region28
        $region27: #{tpu_custom_call.1} parent=11 // pred_region
          %s353 = smul.u32 2, %s28
          %s355 = ssub.s32 512, 512
          %356 = vsyncadd [#allocation10], %s355
          %s357 = smul.addr %s353, 2
          %s358 = smul.addr %s357, 128
          %s359 = scalar_lea.hbm %s3, %s358
          %s360 = sshll.u32 [#allocation9], 4
          %s361 = int_to_ptr.vmem [resolvable:$true] %s360
          %366 = dma.hbm_to_vmem [thread:$0]  %s359, 512, %s361, [#allocation10], 128, 128, 8
        $region28: #{tpu_custom_call.1} parent=11 // pred_fallthru
          _
        // Predicated region
        $region29: #{tpu_custom_call.1} parent=11 // pred_check
          %p367 = pneg %p260
        $region30: #{tpu_custom_call.1} parent=11 // pred_check_branch
          %369 = sbr.rel (%p367) target = $region32
        $region31: #{tpu_custom_call.1} parent=11 // pred_region
          _
        $region32: #{tpu_custom_call.1} parent=11 // pred_fallthru
          _
      $region12: #{tpu_custom_call.1} parent=5 // pred_fallthru
        _
      %p370 = scmp.lt.s32.totalorder %s19, 2
      // Predicated region
      $region33: #{tpu_custom_call.1} parent=5 // pred_check
        %p371 = pneg %p370
      $region34: #{tpu_custom_call.1} parent=5 // pred_check_branch
        %373 = sbr.rel (%p371) target = $region36
      $region35: #{tpu_custom_call.1} parent=5 // pred_region
        // Predicated region
        $region37: #{tpu_custom_call.1} parent=35 // pred_check
          %p374 = pneg %p155
        $region38: #{tpu_custom_call.1} parent=35 // pred_check_branch
          %376 = sbr.rel (%p374) target = $region40
        $region39: #{tpu_custom_call.1} parent=35 // pred_region
          %s377 = sand.u32 %s19, 1
          %s378 = scalar_lea.sflag [#allocation4], %s377
          %s379 = sand.u32 %s145, 1
          %s380 = smul.addr %s379, 640
          %s381 = scalar_lea.vmem [#allocation11], %s380
          %s383 = ssub.s32 10240, 10240
          %384 = vsyncadd %s378, %s383
          %s385 = smul.addr %s27, 160
          %s386 = smul.addr %s385, 64
          %s387 = scalar_lea.hbm %s4, %s386
          %s388 = sshll.u32 %s381, 4
          %s389 = int_to_ptr.vmem [resolvable:$true] %s388
          %394 = dma.hbm_to_vmem [thread:$0]  %s387, 10240, %s389, %s378, 640, 640, 40
        $region40: #{tpu_custom_call.1} parent=35 // pred_fallthru
          _
        // Predicated region
        $region41: #{tpu_custom_call.1} parent=35 // pred_check
          %p395 = pneg %p181
        $region42: #{tpu_custom_call.1} parent=35 // pred_check_branch
          %397 = sbr.rel (%p395) target = $region44
        $region43: #{tpu_custom_call.1} parent=35 // pred_region
          %s398 = sand.u32 %s19, 1
          %s399 = scalar_lea.sflag [#allocation4], %s398
          %s400 = sand.u32 %s171, 1
          %s401 = smul.addr %s400, 128
          %s402 = scalar_lea.vmem [#allocation12], %s401
          %s404 = ssub.s32 2048, 2048
          %405 = vsyncadd %s399, %s404
          %s406 = smul.addr %s27, 32
          %s407 = smul.addr %s406, 64
          %s408 = scalar_lea.hbm %s5, %s407
          %s409 = sshll.u32 %s402, 4
          %s410 = int_to_ptr.vmem [resolvable:$true] %s409
          %415 = dma.hbm_to_vmem [thread:$0]  %s408, 2048, %s410, %s399, 64, 64, 4
        $region44: #{tpu_custom_call.1} parent=35 // pred_fallthru
          _
        // Predicated region
        $region45: #{tpu_custom_call.1} parent=35 // pred_check
          %p416 = pneg %p207
        $region46: #{tpu_custom_call.1} parent=35 // pred_check_branch
          %418 = sbr.rel (%p416) target = $region48
        $region47: #{tpu_custom_call.1} parent=35 // pred_region
          %s419 = sand.u32 %s19, 1
          %s420 = scalar_lea.sflag [#allocation4], %s419
          %s421 = sand.u32 %s197, 1
          %s422 = smul.addr %s421, 16
          %s423 = scalar_lea.vmem [#allocation13], %s422
          %s425 = ssub.s32 256, 256
          %426 = vsyncadd %s420, %s425
          %s427 = smul.addr %s27, 2
          %s428 = smul.addr %s427, 128
          %s429 = scalar_lea.hbm %s6, %s428
          %s430 = sshll.u32 %s423, 4
          %s431 = int_to_ptr.vmem [resolvable:$true] %s430
          %436 = dma.hbm_to_vmem [thread:$0]  %s429, 256, %s431, %s420, 128, 128, 8
        $region48: #{tpu_custom_call.1} parent=35 // pred_fallthru
          _
        // Predicated region
        $region49: #{tpu_custom_call.1} parent=35 // pred_check
          %p437 = pneg %p233
        $region50: #{tpu_custom_call.1} parent=35 // pred_check_branch
          %439 = sbr.rel (%p437) target = $region52
        $region51: #{tpu_custom_call.1} parent=35 // pred_region
          %p440 = scmp.lt.s32.totalorder %s27, 1
          %s441 = scalar_select %p440, %s27, 1
          %s442 = smul.addr %s441, 2
          %s443 = scalar_lea.vmem %s7, %s442
        $region52: #{tpu_custom_call.1} parent=35 // pred_fallthru
          _
      $region36: #{tpu_custom_call.1} parent=5 // pred_fallthru
        _
      %p444 = scmp.le.s32.totalorder 1, %s19
      %p445 = scmp.lt.s32.totalorder %s19, 3
      %p446 = pnand %p444, %p445
      %p447 = pneg %p446
      // Predicated region
      $region53: #{tpu_custom_call.1} parent=5 // pred_check
        _
      $region54: #{tpu_custom_call.1} parent=5 // pred_check_branch
        %449 = sbr.rel (%p446) target = $region56
      $region55: #{tpu_custom_call.1} parent=5 // pred_region
        %s450 = ssub.s32 %s19, 1
        // Predicated region
        $region57: #{tpu_custom_call.1} parent=55 // pred_check
          %p451 = pneg %p57
        $region58: #{tpu_custom_call.1} parent=55 // pred_check_branch
          %453 = sbr.rel (%p451) target = $region60
        $region59: #{tpu_custom_call.1} parent=55 // pred_region
          %454 = dma.done [#allocation4], 256
        $region60: #{tpu_custom_call.1} parent=55 // pred_fallthru
          _
        // Predicated region
        $region61: #{tpu_custom_call.1} parent=55 // pred_check
          %p455 = pneg %p83
        $region62: #{tpu_custom_call.1} parent=55 // pred_check_branch
          %457 = sbr.rel (%p455) target = $region64
        $region63: #{tpu_custom_call.1} parent=55 // pred_region
          %458 = dma.done [#allocation7], 256
        $region64: #{tpu_custom_call.1} parent=55 // pred_fallthru
          _
        // Predicated region
        $region65: #{tpu_custom_call.1} parent=55 // pred_check
          %p459 = pneg %p109
        $region66: #{tpu_custom_call.1} parent=55 // pred_check_branch
          %461 = sbr.rel (%p459) target = $region68
        $region67: #{tpu_custom_call.1} parent=55 // pred_region
          %462 = dma.done [#allocation7], 512
        $region68: #{tpu_custom_call.1} parent=55 // pred_fallthru
          _
        // Predicated region
        $region69: #{tpu_custom_call.1} parent=55 // pred_check
          %p463 = pneg %p135
        $region70: #{tpu_custom_call.1} parent=55 // pred_check_branch
          %465 = sbr.rel (%p463) target = $region72
        $region71: #{tpu_custom_call.1} parent=55 // pred_region
          %466 = dma.done [#allocation10], 512
        $region72: #{tpu_custom_call.1} parent=55 // pred_fallthru
          _
        %s467 = sand.u32 %s24, 1
        %s468 = scalar_lea.sflag [#allocation4], %s467
        %s469 = sand.u32 %s148, 1
        %s470 = smul.addr %s469, 640
        %s471 = scalar_lea.vmem [#allocation11], %s470
        // Predicated region
        $region73: #{tpu_custom_call.1} parent=55 // pred_check
          %p472 = pneg %p161
        $region74: #{tpu_custom_call.1} parent=55 // pred_check_branch
          %474 = sbr.rel (%p472) target = $region76
        $region75: #{tpu_custom_call.1} parent=55 // pred_region
          %475 = dma.done %s468, 10240
        $region76: #{tpu_custom_call.1} parent=55 // pred_fallthru
          _
        %s476 = sand.u32 %s24, 1
        %s477 = scalar_lea.sflag [#allocation4], %s476
        %s478 = sand.u32 %s174, 1
        %s479 = smul.addr %s478, 128
        %s480 = scalar_lea.vmem [#allocation12], %s479
        // Predicated region
        $region77: #{tpu_custom_call.1} parent=55 // pred_check
          %p481 = pneg %p187
        $region78: #{tpu_custom_call.1} parent=55 // pred_check_branch
          %483 = sbr.rel (%p481) target = $region80
        $region79: #{tpu_custom_call.1} parent=55 // pred_region
          %484 = dma.done %s477, 2048
        $region80: #{tpu_custom_call.1} parent=55 // pred_fallthru
          _
        %s485 = sand.u32 %s24, 1
        %s486 = scalar_lea.sflag [#allocation4], %s485
        %s487 = sand.u32 %s200, 1
        %s488 = smul.addr %s487, 16
        %s489 = scalar_lea.vmem [#allocation13], %s488
        // Predicated region
        $region81: #{tpu_custom_call.1} parent=55 // pred_check
          %p490 = pneg %p213
        $region82: #{tpu_custom_call.1} parent=55 // pred_check_branch
          %492 = sbr.rel (%p490) target = $region84
        $region83: #{tpu_custom_call.1} parent=55 // pred_region
          %493 = dma.done %s486, 256
        $region84: #{tpu_custom_call.1} parent=55 // pred_fallthru
          _
        %p494 = pneg %p57
        %p495 = pneg %p54
        %p496 = pneg %p83
        %p497 = pneg %p80
        %p498 = pneg %p109
        %p499 = pneg %p106
        %p500 = pneg %p135
        %p501 = pneg %p132
        %s502 = sand.u32 %s24, 1
        %s503 = scalar_lea.sflag [#allocation4], %s502
        %s504 = sand.u32 %s148, 1
        %s505 = smul.addr %s504, 640
        %s506 = scalar_lea.vmem [#allocation11], %s505
        %p507 = pneg %p161
        %p508 = pneg %p158
        %s509 = sand.u32 %s24, 1
        %s510 = scalar_lea.sflag [#allocation4], %s509
        %s511 = sand.u32 %s174, 1
        %s512 = smul.addr %s511, 128
        %s513 = scalar_lea.vmem [#allocation12], %s512
        %p514 = pneg %p187
        %p515 = pneg %p184
        %s516 = sand.u32 %s24, 1
        %s517 = scalar_lea.sflag [#allocation4], %s516
        %s518 = sand.u32 %s200, 1
        %s519 = smul.addr %s518, 16
        %s520 = scalar_lea.vmem [#allocation13], %s519
        %p521 = pneg %p213
        %p522 = pneg %p210
        %p523 = scmp.lt.s32.totalorder %s29, 1
        %s524 = scalar_select %p523, %s29, 1
        %s525 = smul.addr %s524, 2
        %s526 = scalar_lea.vmem %s7, %s525
        %p527 = pneg %p239
        %p528 = pneg %p236
        %p529 = pneg %p260
        %p530 = pneg %p257
        %p531 = pneg %p286
        %p532 = pneg %p283
        %s533 = smul.u32 2, %s28
        %s534 = smul.u32 2, %s28
        %s535 = smul.u32 2, %s28
        %s536 = smul.u32 2, %s28
        %p537 = scmp.lt.s32.totalorder %s29, 1
        %s538 = scalar_select %p537, %s29, 1
        %s539 = smul.addr %s538, 2
        %s540 = scalar_lea.vmem %s7, %s539
        %s541 = smul.u32 2, %s28
        %p543 = scmp.eq.s32.totalorder %s29, 0
        // Predicated region
        $region85: #{tpu_custom_call.1} parent=55 // pred_check
          %p544 = pneg %p543
        $region86: #{tpu_custom_call.1} parent=55 // pred_check_branch
          %546 = sbr.rel (%p544) target = $region88
        $region87: #{tpu_custom_call.1} parent=55 // pred_region
          %v547 = vld [vmem:[#allocation3] sm:$0xff]
          %v548 = vld [vmem:[#allocation3 + $0x8] sm:$0xff]
          %549 = vst [vmem:[#allocation2] sm:$0xff] %v547
          %550 = vst [vmem:[#allocation2 + $0x8] sm:$0xff] %v548
        $region88: #{tpu_custom_call.1} parent=55 // pred_fallthru
          _
        %v551 = vld [vmem:[#allocation2] sm:$0xff]
        %v552 = vld [vmem:[#allocation2 + $0x8] sm:$0xff]
        %v553 = vld [vmem:[#allocation6] sm:$0xff]
        %v554 = vld [vmem:[#allocation6 + $0x8] sm:$0xff]
        %v555 = vld [vmem:[#allocation8] sm:$0xff]
        %v556 = vld [vmem:[#allocation8 + $0x8] sm:$0xff]
        %v557 = vld [vmem:[#allocation8 + $0x10] sm:$0xff]
        %v558 = vld [vmem:[#allocation8 + $0x18] sm:$0xff]
        %v559 = vld [vmem:[#allocation9] sm:$0xff]
        %v560 = vld [vmem:[#allocation9 + $0x8] sm:$0xff]
        %v561 = vld [vmem:[#allocation9 + $0x10] sm:$0xff]
        %v562 = vld [vmem:[#allocation9 + $0x18] sm:$0xff]
        %v563 = vld [vmem:[%s489] sm:$0xff]
        %v564 = vld [vmem:[%s489 + $0x8] sm:$0xff]
        %v565 = vadd.f32 %v551, %v553
        %v566 = vadd.f32 %v552, %v554
        %v567 = vld [vmem:[%s471] sm:$0xff]
        %v568 = vld [vmem:[%s471 + $0x28] sm:$0xff]
        %v569 = vld [vmem:[%s471 + $0x50] sm:$0xff]
        %v570 = vld [vmem:[%s471 + $0x78] sm:$0xff]
        %v571 = vld [vmem:[%s471 + $0xa0] sm:$0xff]
        %v572 = vld [vmem:[%s471 + $0xc8] sm:$0xff]
        %v573 = vld [vmem:[%s471 + $0xf0] sm:$0xff]
        %v574 = vld [vmem:[%s471 + $0x118] sm:$0xff]
        %v575 = vld [vmem:[%s471 + $0x140] sm:$0xff]
        %v576 = vld [vmem:[%s471 + $0x168] sm:$0xff]
        %v577 = vld [vmem:[%s471 + $0x190] sm:$0xff]
        %v578 = vld [vmem:[%s471 + $0x1b8] sm:$0xff]
        %v579 = vld [vmem:[%s471 + $0x1e0] sm:$0xff]
        %v580 = vld [vmem:[%s471 + $0x208] sm:$0xff]
        %v581 = vld [vmem:[%s471 + $0x230] sm:$0xff]
        %v582 = vld [vmem:[%s471 + $0x258] sm:$0xff]
        %v583 = vpack.c.bf16 %v566, %v565
        %v600 = vunpack.c.l.b16 %v567
        %v601 = vunpack.c.h.b16 %v567
        %v602 = vunpack.c.l.b16 %v568
        %v603 = vunpack.c.h.b16 %v568
        %v604 = vunpack.c.l.b16 %v569
        %v605 = vunpack.c.h.b16 %v569
        %v606 = vunpack.c.l.b16 %v570
        %v607 = vunpack.c.h.b16 %v570
        %v608 = vunpack.c.l.b16 %v571
        %v609 = vunpack.c.h.b16 %v571
        %v610 = vunpack.c.l.b16 %v572
        %v611 = vunpack.c.h.b16 %v572
        %v612 = vunpack.c.l.b16 %v573
        %v613 = vunpack.c.h.b16 %v573
        %v614 = vunpack.c.l.b16 %v574
        %v615 = vunpack.c.h.b16 %v574
        %v616 = vunpack.c.l.b16 %v575
        %v617 = vunpack.c.h.b16 %v575
        %v618 = vunpack.c.l.b16 %v576
        %v619 = vunpack.c.h.b16 %v576
        %v620 = vunpack.c.l.b16 %v577
        %v621 = vunpack.c.h.b16 %v577
        %v622 = vunpack.c.l.b16 %v578
        %v623 = vunpack.c.h.b16 %v578
        %v624 = vunpack.c.l.b16 %v579
        %v625 = vunpack.c.h.b16 %v579
        %v626 = vunpack.c.l.b16 %v580
        %v627 = vunpack.c.h.b16 %v580
        %v628 = vunpack.c.l.b16 %v581
        %v629 = vunpack.c.h.b16 %v581
        %v630 = vunpack.c.l.b16 %v582
        %v631 = vunpack.c.h.b16 %v582
        %v632 = vpack.c.b16 %v602, %v600
        %v633 = vpack.c.b16 %v603, %v601
        %v634 = vpack.c.b16 %v606, %v604
        %v635 = vpack.c.b16 %v607, %v605
        %v636 = vpack.c.b16 %v610, %v608
        %v637 = vpack.c.b16 %v611, %v609
        %v638 = vpack.c.b16 %v614, %v612
        %v639 = vpack.c.b16 %v615, %v613
        %v640 = vpack.c.b16 %v618, %v616
        %v641 = vpack.c.b16 %v619, %v617
        %v642 = vpack.c.b16 %v622, %v620
        %v643 = vpack.c.b16 %v623, %v621
        %v644 = vpack.c.b16 %v626, %v624
        %v645 = vpack.c.b16 %v627, %v625
        %v646 = vpack.c.b16 %v630, %v628
        %v647 = vpack.c.b16 %v631, %v629
        %664 = vmatprep.subr.bf16.mxu0 %v647
        %665 = vmatpush1.bf16.msra.mxu0 %v646
        %666 = vmatprep.subr.bf16.mxu0 %v645
        %667 = vmatpush1.bf16.msra.mxu0 %v644
        %668 = vmatprep.subr.bf16.mxu0 %v643
        %669 = vmatpush1.bf16.msra.mxu0 %v642
        %670 = vmatprep.subr.bf16.mxu0 %v641
        %671 = vmatpush1.bf16.msra.mxu0 %v640
        %672 = vmatprep.subr.bf16.mxu0 %v639
        %673 = vmatpush1.bf16.msra.mxu0 %v638
        %674 = vmatprep.subr.bf16.mxu0 %v637
        %675 = vmatpush1.bf16.msra.mxu0 %v636
        %676 = vmatprep.subr.bf16.mxu0 %v635
        %677 = vmatpush1.bf16.msra.mxu0 %v634
        %678 = vmatprep.subr.bf16.mxu0 %v633
        %679 = vmatpush1.bf16.msra.mxu0 %v632
        %680 = vmatprep.subr.bf16.mxu0 0
        %681 = vmatpush2.bf16.msra.mxu0 0
        %682 = vmatprep.subr.bf16.mxu0 0
        %683 = vmatpush2.bf16.msra.mxu0 0
        %684 = vmatprep.subr.bf16.mxu0 0
        %685 = vmatpush2.bf16.msra.mxu0 0
        %686 = vmatprep.subr.bf16.mxu0 0
        %687 = vmatpush2.bf16.msra.mxu0 0
        %688 = vmatprep.subr.bf16.mxu0 0
        %689 = vmatpush2.bf16.msra.mxu0 0
        %690 = vmatprep.subr.bf16.mxu0 0
        %691 = vmatpush2.bf16.msra.mxu0 0
        %692 = vmatprep.subr.bf16.mxu0 0
        %693 = vmatpush2.bf16.msra.mxu0 0
        %694 = vmatprep.subr.bf16.mxu0 0
        %695 = vmatpush2.bf16.msra.mxu0 0
        %696 = vmatprep.mubr.bf16.mxu0 0
        %697 = vmatmul.mubr.bf16.gmra.mxu0 %v583
        %v698 = vpop.f32.mrf.mxu0
        %v699 = vadd.f32 0.0, %v698
        %v700 = vpop.f32.mrf.mxu0
        %v701 = vadd.f32 0.0, %v700
        %v702 = vpop.f32.mrf.mxu0
        %v703 = vadd.f32 0.0, %v702
        %v704 = vpop.f32.mrf.mxu0
        %v705 = vadd.f32 0.0, %v704
        %706 = vdwg.mxu0
        %v707 = vlaneseq
        %v708 = vshrl.u32 %v707, 7
        %v709 = vsub.s32 0, %v708
        %v710 = vrot.slane %v563, %v709
        %v711 = vadd.f32 %v699, %v710
        %v712 = vadd.f32 %v703, %v710
        %v713 = vlaneseq
        %v714 = vshrl.u32 %v713, 7
        %v715 = vsub.s32 1, %v714
        %v716 = vrot.slane %v563, %v715
        %v717 = vadd.f32 %v701, %v716
        %v718 = vadd.f32 %v705, %v716
        %v719 = vld [vmem:[%s471 + $0x8] sm:$0xf]
        %v720 = vld [vmem:[%s471 + $0x30] sm:$0xf]
        %v721 = vld [vmem:[%s471 + $0x58] sm:$0xf]
        %v722 = vld [vmem:[%s471 + $0x80] sm:$0xf]
        %v723 = vld [vmem:[%s471 + $0xa8] sm:$0xf]
        %v724 = vld [vmem:[%s471 + $0xd0] sm:$0xf]
        %v725 = vld [vmem:[%s471 + $0xf8] sm:$0xf]
        %v726 = vld [vmem:[%s471 + $0x120] sm:$0xf]
        %v727 = vld [vmem:[%s471 + $0x148] sm:$0xf]
        %v728 = vld [vmem:[%s471 + $0x170] sm:$0xf]
        %v729 = vld [vmem:[%s471 + $0x198] sm:$0xf]
        %v730 = vld [vmem:[%s471 + $0x1c0] sm:$0xf]
        %v731 = vld [vmem:[%s471 + $0x1e8] sm:$0xf]
        %v732 = vld [vmem:[%s471 + $0x210] sm:$0xf]
        %v733 = vld [vmem:[%s471 + $0x238] sm:$0xf]
        %v734 = vld [vmem:[%s471 + $0x260] sm:$0xf]
        %v735 = vpack.c.bf16 %v552, %v551
        %v736 = vlaneseq
        %v737 = vshrl.u32 %v736, 7
        %v738 = vsub.s32 2, %v737
        %v739 = vrot.slane %v563, %v738
        %v756 = vunpack.c.l.b16 %v719
        %v757 = vunpack.c.l.b16 %v720
        %v758 = vunpack.c.l.b16 %v721
        %v759 = vunpack.c.l.b16 %v722
        %v760 = vunpack.c.l.b16 %v723
        %v761 = vunpack.c.l.b16 %v724
        %v762 = vunpack.c.l.b16 %v725
        %v763 = vunpack.c.l.b16 %v726
        %v764 = vunpack.c.l.b16 %v727
        %v765 = vunpack.c.l.b16 %v728
        %v766 = vunpack.c.l.b16 %v729
        %v767 = vunpack.c.l.b16 %v730
        %v768 = vunpack.c.l.b16 %v731
        %v769 = vunpack.c.l.b16 %v732
        %v770 = vunpack.c.l.b16 %v733
        %v771 = vunpack.c.l.b16 %v734
        %v772 = vpack.c.b16 %v757, %v756
        %v773 = vpack.c.b16 %v759, %v758
        %v774 = vpack.c.b16 %v761, %v760
        %v775 = vpack.c.b16 %v763, %v762
        %v776 = vpack.c.b16 %v765, %v764
        %v777 = vpack.c.b16 %v767, %v766
        %v778 = vpack.c.b16 %v769, %v768
        %v779 = vpack.c.b16 %v771, %v770
        %788 = vmatprep.subr.bf16.mxu0 0
        %789 = vmatpush1.bf16.msra.mxu0 %v779
        %790 = vmatprep.subr.bf16.mxu0 0
        %791 = vmatpush1.bf16.msra.mxu0 %v778
        %792 = vmatprep.subr.bf16.mxu0 0
        %793 = vmatpush1.bf16.msra.mxu0 %v777
        %794 = vmatprep.subr.bf16.mxu0 0
        %795 = vmatpush1.bf16.msra.mxu0 %v776
        %796 = vmatprep.subr.bf16.mxu0 0
        %797 = vmatpush1.bf16.msra.mxu0 %v775
        %798 = vmatprep.subr.bf16.mxu0 0
        %799 = vmatpush1.bf16.msra.mxu0 %v774
        %800 = vmatprep.subr.bf16.mxu0 0
        %801 = vmatpush1.bf16.msra.mxu0 %v773
        %802 = vmatprep.subr.bf16.mxu0 0
        %803 = vmatpush1.bf16.msra.mxu0 %v772
        %804 = vmatprep.subr.bf16.mxu0 0
        %805 = vmatpush2.bf16.msra.mxu0 0
        %806 = vmatprep.subr.bf16.mxu0 0
        %807 = vmatpush2.bf16.msra.mxu0 0
        %808 = vmatprep.subr.bf16.mxu0 0
        %809 = vmatpush2.bf16.msra.mxu0 0
        %810 = vmatprep.subr.bf16.mxu0 0
        %811 = vmatpush2.bf16.msra.mxu0 0
        %812 = vmatprep.subr.bf16.mxu0 0
        %813 = vmatpush2.bf16.msra.mxu0 0
        %814 = vmatprep.subr.bf16.mxu0 0
        %815 = vmatpush2.bf16.msra.mxu0 0
        %816 = vmatprep.subr.bf16.mxu0 0
        %817 = vmatpush2.bf16.msra.mxu0 0
        %818 = vmatprep.subr.bf16.mxu0 0
        %819 = vmatpush2.bf16.msra.mxu0 0
        %820 = vmatprep.mubr.bf16.mxu0 0
        %821 = vmatmul.mubr.bf16.gmra.mxu0 %v735
        %v822 = vpop.f32.mrf.mxu0
        %v823 = vadd.f32 %v739, %v822
        %v824 = vpop.f32.mrf.mxu0
        %v825 = vpop.f32.mrf.mxu0
        %v826 = vadd.f32 %v739, %v825
        %v827 = vpop.f32.mrf.mxu0
        %828 = vdwg.mxu0
        %831 = vrot.lane.b32.xlu0 %v711, 112
        %v832 = vpop.permute.xlu0 %831
        %833 = vrot.lane.b32.xlu0 %v712, 112
        %v834 = vpop.permute.xlu0 %833
        %837 = vrot.lane.b32.xlu0 %v711, 96
        %v838 = vpop.permute.xlu0 %837
        %839 = vrot.lane.b32.xlu0 %v712, 96
        %v840 = vpop.permute.xlu0 %839
        %843 = vrot.lane.b32.xlu0 %v711, 80
        %v844 = vpop.permute.xlu0 %843
        %845 = vrot.lane.b32.xlu0 %v712, 80
        %v846 = vpop.permute.xlu0 %845
        %849 = vrot.lane.b32.xlu0 %v711, 64
        %v850 = vpop.permute.xlu0 %849
        %851 = vrot.lane.b32.xlu0 %v712, 64
        %v852 = vpop.permute.xlu0 %851
        %855 = vrot.lane.b32.xlu0 %v711, 48
        %v856 = vpop.permute.xlu0 %855
        %857 = vrot.lane.b32.xlu0 %v712, 48
        %v858 = vpop.permute.xlu0 %857
        %861 = vrot.lane.b32.xlu0 %v711, 32
        %v862 = vpop.permute.xlu0 %861
        %863 = vrot.lane.b32.xlu0 %v712, 32
        %v864 = vpop.permute.xlu0 %863
        %867 = vrot.lane.b32.xlu0 %v711, 16
        %v868 = vpop.permute.xlu0 %867
        %869 = vrot.lane.b32.xlu0 %v712, 16
        %v870 = vpop.permute.xlu0 %869
        %v873 = vcombine.low %v711, %v838
        %v874 = vcombine.high %v711, %v838
        %v876 = vunpack.c.l.s4 1983009808
        %v877 = vunpack.c.0.s8 %v876
        %v878 = vlaneseq
        %v879 = vshrl.u32 %v878, 7
        %v880 = vsub.s32 %v877, %v879
        %v881 = vrot.slane %v873, %v880
        %v883 = vunpack.c.l.s4 1983009808
        %v884 = vunpack.c.0.s8 %v883
        %v885 = vlaneseq
        %v886 = vshrl.u32 %v885, 7
        %v887 = vsub.s32 %v884, %v886
        %v888 = vrot.slane %v874, %v887
        %v889 = vcombine.low %v832, %v844
        %v890 = vcombine.high %v832, %v844
        %v892 = vunpack.c.l.s4 1983009808
        %v893 = vunpack.c.0.s8 %v892
        %v894 = vlaneseq
        %v895 = vshrl.u32 %v894, 7
        %v896 = vsub.s32 %v893, %v895
        %v897 = vrot.slane %v889, %v896
        %v899 = vunpack.c.l.s4 1983009808
        %v900 = vunpack.c.0.s8 %v899
        %v901 = vlaneseq
        %v902 = vshrl.u32 %v901, 7
        %v903 = vsub.s32 %v900, %v902
        %v904 = vrot.slane %v890, %v903
        %v905 = vcombine.low %v850, %v862
        %v906 = vcombine.high %v850, %v862
        %v908 = vunpack.c.l.s4 1983009808
        %v909 = vunpack.c.0.s8 %v908
        %v910 = vlaneseq
        %v911 = vshrl.u32 %v910, 7
        %v912 = vsub.s32 %v909, %v911
        %v913 = vrot.slane %v905, %v912
        %v915 = vunpack.c.l.s4 1983009808
        %v916 = vunpack.c.0.s8 %v915
        %v917 = vlaneseq
        %v918 = vshrl.u32 %v917, 7
        %v919 = vsub.s32 %v916, %v918
        %v920 = vrot.slane %v906, %v919
        %v921 = vcombine.low %v856, %v868
        %v922 = vcombine.high %v856, %v868
        %v924 = vunpack.c.l.s4 1983009808
        %v925 = vunpack.c.0.s8 %v924
        %v926 = vlaneseq
        %v927 = vshrl.u32 %v926, 7
        %v928 = vsub.s32 %v925, %v927
        %v929 = vrot.slane %v921, %v928
        %v931 = vunpack.c.l.s4 1983009808
        %v932 = vunpack.c.0.s8 %v931
        %v933 = vlaneseq
        %v934 = vshrl.u32 %v933, 7
        %v935 = vsub.s32 %v932, %v934
        %v936 = vrot.slane %v922, %v935
        %v937 = vcombine.low %v881, %v897
        %v938 = vcombine.high %v881, %v897
        %v940 = vunpack.c.l.s4 1934713408
        %v941 = vunpack.c.0.s8 %v940
        %v942 = vlaneseq
        %v943 = vshrl.u32 %v942, 7
        %v944 = vsub.s32 %v941, %v943
        %v945 = vrot.slane %v937, %v944
        %v947 = vunpack.c.l.s4 1934713408
        %v948 = vunpack.c.0.s8 %v947
        %v949 = vlaneseq
        %v950 = vshrl.u32 %v949, 7
        %v951 = vsub.s32 %v948, %v950
        %v952 = vrot.slane %v938, %v951
        %v953 = vcombine.low %v888, %v904
        %v954 = vcombine.high %v888, %v904
        %v956 = vunpack.c.l.s4 1934713408
        %v957 = vunpack.c.0.s8 %v956
        %v958 = vlaneseq
        %v959 = vshrl.u32 %v958, 7
        %v960 = vsub.s32 %v957, %v959
        %v961 = vrot.slane %v953, %v960
        %v963 = vunpack.c.l.s4 1934713408
        %v964 = vunpack.c.0.s8 %v963
        %v965 = vlaneseq
        %v966 = vshrl.u32 %v965, 7
        %v967 = vsub.s32 %v964, %v966
        %v968 = vrot.slane %v954, %v967
        %v969 = vcombine.low %v913, %v929
        %v970 = vcombine.high %v913, %v929
        %v972 = vunpack.c.l.s4 1934713408
        %v973 = vunpack.c.0.s8 %v972
        %v974 = vlaneseq
        %v975 = vshrl.u32 %v974, 7
        %v976 = vsub.s32 %v973, %v975
        %v977 = vrot.slane %v969, %v976
        %v979 = vunpack.c.l.s4 1934713408
        %v980 = vunpack.c.0.s8 %v979
        %v981 = vlaneseq
        %v982 = vshrl.u32 %v981, 7
        %v983 = vsub.s32 %v980, %v982
        %v984 = vrot.slane %v970, %v983
        %v985 = vcombine.low %v920, %v936
        %v986 = vcombine.high %v920, %v936
        %v988 = vunpack.c.l.s4 1934713408
        %v989 = vunpack.c.0.s8 %v988
        %v990 = vlaneseq
        %v991 = vshrl.u32 %v990, 7
        %v992 = vsub.s32 %v989, %v991
        %v993 = vrot.slane %v985, %v992
        %v995 = vunpack.c.l.s4 1934713408
        %v996 = vunpack.c.0.s8 %v995
        %v997 = vlaneseq
        %v998 = vshrl.u32 %v997, 7
        %v999 = vsub.s32 %v996, %v998
        %v1000 = vrot.slane %v986, %v999
        %v1001 = vcombine.low %v945, %v977
        %v1002 = vcombine.high %v945, %v977
        %v1003 = vcombine.low %v952, %v984
        %v1004 = vcombine.high %v952, %v984
        %v1005 = vcombine.low %v961, %v993
        %v1006 = vcombine.high %v961, %v993
        %v1007 = vcombine.low %v968, %v1000
        %v1008 = vcombine.high %v968, %v1000
        %v1009 = vcombine.low %v712, %v840
        %v1010 = vcombine.high %v712, %v840
        %v1012 = vunpack.c.l.s4 1983009808
        %v1013 = vunpack.c.0.s8 %v1012
        %v1014 = vlaneseq
        %v1015 = vshrl.u32 %v1014, 7
        %v1016 = vsub.s32 %v1013, %v1015
        %v1017 = vrot.slane %v1009, %v1016
        %v1019 = vunpack.c.l.s4 1983009808
        %v1020 = vunpack.c.0.s8 %v1019
        %v1021 = vlaneseq
        %v1022 = vshrl.u32 %v1021, 7
        %v1023 = vsub.s32 %v1020, %v1022
        %v1024 = vrot.slane %v1010, %v1023
        %v1025 = vcombine.low %v834, %v846
        %v1026 = vcombine.high %v834, %v846
        %v1028 = vunpack.c.l.s4 1983009808
        %v1029 = vunpack.c.0.s8 %v1028
        %v1030 = vlaneseq
        %v1031 = vshrl.u32 %v1030, 7
        %v1032 = vsub.s32 %v1029, %v1031
        %v1033 = vrot.slane %v1025, %v1032
        %v1035 = vunpack.c.l.s4 1983009808
        %v1036 = vunpack.c.0.s8 %v1035
        %v1037 = vlaneseq
        %v1038 = vshrl.u32 %v1037, 7
        %v1039 = vsub.s32 %v1036, %v1038
        %v1040 = vrot.slane %v1026, %v1039
        %v1041 = vcombine.low %v852, %v864
        %v1042 = vcombine.high %v852, %v864
        %v1044 = vunpack.c.l.s4 1983009808
        %v1045 = vunpack.c.0.s8 %v1044
        %v1046 = vlaneseq
        %v1047 = vshrl.u32 %v1046, 7
        %v1048 = vsub.s32 %v1045, %v1047
        %v1049 = vrot.slane %v1041, %v1048
        %v1051 = vunpack.c.l.s4 1983009808
        %v1052 = vunpack.c.0.s8 %v1051
        %v1053 = vlaneseq
        %v1054 = vshrl.u32 %v1053, 7
        %v1055 = vsub.s32 %v1052, %v1054
        %v1056 = vrot.slane %v1042, %v1055
        %v1057 = vcombine.low %v858, %v870
        %v1058 = vcombine.high %v858, %v870
        %v1060 = vunpack.c.l.s4 1983009808
        %v1061 = vunpack.c.0.s8 %v1060
        %v1062 = vlaneseq
        %v1063 = vshrl.u32 %v1062, 7
        %v1064 = vsub.s32 %v1061, %v1063
        %v1065 = vrot.slane %v1057, %v1064
        %v1067 = vunpack.c.l.s4 1983009808
        %v1068 = vunpack.c.0.s8 %v1067
        %v1069 = vlaneseq
        %v1070 = vshrl.u32 %v1069, 7
        %v1071 = vsub.s32 %v1068, %v1070
        %v1072 = vrot.slane %v1058, %v1071
        %v1073 = vcombine.low %v1017, %v1033
        %v1074 = vcombine.high %v1017, %v1033
        %v1076 = vunpack.c.l.s4 1934713408
        %v1077 = vunpack.c.0.s8 %v1076
        %v1078 = vlaneseq
        %v1079 = vshrl.u32 %v1078, 7
        %v1080 = vsub.s32 %v1077, %v1079
        %v1081 = vrot.slane %v1073, %v1080
        %v1083 = vunpack.c.l.s4 1934713408
        %v1084 = vunpack.c.0.s8 %v1083
        %v1085 = vlaneseq
        %v1086 = vshrl.u32 %v1085, 7
        %v1087 = vsub.s32 %v1084, %v1086
        %v1088 = vrot.slane %v1074, %v1087
        %v1089 = vcombine.low %v1024, %v1040
        %v1090 = vcombine.high %v1024, %v1040
        %v1092 = vunpack.c.l.s4 1934713408
        %v1093 = vunpack.c.0.s8 %v1092
        %v1094 = vlaneseq
        %v1095 = vshrl.u32 %v1094, 7
        %v1096 = vsub.s32 %v1093, %v1095
        %v1097 = vrot.slane %v1089, %v1096
        %v1099 = vunpack.c.l.s4 1934713408
        %v1100 = vunpack.c.0.s8 %v1099
        %v1101 = vlaneseq
        %v1102 = vshrl.u32 %v1101, 7
        %v1103 = vsub.s32 %v1100, %v1102
        %v1104 = vrot.slane %v1090, %v1103
        %v1105 = vcombine.low %v1049, %v1065
        %v1106 = vcombine.high %v1049, %v1065
        %v1108 = vunpack.c.l.s4 1934713408
        %v1109 = vunpack.c.0.s8 %v1108
        %v1110 = vlaneseq
        %v1111 = vshrl.u32 %v1110, 7
        %v1112 = vsub.s32 %v1109, %v1111
        %v1113 = vrot.slane %v1105, %v1112
        %v1115 = vunpack.c.l.s4 1934713408
        %v1116 = vunpack.c.0.s8 %v1115
        %v1117 = vlaneseq
        %v1118 = vshrl.u32 %v1117, 7
        %v1119 = vsub.s32 %v1116, %v1118
        %v1120 = vrot.slane %v1106, %v1119
        %v1121 = vcombine.low %v1056, %v1072
        %v1122 = vcombine.high %v1056, %v1072
        %v1124 = vunpack.c.l.s4 1934713408
        %v1125 = vunpack.c.0.s8 %v1124
        %v1126 = vlaneseq
        %v1127 = vshrl.u32 %v1126, 7
        %v1128 = vsub.s32 %v1125, %v1127
        %v1129 = vrot.slane %v1121, %v1128
        %v1131 = vunpack.c.l.s4 1934713408
        %v1132 = vunpack.c.0.s8 %v1131
        %v1133 = vlaneseq
        %v1134 = vshrl.u32 %v1133, 7
        %v1135 = vsub.s32 %v1132, %v1134
        %v1136 = vrot.slane %v1122, %v1135
        %v1137 = vcombine.low %v1081, %v1113
        %v1138 = vcombine.high %v1081, %v1113
        %v1139 = vcombine.low %v1088, %v1120
        %v1140 = vcombine.high %v1088, %v1120
        %v1141 = vcombine.low %v1097, %v1129
        %v1142 = vcombine.high %v1097, %v1129
        %v1143 = vcombine.low %v1104, %v1136
        %v1144 = vcombine.high %v1104, %v1136
        %v1145 = vcombine.low %v1001, %v1003
        %v1146 = vcombine.high %v1001, %v1003
        %v1148 = vunpack.c.l.s4 1983009808
        %v1149 = vunpack.c.0.s8 %v1148
        %v1150 = vlaneseq
        %v1151 = vshrl.u32 %v1150, 7
        %v1152 = vsub.s32 %v1149, %v1151
        %v1153 = vrot.slane %v1145, %v1152
        %v1155 = vunpack.c.l.s4 1983009808
        %v1156 = vunpack.c.0.s8 %v1155
        %v1157 = vlaneseq
        %v1158 = vshrl.u32 %v1157, 7
        %v1159 = vsub.s32 %v1156, %v1158
        %v1160 = vrot.slane %v1146, %v1159
        %v1161 = vcombine.low %v1002, %v1004
        %v1162 = vcombine.high %v1002, %v1004
        %v1164 = vunpack.c.l.s4 1983009808
        %v1165 = vunpack.c.0.s8 %v1164
        %v1166 = vlaneseq
        %v1167 = vshrl.u32 %v1166, 7
        %v1168 = vsub.s32 %v1165, %v1167
        %v1169 = vrot.slane %v1161, %v1168
        %v1171 = vunpack.c.l.s4 1983009808
        %v1172 = vunpack.c.0.s8 %v1171
        %v1173 = vlaneseq
        %v1174 = vshrl.u32 %v1173, 7
        %v1175 = vsub.s32 %v1172, %v1174
        %v1176 = vrot.slane %v1162, %v1175
        %v1177 = vcombine.low %v1005, %v1007
        %v1178 = vcombine.high %v1005, %v1007
        %v1180 = vunpack.c.l.s4 1983009808
        %v1181 = vunpack.c.0.s8 %v1180
        %v1182 = vlaneseq
        %v1183 = vshrl.u32 %v1182, 7
        %v1184 = vsub.s32 %v1181, %v1183
        %v1185 = vrot.slane %v1177, %v1184
        %v1187 = vunpack.c.l.s4 1983009808
        %v1188 = vunpack.c.0.s8 %v1187
        %v1189 = vlaneseq
        %v1190 = vshrl.u32 %v1189, 7
        %v1191 = vsub.s32 %v1188, %v1190
        %v1192 = vrot.slane %v1178, %v1191
        %v1193 = vcombine.low %v1006, %v1008
        %v1194 = vcombine.high %v1006, %v1008
        %v1196 = vunpack.c.l.s4 1983009808
        %v1197 = vunpack.c.0.s8 %v1196
        %v1198 = vlaneseq
        %v1199 = vshrl.u32 %v1198, 7
        %v1200 = vsub.s32 %v1197, %v1199
        %v1201 = vrot.slane %v1193, %v1200
        %v1203 = vunpack.c.l.s4 1983009808
        %v1204 = vunpack.c.0.s8 %v1203
        %v1205 = vlaneseq
        %v1206 = vshrl.u32 %v1205, 7
        %v1207 = vsub.s32 %v1204, %v1206
        %v1208 = vrot.slane %v1194, %v1207
        %v1209 = vcombine.low %v1153, %v1169
        %v1210 = vcombine.high %v1153, %v1169
        %v1212 = vunpack.c.l.s4 1934713408
        %v1213 = vunpack.c.0.s8 %v1212
        %v1214 = vlaneseq
        %v1215 = vshrl.u32 %v1214, 7
        %v1216 = vsub.s32 %v1213, %v1215
        %v1217 = vrot.slane %v1209, %v1216
        %v1219 = vunpack.c.l.s4 1934713408
        %v1220 = vunpack.c.0.s8 %v1219
        %v1221 = vlaneseq
        %v1222 = vshrl.u32 %v1221, 7
        %v1223 = vsub.s32 %v1220, %v1222
        %v1224 = vrot.slane %v1210, %v1223
        %v1225 = vcombine.low %v1160, %v1176
        %v1226 = vcombine.high %v1160, %v1176
        %v1228 = vunpack.c.l.s4 1934713408
        %v1229 = vunpack.c.0.s8 %v1228
        %v1230 = vlaneseq
        %v1231 = vshrl.u32 %v1230, 7
        %v1232 = vsub.s32 %v1229, %v1231
        %v1233 = vrot.slane %v1225, %v1232
        %v1235 = vunpack.c.l.s4 1934713408
        %v1236 = vunpack.c.0.s8 %v1235
        %v1237 = vlaneseq
        %v1238 = vshrl.u32 %v1237, 7
        %v1239 = vsub.s32 %v1236, %v1238
        %v1240 = vrot.slane %v1226, %v1239
        %v1241 = vcombine.low %v1185, %v1201
        %v1242 = vcombine.high %v1185, %v1201
        %v1244 = vunpack.c.l.s4 1934713408
        %v1245 = vunpack.c.0.s8 %v1244
        %v1246 = vlaneseq
        %v1247 = vshrl.u32 %v1246, 7
        %v1248 = vsub.s32 %v1245, %v1247
        %v1249 = vrot.slane %v1241, %v1248
        %v1251 = vunpack.c.l.s4 1934713408
        %v1252 = vunpack.c.0.s8 %v1251
        %v1253 = vlaneseq
        %v1254 = vshrl.u32 %v1253, 7
        %v1255 = vsub.s32 %v1252, %v1254
        %v1256 = vrot.slane %v1242, %v1255
        %v1257 = vcombine.low %v1192, %v1208
        %v1258 = vcombine.high %v1192, %v1208
        %v1260 = vunpack.c.l.s4 1934713408
        %v1261 = vunpack.c.0.s8 %v1260
        %v1262 = vlaneseq
        %v1263 = vshrl.u32 %v1262, 7
        %v1264 = vsub.s32 %v1261, %v1263
        %v1265 = vrot.slane %v1257, %v1264
        %v1267 = vunpack.c.l.s4 1934713408
        %v1268 = vunpack.c.0.s8 %v1267
        %v1269 = vlaneseq
        %v1270 = vshrl.u32 %v1269, 7
        %v1271 = vsub.s32 %v1268, %v1270
        %v1272 = vrot.slane %v1258, %v1271
        %v1273 = vcombine.low %v1217, %v1249
        %v1274 = vcombine.high %v1217, %v1249
        %v1275 = vcombine.low %v1224, %v1256
        %v1276 = vcombine.high %v1224, %v1256
        %v1277 = vcombine.low %v1233, %v1265
        %v1278 = vcombine.high %v1233, %v1265
        %v1279 = vcombine.low %v1240, %v1272
        %v1280 = vcombine.high %v1240, %v1272
        %v1281 = vcombine.low %v1137, %v1139
        %v1282 = vcombine.high %v1137, %v1139
        %v1284 = vunpack.c.l.s4 1983009808
        %v1285 = vunpack.c.0.s8 %v1284
        %v1286 = vlaneseq
        %v1287 = vshrl.u32 %v1286, 7
        %v1288 = vsub.s32 %v1285, %v1287
        %v1289 = vrot.slane %v1281, %v1288
        %v1291 = vunpack.c.l.s4 1983009808
        %v1292 = vunpack.c.0.s8 %v1291
        %v1293 = vlaneseq
        %v1294 = vshrl.u32 %v1293, 7
        %v1295 = vsub.s32 %v1292, %v1294
        %v1296 = vrot.slane %v1282, %v1295
        %v1297 = vcombine.low %v1138, %v1140
        %v1298 = vcombine.high %v1138, %v1140
        %v1300 = vunpack.c.l.s4 1983009808
        %v1301 = vunpack.c.0.s8 %v1300
        %v1302 = vlaneseq
        %v1303 = vshrl.u32 %v1302, 7
        %v1304 = vsub.s32 %v1301, %v1303
        %v1305 = vrot.slane %v1297, %v1304
        %v1307 = vunpack.c.l.s4 1983009808
        %v1308 = vunpack.c.0.s8 %v1307
        %v1309 = vlaneseq
        %v1310 = vshrl.u32 %v1309, 7
        %v1311 = vsub.s32 %v1308, %v1310
        %v1312 = vrot.slane %v1298, %v1311
        %v1313 = vcombine.low %v1141, %v1143
        %v1314 = vcombine.high %v1141, %v1143
        %v1316 = vunpack.c.l.s4 1983009808
        %v1317 = vunpack.c.0.s8 %v1316
        %v1318 = vlaneseq
        %v1319 = vshrl.u32 %v1318, 7
        %v1320 = vsub.s32 %v1317, %v1319
        %v1321 = vrot.slane %v1313, %v1320
        %v1323 = vunpack.c.l.s4 1983009808
        %v1324 = vunpack.c.0.s8 %v1323
        %v1325 = vlaneseq
        %v1326 = vshrl.u32 %v1325, 7
        %v1327 = vsub.s32 %v1324, %v1326
        %v1328 = vrot.slane %v1314, %v1327
        %v1329 = vcombine.low %v1142, %v1144
        %v1330 = vcombine.high %v1142, %v1144
        %v1332 = vunpack.c.l.s4 1983009808
        %v1333 = vunpack.c.0.s8 %v1332
        %v1334 = vlaneseq
        %v1335 = vshrl.u32 %v1334, 7
        %v1336 = vsub.s32 %v1333, %v1335
        %v1337 = vrot.slane %v1329, %v1336
        %v1339 = vunpack.c.l.s4 1983009808
        %v1340 = vunpack.c.0.s8 %v1339
        %v1341 = vlaneseq
        %v1342 = vshrl.u32 %v1341, 7
        %v1343 = vsub.s32 %v1340, %v1342
        %v1344 = vrot.slane %v1330, %v1343
        %v1345 = vcombine.low %v1289, %v1305
        %v1346 = vcombine.high %v1289, %v1305
        %v1348 = vunpack.c.l.s4 1934713408
        %v1349 = vunpack.c.0.s8 %v1348
        %v1350 = vlaneseq
        %v1351 = vshrl.u32 %v1350, 7
        %v1352 = vsub.s32 %v1349, %v1351
        %v1353 = vrot.slane %v1345, %v1352
        %v1355 = vunpack.c.l.s4 1934713408
        %v1356 = vunpack.c.0.s8 %v1355
        %v1357 = vlaneseq
        %v1358 = vshrl.u32 %v1357, 7
        %v1359 = vsub.s32 %v1356, %v1358
        %v1360 = vrot.slane %v1346, %v1359
        %v1361 = vcombine.low %v1296, %v1312
        %v1362 = vcombine.high %v1296, %v1312
        %v1364 = vunpack.c.l.s4 1934713408
        %v1365 = vunpack.c.0.s8 %v1364
        %v1366 = vlaneseq
        %v1367 = vshrl.u32 %v1366, 7
        %v1368 = vsub.s32 %v1365, %v1367
        %v1369 = vrot.slane %v1361, %v1368
        %v1371 = vunpack.c.l.s4 1934713408
        %v1372 = vunpack.c.0.s8 %v1371
        %v1373 = vlaneseq
        %v1374 = vshrl.u32 %v1373, 7
        %v1375 = vsub.s32 %v1372, %v1374
        %v1376 = vrot.slane %v1362, %v1375
        %v1377 = vcombine.low %v1321, %v1337
        %v1378 = vcombine.high %v1321, %v1337
        %v1380 = vunpack.c.l.s4 1934713408
        %v1381 = vunpack.c.0.s8 %v1380
        %v1382 = vlaneseq
        %v1383 = vshrl.u32 %v1382, 7
        %v1384 = vsub.s32 %v1381, %v1383
        %v1385 = vrot.slane %v1377, %v1384
        %v1387 = vunpack.c.l.s4 1934713408
        %v1388 = vunpack.c.0.s8 %v1387
        %v1389 = vlaneseq
        %v1390 = vshrl.u32 %v1389, 7
        %v1391 = vsub.s32 %v1388, %v1390
        %v1392 = vrot.slane %v1378, %v1391
        %v1393 = vcombine.low %v1328, %v1344
        %v1394 = vcombine.high %v1328, %v1344
        %v1396 = vunpack.c.l.s4 1934713408
        %v1397 = vunpack.c.0.s8 %v1396
        %v1398 = vlaneseq
        %v1399 = vshrl.u32 %v1398, 7
        %v1400 = vsub.s32 %v1397, %v1399
        %v1401 = vrot.slane %v1393, %v1400
        %v1403 = vunpack.c.l.s4 1934713408
        %v1404 = vunpack.c.0.s8 %v1403
        %v1405 = vlaneseq
        %v1406 = vshrl.u32 %v1405, 7
        %v1407 = vsub.s32 %v1404, %v1406
        %v1408 = vrot.slane %v1394, %v1407
        %v1409 = vcombine.low %v1353, %v1385
        %v1410 = vcombine.high %v1353, %v1385
        %v1411 = vcombine.low %v1360, %v1392
        %v1412 = vcombine.high %v1360, %v1392
        %v1413 = vcombine.low %v1369, %v1401
        %v1414 = vcombine.high %v1369, %v1401
        %v1415 = vcombine.low %v1376, %v1408
        %v1416 = vcombine.high %v1376, %v1408
        %v1417 = vpack.c.bf16 %v1273, %v1273
        %v1418 = vpack.c.bf16 %v1274, %v1274
        %v1419 = vpack.c.bf16 %v1275, %v1275
        %v1420 = vpack.c.bf16 %v1276, %v1276
        %v1421 = vpack.c.bf16 %v1277, %v1277
        %v1422 = vpack.c.bf16 %v1278, %v1278
        %v1423 = vpack.c.bf16 %v1279, %v1279
        %v1424 = vpack.c.bf16 %v1280, %v1280
        %v1425 = vpack.c.bf16 %v1409, %v1409
        %v1426 = vpack.c.bf16 %v1410, %v1410
        %v1427 = vpack.c.bf16 %v1411, %v1411
        %v1428 = vpack.c.bf16 %v1412, %v1412
        %v1429 = vpack.c.bf16 %v1413, %v1413
        %v1430 = vpack.c.bf16 %v1414, %v1414
        %v1431 = vpack.c.bf16 %v1415, %v1415
        %v1432 = vpack.c.bf16 %v1416, %v1416
        %1435 = vrot.lane.b32.xlu0 %v717, 112
        %v1436 = vpop.permute.xlu0 %1435
        %1437 = vrot.lane.b32.xlu0 %v718, 112
        %v1438 = vpop.permute.xlu0 %1437
        %1441 = vrot.lane.b32.xlu0 %v717, 96
        %v1442 = vpop.permute.xlu0 %1441
        %1443 = vrot.lane.b32.xlu0 %v718, 96
        %v1444 = vpop.permute.xlu0 %1443
        %1447 = vrot.lane.b32.xlu0 %v717, 80
        %v1448 = vpop.permute.xlu0 %1447
        %1449 = vrot.lane.b32.xlu0 %v718, 80
        %v1450 = vpop.permute.xlu0 %1449
        %1453 = vrot.lane.b32.xlu0 %v717, 64
        %v1454 = vpop.permute.xlu0 %1453
        %1455 = vrot.lane.b32.xlu0 %v718, 64
        %v1456 = vpop.permute.xlu0 %1455
        %1459 = vrot.lane.b32.xlu0 %v717, 48
        %v1460 = vpop.permute.xlu0 %1459
        %1461 = vrot.lane.b32.xlu0 %v718, 48
        %v1462 = vpop.permute.xlu0 %1461
        %1465 = vrot.lane.b32.xlu0 %v717, 32
        %v1466 = vpop.permute.xlu0 %1465
        %1467 = vrot.lane.b32.xlu0 %v718, 32
        %v1468 = vpop.permute.xlu0 %1467
        %1471 = vrot.lane.b32.xlu0 %v717, 16
        %v1472 = vpop.permute.xlu0 %1471
        %1473 = vrot.lane.b32.xlu0 %v718, 16
        %v1474 = vpop.permute.xlu0 %1473
        %v1477 = vcombine.low %v717, %v1442
        %v1478 = vcombine.high %v717, %v1442
        %v1480 = vunpack.c.l.s4 1983009808
        %v1481 = vunpack.c.0.s8 %v1480
        %v1482 = vlaneseq
        %v1483 = vshrl.u32 %v1482, 7
        %v1484 = vsub.s32 %v1481, %v1483
        %v1485 = vrot.slane %v1477, %v1484
        %v1487 = vunpack.c.l.s4 1983009808
        %v1488 = vunpack.c.0.s8 %v1487
        %v1489 = vlaneseq
        %v1490 = vshrl.u32 %v1489, 7
        %v1491 = vsub.s32 %v1488, %v1490
        %v1492 = vrot.slane %v1478, %v1491
        %v1493 = vcombine.low %v1436, %v1448
        %v1494 = vcombine.high %v1436, %v1448
        %v1496 = vunpack.c.l.s4 1983009808
        %v1497 = vunpack.c.0.s8 %v1496
        %v1498 = vlaneseq
        %v1499 = vshrl.u32 %v1498, 7
        %v1500 = vsub.s32 %v1497, %v1499
        %v1501 = vrot.slane %v1493, %v1500
        %v1503 = vunpack.c.l.s4 1983009808
        %v1504 = vunpack.c.0.s8 %v1503
        %v1505 = vlaneseq
        %v1506 = vshrl.u32 %v1505, 7
        %v1507 = vsub.s32 %v1504, %v1506
        %v1508 = vrot.slane %v1494, %v1507
        %v1509 = vcombine.low %v1454, %v1466
        %v1510 = vcombine.high %v1454, %v1466
        %v1512 = vunpack.c.l.s4 1983009808
        %v1513 = vunpack.c.0.s8 %v1512
        %v1514 = vlaneseq
        %v1515 = vshrl.u32 %v1514, 7
        %v1516 = vsub.s32 %v1513, %v1515
        %v1517 = vrot.slane %v1509, %v1516
        %v1519 = vunpack.c.l.s4 1983009808
        %v1520 = vunpack.c.0.s8 %v1519
        %v1521 = vlaneseq
        %v1522 = vshrl.u32 %v1521, 7
        %v1523 = vsub.s32 %v1520, %v1522
        %v1524 = vrot.slane %v1510, %v1523
        %v1525 = vcombine.low %v1460, %v1472
        %v1526 = vcombine.high %v1460, %v1472
        %v1528 = vunpack.c.l.s4 1983009808
        %v1529 = vunpack.c.0.s8 %v1528
        %v1530 = vlaneseq
        %v1531 = vshrl.u32 %v1530, 7
        %v1532 = vsub.s32 %v1529, %v1531
        %v1533 = vrot.slane %v1525, %v1532
        %v1535 = vunpack.c.l.s4 1983009808
        %v1536 = vunpack.c.0.s8 %v1535
        %v1537 = vlaneseq
        %v1538 = vshrl.u32 %v1537, 7
        %v1539 = vsub.s32 %v1536, %v1538
        %v1540 = vrot.slane %v1526, %v1539
        %v1541 = vcombine.low %v1485, %v1501
        %v1542 = vcombine.high %v1485, %v1501
        %v1544 = vunpack.c.l.s4 1934713408
        %v1545 = vunpack.c.0.s8 %v1544
        %v1546 = vlaneseq
        %v1547 = vshrl.u32 %v1546, 7
        %v1548 = vsub.s32 %v1545, %v1547
        %v1549 = vrot.slane %v1541, %v1548
        %v1551 = vunpack.c.l.s4 1934713408
        %v1552 = vunpack.c.0.s8 %v1551
        %v1553 = vlaneseq
        %v1554 = vshrl.u32 %v1553, 7
        %v1555 = vsub.s32 %v1552, %v1554
        %v1556 = vrot.slane %v1542, %v1555
        %v1557 = vcombine.low %v1492, %v1508
        %v1558 = vcombine.high %v1492, %v1508
        %v1560 = vunpack.c.l.s4 1934713408
        %v1561 = vunpack.c.0.s8 %v1560
        %v1562 = vlaneseq
        %v1563 = vshrl.u32 %v1562, 7
        %v1564 = vsub.s32 %v1561, %v1563
        %v1565 = vrot.slane %v1557, %v1564
        %v1567 = vunpack.c.l.s4 1934713408
        %v1568 = vunpack.c.0.s8 %v1567
        %v1569 = vlaneseq
        %v1570 = vshrl.u32 %v1569, 7
        %v1571 = vsub.s32 %v1568, %v1570
        %v1572 = vrot.slane %v1558, %v1571
        %v1573 = vcombine.low %v1517, %v1533
        %v1574 = vcombine.high %v1517, %v1533
        %v1576 = vunpack.c.l.s4 1934713408
        %v1577 = vunpack.c.0.s8 %v1576
        %v1578 = vlaneseq
        %v1579 = vshrl.u32 %v1578, 7
        %v1580 = vsub.s32 %v1577, %v1579
        %v1581 = vrot.slane %v1573, %v1580
        %v1583 = vunpack.c.l.s4 1934713408
        %v1584 = vunpack.c.0.s8 %v1583
        %v1585 = vlaneseq
        %v1586 = vshrl.u32 %v1585, 7
        %v1587 = vsub.s32 %v1584, %v1586
        %v1588 = vrot.slane %v1574, %v1587
        %v1589 = vcombine.low %v1524, %v1540
        %v1590 = vcombine.high %v1524, %v1540
        %v1592 = vunpack.c.l.s4 1934713408
        %v1593 = vunpack.c.0.s8 %v1592
        %v1594 = vlaneseq
        %v1595 = vshrl.u32 %v1594, 7
        %v1596 = vsub.s32 %v1593, %v1595
        %v1597 = vrot.slane %v1589, %v1596
        %v1599 = vunpack.c.l.s4 1934713408
        %v1600 = vunpack.c.0.s8 %v1599
        %v1601 = vlaneseq
        %v1602 = vshrl.u32 %v1601, 7
        %v1603 = vsub.s32 %v1600, %v1602
        %v1604 = vrot.slane %v1590, %v1603
        %v1605 = vcombine.low %v1549, %v1581
        %v1606 = vcombine.high %v1549, %v1581
        %v1607 = vcombine.low %v1556, %v1588
        %v1608 = vcombine.high %v1556, %v1588
        %v1609 = vcombine.low %v1565, %v1597
        %v1610 = vcombine.high %v1565, %v1597
        %v1611 = vcombine.low %v1572, %v1604
        %v1612 = vcombine.high %v1572, %v1604
        %v1613 = vcombine.low %v718, %v1444
        %v1614 = vcombine.high %v718, %v1444
        %v1616 = vunpack.c.l.s4 1983009808
        %v1617 = vunpack.c.0.s8 %v1616
        %v1618 = vlaneseq
        %v1619 = vshrl.u32 %v1618, 7
        %v1620 = vsub.s32 %v1617, %v1619
        %v1621 = vrot.slane %v1613, %v1620
        %v1623 = vunpack.c.l.s4 1983009808
        %v1624 = vunpack.c.0.s8 %v1623
        %v1625 = vlaneseq
        %v1626 = vshrl.u32 %v1625, 7
        %v1627 = vsub.s32 %v1624, %v1626
        %v1628 = vrot.slane %v1614, %v1627
        %v1629 = vcombine.low %v1438, %v1450
        %v1630 = vcombine.high %v1438, %v1450
        %v1632 = vunpack.c.l.s4 1983009808
        %v1633 = vunpack.c.0.s8 %v1632
        %v1634 = vlaneseq
        %v1635 = vshrl.u32 %v1634, 7
        %v1636 = vsub.s32 %v1633, %v1635
        %v1637 = vrot.slane %v1629, %v1636
        %v1639 = vunpack.c.l.s4 1983009808
        %v1640 = vunpack.c.0.s8 %v1639
        %v1641 = vlaneseq
        %v1642 = vshrl.u32 %v1641, 7
        %v1643 = vsub.s32 %v1640, %v1642
        %v1644 = vrot.slane %v1630, %v1643
        %v1645 = vcombine.low %v1456, %v1468
        %v1646 = vcombine.high %v1456, %v1468
        %v1648 = vunpack.c.l.s4 1983009808
        %v1649 = vunpack.c.0.s8 %v1648
        %v1650 = vlaneseq
        %v1651 = vshrl.u32 %v1650, 7
        %v1652 = vsub.s32 %v1649, %v1651
        %v1653 = vrot.slane %v1645, %v1652
        %v1655 = vunpack.c.l.s4 1983009808
        %v1656 = vunpack.c.0.s8 %v1655
        %v1657 = vlaneseq
        %v1658 = vshrl.u32 %v1657, 7
        %v1659 = vsub.s32 %v1656, %v1658
        %v1660 = vrot.slane %v1646, %v1659
        %v1661 = vcombine.low %v1462, %v1474
        %v1662 = vcombine.high %v1462, %v1474
        %v1664 = vunpack.c.l.s4 1983009808
        %v1665 = vunpack.c.0.s8 %v1664
        %v1666 = vlaneseq
        %v1667 = vshrl.u32 %v1666, 7
        %v1668 = vsub.s32 %v1665, %v1667
        %v1669 = vrot.slane %v1661, %v1668
        %v1671 = vunpack.c.l.s4 1983009808
        %v1672 = vunpack.c.0.s8 %v1671
        %v1673 = vlaneseq
        %v1674 = vshrl.u32 %v1673, 7
        %v1675 = vsub.s32 %v1672, %v1674
        %v1676 = vrot.slane %v1662, %v1675
        %v1677 = vcombine.low %v1621, %v1637
        %v1678 = vcombine.high %v1621, %v1637
        %v1680 = vunpack.c.l.s4 1934713408
        %v1681 = vunpack.c.0.s8 %v1680
        %v1682 = vlaneseq
        %v1683 = vshrl.u32 %v1682, 7
        %v1684 = vsub.s32 %v1681, %v1683
        %v1685 = vrot.slane %v1677, %v1684
        %v1687 = vunpack.c.l.s4 1934713408
        %v1688 = vunpack.c.0.s8 %v1687
        %v1689 = vlaneseq
        %v1690 = vshrl.u32 %v1689, 7
        %v1691 = vsub.s32 %v1688, %v1690
        %v1692 = vrot.slane %v1678, %v1691
        %v1693 = vcombine.low %v1628, %v1644
        %v1694 = vcombine.high %v1628, %v1644
        %v1696 = vunpack.c.l.s4 1934713408
        %v1697 = vunpack.c.0.s8 %v1696
        %v1698 = vlaneseq
        %v1699 = vshrl.u32 %v1698, 7
        %v1700 = vsub.s32 %v1697, %v1699
        %v1701 = vrot.slane %v1693, %v1700
        %v1703 = vunpack.c.l.s4 1934713408
        %v1704 = vunpack.c.0.s8 %v1703
        %v1705 = vlaneseq
        %v1706 = vshrl.u32 %v1705, 7
        %v1707 = vsub.s32 %v1704, %v1706
        %v1708 = vrot.slane %v1694, %v1707
        %v1709 = vcombine.low %v1653, %v1669
        %v1710 = vcombine.high %v1653, %v1669
        %v1712 = vunpack.c.l.s4 1934713408
        %v1713 = vunpack.c.0.s8 %v1712
        %v1714 = vlaneseq
        %v1715 = vshrl.u32 %v1714, 7
        %v1716 = vsub.s32 %v1713, %v1715
        %v1717 = vrot.slane %v1709, %v1716
        %v1719 = vunpack.c.l.s4 1934713408
        %v1720 = vunpack.c.0.s8 %v1719
        %v1721 = vlaneseq
        %v1722 = vshrl.u32 %v1721, 7
        %v1723 = vsub.s32 %v1720, %v1722
        %v1724 = vrot.slane %v1710, %v1723
        %v1725 = vcombine.low %v1660, %v1676
        %v1726 = vcombine.high %v1660, %v1676
        %v1728 = vunpack.c.l.s4 1934713408
        %v1729 = vunpack.c.0.s8 %v1728
        %v1730 = vlaneseq
        %v1731 = vshrl.u32 %v1730, 7
        %v1732 = vsub.s32 %v1729, %v1731
        %v1733 = vrot.slane %v1725, %v1732
        %v1735 = vunpack.c.l.s4 1934713408
        %v1736 = vunpack.c.0.s8 %v1735
        %v1737 = vlaneseq
        %v1738 = vshrl.u32 %v1737, 7
        %v1739 = vsub.s32 %v1736, %v1738
        %v1740 = vrot.slane %v1726, %v1739
        %v1741 = vcombine.low %v1685, %v1717
        %v1742 = vcombine.high %v1685, %v1717
        %v1743 = vcombine.low %v1692, %v1724
        %v1744 = vcombine.high %v1692, %v1724
        %v1745 = vcombine.low %v1701, %v1733
        %v1746 = vcombine.high %v1701, %v1733
        %v1747 = vcombine.low %v1708, %v1740
        %v1748 = vcombine.high %v1708, %v1740
        %v1749 = vcombine.low %v1605, %v1607
        %v1750 = vcombine.high %v1605, %v1607
        %v1752 = vunpack.c.l.s4 1983009808
        %v1753 = vunpack.c.0.s8 %v1752
        %v1754 = vlaneseq
        %v1755 = vshrl.u32 %v1754, 7
        %v1756 = vsub.s32 %v1753, %v1755
        %v1757 = vrot.slane %v1749, %v1756
        %v1759 = vunpack.c.l.s4 1983009808
        %v1760 = vunpack.c.0.s8 %v1759
        %v1761 = vlaneseq
        %v1762 = vshrl.u32 %v1761, 7
        %v1763 = vsub.s32 %v1760, %v1762
        %v1764 = vrot.slane %v1750, %v1763
        %v1765 = vcombine.low %v1606, %v1608
        %v1766 = vcombine.high %v1606, %v1608
        %v1768 = vunpack.c.l.s4 1983009808
        %v1769 = vunpack.c.0.s8 %v1768
        %v1770 = vlaneseq
        %v1771 = vshrl.u32 %v1770, 7
        %v1772 = vsub.s32 %v1769, %v1771
        %v1773 = vrot.slane %v1765, %v1772
        %v1775 = vunpack.c.l.s4 1983009808
        %v1776 = vunpack.c.0.s8 %v1775
        %v1777 = vlaneseq
        %v1778 = vshrl.u32 %v1777, 7
        %v1779 = vsub.s32 %v1776, %v1778
        %v1780 = vrot.slane %v1766, %v1779
        %v1781 = vcombine.low %v1609, %v1611
        %v1782 = vcombine.high %v1609, %v1611
        %v1784 = vunpack.c.l.s4 1983009808
        %v1785 = vunpack.c.0.s8 %v1784
        %v1786 = vlaneseq
        %v1787 = vshrl.u32 %v1786, 7
        %v1788 = vsub.s32 %v1785, %v1787
        %v1789 = vrot.slane %v1781, %v1788
        %v1791 = vunpack.c.l.s4 1983009808
        %v1792 = vunpack.c.0.s8 %v1791
        %v1793 = vlaneseq
        %v1794 = vshrl.u32 %v1793, 7
        %v1795 = vsub.s32 %v1792, %v1794
        %v1796 = vrot.slane %v1782, %v1795
        %v1797 = vcombine.low %v1610, %v1612
        %v1798 = vcombine.high %v1610, %v1612
        %v1800 = vunpack.c.l.s4 1983009808
        %v1801 = vunpack.c.0.s8 %v1800
        %v1802 = vlaneseq
        %v1803 = vshrl.u32 %v1802, 7
        %v1804 = vsub.s32 %v1801, %v1803
        %v1805 = vrot.slane %v1797, %v1804
        %v1807 = vunpack.c.l.s4 1983009808
        %v1808 = vunpack.c.0.s8 %v1807
        %v1809 = vlaneseq
        %v1810 = vshrl.u32 %v1809, 7
        %v1811 = vsub.s32 %v1808, %v1810
        %v1812 = vrot.slane %v1798, %v1811
        %v1813 = vcombine.low %v1757, %v1773
        %v1814 = vcombine.high %v1757, %v1773
        %v1816 = vunpack.c.l.s4 1934713408
        %v1817 = vunpack.c.0.s8 %v1816
        %v1818 = vlaneseq
        %v1819 = vshrl.u32 %v1818, 7
        %v1820 = vsub.s32 %v1817, %v1819
        %v1821 = vrot.slane %v1813, %v1820
        %v1823 = vunpack.c.l.s4 1934713408
        %v1824 = vunpack.c.0.s8 %v1823
        %v1825 = vlaneseq
        %v1826 = vshrl.u32 %v1825, 7
        %v1827 = vsub.s32 %v1824, %v1826
        %v1828 = vrot.slane %v1814, %v1827
        %v1829 = vcombine.low %v1764, %v1780
        %v1830 = vcombine.high %v1764, %v1780
        %v1832 = vunpack.c.l.s4 1934713408
        %v1833 = vunpack.c.0.s8 %v1832
        %v1834 = vlaneseq
        %v1835 = vshrl.u32 %v1834, 7
        %v1836 = vsub.s32 %v1833, %v1835
        %v1837 = vrot.slane %v1829, %v1836
        %v1839 = vunpack.c.l.s4 1934713408
        %v1840 = vunpack.c.0.s8 %v1839
        %v1841 = vlaneseq
        %v1842 = vshrl.u32 %v1841, 7
        %v1843 = vsub.s32 %v1840, %v1842
        %v1844 = vrot.slane %v1830, %v1843
        %v1845 = vcombine.low %v1789, %v1805
        %v1846 = vcombine.high %v1789, %v1805
        %v1848 = vunpack.c.l.s4 1934713408
        %v1849 = vunpack.c.0.s8 %v1848
        %v1850 = vlaneseq
        %v1851 = vshrl.u32 %v1850, 7
        %v1852 = vsub.s32 %v1849, %v1851
        %v1853 = vrot.slane %v1845, %v1852
        %v1855 = vunpack.c.l.s4 1934713408
        %v1856 = vunpack.c.0.s8 %v1855
        %v1857 = vlaneseq
        %v1858 = vshrl.u32 %v1857, 7
        %v1859 = vsub.s32 %v1856, %v1858
        %v1860 = vrot.slane %v1846, %v1859
        %v1861 = vcombine.low %v1796, %v1812
        %v1862 = vcombine.high %v1796, %v1812
        %v1864 = vunpack.c.l.s4 1934713408
        %v1865 = vunpack.c.0.s8 %v1864
        %v1866 = vlaneseq
        %v1867 = vshrl.u32 %v1866, 7
        %v1868 = vsub.s32 %v1865, %v1867
        %v1869 = vrot.slane %v1861, %v1868
        %v1871 = vunpack.c.l.s4 1934713408
        %v1872 = vunpack.c.0.s8 %v1871
        %v1873 = vlaneseq
        %v1874 = vshrl.u32 %v1873, 7
        %v1875 = vsub.s32 %v1872, %v1874
        %v1876 = vrot.slane %v1862, %v1875
        %v1877 = vcombine.low %v1821, %v1853
        %v1878 = vcombine.high %v1821, %v1853
        %v1879 = vcombine.low %v1828, %v1860
        %v1880 = vcombine.high %v1828, %v1860
        %v1881 = vcombine.low %v1837, %v1869
        %v1882 = vcombine.high %v1837, %v1869
        %v1883 = vcombine.low %v1844, %v1876
        %v1884 = vcombine.high %v1844, %v1876
        %v1885 = vcombine.low %v1741, %v1743
        %v1886 = vcombine.high %v1741, %v1743
        %v1888 = vunpack.c.l.s4 1983009808
        %v1889 = vunpack.c.0.s8 %v1888
        %v1890 = vlaneseq
        %v1891 = vshrl.u32 %v1890, 7
        %v1892 = vsub.s32 %v1889, %v1891
        %v1893 = vrot.slane %v1885, %v1892
        %v1895 = vunpack.c.l.s4 1983009808
        %v1896 = vunpack.c.0.s8 %v1895
        %v1897 = vlaneseq
        %v1898 = vshrl.u32 %v1897, 7
        %v1899 = vsub.s32 %v1896, %v1898
        %v1900 = vrot.slane %v1886, %v1899
        %v1901 = vcombine.low %v1742, %v1744
        %v1902 = vcombine.high %v1742, %v1744
        %v1904 = vunpack.c.l.s4 1983009808
        %v1905 = vunpack.c.0.s8 %v1904
        %v1906 = vlaneseq
        %v1907 = vshrl.u32 %v1906, 7
        %v1908 = vsub.s32 %v1905, %v1907
        %v1909 = vrot.slane %v1901, %v1908
        %v1911 = vunpack.c.l.s4 1983009808
        %v1912 = vunpack.c.0.s8 %v1911
        %v1913 = vlaneseq
        %v1914 = vshrl.u32 %v1913, 7
        %v1915 = vsub.s32 %v1912, %v1914
        %v1916 = vrot.slane %v1902, %v1915
        %v1917 = vcombine.low %v1745, %v1747
        %v1918 = vcombine.high %v1745, %v1747
        %v1920 = vunpack.c.l.s4 1983009808
        %v1921 = vunpack.c.0.s8 %v1920
        %v1922 = vlaneseq
        %v1923 = vshrl.u32 %v1922, 7
        %v1924 = vsub.s32 %v1921, %v1923
        %v1925 = vrot.slane %v1917, %v1924
        %v1927 = vunpack.c.l.s4 1983009808
        %v1928 = vunpack.c.0.s8 %v1927
        %v1929 = vlaneseq
        %v1930 = vshrl.u32 %v1929, 7
        %v1931 = vsub.s32 %v1928, %v1930
        %v1932 = vrot.slane %v1918, %v1931
        %v1933 = vcombine.low %v1746, %v1748
        %v1934 = vcombine.high %v1746, %v1748
        %v1936 = vunpack.c.l.s4 1983009808
        %v1937 = vunpack.c.0.s8 %v1936
        %v1938 = vlaneseq
        %v1939 = vshrl.u32 %v1938, 7
        %v1940 = vsub.s32 %v1937, %v1939
        %v1941 = vrot.slane %v1933, %v1940
        %v1943 = vunpack.c.l.s4 1983009808
        %v1944 = vunpack.c.0.s8 %v1943
        %v1945 = vlaneseq
        %v1946 = vshrl.u32 %v1945, 7
        %v1947 = vsub.s32 %v1944, %v1946
        %v1948 = vrot.slane %v1934, %v1947
        %v1949 = vcombine.low %v1893, %v1909
        %v1950 = vcombine.high %v1893, %v1909
        %v1952 = vunpack.c.l.s4 1934713408
        %v1953 = vunpack.c.0.s8 %v1952
        %v1954 = vlaneseq
        %v1955 = vshrl.u32 %v1954, 7
        %v1956 = vsub.s32 %v1953, %v1955
        %v1957 = vrot.slane %v1949, %v1956
        %v1959 = vunpack.c.l.s4 1934713408
        %v1960 = vunpack.c.0.s8 %v1959
        %v1961 = vlaneseq
        %v1962 = vshrl.u32 %v1961, 7
        %v1963 = vsub.s32 %v1960, %v1962
        %v1964 = vrot.slane %v1950, %v1963
        %v1965 = vcombine.low %v1900, %v1916
        %v1966 = vcombine.high %v1900, %v1916
        %v1968 = vunpack.c.l.s4 1934713408
        %v1969 = vunpack.c.0.s8 %v1968
        %v1970 = vlaneseq
        %v1971 = vshrl.u32 %v1970, 7
        %v1972 = vsub.s32 %v1969, %v1971
        %v1973 = vrot.slane %v1965, %v1972
        %v1975 = vunpack.c.l.s4 1934713408
        %v1976 = vunpack.c.0.s8 %v1975
        %v1977 = vlaneseq
        %v1978 = vshrl.u32 %v1977, 7
        %v1979 = vsub.s32 %v1976, %v1978
        %v1980 = vrot.slane %v1966, %v1979
        %v1981 = vcombine.low %v1925, %v1941
        %v1982 = vcombine.high %v1925, %v1941
        %v1984 = vunpack.c.l.s4 1934713408
        %v1985 = vunpack.c.0.s8 %v1984
        %v1986 = vlaneseq
        %v1987 = vshrl.u32 %v1986, 7
        %v1988 = vsub.s32 %v1985, %v1987
        %v1989 = vrot.slane %v1981, %v1988
        %v1991 = vunpack.c.l.s4 1934713408
        %v1992 = vunpack.c.0.s8 %v1991
        %v1993 = vlaneseq
        %v1994 = vshrl.u32 %v1993, 7
        %v1995 = vsub.s32 %v1992, %v1994
        %v1996 = vrot.slane %v1982, %v1995
        %v1997 = vcombine.low %v1932, %v1948
        %v1998 = vcombine.high %v1932, %v1948
        %v2000 = vunpack.c.l.s4 1934713408
        %v2001 = vunpack.c.0.s8 %v2000
        %v2002 = vlaneseq
        %v2003 = vshrl.u32 %v2002, 7
        %v2004 = vsub.s32 %v2001, %v2003
        %v2005 = vrot.slane %v1997, %v2004
        %v2007 = vunpack.c.l.s4 1934713408
        %v2008 = vunpack.c.0.s8 %v2007
        %v2009 = vlaneseq
        %v2010 = vshrl.u32 %v2009, 7
        %v2011 = vsub.s32 %v2008, %v2010
        %v2012 = vrot.slane %v1998, %v2011
        %v2013 = vcombine.low %v1957, %v1989
        %v2014 = vcombine.high %v1957, %v1989
        %v2015 = vcombine.low %v1964, %v1996
        %v2016 = vcombine.high %v1964, %v1996
        %v2017 = vcombine.low %v1973, %v2005
        %v2018 = vcombine.high %v1973, %v2005
        %v2019 = vcombine.low %v1980, %v2012
        %v2020 = vcombine.high %v1980, %v2012
        %v2021 = vpack.c.bf16 %v1877, %v1877
        %v2022 = vpack.c.bf16 %v1878, %v1878
        %v2023 = vpack.c.bf16 %v1879, %v1879
        %v2024 = vpack.c.bf16 %v1880, %v1880
        %v2025 = vpack.c.bf16 %v1881, %v1881
        %v2026 = vpack.c.bf16 %v1882, %v1882
        %v2027 = vpack.c.bf16 %v1883, %v1883
        %v2028 = vpack.c.bf16 %v1884, %v1884
        %v2029 = vpack.c.bf16 %v2013, %v2013
        %v2030 = vpack.c.bf16 %v2014, %v2014
        %v2031 = vpack.c.bf16 %v2015, %v2015
        %v2032 = vpack.c.bf16 %v2016, %v2016
        %v2033 = vpack.c.bf16 %v2017, %v2017
        %v2034 = vpack.c.bf16 %v2018, %v2018
        %v2035 = vpack.c.bf16 %v2019, %v2019
        %v2036 = vpack.c.bf16 %v2020, %v2020
        %2039 = vrot.lane.b32.xlu0 %v823, 112
        %v2040 = vpop.permute.xlu0 %2039
        %2041 = vrot.lane.b32.xlu0 %v826, 112
        %v2042 = vpop.permute.xlu0 %2041
        %2045 = vrot.lane.b32.xlu0 %v823, 96
        %v2046 = vpop.permute.xlu0 %2045
        %2047 = vrot.lane.b32.xlu0 %v826, 96
        %v2048 = vpop.permute.xlu0 %2047
        %2051 = vrot.lane.b32.xlu0 %v823, 80
        %v2052 = vpop.permute.xlu0 %2051
        %2053 = vrot.lane.b32.xlu0 %v826, 80
        %v2054 = vpop.permute.xlu0 %2053
        %2057 = vrot.lane.b32.xlu0 %v823, 64
        %v2058 = vpop.permute.xlu0 %2057
        %2059 = vrot.lane.b32.xlu0 %v826, 64
        %v2060 = vpop.permute.xlu0 %2059
        %2063 = vrot.lane.b32.xlu0 %v823, 48
        %v2064 = vpop.permute.xlu0 %2063
        %2065 = vrot.lane.b32.xlu0 %v826, 48
        %v2066 = vpop.permute.xlu0 %2065
        %2069 = vrot.lane.b32.xlu0 %v823, 32
        %v2070 = vpop.permute.xlu0 %2069
        %2071 = vrot.lane.b32.xlu0 %v826, 32
        %v2072 = vpop.permute.xlu0 %2071
        %2075 = vrot.lane.b32.xlu0 %v823, 16
        %v2076 = vpop.permute.xlu0 %2075
        %2077 = vrot.lane.b32.xlu0 %v826, 16
        %v2078 = vpop.permute.xlu0 %2077
        %v2081 = vcombine.low %v823, %v2046
        %v2082 = vcombine.high %v823, %v2046
        %v2084 = vunpack.c.l.s4 1983009808
        %v2085 = vunpack.c.0.s8 %v2084
        %v2086 = vlaneseq
        %v2087 = vshrl.u32 %v2086, 7
        %v2088 = vsub.s32 %v2085, %v2087
        %v2089 = vrot.slane %v2081, %v2088
        %v2091 = vunpack.c.l.s4 1983009808
        %v2092 = vunpack.c.0.s8 %v2091
        %v2093 = vlaneseq
        %v2094 = vshrl.u32 %v2093, 7
        %v2095 = vsub.s32 %v2092, %v2094
        %v2096 = vrot.slane %v2082, %v2095
        %v2097 = vcombine.low %v2040, %v2052
        %v2098 = vcombine.high %v2040, %v2052
        %v2100 = vunpack.c.l.s4 1983009808
        %v2101 = vunpack.c.0.s8 %v2100
        %v2102 = vlaneseq
        %v2103 = vshrl.u32 %v2102, 7
        %v2104 = vsub.s32 %v2101, %v2103
        %v2105 = vrot.slane %v2097, %v2104
        %v2107 = vunpack.c.l.s4 1983009808
        %v2108 = vunpack.c.0.s8 %v2107
        %v2109 = vlaneseq
        %v2110 = vshrl.u32 %v2109, 7
        %v2111 = vsub.s32 %v2108, %v2110
        %v2112 = vrot.slane %v2098, %v2111
        %v2113 = vcombine.low %v2058, %v2070
        %v2114 = vcombine.high %v2058, %v2070
        %v2116 = vunpack.c.l.s4 1983009808
        %v2117 = vunpack.c.0.s8 %v2116
        %v2118 = vlaneseq
        %v2119 = vshrl.u32 %v2118, 7
        %v2120 = vsub.s32 %v2117, %v2119
        %v2121 = vrot.slane %v2113, %v2120
        %v2123 = vunpack.c.l.s4 1983009808
        %v2124 = vunpack.c.0.s8 %v2123
        %v2125 = vlaneseq
        %v2126 = vshrl.u32 %v2125, 7
        %v2127 = vsub.s32 %v2124, %v2126
        %v2128 = vrot.slane %v2114, %v2127
        %v2129 = vcombine.low %v2064, %v2076
        %v2130 = vcombine.high %v2064, %v2076
        %v2132 = vunpack.c.l.s4 1983009808
        %v2133 = vunpack.c.0.s8 %v2132
        %v2134 = vlaneseq
        %v2135 = vshrl.u32 %v2134, 7
        %v2136 = vsub.s32 %v2133, %v2135
        %v2137 = vrot.slane %v2129, %v2136
        %v2139 = vunpack.c.l.s4 1983009808
        %v2140 = vunpack.c.0.s8 %v2139
        %v2141 = vlaneseq
        %v2142 = vshrl.u32 %v2141, 7
        %v2143 = vsub.s32 %v2140, %v2142
        %v2144 = vrot.slane %v2130, %v2143
        %v2145 = vcombine.low %v2089, %v2105
        %v2146 = vcombine.high %v2089, %v2105
        %v2148 = vunpack.c.l.s4 1934713408
        %v2149 = vunpack.c.0.s8 %v2148
        %v2150 = vlaneseq
        %v2151 = vshrl.u32 %v2150, 7
        %v2152 = vsub.s32 %v2149, %v2151
        %v2153 = vrot.slane %v2145, %v2152
        %v2155 = vunpack.c.l.s4 1934713408
        %v2156 = vunpack.c.0.s8 %v2155
        %v2157 = vlaneseq
        %v2158 = vshrl.u32 %v2157, 7
        %v2159 = vsub.s32 %v2156, %v2158
        %v2160 = vrot.slane %v2146, %v2159
        %v2161 = vcombine.low %v2096, %v2112
        %v2162 = vcombine.high %v2096, %v2112
        %v2164 = vunpack.c.l.s4 1934713408
        %v2165 = vunpack.c.0.s8 %v2164
        %v2166 = vlaneseq
        %v2167 = vshrl.u32 %v2166, 7
        %v2168 = vsub.s32 %v2165, %v2167
        %v2169 = vrot.slane %v2161, %v2168
        %v2171 = vunpack.c.l.s4 1934713408
        %v2172 = vunpack.c.0.s8 %v2171
        %v2173 = vlaneseq
        %v2174 = vshrl.u32 %v2173, 7
        %v2175 = vsub.s32 %v2172, %v2174
        %v2176 = vrot.slane %v2162, %v2175
        %v2177 = vcombine.low %v2121, %v2137
        %v2178 = vcombine.high %v2121, %v2137
        %v2180 = vunpack.c.l.s4 1934713408
        %v2181 = vunpack.c.0.s8 %v2180
        %v2182 = vlaneseq
        %v2183 = vshrl.u32 %v2182, 7
        %v2184 = vsub.s32 %v2181, %v2183
        %v2185 = vrot.slane %v2177, %v2184
        %v2187 = vunpack.c.l.s4 1934713408
        %v2188 = vunpack.c.0.s8 %v2187
        %v2189 = vlaneseq
        %v2190 = vshrl.u32 %v2189, 7
        %v2191 = vsub.s32 %v2188, %v2190
        %v2192 = vrot.slane %v2178, %v2191
        %v2193 = vcombine.low %v2128, %v2144
        %v2194 = vcombine.high %v2128, %v2144
        %v2196 = vunpack.c.l.s4 1934713408
        %v2197 = vunpack.c.0.s8 %v2196
        %v2198 = vlaneseq
        %v2199 = vshrl.u32 %v2198, 7
        %v2200 = vsub.s32 %v2197, %v2199
        %v2201 = vrot.slane %v2193, %v2200
        %v2203 = vunpack.c.l.s4 1934713408
        %v2204 = vunpack.c.0.s8 %v2203
        %v2205 = vlaneseq
        %v2206 = vshrl.u32 %v2205, 7
        %v2207 = vsub.s32 %v2204, %v2206
        %v2208 = vrot.slane %v2194, %v2207
        %v2209 = vcombine.low %v2153, %v2185
        %v2210 = vcombine.high %v2153, %v2185
        %v2211 = vcombine.low %v2160, %v2192
        %v2212 = vcombine.high %v2160, %v2192
        %v2213 = vcombine.low %v2169, %v2201
        %v2214 = vcombine.high %v2169, %v2201
        %v2215 = vcombine.low %v2176, %v2208
        %v2216 = vcombine.high %v2176, %v2208
        %v2217 = vcombine.low %v826, %v2048
        %v2218 = vcombine.high %v826, %v2048
        %v2220 = vunpack.c.l.s4 1983009808
        %v2221 = vunpack.c.0.s8 %v2220
        %v2222 = vlaneseq
        %v2223 = vshrl.u32 %v2222, 7
        %v2224 = vsub.s32 %v2221, %v2223
        %v2225 = vrot.slane %v2217, %v2224
        %v2227 = vunpack.c.l.s4 1983009808
        %v2228 = vunpack.c.0.s8 %v2227
        %v2229 = vlaneseq
        %v2230 = vshrl.u32 %v2229, 7
        %v2231 = vsub.s32 %v2228, %v2230
        %v2232 = vrot.slane %v2218, %v2231
        %v2233 = vcombine.low %v2042, %v2054
        %v2234 = vcombine.high %v2042, %v2054
        %v2236 = vunpack.c.l.s4 1983009808
        %v2237 = vunpack.c.0.s8 %v2236
        %v2238 = vlaneseq
        %v2239 = vshrl.u32 %v2238, 7
        %v2240 = vsub.s32 %v2237, %v2239
        %v2241 = vrot.slane %v2233, %v2240
        %v2243 = vunpack.c.l.s4 1983009808
        %v2244 = vunpack.c.0.s8 %v2243
        %v2245 = vlaneseq
        %v2246 = vshrl.u32 %v2245, 7
        %v2247 = vsub.s32 %v2244, %v2246
        %v2248 = vrot.slane %v2234, %v2247
        %v2249 = vcombine.low %v2060, %v2072
        %v2250 = vcombine.high %v2060, %v2072
        %v2252 = vunpack.c.l.s4 1983009808
        %v2253 = vunpack.c.0.s8 %v2252
        %v2254 = vlaneseq
        %v2255 = vshrl.u32 %v2254, 7
        %v2256 = vsub.s32 %v2253, %v2255
        %v2257 = vrot.slane %v2249, %v2256
        %v2259 = vunpack.c.l.s4 1983009808
        %v2260 = vunpack.c.0.s8 %v2259
        %v2261 = vlaneseq
        %v2262 = vshrl.u32 %v2261, 7
        %v2263 = vsub.s32 %v2260, %v2262
        %v2264 = vrot.slane %v2250, %v2263
        %v2265 = vcombine.low %v2066, %v2078
        %v2266 = vcombine.high %v2066, %v2078
        %v2268 = vunpack.c.l.s4 1983009808
        %v2269 = vunpack.c.0.s8 %v2268
        %v2270 = vlaneseq
        %v2271 = vshrl.u32 %v2270, 7
        %v2272 = vsub.s32 %v2269, %v2271
        %v2273 = vrot.slane %v2265, %v2272
        %v2275 = vunpack.c.l.s4 1983009808
        %v2276 = vunpack.c.0.s8 %v2275
        %v2277 = vlaneseq
        %v2278 = vshrl.u32 %v2277, 7
        %v2279 = vsub.s32 %v2276, %v2278
        %v2280 = vrot.slane %v2266, %v2279
        %v2281 = vcombine.low %v2225, %v2241
        %v2282 = vcombine.high %v2225, %v2241
        %v2284 = vunpack.c.l.s4 1934713408
        %v2285 = vunpack.c.0.s8 %v2284
        %v2286 = vlaneseq
        %v2287 = vshrl.u32 %v2286, 7
        %v2288 = vsub.s32 %v2285, %v2287
        %v2289 = vrot.slane %v2281, %v2288
        %v2291 = vunpack.c.l.s4 1934713408
        %v2292 = vunpack.c.0.s8 %v2291
        %v2293 = vlaneseq
        %v2294 = vshrl.u32 %v2293, 7
        %v2295 = vsub.s32 %v2292, %v2294
        %v2296 = vrot.slane %v2282, %v2295
        %v2297 = vcombine.low %v2232, %v2248
        %v2298 = vcombine.high %v2232, %v2248
        %v2300 = vunpack.c.l.s4 1934713408
        %v2301 = vunpack.c.0.s8 %v2300
        %v2302 = vlaneseq
        %v2303 = vshrl.u32 %v2302, 7
        %v2304 = vsub.s32 %v2301, %v2303
        %v2305 = vrot.slane %v2297, %v2304
        %v2307 = vunpack.c.l.s4 1934713408
        %v2308 = vunpack.c.0.s8 %v2307
        %v2309 = vlaneseq
        %v2310 = vshrl.u32 %v2309, 7
        %v2311 = vsub.s32 %v2308, %v2310
        %v2312 = vrot.slane %v2298, %v2311
        %v2313 = vcombine.low %v2257, %v2273
        %v2314 = vcombine.high %v2257, %v2273
        %v2316 = vunpack.c.l.s4 1934713408
        %v2317 = vunpack.c.0.s8 %v2316
        %v2318 = vlaneseq
        %v2319 = vshrl.u32 %v2318, 7
        %v2320 = vsub.s32 %v2317, %v2319
        %v2321 = vrot.slane %v2313, %v2320
        %v2323 = vunpack.c.l.s4 1934713408
        %v2324 = vunpack.c.0.s8 %v2323
        %v2325 = vlaneseq
        %v2326 = vshrl.u32 %v2325, 7
        %v2327 = vsub.s32 %v2324, %v2326
        %v2328 = vrot.slane %v2314, %v2327
        %v2329 = vcombine.low %v2264, %v2280
        %v2330 = vcombine.high %v2264, %v2280
        %v2332 = vunpack.c.l.s4 1934713408
        %v2333 = vunpack.c.0.s8 %v2332
        %v2334 = vlaneseq
        %v2335 = vshrl.u32 %v2334, 7
        %v2336 = vsub.s32 %v2333, %v2335
        %v2337 = vrot.slane %v2329, %v2336
        %v2339 = vunpack.c.l.s4 1934713408
        %v2340 = vunpack.c.0.s8 %v2339
        %v2341 = vlaneseq
        %v2342 = vshrl.u32 %v2341, 7
        %v2343 = vsub.s32 %v2340, %v2342
        %v2344 = vrot.slane %v2330, %v2343
        %v2345 = vcombine.low %v2289, %v2321
        %v2346 = vcombine.high %v2289, %v2321
        %v2347 = vcombine.low %v2296, %v2328
        %v2348 = vcombine.high %v2296, %v2328
        %v2349 = vcombine.low %v2305, %v2337
        %v2350 = vcombine.high %v2305, %v2337
        %v2351 = vcombine.low %v2312, %v2344
        %v2352 = vcombine.high %v2312, %v2344
        %v2353 = vcombine.low %v2209, %v2211
        %v2354 = vcombine.high %v2209, %v2211
        %v2356 = vunpack.c.l.s4 1983009808
        %v2357 = vunpack.c.0.s8 %v2356
        %v2358 = vlaneseq
        %v2359 = vshrl.u32 %v2358, 7
        %v2360 = vsub.s32 %v2357, %v2359
        %v2361 = vrot.slane %v2353, %v2360
        %v2363 = vunpack.c.l.s4 1983009808
        %v2364 = vunpack.c.0.s8 %v2363
        %v2365 = vlaneseq
        %v2366 = vshrl.u32 %v2365, 7
        %v2367 = vsub.s32 %v2364, %v2366
        %v2368 = vrot.slane %v2354, %v2367
        %v2369 = vcombine.low %v2210, %v2212
        %v2370 = vcombine.high %v2210, %v2212
        %v2372 = vunpack.c.l.s4 1983009808
        %v2373 = vunpack.c.0.s8 %v2372
        %v2374 = vlaneseq
        %v2375 = vshrl.u32 %v2374, 7
        %v2376 = vsub.s32 %v2373, %v2375
        %v2377 = vrot.slane %v2369, %v2376
        %v2379 = vunpack.c.l.s4 1983009808
        %v2380 = vunpack.c.0.s8 %v2379
        %v2381 = vlaneseq
        %v2382 = vshrl.u32 %v2381, 7
        %v2383 = vsub.s32 %v2380, %v2382
        %v2384 = vrot.slane %v2370, %v2383
        %v2385 = vcombine.low %v2213, %v2215
        %v2386 = vcombine.high %v2213, %v2215
        %v2388 = vunpack.c.l.s4 1983009808
        %v2389 = vunpack.c.0.s8 %v2388
        %v2390 = vlaneseq
        %v2391 = vshrl.u32 %v2390, 7
        %v2392 = vsub.s32 %v2389, %v2391
        %v2393 = vrot.slane %v2385, %v2392
        %v2395 = vunpack.c.l.s4 1983009808
        %v2396 = vunpack.c.0.s8 %v2395
        %v2397 = vlaneseq
        %v2398 = vshrl.u32 %v2397, 7
        %v2399 = vsub.s32 %v2396, %v2398
        %v2400 = vrot.slane %v2386, %v2399
        %v2401 = vcombine.low %v2214, %v2216
        %v2402 = vcombine.high %v2214, %v2216
        %v2404 = vunpack.c.l.s4 1983009808
        %v2405 = vunpack.c.0.s8 %v2404
        %v2406 = vlaneseq
        %v2407 = vshrl.u32 %v2406, 7
        %v2408 = vsub.s32 %v2405, %v2407
        %v2409 = vrot.slane %v2401, %v2408
        %v2411 = vunpack.c.l.s4 1983009808
        %v2412 = vunpack.c.0.s8 %v2411
        %v2413 = vlaneseq
        %v2414 = vshrl.u32 %v2413, 7
        %v2415 = vsub.s32 %v2412, %v2414
        %v2416 = vrot.slane %v2402, %v2415
        %v2417 = vcombine.low %v2361, %v2377
        %v2418 = vcombine.high %v2361, %v2377
        %v2420 = vunpack.c.l.s4 1934713408
        %v2421 = vunpack.c.0.s8 %v2420
        %v2422 = vlaneseq
        %v2423 = vshrl.u32 %v2422, 7
        %v2424 = vsub.s32 %v2421, %v2423
        %v2425 = vrot.slane %v2417, %v2424
        %v2427 = vunpack.c.l.s4 1934713408
        %v2428 = vunpack.c.0.s8 %v2427
        %v2429 = vlaneseq
        %v2430 = vshrl.u32 %v2429, 7
        %v2431 = vsub.s32 %v2428, %v2430
        %v2432 = vrot.slane %v2418, %v2431
        %v2433 = vcombine.low %v2368, %v2384
        %v2434 = vcombine.high %v2368, %v2384
        %v2436 = vunpack.c.l.s4 1934713408
        %v2437 = vunpack.c.0.s8 %v2436
        %v2438 = vlaneseq
        %v2439 = vshrl.u32 %v2438, 7
        %v2440 = vsub.s32 %v2437, %v2439
        %v2441 = vrot.slane %v2433, %v2440
        %v2443 = vunpack.c.l.s4 1934713408
        %v2444 = vunpack.c.0.s8 %v2443
        %v2445 = vlaneseq
        %v2446 = vshrl.u32 %v2445, 7
        %v2447 = vsub.s32 %v2444, %v2446
        %v2448 = vrot.slane %v2434, %v2447
        %v2449 = vcombine.low %v2393, %v2409
        %v2450 = vcombine.high %v2393, %v2409
        %v2452 = vunpack.c.l.s4 1934713408
        %v2453 = vunpack.c.0.s8 %v2452
        %v2454 = vlaneseq
        %v2455 = vshrl.u32 %v2454, 7
        %v2456 = vsub.s32 %v2453, %v2455
        %v2457 = vrot.slane %v2449, %v2456
        %v2459 = vunpack.c.l.s4 1934713408
        %v2460 = vunpack.c.0.s8 %v2459
        %v2461 = vlaneseq
        %v2462 = vshrl.u32 %v2461, 7
        %v2463 = vsub.s32 %v2460, %v2462
        %v2464 = vrot.slane %v2450, %v2463
        %v2465 = vcombine.low %v2400, %v2416
        %v2466 = vcombine.high %v2400, %v2416
        %v2468 = vunpack.c.l.s4 1934713408
        %v2469 = vunpack.c.0.s8 %v2468
        %v2470 = vlaneseq
        %v2471 = vshrl.u32 %v2470, 7
        %v2472 = vsub.s32 %v2469, %v2471
        %v2473 = vrot.slane %v2465, %v2472
        %v2475 = vunpack.c.l.s4 1934713408
        %v2476 = vunpack.c.0.s8 %v2475
        %v2477 = vlaneseq
        %v2478 = vshrl.u32 %v2477, 7
        %v2479 = vsub.s32 %v2476, %v2478
        %v2480 = vrot.slane %v2466, %v2479
        %v2481 = vcombine.low %v2425, %v2457
        %v2482 = vcombine.high %v2425, %v2457
        %v2483 = vcombine.low %v2432, %v2464
        %v2484 = vcombine.high %v2432, %v2464
        %v2485 = vcombine.low %v2441, %v2473
        %v2486 = vcombine.high %v2441, %v2473
        %v2487 = vcombine.low %v2448, %v2480
        %v2488 = vcombine.high %v2448, %v2480
        %v2489 = vcombine.low %v2345, %v2347
        %v2490 = vcombine.high %v2345, %v2347
        %v2492 = vunpack.c.l.s4 1983009808
        %v2493 = vunpack.c.0.s8 %v2492
        %v2494 = vlaneseq
        %v2495 = vshrl.u32 %v2494, 7
        %v2496 = vsub.s32 %v2493, %v2495
        %v2497 = vrot.slane %v2489, %v2496
        %v2499 = vunpack.c.l.s4 1983009808
        %v2500 = vunpack.c.0.s8 %v2499
        %v2501 = vlaneseq
        %v2502 = vshrl.u32 %v2501, 7
        %v2503 = vsub.s32 %v2500, %v2502
        %v2504 = vrot.slane %v2490, %v2503
        %v2505 = vcombine.low %v2346, %v2348
        %v2506 = vcombine.high %v2346, %v2348
        %v2508 = vunpack.c.l.s4 1983009808
        %v2509 = vunpack.c.0.s8 %v2508
        %v2510 = vlaneseq
        %v2511 = vshrl.u32 %v2510, 7
        %v2512 = vsub.s32 %v2509, %v2511
        %v2513 = vrot.slane %v2505, %v2512
        %v2515 = vunpack.c.l.s4 1983009808
        %v2516 = vunpack.c.0.s8 %v2515
        %v2517 = vlaneseq
        %v2518 = vshrl.u32 %v2517, 7
        %v2519 = vsub.s32 %v2516, %v2518
        %v2520 = vrot.slane %v2506, %v2519
        %v2521 = vcombine.low %v2349, %v2351
        %v2522 = vcombine.high %v2349, %v2351
        %v2524 = vunpack.c.l.s4 1983009808
        %v2525 = vunpack.c.0.s8 %v2524
        %v2526 = vlaneseq
        %v2527 = vshrl.u32 %v2526, 7
        %v2528 = vsub.s32 %v2525, %v2527
        %v2529 = vrot.slane %v2521, %v2528
        %v2531 = vunpack.c.l.s4 1983009808
        %v2532 = vunpack.c.0.s8 %v2531
        %v2533 = vlaneseq
        %v2534 = vshrl.u32 %v2533, 7
        %v2535 = vsub.s32 %v2532, %v2534
        %v2536 = vrot.slane %v2522, %v2535
        %v2537 = vcombine.low %v2350, %v2352
        %v2538 = vcombine.high %v2350, %v2352
        %v2540 = vunpack.c.l.s4 1983009808
        %v2541 = vunpack.c.0.s8 %v2540
        %v2542 = vlaneseq
        %v2543 = vshrl.u32 %v2542, 7
        %v2544 = vsub.s32 %v2541, %v2543
        %v2545 = vrot.slane %v2537, %v2544
        %v2547 = vunpack.c.l.s4 1983009808
        %v2548 = vunpack.c.0.s8 %v2547
        %v2549 = vlaneseq
        %v2550 = vshrl.u32 %v2549, 7
        %v2551 = vsub.s32 %v2548, %v2550
        %v2552 = vrot.slane %v2538, %v2551
        %v2553 = vcombine.low %v2497, %v2513
        %v2554 = vcombine.high %v2497, %v2513
        %v2556 = vunpack.c.l.s4 1934713408
        %v2557 = vunpack.c.0.s8 %v2556
        %v2558 = vlaneseq
        %v2559 = vshrl.u32 %v2558, 7
        %v2560 = vsub.s32 %v2557, %v2559
        %v2561 = vrot.slane %v2553, %v2560
        %v2563 = vunpack.c.l.s4 1934713408
        %v2564 = vunpack.c.0.s8 %v2563
        %v2565 = vlaneseq
        %v2566 = vshrl.u32 %v2565, 7
        %v2567 = vsub.s32 %v2564, %v2566
        %v2568 = vrot.slane %v2554, %v2567
        %v2569 = vcombine.low %v2504, %v2520
        %v2570 = vcombine.high %v2504, %v2520
        %v2572 = vunpack.c.l.s4 1934713408
        %v2573 = vunpack.c.0.s8 %v2572
        %v2574 = vlaneseq
        %v2575 = vshrl.u32 %v2574, 7
        %v2576 = vsub.s32 %v2573, %v2575
        %v2577 = vrot.slane %v2569, %v2576
        %v2579 = vunpack.c.l.s4 1934713408
        %v2580 = vunpack.c.0.s8 %v2579
        %v2581 = vlaneseq
        %v2582 = vshrl.u32 %v2581, 7
        %v2583 = vsub.s32 %v2580, %v2582
        %v2584 = vrot.slane %v2570, %v2583
        %v2585 = vcombine.low %v2529, %v2545
        %v2586 = vcombine.high %v2529, %v2545
        %v2588 = vunpack.c.l.s4 1934713408
        %v2589 = vunpack.c.0.s8 %v2588
        %v2590 = vlaneseq
        %v2591 = vshrl.u32 %v2590, 7
        %v2592 = vsub.s32 %v2589, %v2591
        %v2593 = vrot.slane %v2585, %v2592
        %v2595 = vunpack.c.l.s4 1934713408
        %v2596 = vunpack.c.0.s8 %v2595
        %v2597 = vlaneseq
        %v2598 = vshrl.u32 %v2597, 7
        %v2599 = vsub.s32 %v2596, %v2598
        %v2600 = vrot.slane %v2586, %v2599
        %v2601 = vcombine.low %v2536, %v2552
        %v2602 = vcombine.high %v2536, %v2552
        %v2604 = vunpack.c.l.s4 1934713408
        %v2605 = vunpack.c.0.s8 %v2604
        %v2606 = vlaneseq
        %v2607 = vshrl.u32 %v2606, 7
        %v2608 = vsub.s32 %v2605, %v2607
        %v2609 = vrot.slane %v2601, %v2608
        %v2611 = vunpack.c.l.s4 1934713408
        %v2612 = vunpack.c.0.s8 %v2611
        %v2613 = vlaneseq
        %v2614 = vshrl.u32 %v2613, 7
        %v2615 = vsub.s32 %v2612, %v2614
        %v2616 = vrot.slane %v2602, %v2615
        %v2617 = vcombine.low %v2561, %v2593
        %v2618 = vcombine.high %v2561, %v2593
        %v2619 = vcombine.low %v2568, %v2600
        %v2620 = vcombine.high %v2568, %v2600
        %v2621 = vcombine.low %v2577, %v2609
        %v2622 = vcombine.high %v2577, %v2609
        %v2623 = vcombine.low %v2584, %v2616
        %v2624 = vcombine.high %v2584, %v2616
        %v2625 = vpack.c.bf16 %v2481, %v2481
        %v2626 = vpack.c.bf16 %v2482, %v2482
        %v2627 = vpack.c.bf16 %v2483, %v2483
        %v2628 = vpack.c.bf16 %v2484, %v2484
        %v2629 = vpack.c.bf16 %v2485, %v2485
        %v2630 = vpack.c.bf16 %v2486, %v2486
        %v2631 = vpack.c.bf16 %v2487, %v2487
        %v2632 = vpack.c.bf16 %v2488, %v2488
        %v2633 = vpack.c.bf16 %v2617, %v2617
        %v2634 = vpack.c.bf16 %v2618, %v2618
        %v2635 = vpack.c.bf16 %v2619, %v2619
        %v2636 = vpack.c.bf16 %v2620, %v2620
        %v2637 = vpack.c.bf16 %v2621, %v2621
        %v2638 = vpack.c.bf16 %v2622, %v2622
        %v2639 = vpack.c.bf16 %v2623, %v2623
        %v2640 = vpack.c.bf16 %v2624, %v2624
        %vm2641 = vcmask 130048
        %v2643 = vsel %vm2641, %v1417, 0
        %v2646 = vsel %vm2641, %v2021, 0
        %2648 = vmatprep.subr.bf16.mxu0 0
        %2649 = vmatpush1.bf16.xpose.msra.mxu0 0
        %2650 = vmatprep.subr.bf16.mxu0 0
        %2651 = vmatpush1.bf16.xpose.msra.mxu0 0
        %2652 = vmatprep.subr.bf16.mxu0 0
        %2653 = vmatpush1.bf16.xpose.msra.mxu0 0
        %2654 = vmatprep.subr.bf16.mxu0 0
        %2655 = vmatpush1.bf16.xpose.msra.mxu0 0
        %2656 = vmatprep.subr.bf16.mxu0 0
        %2657 = vmatpush1.bf16.xpose.msra.mxu0 0
        %2658 = vmatprep.subr.bf16.mxu0 0
        %2659 = vmatpush1.bf16.xpose.msra.mxu0 0
        %2660 = vmatprep.subr.bf16.mxu0 0
        %2661 = vmatpush1.bf16.xpose.msra.mxu0 0
        %2662 = vmatprep.subr.bf16.mxu0 0
        %2663 = vmatpush1.bf16.xpose.msra.mxu0 %v2646
        %2664 = vmatprep.subr.bf16.mxu0 0
        %2665 = vmatpush2.bf16.xpose.msra.mxu0 0
        %2666 = vmatprep.subr.bf16.mxu0 0
        %2667 = vmatpush2.bf16.xpose.msra.mxu0 0
        %2668 = vmatprep.subr.bf16.mxu0 0
        %2669 = vmatpush2.bf16.xpose.msra.mxu0 0
        %2670 = vmatprep.subr.bf16.mxu0 0
        %2671 = vmatpush2.bf16.xpose.msra.mxu0 0
        %2672 = vmatprep.subr.bf16.mxu0 0
        %2673 = vmatpush2.bf16.xpose.msra.mxu0 0
        %2674 = vmatprep.subr.bf16.mxu0 0
        %2675 = vmatpush2.bf16.xpose.msra.mxu0 0
        %2676 = vmatprep.subr.bf16.mxu0 0
        %2677 = vmatpush2.bf16.xpose.msra.mxu0 0
        %2678 = vmatprep.subr.bf16.mxu0 0
        %2679 = vmatpush2.bf16.xpose.msra.mxu0 0
        %2680 = vmatprep.mubr.bf16.mxu0 0
        %2681 = vmatmul.mubr.bf16.gmra.mxu0 %v2643
        %v2682 = vpop.f32.mrf.mxu0
        %v2683 = vadd.f32 0.0, %v2682
        %v2684 = vpop.f32.mrf.mxu0
        %v2685 = vpop.f32.mrf.mxu0
        %v2686 = vpop.f32.mrf.mxu0
        %2687 = vdwg.mxu0
        %v2689 = vsel %vm2641, %v1418, 0
        %v2692 = vsel %vm2641, %v2022, 0
        %2694 = vmatprep.subr.bf16.mxu0 0
        %2695 = vmatpush1.bf16.xpose.msra.mxu0 0
        %2696 = vmatprep.subr.bf16.mxu0 0
        %2697 = vmatpush1.bf16.xpose.msra.mxu0 0
        %2698 = vmatprep.subr.bf16.mxu0 0
        %2699 = vmatpush1.bf16.xpose.msra.mxu0 0
        %2700 = vmatprep.subr.bf16.mxu0 0
        %2701 = vmatpush1.bf16.xpose.msra.mxu0 0
        %2702 = vmatprep.subr.bf16.mxu0 0
        %2703 = vmatpush1.bf16.xpose.msra.mxu0 0
        %2704 = vmatprep.subr.bf16.mxu0 0
        %2705 = vmatpush1.bf16.xpose.msra.mxu0 0
        %2706 = vmatprep.subr.bf16.mxu0 0
        %2707 = vmatpush1.bf16.xpose.msra.mxu0 0
        %2708 = vmatprep.subr.bf16.mxu0 0
        %2709 = vmatpush1.bf16.xpose.msra.mxu0 %v2692
        %2710 = vmatprep.subr.bf16.mxu0 0
        %2711 = vmatpush2.bf16.xpose.msra.mxu0 0
        %2712 = vmatprep.subr.bf16.mxu0 0
        %2713 = vmatpush2.bf16.xpose.msra.mxu0 0
        %2714 = vmatprep.subr.bf16.mxu0 0
        %2715 = vmatpush2.bf16.xpose.msra.mxu0 0
        %2716 = vmatprep.subr.bf16.mxu0 0
        %2717 = vmatpush2.bf16.xpose.msra.mxu0 0
        %2718 = vmatprep.subr.bf16.mxu0 0
        %2719 = vmatpush2.bf16.xpose.msra.mxu0 0
        %2720 = vmatprep.subr.bf16.mxu0 0
        %2721 = vmatpush2.bf16.xpose.msra.mxu0 0
        %2722 = vmatprep.subr.bf16.mxu0 0
        %2723 = vmatpush2.bf16.xpose.msra.mxu0 0
        %2724 = vmatprep.subr.bf16.mxu0 0
        %2725 = vmatpush2.bf16.xpose.msra.mxu0 0
        %2726 = vmatprep.mubr.bf16.mxu0 0
        %2727 = vmatmul.mubr.bf16.gmra.mxu0 %v2689
        %v2728 = vpop.f32.mrf.mxu0
        %v2729 = vadd.f32 0.0, %v2728
        %v2730 = vpop.f32.mrf.mxu0
        %v2731 = vpop.f32.mrf.mxu0
        %v2732 = vpop.f32.mrf.mxu0
        %2733 = vdwg.mxu0
        %v2735 = vsel %vm2641, %v1419, 0
        %v2738 = vsel %vm2641, %v2023, 0
        %2740 = vmatprep.subr.bf16.mxu0 0
        %2741 = vmatpush1.bf16.xpose.msra.mxu0 0
        %2742 = vmatprep.subr.bf16.mxu0 0
        %2743 = vmatpush1.bf16.xpose.msra.mxu0 0
        %2744 = vmatprep.subr.bf16.mxu0 0
        %2745 = vmatpush1.bf16.xpose.msra.mxu0 0
        %2746 = vmatprep.subr.bf16.mxu0 0
        %2747 = vmatpush1.bf16.xpose.msra.mxu0 0
        %2748 = vmatprep.subr.bf16.mxu0 0
        %2749 = vmatpush1.bf16.xpose.msra.mxu0 0
        %2750 = vmatprep.subr.bf16.mxu0 0
        %2751 = vmatpush1.bf16.xpose.msra.mxu0 0
        %2752 = vmatprep.subr.bf16.mxu0 0
        %2753 = vmatpush1.bf16.xpose.msra.mxu0 0
        %2754 = vmatprep.subr.bf16.mxu0 0
        %2755 = vmatpush1.bf16.xpose.msra.mxu0 %v2738
        %2756 = vmatprep.subr.bf16.mxu0 0
        %2757 = vmatpush2.bf16.xpose.msra.mxu0 0
        %2758 = vmatprep.subr.bf16.mxu0 0
        %2759 = vmatpush2.bf16.xpose.msra.mxu0 0
        %2760 = vmatprep.subr.bf16.mxu0 0
        %2761 = vmatpush2.bf16.xpose.msra.mxu0 0
        %2762 = vmatprep.subr.bf16.mxu0 0
        %2763 = vmatpush2.bf16.xpose.msra.mxu0 0
        %2764 = vmatprep.subr.bf16.mxu0 0
        %2765 = vmatpush2.bf16.xpose.msra.mxu0 0
        %2766 = vmatprep.subr.bf16.mxu0 0
        %2767 = vmatpush2.bf16.xpose.msra.mxu0 0
        %2768 = vmatprep.subr.bf16.mxu0 0
        %2769 = vmatpush2.bf16.xpose.msra.mxu0 0
        %2770 = vmatprep.subr.bf16.mxu0 0
        %2771 = vmatpush2.bf16.xpose.msra.mxu0 0
        %2772 = vmatprep.mubr.bf16.mxu0 0
        %2773 = vmatmul.mubr.bf16.gmra.mxu0 %v2735
        %v2774 = vpop.f32.mrf.mxu0
        %v2775 = vadd.f32 0.0, %v2774
        %v2776 = vpop.f32.mrf.mxu0
        %v2777 = vpop.f32.mrf.mxu0
        %v2778 = vpop.f32.mrf.mxu0
        %2779 = vdwg.mxu0
        %v2781 = vsel %vm2641, %v1420, 0
        %v2784 = vsel %vm2641, %v2024, 0
        %2786 = vmatprep.subr.bf16.mxu0 0
        %2787 = vmatpush1.bf16.xpose.msra.mxu0 0
        %2788 = vmatprep.subr.bf16.mxu0 0
        %2789 = vmatpush1.bf16.xpose.msra.mxu0 0
        %2790 = vmatprep.subr.bf16.mxu0 0
        %2791 = vmatpush1.bf16.xpose.msra.mxu0 0
        %2792 = vmatprep.subr.bf16.mxu0 0
        %2793 = vmatpush1.bf16.xpose.msra.mxu0 0
        %2794 = vmatprep.subr.bf16.mxu0 0
        %2795 = vmatpush1.bf16.xpose.msra.mxu0 0
        %2796 = vmatprep.subr.bf16.mxu0 0
        %2797 = vmatpush1.bf16.xpose.msra.mxu0 0
        %2798 = vmatprep.subr.bf16.mxu0 0
        %2799 = vmatpush1.bf16.xpose.msra.mxu0 0
        %2800 = vmatprep.subr.bf16.mxu0 0
        %2801 = vmatpush1.bf16.xpose.msra.mxu0 %v2784
        %2802 = vmatprep.subr.bf16.mxu0 0
        %2803 = vmatpush2.bf16.xpose.msra.mxu0 0
        %2804 = vmatprep.subr.bf16.mxu0 0
        %2805 = vmatpush2.bf16.xpose.msra.mxu0 0
        %2806 = vmatprep.subr.bf16.mxu0 0
        %2807 = vmatpush2.bf16.xpose.msra.mxu0 0
        %2808 = vmatprep.subr.bf16.mxu0 0
        %2809 = vmatpush2.bf16.xpose.msra.mxu0 0
        %2810 = vmatprep.subr.bf16.mxu0 0
        %2811 = vmatpush2.bf16.xpose.msra.mxu0 0
        %2812 = vmatprep.subr.bf16.mxu0 0
        %2813 = vmatpush2.bf16.xpose.msra.mxu0 0
        %2814 = vmatprep.subr.bf16.mxu0 0
        %2815 = vmatpush2.bf16.xpose.msra.mxu0 0
        %2816 = vmatprep.subr.bf16.mxu0 0
        %2817 = vmatpush2.bf16.xpose.msra.mxu0 0
        %2818 = vmatprep.mubr.bf16.mxu0 0
        %2819 = vmatmul.mubr.bf16.gmra.mxu0 %v2781
        %v2820 = vpop.f32.mrf.mxu0
        %v2821 = vadd.f32 0.0, %v2820
        %v2822 = vpop.f32.mrf.mxu0
        %v2823 = vpop.f32.mrf.mxu0
        %v2824 = vpop.f32.mrf.mxu0
        %2825 = vdwg.mxu0
        %v2827 = vsel %vm2641, %v1421, 0
        %v2830 = vsel %vm2641, %v2025, 0
        %2832 = vmatprep.subr.bf16.mxu0 0
        %2833 = vmatpush1.bf16.xpose.msra.mxu0 0
        %2834 = vmatprep.subr.bf16.mxu0 0
        %2835 = vmatpush1.bf16.xpose.msra.mxu0 0
        %2836 = vmatprep.subr.bf16.mxu0 0
        %2837 = vmatpush1.bf16.xpose.msra.mxu0 0
        %2838 = vmatprep.subr.bf16.mxu0 0
        %2839 = vmatpush1.bf16.xpose.msra.mxu0 0
        %2840 = vmatprep.subr.bf16.mxu0 0
        %2841 = vmatpush1.bf16.xpose.msra.mxu0 0
        %2842 = vmatprep.subr.bf16.mxu0 0
        %2843 = vmatpush1.bf16.xpose.msra.mxu0 0
        %2844 = vmatprep.subr.bf16.mxu0 0
        %2845 = vmatpush1.bf16.xpose.msra.mxu0 0
        %2846 = vmatprep.subr.bf16.mxu0 0
        %2847 = vmatpush1.bf16.xpose.msra.mxu0 %v2830
        %2848 = vmatprep.subr.bf16.mxu0 0
        %2849 = vmatpush2.bf16.xpose.msra.mxu0 0
        %2850 = vmatprep.subr.bf16.mxu0 0
        %2851 = vmatpush2.bf16.xpose.msra.mxu0 0
        %2852 = vmatprep.subr.bf16.mxu0 0
        %2853 = vmatpush2.bf16.xpose.msra.mxu0 0
        %2854 = vmatprep.subr.bf16.mxu0 0
        %2855 = vmatpush2.bf16.xpose.msra.mxu0 0
        %2856 = vmatprep.subr.bf16.mxu0 0
        %2857 = vmatpush2.bf16.xpose.msra.mxu0 0
        %2858 = vmatprep.subr.bf16.mxu0 0
        %2859 = vmatpush2.bf16.xpose.msra.mxu0 0
        %2860 = vmatprep.subr.bf16.mxu0 0
        %2861 = vmatpush2.bf16.xpose.msra.mxu0 0
        %2862 = vmatprep.subr.bf16.mxu0 0
        %2863 = vmatpush2.bf16.xpose.msra.mxu0 0
        %2864 = vmatprep.mubr.bf16.mxu0 0
        %2865 = vmatmul.mubr.bf16.gmra.mxu0 %v2827
        %v2866 = vpop.f32.mrf.mxu0
        %v2867 = vadd.f32 0.0, %v2866
        %v2868 = vpop.f32.mrf.mxu0
        %v2869 = vpop.f32.mrf.mxu0
        %v2870 = vpop.f32.mrf.mxu0
        %2871 = vdwg.mxu0
        %v2873 = vsel %vm2641, %v1422, 0
        %v2876 = vsel %vm2641, %v2026, 0
        %2878 = vmatprep.subr.bf16.mxu0 0
        %2879 = vmatpush1.bf16.xpose.msra.mxu0 0
        %2880 = vmatprep.subr.bf16.mxu0 0
        %2881 = vmatpush1.bf16.xpose.msra.mxu0 0
        %2882 = vmatprep.subr.bf16.mxu0 0
        %2883 = vmatpush1.bf16.xpose.msra.mxu0 0
        %2884 = vmatprep.subr.bf16.mxu0 0
        %2885 = vmatpush1.bf16.xpose.msra.mxu0 0
        %2886 = vmatprep.subr.bf16.mxu0 0
        %2887 = vmatpush1.bf16.xpose.msra.mxu0 0
        %2888 = vmatprep.subr.bf16.mxu0 0
        %2889 = vmatpush1.bf16.xpose.msra.mxu0 0
        %2890 = vmatprep.subr.bf16.mxu0 0
        %2891 = vmatpush1.bf16.xpose.msra.mxu0 0
        %2892 = vmatprep.subr.bf16.mxu0 0
        %2893 = vmatpush1.bf16.xpose.msra.mxu0 %v2876
        %2894 = vmatprep.subr.bf16.mxu0 0
        %2895 = vmatpush2.bf16.xpose.msra.mxu0 0
        %2896 = vmatprep.subr.bf16.mxu0 0
        %2897 = vmatpush2.bf16.xpose.msra.mxu0 0
        %2898 = vmatprep.subr.bf16.mxu0 0
        %2899 = vmatpush2.bf16.xpose.msra.mxu0 0
        %2900 = vmatprep.subr.bf16.mxu0 0
        %2901 = vmatpush2.bf16.xpose.msra.mxu0 0
        %2902 = vmatprep.subr.bf16.mxu0 0
        %2903 = vmatpush2.bf16.xpose.msra.mxu0 0
        %2904 = vmatprep.subr.bf16.mxu0 0
        %2905 = vmatpush2.bf16.xpose.msra.mxu0 0
        %2906 = vmatprep.subr.bf16.mxu0 0
        %2907 = vmatpush2.bf16.xpose.msra.mxu0 0
        %2908 = vmatprep.subr.bf16.mxu0 0
        %2909 = vmatpush2.bf16.xpose.msra.mxu0 0
        %2910 = vmatprep.mubr.bf16.mxu0 0
        %2911 = vmatmul.mubr.bf16.gmra.mxu0 %v2873
        %v2912 = vpop.f32.mrf.mxu0
        %v2913 = vadd.f32 0.0, %v2912
        %v2914 = vpop.f32.mrf.mxu0
        %v2915 = vpop.f32.mrf.mxu0
        %v2916 = vpop.f32.mrf.mxu0
        %2917 = vdwg.mxu0
        %v2919 = vsel %vm2641, %v1423, 0
        %v2922 = vsel %vm2641, %v2027, 0
        %2924 = vmatprep.subr.bf16.mxu0 0
        %2925 = vmatpush1.bf16.xpose.msra.mxu0 0
        %2926 = vmatprep.subr.bf16.mxu0 0
        %2927 = vmatpush1.bf16.xpose.msra.mxu0 0
        %2928 = vmatprep.subr.bf16.mxu0 0
        %2929 = vmatpush1.bf16.xpose.msra.mxu0 0
        %2930 = vmatprep.subr.bf16.mxu0 0
        %2931 = vmatpush1.bf16.xpose.msra.mxu0 0
        %2932 = vmatprep.subr.bf16.mxu0 0
        %2933 = vmatpush1.bf16.xpose.msra.mxu0 0
        %2934 = vmatprep.subr.bf16.mxu0 0
        %2935 = vmatpush1.bf16.xpose.msra.mxu0 0
        %2936 = vmatprep.subr.bf16.mxu0 0
        %2937 = vmatpush1.bf16.xpose.msra.mxu0 0
        %2938 = vmatprep.subr.bf16.mxu0 0
        %2939 = vmatpush1.bf16.xpose.msra.mxu0 %v2922
        %2940 = vmatprep.subr.bf16.mxu0 0
        %2941 = vmatpush2.bf16.xpose.msra.mxu0 0
        %2942 = vmatprep.subr.bf16.mxu0 0
        %2943 = vmatpush2.bf16.xpose.msra.mxu0 0
        %2944 = vmatprep.subr.bf16.mxu0 0
        %2945 = vmatpush2.bf16.xpose.msra.mxu0 0
        %2946 = vmatprep.subr.bf16.mxu0 0
        %2947 = vmatpush2.bf16.xpose.msra.mxu0 0
        %2948 = vmatprep.subr.bf16.mxu0 0
        %2949 = vmatpush2.bf16.xpose.msra.mxu0 0
        %2950 = vmatprep.subr.bf16.mxu0 0
        %2951 = vmatpush2.bf16.xpose.msra.mxu0 0
        %2952 = vmatprep.subr.bf16.mxu0 0
        %2953 = vmatpush2.bf16.xpose.msra.mxu0 0
        %2954 = vmatprep.subr.bf16.mxu0 0
        %2955 = vmatpush2.bf16.xpose.msra.mxu0 0
        %2956 = vmatprep.mubr.bf16.mxu0 0
        %2957 = vmatmul.mubr.bf16.gmra.mxu0 %v2919
        %v2958 = vpop.f32.mrf.mxu0
        %v2959 = vadd.f32 0.0, %v2958
        %v2960 = vpop.f32.mrf.mxu0
        %v2961 = vpop.f32.mrf.mxu0
        %v2962 = vpop.f32.mrf.mxu0
        %2963 = vdwg.mxu0
        %v2965 = vsel %vm2641, %v1424, 0
        %v2968 = vsel %vm2641, %v2028, 0
        %2970 = vmatprep.subr.bf16.mxu0 0
        %2971 = vmatpush1.bf16.xpose.msra.mxu0 0
        %2972 = vmatprep.subr.bf16.mxu0 0
        %2973 = vmatpush1.bf16.xpose.msra.mxu0 0
        %2974 = vmatprep.subr.bf16.mxu0 0
        %2975 = vmatpush1.bf16.xpose.msra.mxu0 0
        %2976 = vmatprep.subr.bf16.mxu0 0
        %2977 = vmatpush1.bf16.xpose.msra.mxu0 0
        %2978 = vmatprep.subr.bf16.mxu0 0
        %2979 = vmatpush1.bf16.xpose.msra.mxu0 0
        %2980 = vmatprep.subr.bf16.mxu0 0
        %2981 = vmatpush1.bf16.xpose.msra.mxu0 0
        %2982 = vmatprep.subr.bf16.mxu0 0
        %2983 = vmatpush1.bf16.xpose.msra.mxu0 0
        %2984 = vmatprep.subr.bf16.mxu0 0
        %2985 = vmatpush1.bf16.xpose.msra.mxu0 %v2968
        %2986 = vmatprep.subr.bf16.mxu0 0
        %2987 = vmatpush2.bf16.xpose.msra.mxu0 0
        %2988 = vmatprep.subr.bf16.mxu0 0
        %2989 = vmatpush2.bf16.xpose.msra.mxu0 0
        %2990 = vmatprep.subr.bf16.mxu0 0
        %2991 = vmatpush2.bf16.xpose.msra.mxu0 0
        %2992 = vmatprep.subr.bf16.mxu0 0
        %2993 = vmatpush2.bf16.xpose.msra.mxu0 0
        %2994 = vmatprep.subr.bf16.mxu0 0
        %2995 = vmatpush2.bf16.xpose.msra.mxu0 0
        %2996 = vmatprep.subr.bf16.mxu0 0
        %2997 = vmatpush2.bf16.xpose.msra.mxu0 0
        %2998 = vmatprep.subr.bf16.mxu0 0
        %2999 = vmatpush2.bf16.xpose.msra.mxu0 0
        %3000 = vmatprep.subr.bf16.mxu0 0
        %3001 = vmatpush2.bf16.xpose.msra.mxu0 0
        %3002 = vmatprep.mubr.bf16.mxu0 0
        %3003 = vmatmul.mubr.bf16.gmra.mxu0 %v2965
        %v3004 = vpop.f32.mrf.mxu0
        %v3005 = vadd.f32 0.0, %v3004
        %v3006 = vpop.f32.mrf.mxu0
        %v3007 = vpop.f32.mrf.mxu0
        %v3008 = vpop.f32.mrf.mxu0
        %3009 = vdwg.mxu0
        %v3011 = vsel %vm2641, %v1425, 0
        %v3014 = vsel %vm2641, %v2029, 0
        %3016 = vmatprep.subr.bf16.mxu0 0
        %3017 = vmatpush1.bf16.xpose.msra.mxu0 0
        %3018 = vmatprep.subr.bf16.mxu0 0
        %3019 = vmatpush1.bf16.xpose.msra.mxu0 0
        %3020 = vmatprep.subr.bf16.mxu0 0
        %3021 = vmatpush1.bf16.xpose.msra.mxu0 0
        %3022 = vmatprep.subr.bf16.mxu0 0
        %3023 = vmatpush1.bf16.xpose.msra.mxu0 0
        %3024 = vmatprep.subr.bf16.mxu0 0
        %3025 = vmatpush1.bf16.xpose.msra.mxu0 0
        %3026 = vmatprep.subr.bf16.mxu0 0
        %3027 = vmatpush1.bf16.xpose.msra.mxu0 0
        %3028 = vmatprep.subr.bf16.mxu0 0
        %3029 = vmatpush1.bf16.xpose.msra.mxu0 0
        %3030 = vmatprep.subr.bf16.mxu0 0
        %3031 = vmatpush1.bf16.xpose.msra.mxu0 %v3014
        %3032 = vmatprep.subr.bf16.mxu0 0
        %3033 = vmatpush2.bf16.xpose.msra.mxu0 0
        %3034 = vmatprep.subr.bf16.mxu0 0
        %3035 = vmatpush2.bf16.xpose.msra.mxu0 0
        %3036 = vmatprep.subr.bf16.mxu0 0
        %3037 = vmatpush2.bf16.xpose.msra.mxu0 0
        %3038 = vmatprep.subr.bf16.mxu0 0
        %3039 = vmatpush2.bf16.xpose.msra.mxu0 0
        %3040 = vmatprep.subr.bf16.mxu0 0
        %3041 = vmatpush2.bf16.xpose.msra.mxu0 0
        %3042 = vmatprep.subr.bf16.mxu0 0
        %3043 = vmatpush2.bf16.xpose.msra.mxu0 0
        %3044 = vmatprep.subr.bf16.mxu0 0
        %3045 = vmatpush2.bf16.xpose.msra.mxu0 0
        %3046 = vmatprep.subr.bf16.mxu0 0
        %3047 = vmatpush2.bf16.xpose.msra.mxu0 0
        %3048 = vmatprep.mubr.bf16.mxu0 0
        %3049 = vmatmul.mubr.bf16.gmra.mxu0 %v3011
        %v3050 = vpop.f32.mrf.mxu0
        %v3051 = vadd.f32 0.0, %v3050
        %v3052 = vpop.f32.mrf.mxu0
        %v3053 = vpop.f32.mrf.mxu0
        %v3054 = vpop.f32.mrf.mxu0
        %3055 = vdwg.mxu0
        %v3057 = vsel %vm2641, %v1426, 0
        %v3060 = vsel %vm2641, %v2030, 0
        %3062 = vmatprep.subr.bf16.mxu0 0
        %3063 = vmatpush1.bf16.xpose.msra.mxu0 0
        %3064 = vmatprep.subr.bf16.mxu0 0
        %3065 = vmatpush1.bf16.xpose.msra.mxu0 0
        %3066 = vmatprep.subr.bf16.mxu0 0
        %3067 = vmatpush1.bf16.xpose.msra.mxu0 0
        %3068 = vmatprep.subr.bf16.mxu0 0
        %3069 = vmatpush1.bf16.xpose.msra.mxu0 0
        %3070 = vmatprep.subr.bf16.mxu0 0
        %3071 = vmatpush1.bf16.xpose.msra.mxu0 0
        %3072 = vmatprep.subr.bf16.mxu0 0
        %3073 = vmatpush1.bf16.xpose.msra.mxu0 0
        %3074 = vmatprep.subr.bf16.mxu0 0
        %3075 = vmatpush1.bf16.xpose.msra.mxu0 0
        %3076 = vmatprep.subr.bf16.mxu0 0
        %3077 = vmatpush1.bf16.xpose.msra.mxu0 %v3060
        %3078 = vmatprep.subr.bf16.mxu0 0
        %3079 = vmatpush2.bf16.xpose.msra.mxu0 0
        %3080 = vmatprep.subr.bf16.mxu0 0
        %3081 = vmatpush2.bf16.xpose.msra.mxu0 0
        %3082 = vmatprep.subr.bf16.mxu0 0
        %3083 = vmatpush2.bf16.xpose.msra.mxu0 0
        %3084 = vmatprep.subr.bf16.mxu0 0
        %3085 = vmatpush2.bf16.xpose.msra.mxu0 0
        %3086 = vmatprep.subr.bf16.mxu0 0
        %3087 = vmatpush2.bf16.xpose.msra.mxu0 0
        %3088 = vmatprep.subr.bf16.mxu0 0
        %3089 = vmatpush2.bf16.xpose.msra.mxu0 0
        %3090 = vmatprep.subr.bf16.mxu0 0
        %3091 = vmatpush2.bf16.xpose.msra.mxu0 0
        %3092 = vmatprep.subr.bf16.mxu0 0
        %3093 = vmatpush2.bf16.xpose.msra.mxu0 0
        %3094 = vmatprep.mubr.bf16.mxu0 0
        %3095 = vmatmul.mubr.bf16.gmra.mxu0 %v3057
        %v3096 = vpop.f32.mrf.mxu0
        %v3097 = vadd.f32 0.0, %v3096
        %v3098 = vpop.f32.mrf.mxu0
        %v3099 = vpop.f32.mrf.mxu0
        %v3100 = vpop.f32.mrf.mxu0
        %3101 = vdwg.mxu0
        %v3103 = vsel %vm2641, %v1427, 0
        %v3106 = vsel %vm2641, %v2031, 0
        %3108 = vmatprep.subr.bf16.mxu0 0
        %3109 = vmatpush1.bf16.xpose.msra.mxu0 0
        %3110 = vmatprep.subr.bf16.mxu0 0
        %3111 = vmatpush1.bf16.xpose.msra.mxu0 0
        %3112 = vmatprep.subr.bf16.mxu0 0
        %3113 = vmatpush1.bf16.xpose.msra.mxu0 0
        %3114 = vmatprep.subr.bf16.mxu0 0
        %3115 = vmatpush1.bf16.xpose.msra.mxu0 0
        %3116 = vmatprep.subr.bf16.mxu0 0
        %3117 = vmatpush1.bf16.xpose.msra.mxu0 0
        %3118 = vmatprep.subr.bf16.mxu0 0
        %3119 = vmatpush1.bf16.xpose.msra.mxu0 0
        %3120 = vmatprep.subr.bf16.mxu0 0
        %3121 = vmatpush1.bf16.xpose.msra.mxu0 0
        %3122 = vmatprep.subr.bf16.mxu0 0
        %3123 = vmatpush1.bf16.xpose.msra.mxu0 %v3106
        %3124 = vmatprep.subr.bf16.mxu0 0
        %3125 = vmatpush2.bf16.xpose.msra.mxu0 0
        %3126 = vmatprep.subr.bf16.mxu0 0
        %3127 = vmatpush2.bf16.xpose.msra.mxu0 0
        %3128 = vmatprep.subr.bf16.mxu0 0
        %3129 = vmatpush2.bf16.xpose.msra.mxu0 0
        %3130 = vmatprep.subr.bf16.mxu0 0
        %3131 = vmatpush2.bf16.xpose.msra.mxu0 0
        %3132 = vmatprep.subr.bf16.mxu0 0
        %3133 = vmatpush2.bf16.xpose.msra.mxu0 0
        %3134 = vmatprep.subr.bf16.mxu0 0
        %3135 = vmatpush2.bf16.xpose.msra.mxu0 0
        %3136 = vmatprep.subr.bf16.mxu0 0
        %3137 = vmatpush2.bf16.xpose.msra.mxu0 0
        %3138 = vmatprep.subr.bf16.mxu0 0
        %3139 = vmatpush2.bf16.xpose.msra.mxu0 0
        %3140 = vmatprep.mubr.bf16.mxu0 0
        %3141 = vmatmul.mubr.bf16.gmra.mxu0 %v3103
        %v3142 = vpop.f32.mrf.mxu0
        %v3143 = vadd.f32 0.0, %v3142
        %v3144 = vpop.f32.mrf.mxu0
        %v3145 = vpop.f32.mrf.mxu0
        %v3146 = vpop.f32.mrf.mxu0
        %3147 = vdwg.mxu0
        %v3149 = vsel %vm2641, %v1428, 0
        %v3152 = vsel %vm2641, %v2032, 0
        %3154 = vmatprep.subr.bf16.mxu0 0
        %3155 = vmatpush1.bf16.xpose.msra.mxu0 0
        %3156 = vmatprep.subr.bf16.mxu0 0
        %3157 = vmatpush1.bf16.xpose.msra.mxu0 0
        %3158 = vmatprep.subr.bf16.mxu0 0
        %3159 = vmatpush1.bf16.xpose.msra.mxu0 0
        %3160 = vmatprep.subr.bf16.mxu0 0
        %3161 = vmatpush1.bf16.xpose.msra.mxu0 0
        %3162 = vmatprep.subr.bf16.mxu0 0
        %3163 = vmatpush1.bf16.xpose.msra.mxu0 0
        %3164 = vmatprep.subr.bf16.mxu0 0
        %3165 = vmatpush1.bf16.xpose.msra.mxu0 0
        %3166 = vmatprep.subr.bf16.mxu0 0
        %3167 = vmatpush1.bf16.xpose.msra.mxu0 0
        %3168 = vmatprep.subr.bf16.mxu0 0
        %3169 = vmatpush1.bf16.xpose.msra.mxu0 %v3152
        %3170 = vmatprep.subr.bf16.mxu0 0
        %3171 = vmatpush2.bf16.xpose.msra.mxu0 0
        %3172 = vmatprep.subr.bf16.mxu0 0
        %3173 = vmatpush2.bf16.xpose.msra.mxu0 0
        %3174 = vmatprep.subr.bf16.mxu0 0
        %3175 = vmatpush2.bf16.xpose.msra.mxu0 0
        %3176 = vmatprep.subr.bf16.mxu0 0
        %3177 = vmatpush2.bf16.xpose.msra.mxu0 0
        %3178 = vmatprep.subr.bf16.mxu0 0
        %3179 = vmatpush2.bf16.xpose.msra.mxu0 0
        %3180 = vmatprep.subr.bf16.mxu0 0
        %3181 = vmatpush2.bf16.xpose.msra.mxu0 0
        %3182 = vmatprep.subr.bf16.mxu0 0
        %3183 = vmatpush2.bf16.xpose.msra.mxu0 0
        %3184 = vmatprep.subr.bf16.mxu0 0
        %3185 = vmatpush2.bf16.xpose.msra.mxu0 0
        %3186 = vmatprep.mubr.bf16.mxu0 0
        %3187 = vmatmul.mubr.bf16.gmra.mxu0 %v3149
        %v3188 = vpop.f32.mrf.mxu0
        %v3189 = vadd.f32 0.0, %v3188
        %v3190 = vpop.f32.mrf.mxu0
        %v3191 = vpop.f32.mrf.mxu0
        %v3192 = vpop.f32.mrf.mxu0
        %3193 = vdwg.mxu0
        %v3195 = vsel %vm2641, %v1429, 0
        %v3198 = vsel %vm2641, %v2033, 0
        %3200 = vmatprep.subr.bf16.mxu0 0
        %3201 = vmatpush1.bf16.xpose.msra.mxu0 0
        %3202 = vmatprep.subr.bf16.mxu0 0
        %3203 = vmatpush1.bf16.xpose.msra.mxu0 0
        %3204 = vmatprep.subr.bf16.mxu0 0
        %3205 = vmatpush1.bf16.xpose.msra.mxu0 0
        %3206 = vmatprep.subr.bf16.mxu0 0
        %3207 = vmatpush1.bf16.xpose.msra.mxu0 0
        %3208 = vmatprep.subr.bf16.mxu0 0
        %3209 = vmatpush1.bf16.xpose.msra.mxu0 0
        %3210 = vmatprep.subr.bf16.mxu0 0
        %3211 = vmatpush1.bf16.xpose.msra.mxu0 0
        %3212 = vmatprep.subr.bf16.mxu0 0
        %3213 = vmatpush1.bf16.xpose.msra.mxu0 0
        %3214 = vmatprep.subr.bf16.mxu0 0
        %3215 = vmatpush1.bf16.xpose.msra.mxu0 %v3198
        %3216 = vmatprep.subr.bf16.mxu0 0
        %3217 = vmatpush2.bf16.xpose.msra.mxu0 0
        %3218 = vmatprep.subr.bf16.mxu0 0
        %3219 = vmatpush2.bf16.xpose.msra.mxu0 0
        %3220 = vmatprep.subr.bf16.mxu0 0
        %3221 = vmatpush2.bf16.xpose.msra.mxu0 0
        %3222 = vmatprep.subr.bf16.mxu0 0
        %3223 = vmatpush2.bf16.xpose.msra.mxu0 0
        %3224 = vmatprep.subr.bf16.mxu0 0
        %3225 = vmatpush2.bf16.xpose.msra.mxu0 0
        %3226 = vmatprep.subr.bf16.mxu0 0
        %3227 = vmatpush2.bf16.xpose.msra.mxu0 0
        %3228 = vmatprep.subr.bf16.mxu0 0
        %3229 = vmatpush2.bf16.xpose.msra.mxu0 0
        %3230 = vmatprep.subr.bf16.mxu0 0
        %3231 = vmatpush2.bf16.xpose.msra.mxu0 0
        %3232 = vmatprep.mubr.bf16.mxu0 0
        %3233 = vmatmul.mubr.bf16.gmra.mxu0 %v3195
        %v3234 = vpop.f32.mrf.mxu0
        %v3235 = vadd.f32 0.0, %v3234
        %v3236 = vpop.f32.mrf.mxu0
        %v3237 = vpop.f32.mrf.mxu0
        %v3238 = vpop.f32.mrf.mxu0
        %3239 = vdwg.mxu0
        %v3241 = vsel %vm2641, %v1430, 0
        %v3244 = vsel %vm2641, %v2034, 0
        %3246 = vmatprep.subr.bf16.mxu0 0
        %3247 = vmatpush1.bf16.xpose.msra.mxu0 0
        %3248 = vmatprep.subr.bf16.mxu0 0
        %3249 = vmatpush1.bf16.xpose.msra.mxu0 0
        %3250 = vmatprep.subr.bf16.mxu0 0
        %3251 = vmatpush1.bf16.xpose.msra.mxu0 0
        %3252 = vmatprep.subr.bf16.mxu0 0
        %3253 = vmatpush1.bf16.xpose.msra.mxu0 0
        %3254 = vmatprep.subr.bf16.mxu0 0
        %3255 = vmatpush1.bf16.xpose.msra.mxu0 0
        %3256 = vmatprep.subr.bf16.mxu0 0
        %3257 = vmatpush1.bf16.xpose.msra.mxu0 0
        %3258 = vmatprep.subr.bf16.mxu0 0
        %3259 = vmatpush1.bf16.xpose.msra.mxu0 0
        %3260 = vmatprep.subr.bf16.mxu0 0
        %3261 = vmatpush1.bf16.xpose.msra.mxu0 %v3244
        %3262 = vmatprep.subr.bf16.mxu0 0
        %3263 = vmatpush2.bf16.xpose.msra.mxu0 0
        %3264 = vmatprep.subr.bf16.mxu0 0
        %3265 = vmatpush2.bf16.xpose.msra.mxu0 0
        %3266 = vmatprep.subr.bf16.mxu0 0
        %3267 = vmatpush2.bf16.xpose.msra.mxu0 0
        %3268 = vmatprep.subr.bf16.mxu0 0
        %3269 = vmatpush2.bf16.xpose.msra.mxu0 0
        %3270 = vmatprep.subr.bf16.mxu0 0
        %3271 = vmatpush2.bf16.xpose.msra.mxu0 0
        %3272 = vmatprep.subr.bf16.mxu0 0
        %3273 = vmatpush2.bf16.xpose.msra.mxu0 0
        %3274 = vmatprep.subr.bf16.mxu0 0
        %3275 = vmatpush2.bf16.xpose.msra.mxu0 0
        %3276 = vmatprep.subr.bf16.mxu0 0
        %3277 = vmatpush2.bf16.xpose.msra.mxu0 0
        %3278 = vmatprep.mubr.bf16.mxu0 0
        %3279 = vmatmul.mubr.bf16.gmra.mxu0 %v3241
        %v3280 = vpop.f32.mrf.mxu0
        %v3281 = vadd.f32 0.0, %v3280
        %v3282 = vpop.f32.mrf.mxu0
        %v3283 = vpop.f32.mrf.mxu0
        %v3284 = vpop.f32.mrf.mxu0
        %3285 = vdwg.mxu0
        %v3287 = vsel %vm2641, %v1431, 0
        %v3290 = vsel %vm2641, %v2035, 0
        %3292 = vmatprep.subr.bf16.mxu0 0
        %3293 = vmatpush1.bf16.xpose.msra.mxu0 0
        %3294 = vmatprep.subr.bf16.mxu0 0
        %3295 = vmatpush1.bf16.xpose.msra.mxu0 0
        %3296 = vmatprep.subr.bf16.mxu0 0
        %3297 = vmatpush1.bf16.xpose.msra.mxu0 0
        %3298 = vmatprep.subr.bf16.mxu0 0
        %3299 = vmatpush1.bf16.xpose.msra.mxu0 0
        %3300 = vmatprep.subr.bf16.mxu0 0
        %3301 = vmatpush1.bf16.xpose.msra.mxu0 0
        %3302 = vmatprep.subr.bf16.mxu0 0
        %3303 = vmatpush1.bf16.xpose.msra.mxu0 0
        %3304 = vmatprep.subr.bf16.mxu0 0
        %3305 = vmatpush1.bf16.xpose.msra.mxu0 0
        %3306 = vmatprep.subr.bf16.mxu0 0
        %3307 = vmatpush1.bf16.xpose.msra.mxu0 %v3290
        %3308 = vmatprep.subr.bf16.mxu0 0
        %3309 = vmatpush2.bf16.xpose.msra.mxu0 0
        %3310 = vmatprep.subr.bf16.mxu0 0
        %3311 = vmatpush2.bf16.xpose.msra.mxu0 0
        %3312 = vmatprep.subr.bf16.mxu0 0
        %3313 = vmatpush2.bf16.xpose.msra.mxu0 0
        %3314 = vmatprep.subr.bf16.mxu0 0
        %3315 = vmatpush2.bf16.xpose.msra.mxu0 0
        %3316 = vmatprep.subr.bf16.mxu0 0
        %3317 = vmatpush2.bf16.xpose.msra.mxu0 0
        %3318 = vmatprep.subr.bf16.mxu0 0
        %3319 = vmatpush2.bf16.xpose.msra.mxu0 0
        %3320 = vmatprep.subr.bf16.mxu0 0
        %3321 = vmatpush2.bf16.xpose.msra.mxu0 0
        %3322 = vmatprep.subr.bf16.mxu0 0
        %3323 = vmatpush2.bf16.xpose.msra.mxu0 0
        %3324 = vmatprep.mubr.bf16.mxu0 0
        %3325 = vmatmul.mubr.bf16.gmra.mxu0 %v3287
        %v3326 = vpop.f32.mrf.mxu0
        %v3327 = vadd.f32 0.0, %v3326
        %v3328 = vpop.f32.mrf.mxu0
        %v3329 = vpop.f32.mrf.mxu0
        %v3330 = vpop.f32.mrf.mxu0
        %3331 = vdwg.mxu0
        %v3333 = vsel %vm2641, %v1432, 0
        %v3336 = vsel %vm2641, %v2036, 0
        %3338 = vmatprep.subr.bf16.mxu0 0
        %3339 = vmatpush1.bf16.xpose.msra.mxu0 0
        %3340 = vmatprep.subr.bf16.mxu0 0
        %3341 = vmatpush1.bf16.xpose.msra.mxu0 0
        %3342 = vmatprep.subr.bf16.mxu0 0
        %3343 = vmatpush1.bf16.xpose.msra.mxu0 0
        %3344 = vmatprep.subr.bf16.mxu0 0
        %3345 = vmatpush1.bf16.xpose.msra.mxu0 0
        %3346 = vmatprep.subr.bf16.mxu0 0
        %3347 = vmatpush1.bf16.xpose.msra.mxu0 0
        %3348 = vmatprep.subr.bf16.mxu0 0
        %3349 = vmatpush1.bf16.xpose.msra.mxu0 0
        %3350 = vmatprep.subr.bf16.mxu0 0
        %3351 = vmatpush1.bf16.xpose.msra.mxu0 0
        %3352 = vmatprep.subr.bf16.mxu0 0
        %3353 = vmatpush1.bf16.xpose.msra.mxu0 %v3336
        %3354 = vmatprep.subr.bf16.mxu0 0
        %3355 = vmatpush2.bf16.xpose.msra.mxu0 0
        %3356 = vmatprep.subr.bf16.mxu0 0
        %3357 = vmatpush2.bf16.xpose.msra.mxu0 0
        %3358 = vmatprep.subr.bf16.mxu0 0
        %3359 = vmatpush2.bf16.xpose.msra.mxu0 0
        %3360 = vmatprep.subr.bf16.mxu0 0
        %3361 = vmatpush2.bf16.xpose.msra.mxu0 0
        %3362 = vmatprep.subr.bf16.mxu0 0
        %3363 = vmatpush2.bf16.xpose.msra.mxu0 0
        %3364 = vmatprep.subr.bf16.mxu0 0
        %3365 = vmatpush2.bf16.xpose.msra.mxu0 0
        %3366 = vmatprep.subr.bf16.mxu0 0
        %3367 = vmatpush2.bf16.xpose.msra.mxu0 0
        %3368 = vmatprep.subr.bf16.mxu0 0
        %3369 = vmatpush2.bf16.xpose.msra.mxu0 0
        %3370 = vmatprep.mubr.bf16.mxu0 0
        %3371 = vmatmul.mubr.bf16.gmra.mxu0 %v3333
        %v3372 = vpop.f32.mrf.mxu0
        %v3373 = vadd.f32 0.0, %v3372
        %v3374 = vpop.f32.mrf.mxu0
        %v3375 = vpop.f32.mrf.mxu0
        %v3376 = vpop.f32.mrf.mxu0
        %3377 = vdwg.mxu0
        %v3378 = vmul.f32 %v2683, 0.25
        %v3379 = vmul.f32 %v2729, 0.25
        %v3380 = vmul.f32 %v2775, 0.25
        %v3381 = vmul.f32 %v2821, 0.25
        %v3382 = vmul.f32 %v2867, 0.25
        %v3383 = vmul.f32 %v2913, 0.25
        %v3384 = vmul.f32 %v2959, 0.25
        %v3385 = vmul.f32 %v3005, 0.25
        %v3386 = vmul.f32 %v3051, 0.25
        %v3387 = vmul.f32 %v3097, 0.25
        %v3388 = vmul.f32 %v3143, 0.25
        %v3389 = vmul.f32 %v3189, 0.25
        %v3390 = vmul.f32 %v3235, 0.25
        %v3391 = vmul.f32 %v3281, 0.25
        %v3392 = vmul.f32 %v3327, 0.25
        %v3393 = vmul.f32 %v3373, 0.25
        %vm3394 = vcmask 64512
        %v3395 = vsel %vm3394, %v3378, -inf
        %3396 = vmax.xlane.f32.xlu0 %v3395
        %v3397 = vpop.xlane.xlu0 %3396
        %v3398 = vsel %vm3394, %v3379, -inf
        %3399 = vmax.xlane.f32.xlu0 %v3398
        %v3400 = vpop.xlane.xlu0 %3399
        %v3401 = vsel %vm3394, %v3380, -inf
        %3402 = vmax.xlane.f32.xlu0 %v3401
        %v3403 = vpop.xlane.xlu0 %3402
        %v3404 = vsel %vm3394, %v3381, -inf
        %3405 = vmax.xlane.f32.xlu0 %v3404
        %v3406 = vpop.xlane.xlu0 %3405
        %v3407 = vsel %vm3394, %v3382, -inf
        %3408 = vmax.xlane.f32.xlu0 %v3407
        %v3409 = vpop.xlane.xlu0 %3408
        %v3410 = vsel %vm3394, %v3383, -inf
        %3411 = vmax.xlane.f32.xlu0 %v3410
        %v3412 = vpop.xlane.xlu0 %3411
        %v3413 = vsel %vm3394, %v3384, -inf
        %3414 = vmax.xlane.f32.xlu0 %v3413
        %v3415 = vpop.xlane.xlu0 %3414
        %v3416 = vsel %vm3394, %v3385, -inf
        %3417 = vmax.xlane.f32.xlu0 %v3416
        %v3418 = vpop.xlane.xlu0 %3417
        %v3419 = vsel %vm3394, %v3386, -inf
        %3420 = vmax.xlane.f32.xlu0 %v3419
        %v3421 = vpop.xlane.xlu0 %3420
        %v3422 = vsel %vm3394, %v3387, -inf
        %3423 = vmax.xlane.f32.xlu0 %v3422
        %v3424 = vpop.xlane.xlu0 %3423
        %v3425 = vsel %vm3394, %v3388, -inf
        %3426 = vmax.xlane.f32.xlu0 %v3425
        %v3427 = vpop.xlane.xlu0 %3426
        %v3428 = vsel %vm3394, %v3389, -inf
        %3429 = vmax.xlane.f32.xlu0 %v3428
        %v3430 = vpop.xlane.xlu0 %3429
        %v3431 = vsel %vm3394, %v3390, -inf
        %3432 = vmax.xlane.f32.xlu0 %v3431
        %v3433 = vpop.xlane.xlu0 %3432
        %v3434 = vsel %vm3394, %v3391, -inf
        %3435 = vmax.xlane.f32.xlu0 %v3434
        %v3436 = vpop.xlane.xlu0 %3435
        %v3437 = vsel %vm3394, %v3392, -inf
        %3438 = vmax.xlane.f32.xlu0 %v3437
        %v3439 = vpop.xlane.xlu0 %3438
        %v3440 = vsel %vm3394, %v3393, -inf
        %3441 = vmax.xlane.f32.xlu0 %v3440
        %v3442 = vpop.xlane.xlu0 %3441
        %v3443 = vsub.f32 %v3378, %v3397
        %v3444 = vsub.f32 %v3379, %v3400
        %v3445 = vsub.f32 %v3380, %v3403
        %v3446 = vsub.f32 %v3381, %v3406
        %v3447 = vsub.f32 %v3382, %v3409
        %v3448 = vsub.f32 %v3383, %v3412
        %v3449 = vsub.f32 %v3384, %v3415
        %v3450 = vsub.f32 %v3385, %v3418
        %v3451 = vsub.f32 %v3386, %v3421
        %v3452 = vsub.f32 %v3387, %v3424
        %v3453 = vsub.f32 %v3388, %v3427
        %v3454 = vsub.f32 %v3389, %v3430
        %v3455 = vsub.f32 %v3390, %v3433
        %v3456 = vsub.f32 %v3391, %v3436
        %v3457 = vsub.f32 %v3392, %v3439
        %v3458 = vsub.f32 %v3393, %v3442
        %v3459 = vmul.f32 %v3443, 1.442695
        %v3460 = vpow.pop %v3459
        %v3461 = vmul.f32 %v3444, 1.442695
        %v3462 = vpow.pop %v3461
        %v3463 = vmul.f32 %v3445, 1.442695
        %v3464 = vpow.pop %v3463
        %v3465 = vmul.f32 %v3446, 1.442695
        %v3466 = vpow.pop %v3465
        %v3467 = vmul.f32 %v3447, 1.442695
        %v3468 = vpow.pop %v3467
        %v3469 = vmul.f32 %v3448, 1.442695
        %v3470 = vpow.pop %v3469
        %v3471 = vmul.f32 %v3449, 1.442695
        %v3472 = vpow.pop %v3471
        %v3473 = vmul.f32 %v3450, 1.442695
        %v3474 = vpow.pop %v3473
        %v3475 = vmul.f32 %v3451, 1.442695
        %v3476 = vpow.pop %v3475
        %v3477 = vmul.f32 %v3452, 1.442695
        %v3478 = vpow.pop %v3477
        %v3479 = vmul.f32 %v3453, 1.442695
        %v3480 = vpow.pop %v3479
        %v3481 = vmul.f32 %v3454, 1.442695
        %v3482 = vpow.pop %v3481
        %v3483 = vmul.f32 %v3455, 1.442695
        %v3484 = vpow.pop %v3483
        %v3485 = vmul.f32 %v3456, 1.442695
        %v3486 = vpow.pop %v3485
        %v3487 = vmul.f32 %v3457, 1.442695
        %v3488 = vpow.pop %v3487
        %v3489 = vmul.f32 %v3458, 1.442695
        %v3490 = vpow.pop %v3489
        %v3491 = vsel %vm3394, %v3460, 0.0
        %3492 = vadd.xlane.f32.xlu0 %v3491
        %v3493 = vpop.xlane.xlu0 %3492
        %v3494 = vsel %vm3394, %v3462, 0.0
        %3495 = vadd.xlane.f32.xlu0 %v3494
        %v3496 = vpop.xlane.xlu0 %3495
        %v3497 = vsel %vm3394, %v3464, 0.0
        %3498 = vadd.xlane.f32.xlu0 %v3497
        %v3499 = vpop.xlane.xlu0 %3498
        %v3500 = vsel %vm3394, %v3466, 0.0
        %3501 = vadd.xlane.f32.xlu0 %v3500
        %v3502 = vpop.xlane.xlu0 %3501
        %v3503 = vsel %vm3394, %v3468, 0.0
        %3504 = vadd.xlane.f32.xlu0 %v3503
        %v3505 = vpop.xlane.xlu0 %3504
        %v3506 = vsel %vm3394, %v3470, 0.0
        %3507 = vadd.xlane.f32.xlu0 %v3506
        %v3508 = vpop.xlane.xlu0 %3507
        %v3509 = vsel %vm3394, %v3472, 0.0
        %3510 = vadd.xlane.f32.xlu0 %v3509
        %v3511 = vpop.xlane.xlu0 %3510
        %v3512 = vsel %vm3394, %v3474, 0.0
        %3513 = vadd.xlane.f32.xlu0 %v3512
        %v3514 = vpop.xlane.xlu0 %3513
        %v3515 = vsel %vm3394, %v3476, 0.0
        %3516 = vadd.xlane.f32.xlu0 %v3515
        %v3517 = vpop.xlane.xlu0 %3516
        %v3518 = vsel %vm3394, %v3478, 0.0
        %3519 = vadd.xlane.f32.xlu0 %v3518
        %v3520 = vpop.xlane.xlu0 %3519
        %v3521 = vsel %vm3394, %v3480, 0.0
        %3522 = vadd.xlane.f32.xlu0 %v3521
        %v3523 = vpop.xlane.xlu0 %3522
        %v3524 = vsel %vm3394, %v3482, 0.0
        %3525 = vadd.xlane.f32.xlu0 %v3524
        %v3526 = vpop.xlane.xlu0 %3525
        %v3527 = vsel %vm3394, %v3484, 0.0
        %3528 = vadd.xlane.f32.xlu0 %v3527
        %v3529 = vpop.xlane.xlu0 %3528
        %v3530 = vsel %vm3394, %v3486, 0.0
        %3531 = vadd.xlane.f32.xlu0 %v3530
        %v3532 = vpop.xlane.xlu0 %3531
        %v3533 = vsel %vm3394, %v3488, 0.0
        %3534 = vadd.xlane.f32.xlu0 %v3533
        %v3535 = vpop.xlane.xlu0 %3534
        %v3536 = vsel %vm3394, %v3490, 0.0
        %3537 = vadd.xlane.f32.xlu0 %v3536
        %v3538 = vpop.xlane.xlu0 %3537
        %v3539 = vrcp.pop %v3493
        %v3540 = vmul.f32 %v3460, %v3539
        %v3541 = vrcp.pop %v3496
        %v3542 = vmul.f32 %v3462, %v3541
        %v3543 = vrcp.pop %v3499
        %v3544 = vmul.f32 %v3464, %v3543
        %v3545 = vrcp.pop %v3502
        %v3546 = vmul.f32 %v3466, %v3545
        %v3547 = vrcp.pop %v3505
        %v3548 = vmul.f32 %v3468, %v3547
        %v3549 = vrcp.pop %v3508
        %v3550 = vmul.f32 %v3470, %v3549
        %v3551 = vrcp.pop %v3511
        %v3552 = vmul.f32 %v3472, %v3551
        %v3553 = vrcp.pop %v3514
        %v3554 = vmul.f32 %v3474, %v3553
        %v3555 = vrcp.pop %v3517
        %v3556 = vmul.f32 %v3476, %v3555
        %v3557 = vrcp.pop %v3520
        %v3558 = vmul.f32 %v3478, %v3557
        %v3559 = vrcp.pop %v3523
        %v3560 = vmul.f32 %v3480, %v3559
        %v3561 = vrcp.pop %v3526
        %v3562 = vmul.f32 %v3482, %v3561
        %v3563 = vrcp.pop %v3529
        %v3564 = vmul.f32 %v3484, %v3563
        %v3565 = vrcp.pop %v3532
        %v3566 = vmul.f32 %v3486, %v3565
        %v3567 = vrcp.pop %v3535
        %v3568 = vmul.f32 %v3488, %v3567
        %v3569 = vrcp.pop %v3538
        %v3570 = vmul.f32 %v3490, %v3569
        %v3571 = vpack.c.bf16 %v3540, %v3540
        %v3572 = vpack.c.bf16 %v3542, %v3542
        %v3573 = vpack.c.bf16 %v3544, %v3544
        %v3574 = vpack.c.bf16 %v3546, %v3546
        %v3575 = vpack.c.bf16 %v3548, %v3548
        %v3576 = vpack.c.bf16 %v3550, %v3550
        %v3577 = vpack.c.bf16 %v3552, %v3552
        %v3578 = vpack.c.bf16 %v3554, %v3554
        %v3579 = vpack.c.bf16 %v3556, %v3556
        %v3580 = vpack.c.bf16 %v3558, %v3558
        %v3581 = vpack.c.bf16 %v3560, %v3560
        %v3582 = vpack.c.bf16 %v3562, %v3562
        %v3583 = vpack.c.bf16 %v3564, %v3564
        %v3584 = vpack.c.bf16 %v3566, %v3566
        %v3585 = vpack.c.bf16 %v3568, %v3568
        %v3586 = vpack.c.bf16 %v3570, %v3570
        %v3588 = vsel %vm3394, %v3571, 0
        %vm3590 = vcmask 1043456
        %v3592 = vsel %vm3590, %v2625, 0
        %3594 = vmatprep.subr.bf16.mxu0 0
        %3595 = vmatpush1.bf16.msra.mxu0 0
        %3596 = vmatprep.subr.bf16.mxu0 0
        %3597 = vmatpush1.bf16.msra.mxu0 0
        %3598 = vmatprep.subr.bf16.mxu0 0
        %3599 = vmatpush1.bf16.msra.mxu0 0
        %3600 = vmatprep.subr.bf16.mxu0 0
        %3601 = vmatpush1.bf16.msra.mxu0 0
        %3602 = vmatprep.subr.bf16.mxu0 0
        %3603 = vmatpush1.bf16.msra.mxu0 0
        %3604 = vmatprep.subr.bf16.mxu0 0
        %3605 = vmatpush1.bf16.msra.mxu0 0
        %3606 = vmatprep.subr.bf16.mxu0 0
        %3607 = vmatpush1.bf16.msra.mxu0 0
        %3608 = vmatprep.subr.bf16.mxu0 0
        %3609 = vmatpush1.bf16.msra.mxu0 %v3592
        %3610 = vmatprep.subr.bf16.mxu0 0
        %3611 = vmatpush2.bf16.msra.mxu0 0
        %3612 = vmatprep.subr.bf16.mxu0 0
        %3613 = vmatpush2.bf16.msra.mxu0 0
        %3614 = vmatprep.subr.bf16.mxu0 0
        %3615 = vmatpush2.bf16.msra.mxu0 0
        %3616 = vmatprep.subr.bf16.mxu0 0
        %3617 = vmatpush2.bf16.msra.mxu0 0
        %3618 = vmatprep.subr.bf16.mxu0 0
        %3619 = vmatpush2.bf16.msra.mxu0 0
        %3620 = vmatprep.subr.bf16.mxu0 0
        %3621 = vmatpush2.bf16.msra.mxu0 0
        %3622 = vmatprep.subr.bf16.mxu0 0
        %3623 = vmatpush2.bf16.msra.mxu0 0
        %3624 = vmatprep.subr.bf16.mxu0 0
        %3625 = vmatpush2.bf16.msra.mxu0 0
        %3626 = vmatprep.mubr.bf16.mxu0 0
        %3627 = vmatmul.mubr.bf16.gmra.mxu0 %v3588
        %v3628 = vpop.f32.mrf.mxu0
        %v3629 = vadd.f32 0.0, %v3628
        %v3630 = vpop.f32.mrf.mxu0
        %v3631 = vpop.f32.mrf.mxu0
        %v3632 = vpop.f32.mrf.mxu0
        %3633 = vdwg.mxu0
        %v3635 = vsel %vm3394, %v3572, 0
        %v3638 = vsel %vm3590, %v2626, 0
        %3640 = vmatprep.subr.bf16.mxu0 0
        %3641 = vmatpush1.bf16.msra.mxu0 0
        %3642 = vmatprep.subr.bf16.mxu0 0
        %3643 = vmatpush1.bf16.msra.mxu0 0
        %3644 = vmatprep.subr.bf16.mxu0 0
        %3645 = vmatpush1.bf16.msra.mxu0 0
        %3646 = vmatprep.subr.bf16.mxu0 0
        %3647 = vmatpush1.bf16.msra.mxu0 0
        %3648 = vmatprep.subr.bf16.mxu0 0
        %3649 = vmatpush1.bf16.msra.mxu0 0
        %3650 = vmatprep.subr.bf16.mxu0 0
        %3651 = vmatpush1.bf16.msra.mxu0 0
        %3652 = vmatprep.subr.bf16.mxu0 0
        %3653 = vmatpush1.bf16.msra.mxu0 0
        %3654 = vmatprep.subr.bf16.mxu0 0
        %3655 = vmatpush1.bf16.msra.mxu0 %v3638
        %3656 = vmatprep.subr.bf16.mxu0 0
        %3657 = vmatpush2.bf16.msra.mxu0 0
        %3658 = vmatprep.subr.bf16.mxu0 0
        %3659 = vmatpush2.bf16.msra.mxu0 0
        %3660 = vmatprep.subr.bf16.mxu0 0
        %3661 = vmatpush2.bf16.msra.mxu0 0
        %3662 = vmatprep.subr.bf16.mxu0 0
        %3663 = vmatpush2.bf16.msra.mxu0 0
        %3664 = vmatprep.subr.bf16.mxu0 0
        %3665 = vmatpush2.bf16.msra.mxu0 0
        %3666 = vmatprep.subr.bf16.mxu0 0
        %3667 = vmatpush2.bf16.msra.mxu0 0
        %3668 = vmatprep.subr.bf16.mxu0 0
        %3669 = vmatpush2.bf16.msra.mxu0 0
        %3670 = vmatprep.subr.bf16.mxu0 0
        %3671 = vmatpush2.bf16.msra.mxu0 0
        %3672 = vmatprep.mubr.bf16.mxu0 0
        %3673 = vmatmul.mubr.bf16.gmra.mxu0 %v3635
        %v3674 = vpop.f32.mrf.mxu0
        %v3675 = vadd.f32 0.0, %v3674
        %v3676 = vpop.f32.mrf.mxu0
        %v3677 = vpop.f32.mrf.mxu0
        %v3678 = vpop.f32.mrf.mxu0
        %3679 = vdwg.mxu0
        %v3681 = vsel %vm3394, %v3573, 0
        %v3684 = vsel %vm3590, %v2627, 0
        %3686 = vmatprep.subr.bf16.mxu0 0
        %3687 = vmatpush1.bf16.msra.mxu0 0
        %3688 = vmatprep.subr.bf16.mxu0 0
        %3689 = vmatpush1.bf16.msra.mxu0 0
        %3690 = vmatprep.subr.bf16.mxu0 0
        %3691 = vmatpush1.bf16.msra.mxu0 0
        %3692 = vmatprep.subr.bf16.mxu0 0
        %3693 = vmatpush1.bf16.msra.mxu0 0
        %3694 = vmatprep.subr.bf16.mxu0 0
        %3695 = vmatpush1.bf16.msra.mxu0 0
        %3696 = vmatprep.subr.bf16.mxu0 0
        %3697 = vmatpush1.bf16.msra.mxu0 0
        %3698 = vmatprep.subr.bf16.mxu0 0
        %3699 = vmatpush1.bf16.msra.mxu0 0
        %3700 = vmatprep.subr.bf16.mxu0 0
        %3701 = vmatpush1.bf16.msra.mxu0 %v3684
        %3702 = vmatprep.subr.bf16.mxu0 0
        %3703 = vmatpush2.bf16.msra.mxu0 0
        %3704 = vmatprep.subr.bf16.mxu0 0
        %3705 = vmatpush2.bf16.msra.mxu0 0
        %3706 = vmatprep.subr.bf16.mxu0 0
        %3707 = vmatpush2.bf16.msra.mxu0 0
        %3708 = vmatprep.subr.bf16.mxu0 0
        %3709 = vmatpush2.bf16.msra.mxu0 0
        %3710 = vmatprep.subr.bf16.mxu0 0
        %3711 = vmatpush2.bf16.msra.mxu0 0
        %3712 = vmatprep.subr.bf16.mxu0 0
        %3713 = vmatpush2.bf16.msra.mxu0 0
        %3714 = vmatprep.subr.bf16.mxu0 0
        %3715 = vmatpush2.bf16.msra.mxu0 0
        %3716 = vmatprep.subr.bf16.mxu0 0
        %3717 = vmatpush2.bf16.msra.mxu0 0
        %3718 = vmatprep.mubr.bf16.mxu0 0
        %3719 = vmatmul.mubr.bf16.gmra.mxu0 %v3681
        %v3720 = vpop.f32.mrf.mxu0
        %v3721 = vadd.f32 0.0, %v3720
        %v3722 = vpop.f32.mrf.mxu0
        %v3723 = vpop.f32.mrf.mxu0
        %v3724 = vpop.f32.mrf.mxu0
        %3725 = vdwg.mxu0
        %v3727 = vsel %vm3394, %v3574, 0
        %v3730 = vsel %vm3590, %v2628, 0
        %3732 = vmatprep.subr.bf16.mxu0 0
        %3733 = vmatpush1.bf16.msra.mxu0 0
        %3734 = vmatprep.subr.bf16.mxu0 0
        %3735 = vmatpush1.bf16.msra.mxu0 0
        %3736 = vmatprep.subr.bf16.mxu0 0
        %3737 = vmatpush1.bf16.msra.mxu0 0
        %3738 = vmatprep.subr.bf16.mxu0 0
        %3739 = vmatpush1.bf16.msra.mxu0 0
        %3740 = vmatprep.subr.bf16.mxu0 0
        %3741 = vmatpush1.bf16.msra.mxu0 0
        %3742 = vmatprep.subr.bf16.mxu0 0
        %3743 = vmatpush1.bf16.msra.mxu0 0
        %3744 = vmatprep.subr.bf16.mxu0 0
        %3745 = vmatpush1.bf16.msra.mxu0 0
        %3746 = vmatprep.subr.bf16.mxu0 0
        %3747 = vmatpush1.bf16.msra.mxu0 %v3730
        %3748 = vmatprep.subr.bf16.mxu0 0
        %3749 = vmatpush2.bf16.msra.mxu0 0
        %3750 = vmatprep.subr.bf16.mxu0 0
        %3751 = vmatpush2.bf16.msra.mxu0 0
        %3752 = vmatprep.subr.bf16.mxu0 0
        %3753 = vmatpush2.bf16.msra.mxu0 0
        %3754 = vmatprep.subr.bf16.mxu0 0
        %3755 = vmatpush2.bf16.msra.mxu0 0
        %3756 = vmatprep.subr.bf16.mxu0 0
        %3757 = vmatpush2.bf16.msra.mxu0 0
        %3758 = vmatprep.subr.bf16.mxu0 0
        %3759 = vmatpush2.bf16.msra.mxu0 0
        %3760 = vmatprep.subr.bf16.mxu0 0
        %3761 = vmatpush2.bf16.msra.mxu0 0
        %3762 = vmatprep.subr.bf16.mxu0 0
        %3763 = vmatpush2.bf16.msra.mxu0 0
        %3764 = vmatprep.mubr.bf16.mxu0 0
        %3765 = vmatmul.mubr.bf16.gmra.mxu0 %v3727
        %v3766 = vpop.f32.mrf.mxu0
        %v3767 = vadd.f32 0.0, %v3766
        %v3768 = vpop.f32.mrf.mxu0
        %v3769 = vpop.f32.mrf.mxu0
        %v3770 = vpop.f32.mrf.mxu0
        %3771 = vdwg.mxu0
        %v3773 = vsel %vm3394, %v3575, 0
        %v3776 = vsel %vm3590, %v2629, 0
        %3778 = vmatprep.subr.bf16.mxu0 0
        %3779 = vmatpush1.bf16.msra.mxu0 0
        %3780 = vmatprep.subr.bf16.mxu0 0
        %3781 = vmatpush1.bf16.msra.mxu0 0
        %3782 = vmatprep.subr.bf16.mxu0 0
        %3783 = vmatpush1.bf16.msra.mxu0 0
        %3784 = vmatprep.subr.bf16.mxu0 0
        %3785 = vmatpush1.bf16.msra.mxu0 0
        %3786 = vmatprep.subr.bf16.mxu0 0
        %3787 = vmatpush1.bf16.msra.mxu0 0
        %3788 = vmatprep.subr.bf16.mxu0 0
        %3789 = vmatpush1.bf16.msra.mxu0 0
        %3790 = vmatprep.subr.bf16.mxu0 0
        %3791 = vmatpush1.bf16.msra.mxu0 0
        %3792 = vmatprep.subr.bf16.mxu0 0
        %3793 = vmatpush1.bf16.msra.mxu0 %v3776
        %3794 = vmatprep.subr.bf16.mxu0 0
        %3795 = vmatpush2.bf16.msra.mxu0 0
        %3796 = vmatprep.subr.bf16.mxu0 0
        %3797 = vmatpush2.bf16.msra.mxu0 0
        %3798 = vmatprep.subr.bf16.mxu0 0
        %3799 = vmatpush2.bf16.msra.mxu0 0
        %3800 = vmatprep.subr.bf16.mxu0 0
        %3801 = vmatpush2.bf16.msra.mxu0 0
        %3802 = vmatprep.subr.bf16.mxu0 0
        %3803 = vmatpush2.bf16.msra.mxu0 0
        %3804 = vmatprep.subr.bf16.mxu0 0
        %3805 = vmatpush2.bf16.msra.mxu0 0
        %3806 = vmatprep.subr.bf16.mxu0 0
        %3807 = vmatpush2.bf16.msra.mxu0 0
        %3808 = vmatprep.subr.bf16.mxu0 0
        %3809 = vmatpush2.bf16.msra.mxu0 0
        %3810 = vmatprep.mubr.bf16.mxu0 0
        %3811 = vmatmul.mubr.bf16.gmra.mxu0 %v3773
        %v3812 = vpop.f32.mrf.mxu0
        %v3813 = vadd.f32 0.0, %v3812
        %v3814 = vpop.f32.mrf.mxu0
        %v3815 = vpop.f32.mrf.mxu0
        %v3816 = vpop.f32.mrf.mxu0
        %3817 = vdwg.mxu0
        %v3819 = vsel %vm3394, %v3576, 0
        %v3822 = vsel %vm3590, %v2630, 0
        %3824 = vmatprep.subr.bf16.mxu0 0
        %3825 = vmatpush1.bf16.msra.mxu0 0
        %3826 = vmatprep.subr.bf16.mxu0 0
        %3827 = vmatpush1.bf16.msra.mxu0 0
        %3828 = vmatprep.subr.bf16.mxu0 0
        %3829 = vmatpush1.bf16.msra.mxu0 0
        %3830 = vmatprep.subr.bf16.mxu0 0
        %3831 = vmatpush1.bf16.msra.mxu0 0
        %3832 = vmatprep.subr.bf16.mxu0 0
        %3833 = vmatpush1.bf16.msra.mxu0 0
        %3834 = vmatprep.subr.bf16.mxu0 0
        %3835 = vmatpush1.bf16.msra.mxu0 0
        %3836 = vmatprep.subr.bf16.mxu0 0
        %3837 = vmatpush1.bf16.msra.mxu0 0
        %3838 = vmatprep.subr.bf16.mxu0 0
        %3839 = vmatpush1.bf16.msra.mxu0 %v3822
        %3840 = vmatprep.subr.bf16.mxu0 0
        %3841 = vmatpush2.bf16.msra.mxu0 0
        %3842 = vmatprep.subr.bf16.mxu0 0
        %3843 = vmatpush2.bf16.msra.mxu0 0
        %3844 = vmatprep.subr.bf16.mxu0 0
        %3845 = vmatpush2.bf16.msra.mxu0 0
        %3846 = vmatprep.subr.bf16.mxu0 0
        %3847 = vmatpush2.bf16.msra.mxu0 0
        %3848 = vmatprep.subr.bf16.mxu0 0
        %3849 = vmatpush2.bf16.msra.mxu0 0
        %3850 = vmatprep.subr.bf16.mxu0 0
        %3851 = vmatpush2.bf16.msra.mxu0 0
        %3852 = vmatprep.subr.bf16.mxu0 0
        %3853 = vmatpush2.bf16.msra.mxu0 0
        %3854 = vmatprep.subr.bf16.mxu0 0
        %3855 = vmatpush2.bf16.msra.mxu0 0
        %3856 = vmatprep.mubr.bf16.mxu0 0
        %3857 = vmatmul.mubr.bf16.gmra.mxu0 %v3819
        %v3858 = vpop.f32.mrf.mxu0
        %v3859 = vadd.f32 0.0, %v3858
        %v3860 = vpop.f32.mrf.mxu0
        %v3861 = vpop.f32.mrf.mxu0
        %v3862 = vpop.f32.mrf.mxu0
        %3863 = vdwg.mxu0
        %v3865 = vsel %vm3394, %v3577, 0
        %v3868 = vsel %vm3590, %v2631, 0
        %3870 = vmatprep.subr.bf16.mxu0 0
        %3871 = vmatpush1.bf16.msra.mxu0 0
        %3872 = vmatprep.subr.bf16.mxu0 0
        %3873 = vmatpush1.bf16.msra.mxu0 0
        %3874 = vmatprep.subr.bf16.mxu0 0
        %3875 = vmatpush1.bf16.msra.mxu0 0
        %3876 = vmatprep.subr.bf16.mxu0 0
        %3877 = vmatpush1.bf16.msra.mxu0 0
        %3878 = vmatprep.subr.bf16.mxu0 0
        %3879 = vmatpush1.bf16.msra.mxu0 0
        %3880 = vmatprep.subr.bf16.mxu0 0
        %3881 = vmatpush1.bf16.msra.mxu0 0
        %3882 = vmatprep.subr.bf16.mxu0 0
        %3883 = vmatpush1.bf16.msra.mxu0 0
        %3884 = vmatprep.subr.bf16.mxu0 0
        %3885 = vmatpush1.bf16.msra.mxu0 %v3868
        %3886 = vmatprep.subr.bf16.mxu0 0
        %3887 = vmatpush2.bf16.msra.mxu0 0
        %3888 = vmatprep.subr.bf16.mxu0 0
        %3889 = vmatpush2.bf16.msra.mxu0 0
        %3890 = vmatprep.subr.bf16.mxu0 0
        %3891 = vmatpush2.bf16.msra.mxu0 0
        %3892 = vmatprep.subr.bf16.mxu0 0
        %3893 = vmatpush2.bf16.msra.mxu0 0
        %3894 = vmatprep.subr.bf16.mxu0 0
        %3895 = vmatpush2.bf16.msra.mxu0 0
        %3896 = vmatprep.subr.bf16.mxu0 0
        %3897 = vmatpush2.bf16.msra.mxu0 0
        %3898 = vmatprep.subr.bf16.mxu0 0
        %3899 = vmatpush2.bf16.msra.mxu0 0
        %3900 = vmatprep.subr.bf16.mxu0 0
        %3901 = vmatpush2.bf16.msra.mxu0 0
        %3902 = vmatprep.mubr.bf16.mxu0 0
        %3903 = vmatmul.mubr.bf16.gmra.mxu0 %v3865
        %v3904 = vpop.f32.mrf.mxu0
        %v3905 = vadd.f32 0.0, %v3904
        %v3906 = vpop.f32.mrf.mxu0
        %v3907 = vpop.f32.mrf.mxu0
        %v3908 = vpop.f32.mrf.mxu0
        %3909 = vdwg.mxu0
        %v3911 = vsel %vm3394, %v3578, 0
        %v3914 = vsel %vm3590, %v2632, 0
        %3916 = vmatprep.subr.bf16.mxu0 0
        %3917 = vmatpush1.bf16.msra.mxu0 0
        %3918 = vmatprep.subr.bf16.mxu0 0
        %3919 = vmatpush1.bf16.msra.mxu0 0
        %3920 = vmatprep.subr.bf16.mxu0 0
        %3921 = vmatpush1.bf16.msra.mxu0 0
        %3922 = vmatprep.subr.bf16.mxu0 0
        %3923 = vmatpush1.bf16.msra.mxu0 0
        %3924 = vmatprep.subr.bf16.mxu0 0
        %3925 = vmatpush1.bf16.msra.mxu0 0
        %3926 = vmatprep.subr.bf16.mxu0 0
        %3927 = vmatpush1.bf16.msra.mxu0 0
        %3928 = vmatprep.subr.bf16.mxu0 0
        %3929 = vmatpush1.bf16.msra.mxu0 0
        %3930 = vmatprep.subr.bf16.mxu0 0
        %3931 = vmatpush1.bf16.msra.mxu0 %v3914
        %3932 = vmatprep.subr.bf16.mxu0 0
        %3933 = vmatpush2.bf16.msra.mxu0 0
        %3934 = vmatprep.subr.bf16.mxu0 0
        %3935 = vmatpush2.bf16.msra.mxu0 0
        %3936 = vmatprep.subr.bf16.mxu0 0
        %3937 = vmatpush2.bf16.msra.mxu0 0
        %3938 = vmatprep.subr.bf16.mxu0 0
        %3939 = vmatpush2.bf16.msra.mxu0 0
        %3940 = vmatprep.subr.bf16.mxu0 0
        %3941 = vmatpush2.bf16.msra.mxu0 0
        %3942 = vmatprep.subr.bf16.mxu0 0
        %3943 = vmatpush2.bf16.msra.mxu0 0
        %3944 = vmatprep.subr.bf16.mxu0 0
        %3945 = vmatpush2.bf16.msra.mxu0 0
        %3946 = vmatprep.subr.bf16.mxu0 0
        %3947 = vmatpush2.bf16.msra.mxu0 0
        %3948 = vmatprep.mubr.bf16.mxu0 0
        %3949 = vmatmul.mubr.bf16.gmra.mxu0 %v3911
        %v3950 = vpop.f32.mrf.mxu0
        %v3951 = vadd.f32 0.0, %v3950
        %v3952 = vpop.f32.mrf.mxu0
        %v3953 = vpop.f32.mrf.mxu0
        %v3954 = vpop.f32.mrf.mxu0
        %3955 = vdwg.mxu0
        %v3957 = vsel %vm3394, %v3579, 0
        %v3960 = vsel %vm3590, %v2633, 0
        %3962 = vmatprep.subr.bf16.mxu0 0
        %3963 = vmatpush1.bf16.msra.mxu0 0
        %3964 = vmatprep.subr.bf16.mxu0 0
        %3965 = vmatpush1.bf16.msra.mxu0 0
        %3966 = vmatprep.subr.bf16.mxu0 0
        %3967 = vmatpush1.bf16.msra.mxu0 0
        %3968 = vmatprep.subr.bf16.mxu0 0
        %3969 = vmatpush1.bf16.msra.mxu0 0
        %3970 = vmatprep.subr.bf16.mxu0 0
        %3971 = vmatpush1.bf16.msra.mxu0 0
        %3972 = vmatprep.subr.bf16.mxu0 0
        %3973 = vmatpush1.bf16.msra.mxu0 0
        %3974 = vmatprep.subr.bf16.mxu0 0
        %3975 = vmatpush1.bf16.msra.mxu0 0
        %3976 = vmatprep.subr.bf16.mxu0 0
        %3977 = vmatpush1.bf16.msra.mxu0 %v3960
        %3978 = vmatprep.subr.bf16.mxu0 0
        %3979 = vmatpush2.bf16.msra.mxu0 0
        %3980 = vmatprep.subr.bf16.mxu0 0
        %3981 = vmatpush2.bf16.msra.mxu0 0
        %3982 = vmatprep.subr.bf16.mxu0 0
        %3983 = vmatpush2.bf16.msra.mxu0 0
        %3984 = vmatprep.subr.bf16.mxu0 0
        %3985 = vmatpush2.bf16.msra.mxu0 0
        %3986 = vmatprep.subr.bf16.mxu0 0
        %3987 = vmatpush2.bf16.msra.mxu0 0
        %3988 = vmatprep.subr.bf16.mxu0 0
        %3989 = vmatpush2.bf16.msra.mxu0 0
        %3990 = vmatprep.subr.bf16.mxu0 0
        %3991 = vmatpush2.bf16.msra.mxu0 0
        %3992 = vmatprep.subr.bf16.mxu0 0
        %3993 = vmatpush2.bf16.msra.mxu0 0
        %3994 = vmatprep.mubr.bf16.mxu0 0
        %3995 = vmatmul.mubr.bf16.gmra.mxu0 %v3957
        %v3996 = vpop.f32.mrf.mxu0
        %v3997 = vadd.f32 0.0, %v3996
        %v3998 = vpop.f32.mrf.mxu0
        %v3999 = vpop.f32.mrf.mxu0
        %v4000 = vpop.f32.mrf.mxu0
        %4001 = vdwg.mxu0
        %v4003 = vsel %vm3394, %v3580, 0
        %v4006 = vsel %vm3590, %v2634, 0
        %4008 = vmatprep.subr.bf16.mxu0 0
        %4009 = vmatpush1.bf16.msra.mxu0 0
        %4010 = vmatprep.subr.bf16.mxu0 0
        %4011 = vmatpush1.bf16.msra.mxu0 0
        %4012 = vmatprep.subr.bf16.mxu0 0
        %4013 = vmatpush1.bf16.msra.mxu0 0
        %4014 = vmatprep.subr.bf16.mxu0 0
        %4015 = vmatpush1.bf16.msra.mxu0 0
        %4016 = vmatprep.subr.bf16.mxu0 0
        %4017 = vmatpush1.bf16.msra.mxu0 0
        %4018 = vmatprep.subr.bf16.mxu0 0
        %4019 = vmatpush1.bf16.msra.mxu0 0
        %4020 = vmatprep.subr.bf16.mxu0 0
        %4021 = vmatpush1.bf16.msra.mxu0 0
        %4022 = vmatprep.subr.bf16.mxu0 0
        %4023 = vmatpush1.bf16.msra.mxu0 %v4006
        %4024 = vmatprep.subr.bf16.mxu0 0
        %4025 = vmatpush2.bf16.msra.mxu0 0
        %4026 = vmatprep.subr.bf16.mxu0 0
        %4027 = vmatpush2.bf16.msra.mxu0 0
        %4028 = vmatprep.subr.bf16.mxu0 0
        %4029 = vmatpush2.bf16.msra.mxu0 0
        %4030 = vmatprep.subr.bf16.mxu0 0
        %4031 = vmatpush2.bf16.msra.mxu0 0
        %4032 = vmatprep.subr.bf16.mxu0 0
        %4033 = vmatpush2.bf16.msra.mxu0 0
        %4034 = vmatprep.subr.bf16.mxu0 0
        %4035 = vmatpush2.bf16.msra.mxu0 0
        %4036 = vmatprep.subr.bf16.mxu0 0
        %4037 = vmatpush2.bf16.msra.mxu0 0
        %4038 = vmatprep.subr.bf16.mxu0 0
        %4039 = vmatpush2.bf16.msra.mxu0 0
        %4040 = vmatprep.mubr.bf16.mxu0 0
        %4041 = vmatmul.mubr.bf16.gmra.mxu0 %v4003
        %v4042 = vpop.f32.mrf.mxu0
        %v4043 = vadd.f32 0.0, %v4042
        %v4044 = vpop.f32.mrf.mxu0
        %v4045 = vpop.f32.mrf.mxu0
        %v4046 = vpop.f32.mrf.mxu0
        %4047 = vdwg.mxu0
        %v4049 = vsel %vm3394, %v3581, 0
        %v4052 = vsel %vm3590, %v2635, 0
        %4054 = vmatprep.subr.bf16.mxu0 0
        %4055 = vmatpush1.bf16.msra.mxu0 0
        %4056 = vmatprep.subr.bf16.mxu0 0
        %4057 = vmatpush1.bf16.msra.mxu0 0
        %4058 = vmatprep.subr.bf16.mxu0 0
        %4059 = vmatpush1.bf16.msra.mxu0 0
        %4060 = vmatprep.subr.bf16.mxu0 0
        %4061 = vmatpush1.bf16.msra.mxu0 0
        %4062 = vmatprep.subr.bf16.mxu0 0
        %4063 = vmatpush1.bf16.msra.mxu0 0
        %4064 = vmatprep.subr.bf16.mxu0 0
        %4065 = vmatpush1.bf16.msra.mxu0 0
        %4066 = vmatprep.subr.bf16.mxu0 0
        %4067 = vmatpush1.bf16.msra.mxu0 0
        %4068 = vmatprep.subr.bf16.mxu0 0
        %4069 = vmatpush1.bf16.msra.mxu0 %v4052
        %4070 = vmatprep.subr.bf16.mxu0 0
        %4071 = vmatpush2.bf16.msra.mxu0 0
        %4072 = vmatprep.subr.bf16.mxu0 0
        %4073 = vmatpush2.bf16.msra.mxu0 0
        %4074 = vmatprep.subr.bf16.mxu0 0
        %4075 = vmatpush2.bf16.msra.mxu0 0
        %4076 = vmatprep.subr.bf16.mxu0 0
        %4077 = vmatpush2.bf16.msra.mxu0 0
        %4078 = vmatprep.subr.bf16.mxu0 0
        %4079 = vmatpush2.bf16.msra.mxu0 0
        %4080 = vmatprep.subr.bf16.mxu0 0
        %4081 = vmatpush2.bf16.msra.mxu0 0
        %4082 = vmatprep.subr.bf16.mxu0 0
        %4083 = vmatpush2.bf16.msra.mxu0 0
        %4084 = vmatprep.subr.bf16.mxu0 0
        %4085 = vmatpush2.bf16.msra.mxu0 0
        %4086 = vmatprep.mubr.bf16.mxu0 0
        %4087 = vmatmul.mubr.bf16.gmra.mxu0 %v4049
        %v4088 = vpop.f32.mrf.mxu0
        %v4089 = vadd.f32 0.0, %v4088
        %v4090 = vpop.f32.mrf.mxu0
        %v4091 = vpop.f32.mrf.mxu0
        %v4092 = vpop.f32.mrf.mxu0
        %4093 = vdwg.mxu0
        %v4095 = vsel %vm3394, %v3582, 0
        %v4098 = vsel %vm3590, %v2636, 0
        %4100 = vmatprep.subr.bf16.mxu0 0
        %4101 = vmatpush1.bf16.msra.mxu0 0
        %4102 = vmatprep.subr.bf16.mxu0 0
        %4103 = vmatpush1.bf16.msra.mxu0 0
        %4104 = vmatprep.subr.bf16.mxu0 0
        %4105 = vmatpush1.bf16.msra.mxu0 0
        %4106 = vmatprep.subr.bf16.mxu0 0
        %4107 = vmatpush1.bf16.msra.mxu0 0
        %4108 = vmatprep.subr.bf16.mxu0 0
        %4109 = vmatpush1.bf16.msra.mxu0 0
        %4110 = vmatprep.subr.bf16.mxu0 0
        %4111 = vmatpush1.bf16.msra.mxu0 0
        %4112 = vmatprep.subr.bf16.mxu0 0
        %4113 = vmatpush1.bf16.msra.mxu0 0
        %4114 = vmatprep.subr.bf16.mxu0 0
        %4115 = vmatpush1.bf16.msra.mxu0 %v4098
        %4116 = vmatprep.subr.bf16.mxu0 0
        %4117 = vmatpush2.bf16.msra.mxu0 0
        %4118 = vmatprep.subr.bf16.mxu0 0
        %4119 = vmatpush2.bf16.msra.mxu0 0
        %4120 = vmatprep.subr.bf16.mxu0 0
        %4121 = vmatpush2.bf16.msra.mxu0 0
        %4122 = vmatprep.subr.bf16.mxu0 0
        %4123 = vmatpush2.bf16.msra.mxu0 0
        %4124 = vmatprep.subr.bf16.mxu0 0
        %4125 = vmatpush2.bf16.msra.mxu0 0
        %4126 = vmatprep.subr.bf16.mxu0 0
        %4127 = vmatpush2.bf16.msra.mxu0 0
        %4128 = vmatprep.subr.bf16.mxu0 0
        %4129 = vmatpush2.bf16.msra.mxu0 0
        %4130 = vmatprep.subr.bf16.mxu0 0
        %4131 = vmatpush2.bf16.msra.mxu0 0
        %4132 = vmatprep.mubr.bf16.mxu0 0
        %4133 = vmatmul.mubr.bf16.gmra.mxu0 %v4095
        %v4134 = vpop.f32.mrf.mxu0
        %v4135 = vadd.f32 0.0, %v4134
        %v4136 = vpop.f32.mrf.mxu0
        %v4137 = vpop.f32.mrf.mxu0
        %v4138 = vpop.f32.mrf.mxu0
        %4139 = vdwg.mxu0
        %v4141 = vsel %vm3394, %v3583, 0
        %v4144 = vsel %vm3590, %v2637, 0
        %4146 = vmatprep.subr.bf16.mxu0 0
        %4147 = vmatpush1.bf16.msra.mxu0 0
        %4148 = vmatprep.subr.bf16.mxu0 0
        %4149 = vmatpush1.bf16.msra.mxu0 0
        %4150 = vmatprep.subr.bf16.mxu0 0
        %4151 = vmatpush1.bf16.msra.mxu0 0
        %4152 = vmatprep.subr.bf16.mxu0 0
        %4153 = vmatpush1.bf16.msra.mxu0 0
        %4154 = vmatprep.subr.bf16.mxu0 0
        %4155 = vmatpush1.bf16.msra.mxu0 0
        %4156 = vmatprep.subr.bf16.mxu0 0
        %4157 = vmatpush1.bf16.msra.mxu0 0
        %4158 = vmatprep.subr.bf16.mxu0 0
        %4159 = vmatpush1.bf16.msra.mxu0 0
        %4160 = vmatprep.subr.bf16.mxu0 0
        %4161 = vmatpush1.bf16.msra.mxu0 %v4144
        %4162 = vmatprep.subr.bf16.mxu0 0
        %4163 = vmatpush2.bf16.msra.mxu0 0
        %4164 = vmatprep.subr.bf16.mxu0 0
        %4165 = vmatpush2.bf16.msra.mxu0 0
        %4166 = vmatprep.subr.bf16.mxu0 0
        %4167 = vmatpush2.bf16.msra.mxu0 0
        %4168 = vmatprep.subr.bf16.mxu0 0
        %4169 = vmatpush2.bf16.msra.mxu0 0
        %4170 = vmatprep.subr.bf16.mxu0 0
        %4171 = vmatpush2.bf16.msra.mxu0 0
        %4172 = vmatprep.subr.bf16.mxu0 0
        %4173 = vmatpush2.bf16.msra.mxu0 0
        %4174 = vmatprep.subr.bf16.mxu0 0
        %4175 = vmatpush2.bf16.msra.mxu0 0
        %4176 = vmatprep.subr.bf16.mxu0 0
        %4177 = vmatpush2.bf16.msra.mxu0 0
        %4178 = vmatprep.mubr.bf16.mxu0 0
        %4179 = vmatmul.mubr.bf16.gmra.mxu0 %v4141
        %v4180 = vpop.f32.mrf.mxu0
        %v4181 = vadd.f32 0.0, %v4180
        %v4182 = vpop.f32.mrf.mxu0
        %v4183 = vpop.f32.mrf.mxu0
        %v4184 = vpop.f32.mrf.mxu0
        %4185 = vdwg.mxu0
        %v4187 = vsel %vm3394, %v3584, 0
        %v4190 = vsel %vm3590, %v2638, 0
        %4192 = vmatprep.subr.bf16.mxu0 0
        %4193 = vmatpush1.bf16.msra.mxu0 0
        %4194 = vmatprep.subr.bf16.mxu0 0
        %4195 = vmatpush1.bf16.msra.mxu0 0
        %4196 = vmatprep.subr.bf16.mxu0 0
        %4197 = vmatpush1.bf16.msra.mxu0 0
        %4198 = vmatprep.subr.bf16.mxu0 0
        %4199 = vmatpush1.bf16.msra.mxu0 0
        %4200 = vmatprep.subr.bf16.mxu0 0
        %4201 = vmatpush1.bf16.msra.mxu0 0
        %4202 = vmatprep.subr.bf16.mxu0 0
        %4203 = vmatpush1.bf16.msra.mxu0 0
        %4204 = vmatprep.subr.bf16.mxu0 0
        %4205 = vmatpush1.bf16.msra.mxu0 0
        %4206 = vmatprep.subr.bf16.mxu0 0
        %4207 = vmatpush1.bf16.msra.mxu0 %v4190
        %4208 = vmatprep.subr.bf16.mxu0 0
        %4209 = vmatpush2.bf16.msra.mxu0 0
        %4210 = vmatprep.subr.bf16.mxu0 0
        %4211 = vmatpush2.bf16.msra.mxu0 0
        %4212 = vmatprep.subr.bf16.mxu0 0
        %4213 = vmatpush2.bf16.msra.mxu0 0
        %4214 = vmatprep.subr.bf16.mxu0 0
        %4215 = vmatpush2.bf16.msra.mxu0 0
        %4216 = vmatprep.subr.bf16.mxu0 0
        %4217 = vmatpush2.bf16.msra.mxu0 0
        %4218 = vmatprep.subr.bf16.mxu0 0
        %4219 = vmatpush2.bf16.msra.mxu0 0
        %4220 = vmatprep.subr.bf16.mxu0 0
        %4221 = vmatpush2.bf16.msra.mxu0 0
        %4222 = vmatprep.subr.bf16.mxu0 0
        %4223 = vmatpush2.bf16.msra.mxu0 0
        %4224 = vmatprep.mubr.bf16.mxu0 0
        %4225 = vmatmul.mubr.bf16.gmra.mxu0 %v4187
        %v4226 = vpop.f32.mrf.mxu0
        %v4227 = vadd.f32 0.0, %v4226
        %v4228 = vpop.f32.mrf.mxu0
        %v4229 = vpop.f32.mrf.mxu0
        %v4230 = vpop.f32.mrf.mxu0
        %4231 = vdwg.mxu0
        %v4233 = vsel %vm3394, %v3585, 0
        %v4236 = vsel %vm3590, %v2639, 0
        %4238 = vmatprep.subr.bf16.mxu0 0
        %4239 = vmatpush1.bf16.msra.mxu0 0
        %4240 = vmatprep.subr.bf16.mxu0 0
        %4241 = vmatpush1.bf16.msra.mxu0 0
        %4242 = vmatprep.subr.bf16.mxu0 0
        %4243 = vmatpush1.bf16.msra.mxu0 0
        %4244 = vmatprep.subr.bf16.mxu0 0
        %4245 = vmatpush1.bf16.msra.mxu0 0
        %4246 = vmatprep.subr.bf16.mxu0 0
        %4247 = vmatpush1.bf16.msra.mxu0 0
        %4248 = vmatprep.subr.bf16.mxu0 0
        %4249 = vmatpush1.bf16.msra.mxu0 0
        %4250 = vmatprep.subr.bf16.mxu0 0
        %4251 = vmatpush1.bf16.msra.mxu0 0
        %4252 = vmatprep.subr.bf16.mxu0 0
        %4253 = vmatpush1.bf16.msra.mxu0 %v4236
        %4254 = vmatprep.subr.bf16.mxu0 0
        %4255 = vmatpush2.bf16.msra.mxu0 0
        %4256 = vmatprep.subr.bf16.mxu0 0
        %4257 = vmatpush2.bf16.msra.mxu0 0
        %4258 = vmatprep.subr.bf16.mxu0 0
        %4259 = vmatpush2.bf16.msra.mxu0 0
        %4260 = vmatprep.subr.bf16.mxu0 0
        %4261 = vmatpush2.bf16.msra.mxu0 0
        %4262 = vmatprep.subr.bf16.mxu0 0
        %4263 = vmatpush2.bf16.msra.mxu0 0
        %4264 = vmatprep.subr.bf16.mxu0 0
        %4265 = vmatpush2.bf16.msra.mxu0 0
        %4266 = vmatprep.subr.bf16.mxu0 0
        %4267 = vmatpush2.bf16.msra.mxu0 0
        %4268 = vmatprep.subr.bf16.mxu0 0
        %4269 = vmatpush2.bf16.msra.mxu0 0
        %4270 = vmatprep.mubr.bf16.mxu0 0
        %4271 = vmatmul.mubr.bf16.gmra.mxu0 %v4233
        %v4272 = vpop.f32.mrf.mxu0
        %v4273 = vadd.f32 0.0, %v4272
        %v4274 = vpop.f32.mrf.mxu0
        %v4275 = vpop.f32.mrf.mxu0
        %v4276 = vpop.f32.mrf.mxu0
        %4277 = vdwg.mxu0
        %v4279 = vsel %vm3394, %v3586, 0
        %v4282 = vsel %vm3590, %v2640, 0
        %4284 = vmatprep.subr.bf16.mxu0 0
        %4285 = vmatpush1.bf16.msra.mxu0 0
        %4286 = vmatprep.subr.bf16.mxu0 0
        %4287 = vmatpush1.bf16.msra.mxu0 0
        %4288 = vmatprep.subr.bf16.mxu0 0
        %4289 = vmatpush1.bf16.msra.mxu0 0
        %4290 = vmatprep.subr.bf16.mxu0 0
        %4291 = vmatpush1.bf16.msra.mxu0 0
        %4292 = vmatprep.subr.bf16.mxu0 0
        %4293 = vmatpush1.bf16.msra.mxu0 0
        %4294 = vmatprep.subr.bf16.mxu0 0
        %4295 = vmatpush1.bf16.msra.mxu0 0
        %4296 = vmatprep.subr.bf16.mxu0 0
        %4297 = vmatpush1.bf16.msra.mxu0 0
        %4298 = vmatprep.subr.bf16.mxu0 0
        %4299 = vmatpush1.bf16.msra.mxu0 %v4282
        %4300 = vmatprep.subr.bf16.mxu0 0
        %4301 = vmatpush2.bf16.msra.mxu0 0
        %4302 = vmatprep.subr.bf16.mxu0 0
        %4303 = vmatpush2.bf16.msra.mxu0 0
        %4304 = vmatprep.subr.bf16.mxu0 0
        %4305 = vmatpush2.bf16.msra.mxu0 0
        %4306 = vmatprep.subr.bf16.mxu0 0
        %4307 = vmatpush2.bf16.msra.mxu0 0
        %4308 = vmatprep.subr.bf16.mxu0 0
        %4309 = vmatpush2.bf16.msra.mxu0 0
        %4310 = vmatprep.subr.bf16.mxu0 0
        %4311 = vmatpush2.bf16.msra.mxu0 0
        %4312 = vmatprep.subr.bf16.mxu0 0
        %4313 = vmatpush2.bf16.msra.mxu0 0
        %4314 = vmatprep.subr.bf16.mxu0 0
        %4315 = vmatpush2.bf16.msra.mxu0 0
        %4316 = vmatprep.mubr.bf16.mxu0 0
        %4317 = vmatmul.mubr.bf16.gmra.mxu0 %v4279
        %v4318 = vpop.f32.mrf.mxu0
        %v4319 = vadd.f32 0.0, %v4318
        %v4320 = vpop.f32.mrf.mxu0
        %v4321 = vpop.f32.mrf.mxu0
        %v4322 = vpop.f32.mrf.mxu0
        %4323 = vdwg.mxu0
        %v4324 = vcombine.low %v3629, %v3721
        %v4325 = vcombine.high %v3629, %v3721
        %v4327 = vunpack.c.l.s4 1983009808
        %v4328 = vunpack.c.0.s8 %v4327
        %v4329 = vlaneseq
        %v4330 = vshrl.u32 %v4329, 7
        %v4331 = vsub.s32 %v4328, %v4330
        %v4332 = vrot.slane %v4324, %v4331
        %v4334 = vunpack.c.l.s4 1983009808
        %v4335 = vunpack.c.0.s8 %v4334
        %v4336 = vlaneseq
        %v4337 = vshrl.u32 %v4336, 7
        %v4338 = vsub.s32 %v4335, %v4337
        %v4339 = vrot.slane %v4325, %v4338
        %v4340 = vcombine.low %v3675, %v3767
        %v4341 = vcombine.high %v3675, %v3767
        %v4343 = vunpack.c.l.s4 1983009808
        %v4344 = vunpack.c.0.s8 %v4343
        %v4345 = vlaneseq
        %v4346 = vshrl.u32 %v4345, 7
        %v4347 = vsub.s32 %v4344, %v4346
        %v4348 = vrot.slane %v4340, %v4347
        %v4350 = vunpack.c.l.s4 1983009808
        %v4351 = vunpack.c.0.s8 %v4350
        %v4352 = vlaneseq
        %v4353 = vshrl.u32 %v4352, 7
        %v4354 = vsub.s32 %v4351, %v4353
        %v4355 = vrot.slane %v4341, %v4354
        %v4356 = vcombine.low %v3813, %v3905
        %v4357 = vcombine.high %v3813, %v3905
        %v4359 = vunpack.c.l.s4 1983009808
        %v4360 = vunpack.c.0.s8 %v4359
        %v4361 = vlaneseq
        %v4362 = vshrl.u32 %v4361, 7
        %v4363 = vsub.s32 %v4360, %v4362
        %v4364 = vrot.slane %v4356, %v4363
        %v4366 = vunpack.c.l.s4 1983009808
        %v4367 = vunpack.c.0.s8 %v4366
        %v4368 = vlaneseq
        %v4369 = vshrl.u32 %v4368, 7
        %v4370 = vsub.s32 %v4367, %v4369
        %v4371 = vrot.slane %v4357, %v4370
        %v4372 = vcombine.low %v3859, %v3951
        %v4373 = vcombine.high %v3859, %v3951
        %v4375 = vunpack.c.l.s4 1983009808
        %v4376 = vunpack.c.0.s8 %v4375
        %v4377 = vlaneseq
        %v4378 = vshrl.u32 %v4377, 7
        %v4379 = vsub.s32 %v4376, %v4378
        %v4380 = vrot.slane %v4372, %v4379
        %v4382 = vunpack.c.l.s4 1983009808
        %v4383 = vunpack.c.0.s8 %v4382
        %v4384 = vlaneseq
        %v4385 = vshrl.u32 %v4384, 7
        %v4386 = vsub.s32 %v4383, %v4385
        %v4387 = vrot.slane %v4373, %v4386
        %v4388 = vcombine.low %v4332, %v4348
        %v4389 = vcombine.high %v4332, %v4348
        %v4391 = vunpack.c.l.s4 1934713408
        %v4392 = vunpack.c.0.s8 %v4391
        %v4393 = vlaneseq
        %v4394 = vshrl.u32 %v4393, 7
        %v4395 = vsub.s32 %v4392, %v4394
        %v4396 = vrot.slane %v4388, %v4395
        %v4398 = vunpack.c.l.s4 1934713408
        %v4399 = vunpack.c.0.s8 %v4398
        %v4400 = vlaneseq
        %v4401 = vshrl.u32 %v4400, 7
        %v4402 = vsub.s32 %v4399, %v4401
        %v4403 = vrot.slane %v4389, %v4402
        %v4404 = vcombine.low %v4339, %v4355
        %v4405 = vcombine.high %v4339, %v4355
        %v4407 = vunpack.c.l.s4 1934713408
        %v4408 = vunpack.c.0.s8 %v4407
        %v4409 = vlaneseq
        %v4410 = vshrl.u32 %v4409, 7
        %v4411 = vsub.s32 %v4408, %v4410
        %v4412 = vrot.slane %v4404, %v4411
        %v4414 = vunpack.c.l.s4 1934713408
        %v4415 = vunpack.c.0.s8 %v4414
        %v4416 = vlaneseq
        %v4417 = vshrl.u32 %v4416, 7
        %v4418 = vsub.s32 %v4415, %v4417
        %v4419 = vrot.slane %v4405, %v4418
        %v4420 = vcombine.low %v4364, %v4380
        %v4421 = vcombine.high %v4364, %v4380
        %v4423 = vunpack.c.l.s4 1934713408
        %v4424 = vunpack.c.0.s8 %v4423
        %v4425 = vlaneseq
        %v4426 = vshrl.u32 %v4425, 7
        %v4427 = vsub.s32 %v4424, %v4426
        %v4428 = vrot.slane %v4420, %v4427
        %v4430 = vunpack.c.l.s4 1934713408
        %v4431 = vunpack.c.0.s8 %v4430
        %v4432 = vlaneseq
        %v4433 = vshrl.u32 %v4432, 7
        %v4434 = vsub.s32 %v4431, %v4433
        %v4435 = vrot.slane %v4421, %v4434
        %v4436 = vcombine.low %v4371, %v4387
        %v4437 = vcombine.high %v4371, %v4387
        %v4439 = vunpack.c.l.s4 1934713408
        %v4440 = vunpack.c.0.s8 %v4439
        %v4441 = vlaneseq
        %v4442 = vshrl.u32 %v4441, 7
        %v4443 = vsub.s32 %v4440, %v4442
        %v4444 = vrot.slane %v4436, %v4443
        %v4446 = vunpack.c.l.s4 1934713408
        %v4447 = vunpack.c.0.s8 %v4446
        %v4448 = vlaneseq
        %v4449 = vshrl.u32 %v4448, 7
        %v4450 = vsub.s32 %v4447, %v4449
        %v4451 = vrot.slane %v4437, %v4450
        %v4452 = vcombine.low %v4396, %v4428
        %v4453 = vcombine.high %v4396, %v4428
        %v4454 = vcombine.low %v4403, %v4435
        %v4455 = vcombine.high %v4403, %v4435
        %v4456 = vcombine.low %v4412, %v4444
        %v4457 = vcombine.high %v4412, %v4444
        %v4458 = vcombine.low %v4419, %v4451
        %v4459 = vcombine.high %v4419, %v4451
        %v4460 = vcombine.low %v3997, %v4089
        %v4461 = vcombine.high %v3997, %v4089
        %v4463 = vunpack.c.l.s4 1983009808
        %v4464 = vunpack.c.0.s8 %v4463
        %v4465 = vlaneseq
        %v4466 = vshrl.u32 %v4465, 7
        %v4467 = vsub.s32 %v4464, %v4466
        %v4468 = vrot.slane %v4460, %v4467
        %v4470 = vunpack.c.l.s4 1983009808
        %v4471 = vunpack.c.0.s8 %v4470
        %v4472 = vlaneseq
        %v4473 = vshrl.u32 %v4472, 7
        %v4474 = vsub.s32 %v4471, %v4473
        %v4475 = vrot.slane %v4461, %v4474
        %v4476 = vcombine.low %v4043, %v4135
        %v4477 = vcombine.high %v4043, %v4135
        %v4479 = vunpack.c.l.s4 1983009808
        %v4480 = vunpack.c.0.s8 %v4479
        %v4481 = vlaneseq
        %v4482 = vshrl.u32 %v4481, 7
        %v4483 = vsub.s32 %v4480, %v4482
        %v4484 = vrot.slane %v4476, %v4483
        %v4486 = vunpack.c.l.s4 1983009808
        %v4487 = vunpack.c.0.s8 %v4486
        %v4488 = vlaneseq
        %v4489 = vshrl.u32 %v4488, 7
        %v4490 = vsub.s32 %v4487, %v4489
        %v4491 = vrot.slane %v4477, %v4490
        %v4492 = vcombine.low %v4181, %v4273
        %v4493 = vcombine.high %v4181, %v4273
        %v4495 = vunpack.c.l.s4 1983009808
        %v4496 = vunpack.c.0.s8 %v4495
        %v4497 = vlaneseq
        %v4498 = vshrl.u32 %v4497, 7
        %v4499 = vsub.s32 %v4496, %v4498
        %v4500 = vrot.slane %v4492, %v4499
        %v4502 = vunpack.c.l.s4 1983009808
        %v4503 = vunpack.c.0.s8 %v4502
        %v4504 = vlaneseq
        %v4505 = vshrl.u32 %v4504, 7
        %v4506 = vsub.s32 %v4503, %v4505
        %v4507 = vrot.slane %v4493, %v4506
        %v4508 = vcombine.low %v4227, %v4319
        %v4509 = vcombine.high %v4227, %v4319
        %v4511 = vunpack.c.l.s4 1983009808
        %v4512 = vunpack.c.0.s8 %v4511
        %v4513 = vlaneseq
        %v4514 = vshrl.u32 %v4513, 7
        %v4515 = vsub.s32 %v4512, %v4514
        %v4516 = vrot.slane %v4508, %v4515
        %v4518 = vunpack.c.l.s4 1983009808
        %v4519 = vunpack.c.0.s8 %v4518
        %v4520 = vlaneseq
        %v4521 = vshrl.u32 %v4520, 7
        %v4522 = vsub.s32 %v4519, %v4521
        %v4523 = vrot.slane %v4509, %v4522
        %v4524 = vcombine.low %v4468, %v4484
        %v4525 = vcombine.high %v4468, %v4484
        %v4527 = vunpack.c.l.s4 1934713408
        %v4528 = vunpack.c.0.s8 %v4527
        %v4529 = vlaneseq
        %v4530 = vshrl.u32 %v4529, 7
        %v4531 = vsub.s32 %v4528, %v4530
        %v4532 = vrot.slane %v4524, %v4531
        %v4534 = vunpack.c.l.s4 1934713408
        %v4535 = vunpack.c.0.s8 %v4534
        %v4536 = vlaneseq
        %v4537 = vshrl.u32 %v4536, 7
        %v4538 = vsub.s32 %v4535, %v4537
        %v4539 = vrot.slane %v4525, %v4538
        %v4540 = vcombine.low %v4475, %v4491
        %v4541 = vcombine.high %v4475, %v4491
        %v4543 = vunpack.c.l.s4 1934713408
        %v4544 = vunpack.c.0.s8 %v4543
        %v4545 = vlaneseq
        %v4546 = vshrl.u32 %v4545, 7
        %v4547 = vsub.s32 %v4544, %v4546
        %v4548 = vrot.slane %v4540, %v4547
        %v4550 = vunpack.c.l.s4 1934713408
        %v4551 = vunpack.c.0.s8 %v4550
        %v4552 = vlaneseq
        %v4553 = vshrl.u32 %v4552, 7
        %v4554 = vsub.s32 %v4551, %v4553
        %v4555 = vrot.slane %v4541, %v4554
        %v4556 = vcombine.low %v4500, %v4516
        %v4557 = vcombine.high %v4500, %v4516
        %v4559 = vunpack.c.l.s4 1934713408
        %v4560 = vunpack.c.0.s8 %v4559
        %v4561 = vlaneseq
        %v4562 = vshrl.u32 %v4561, 7
        %v4563 = vsub.s32 %v4560, %v4562
        %v4564 = vrot.slane %v4556, %v4563
        %v4566 = vunpack.c.l.s4 1934713408
        %v4567 = vunpack.c.0.s8 %v4566
        %v4568 = vlaneseq
        %v4569 = vshrl.u32 %v4568, 7
        %v4570 = vsub.s32 %v4567, %v4569
        %v4571 = vrot.slane %v4557, %v4570
        %v4572 = vcombine.low %v4507, %v4523
        %v4573 = vcombine.high %v4507, %v4523
        %v4575 = vunpack.c.l.s4 1934713408
        %v4576 = vunpack.c.0.s8 %v4575
        %v4577 = vlaneseq
        %v4578 = vshrl.u32 %v4577, 7
        %v4579 = vsub.s32 %v4576, %v4578
        %v4580 = vrot.slane %v4572, %v4579
        %v4582 = vunpack.c.l.s4 1934713408
        %v4583 = vunpack.c.0.s8 %v4582
        %v4584 = vlaneseq
        %v4585 = vshrl.u32 %v4584, 7
        %v4586 = vsub.s32 %v4583, %v4585
        %v4587 = vrot.slane %v4573, %v4586
        %v4588 = vcombine.low %v4532, %v4564
        %v4589 = vcombine.high %v4532, %v4564
        %v4590 = vcombine.low %v4539, %v4571
        %v4591 = vcombine.high %v4539, %v4571
        %v4592 = vcombine.low %v4548, %v4580
        %v4593 = vcombine.high %v4548, %v4580
        %v4594 = vcombine.low %v4555, %v4587
        %v4595 = vcombine.high %v4555, %v4587
        %v4596 = vcombine.low %v4452, %v4454
        %v4597 = vcombine.high %v4452, %v4454
        %v4599 = vunpack.c.l.s4 1983009808
        %v4600 = vunpack.c.0.s8 %v4599
        %v4601 = vlaneseq
        %v4602 = vshrl.u32 %v4601, 7
        %v4603 = vsub.s32 %v4600, %v4602
        %v4604 = vrot.slane %v4596, %v4603
        %v4606 = vunpack.c.l.s4 1983009808
        %v4607 = vunpack.c.0.s8 %v4606
        %v4608 = vlaneseq
        %v4609 = vshrl.u32 %v4608, 7
        %v4610 = vsub.s32 %v4607, %v4609
        %v4611 = vrot.slane %v4597, %v4610
        %v4612 = vcombine.low %v4453, %v4455
        %v4613 = vcombine.high %v4453, %v4455
        %v4615 = vunpack.c.l.s4 1983009808
        %v4616 = vunpack.c.0.s8 %v4615
        %v4617 = vlaneseq
        %v4618 = vshrl.u32 %v4617, 7
        %v4619 = vsub.s32 %v4616, %v4618
        %v4620 = vrot.slane %v4612, %v4619
        %v4622 = vunpack.c.l.s4 1983009808
        %v4623 = vunpack.c.0.s8 %v4622
        %v4624 = vlaneseq
        %v4625 = vshrl.u32 %v4624, 7
        %v4626 = vsub.s32 %v4623, %v4625
        %v4627 = vrot.slane %v4613, %v4626
        %v4628 = vcombine.low %v4456, %v4458
        %v4629 = vcombine.high %v4456, %v4458
        %v4631 = vunpack.c.l.s4 1983009808
        %v4632 = vunpack.c.0.s8 %v4631
        %v4633 = vlaneseq
        %v4634 = vshrl.u32 %v4633, 7
        %v4635 = vsub.s32 %v4632, %v4634
        %v4636 = vrot.slane %v4628, %v4635
        %v4638 = vunpack.c.l.s4 1983009808
        %v4639 = vunpack.c.0.s8 %v4638
        %v4640 = vlaneseq
        %v4641 = vshrl.u32 %v4640, 7
        %v4642 = vsub.s32 %v4639, %v4641
        %v4643 = vrot.slane %v4629, %v4642
        %v4644 = vcombine.low %v4457, %v4459
        %v4645 = vcombine.high %v4457, %v4459
        %v4647 = vunpack.c.l.s4 1983009808
        %v4648 = vunpack.c.0.s8 %v4647
        %v4649 = vlaneseq
        %v4650 = vshrl.u32 %v4649, 7
        %v4651 = vsub.s32 %v4648, %v4650
        %v4652 = vrot.slane %v4644, %v4651
        %v4654 = vunpack.c.l.s4 1983009808
        %v4655 = vunpack.c.0.s8 %v4654
        %v4656 = vlaneseq
        %v4657 = vshrl.u32 %v4656, 7
        %v4658 = vsub.s32 %v4655, %v4657
        %v4659 = vrot.slane %v4645, %v4658
        %v4660 = vcombine.low %v4604, %v4620
        %v4661 = vcombine.high %v4604, %v4620
        %v4663 = vunpack.c.l.s4 1934713408
        %v4664 = vunpack.c.0.s8 %v4663
        %v4665 = vlaneseq
        %v4666 = vshrl.u32 %v4665, 7
        %v4667 = vsub.s32 %v4664, %v4666
        %v4668 = vrot.slane %v4660, %v4667
        %v4670 = vunpack.c.l.s4 1934713408
        %v4671 = vunpack.c.0.s8 %v4670
        %v4672 = vlaneseq
        %v4673 = vshrl.u32 %v4672, 7
        %v4674 = vsub.s32 %v4671, %v4673
        %v4675 = vrot.slane %v4661, %v4674
        %v4676 = vcombine.low %v4611, %v4627
        %v4677 = vcombine.high %v4611, %v4627
        %v4679 = vunpack.c.l.s4 1934713408
        %v4680 = vunpack.c.0.s8 %v4679
        %v4681 = vlaneseq
        %v4682 = vshrl.u32 %v4681, 7
        %v4683 = vsub.s32 %v4680, %v4682
        %v4684 = vrot.slane %v4676, %v4683
        %v4686 = vunpack.c.l.s4 1934713408
        %v4687 = vunpack.c.0.s8 %v4686
        %v4688 = vlaneseq
        %v4689 = vshrl.u32 %v4688, 7
        %v4690 = vsub.s32 %v4687, %v4689
        %v4691 = vrot.slane %v4677, %v4690
        %v4692 = vcombine.low %v4636, %v4652
        %v4693 = vcombine.high %v4636, %v4652
        %v4695 = vunpack.c.l.s4 1934713408
        %v4696 = vunpack.c.0.s8 %v4695
        %v4697 = vlaneseq
        %v4698 = vshrl.u32 %v4697, 7
        %v4699 = vsub.s32 %v4696, %v4698
        %v4700 = vrot.slane %v4692, %v4699
        %v4702 = vunpack.c.l.s4 1934713408
        %v4703 = vunpack.c.0.s8 %v4702
        %v4704 = vlaneseq
        %v4705 = vshrl.u32 %v4704, 7
        %v4706 = vsub.s32 %v4703, %v4705
        %v4707 = vrot.slane %v4693, %v4706
        %v4708 = vcombine.low %v4643, %v4659
        %v4709 = vcombine.high %v4643, %v4659
        %v4711 = vunpack.c.l.s4 1934713408
        %v4712 = vunpack.c.0.s8 %v4711
        %v4713 = vlaneseq
        %v4714 = vshrl.u32 %v4713, 7
        %v4715 = vsub.s32 %v4712, %v4714
        %v4716 = vrot.slane %v4708, %v4715
        %v4718 = vunpack.c.l.s4 1934713408
        %v4719 = vunpack.c.0.s8 %v4718
        %v4720 = vlaneseq
        %v4721 = vshrl.u32 %v4720, 7
        %v4722 = vsub.s32 %v4719, %v4721
        %v4723 = vrot.slane %v4709, %v4722
        %v4724 = vcombine.low %v4668, %v4700
        %v4725 = vcombine.high %v4668, %v4700
        %v4726 = vcombine.low %v4675, %v4707
        %v4727 = vcombine.high %v4675, %v4707
        %v4728 = vcombine.low %v4684, %v4716
        %v4729 = vcombine.high %v4684, %v4716
        %v4730 = vcombine.low %v4691, %v4723
        %v4731 = vcombine.high %v4691, %v4723
        %v4732 = vcombine.low %v4588, %v4590
        %v4733 = vcombine.high %v4588, %v4590
        %v4735 = vunpack.c.l.s4 1983009808
        %v4736 = vunpack.c.0.s8 %v4735
        %v4737 = vlaneseq
        %v4738 = vshrl.u32 %v4737, 7
        %v4739 = vsub.s32 %v4736, %v4738
        %v4740 = vrot.slane %v4732, %v4739
        %v4742 = vunpack.c.l.s4 1983009808
        %v4743 = vunpack.c.0.s8 %v4742
        %v4744 = vlaneseq
        %v4745 = vshrl.u32 %v4744, 7
        %v4746 = vsub.s32 %v4743, %v4745
        %v4747 = vrot.slane %v4733, %v4746
        %v4748 = vcombine.low %v4589, %v4591
        %v4749 = vcombine.high %v4589, %v4591
        %v4751 = vunpack.c.l.s4 1983009808
        %v4752 = vunpack.c.0.s8 %v4751
        %v4753 = vlaneseq
        %v4754 = vshrl.u32 %v4753, 7
        %v4755 = vsub.s32 %v4752, %v4754
        %v4756 = vrot.slane %v4748, %v4755
        %v4758 = vunpack.c.l.s4 1983009808
        %v4759 = vunpack.c.0.s8 %v4758
        %v4760 = vlaneseq
        %v4761 = vshrl.u32 %v4760, 7
        %v4762 = vsub.s32 %v4759, %v4761
        %v4763 = vrot.slane %v4749, %v4762
        %v4764 = vcombine.low %v4592, %v4594
        %v4765 = vcombine.high %v4592, %v4594
        %v4767 = vunpack.c.l.s4 1983009808
        %v4768 = vunpack.c.0.s8 %v4767
        %v4769 = vlaneseq
        %v4770 = vshrl.u32 %v4769, 7
        %v4771 = vsub.s32 %v4768, %v4770
        %v4772 = vrot.slane %v4764, %v4771
        %v4774 = vunpack.c.l.s4 1983009808
        %v4775 = vunpack.c.0.s8 %v4774
        %v4776 = vlaneseq
        %v4777 = vshrl.u32 %v4776, 7
        %v4778 = vsub.s32 %v4775, %v4777
        %v4779 = vrot.slane %v4765, %v4778
        %v4780 = vcombine.low %v4593, %v4595
        %v4781 = vcombine.high %v4593, %v4595
        %v4783 = vunpack.c.l.s4 1983009808
        %v4784 = vunpack.c.0.s8 %v4783
        %v4785 = vlaneseq
        %v4786 = vshrl.u32 %v4785, 7
        %v4787 = vsub.s32 %v4784, %v4786
        %v4788 = vrot.slane %v4780, %v4787
        %v4790 = vunpack.c.l.s4 1983009808
        %v4791 = vunpack.c.0.s8 %v4790
        %v4792 = vlaneseq
        %v4793 = vshrl.u32 %v4792, 7
        %v4794 = vsub.s32 %v4791, %v4793
        %v4795 = vrot.slane %v4781, %v4794
        %v4796 = vcombine.low %v4740, %v4756
        %v4797 = vcombine.high %v4740, %v4756
        %v4799 = vunpack.c.l.s4 1934713408
        %v4800 = vunpack.c.0.s8 %v4799
        %v4801 = vlaneseq
        %v4802 = vshrl.u32 %v4801, 7
        %v4803 = vsub.s32 %v4800, %v4802
        %v4804 = vrot.slane %v4796, %v4803
        %v4806 = vunpack.c.l.s4 1934713408
        %v4807 = vunpack.c.0.s8 %v4806
        %v4808 = vlaneseq
        %v4809 = vshrl.u32 %v4808, 7
        %v4810 = vsub.s32 %v4807, %v4809
        %v4811 = vrot.slane %v4797, %v4810
        %v4812 = vcombine.low %v4747, %v4763
        %v4813 = vcombine.high %v4747, %v4763
        %v4815 = vunpack.c.l.s4 1934713408
        %v4816 = vunpack.c.0.s8 %v4815
        %v4817 = vlaneseq
        %v4818 = vshrl.u32 %v4817, 7
        %v4819 = vsub.s32 %v4816, %v4818
        %v4820 = vrot.slane %v4812, %v4819
        %v4822 = vunpack.c.l.s4 1934713408
        %v4823 = vunpack.c.0.s8 %v4822
        %v4824 = vlaneseq
        %v4825 = vshrl.u32 %v4824, 7
        %v4826 = vsub.s32 %v4823, %v4825
        %v4827 = vrot.slane %v4813, %v4826
        %v4828 = vcombine.low %v4772, %v4788
        %v4829 = vcombine.high %v4772, %v4788
        %v4831 = vunpack.c.l.s4 1934713408
        %v4832 = vunpack.c.0.s8 %v4831
        %v4833 = vlaneseq
        %v4834 = vshrl.u32 %v4833, 7
        %v4835 = vsub.s32 %v4832, %v4834
        %v4836 = vrot.slane %v4828, %v4835
        %v4838 = vunpack.c.l.s4 1934713408
        %v4839 = vunpack.c.0.s8 %v4838
        %v4840 = vlaneseq
        %v4841 = vshrl.u32 %v4840, 7
        %v4842 = vsub.s32 %v4839, %v4841
        %v4843 = vrot.slane %v4829, %v4842
        %v4844 = vcombine.low %v4779, %v4795
        %v4845 = vcombine.high %v4779, %v4795
        %v4847 = vunpack.c.l.s4 1934713408
        %v4848 = vunpack.c.0.s8 %v4847
        %v4849 = vlaneseq
        %v4850 = vshrl.u32 %v4849, 7
        %v4851 = vsub.s32 %v4848, %v4850
        %v4852 = vrot.slane %v4844, %v4851
        %v4854 = vunpack.c.l.s4 1934713408
        %v4855 = vunpack.c.0.s8 %v4854
        %v4856 = vlaneseq
        %v4857 = vshrl.u32 %v4856, 7
        %v4858 = vsub.s32 %v4855, %v4857
        %v4859 = vrot.slane %v4845, %v4858
        %v4860 = vcombine.low %v4804, %v4836
        %v4861 = vcombine.high %v4804, %v4836
        %v4862 = vcombine.low %v4811, %v4843
        %v4863 = vcombine.high %v4811, %v4843
        %v4864 = vcombine.low %v4820, %v4852
        %v4865 = vcombine.high %v4820, %v4852
        %v4866 = vcombine.low %v4827, %v4859
        %v4867 = vcombine.high %v4827, %v4859
        %4870 = vrot.lane.b32.xlu0 %v4725, 16
        %v4871 = vpop.permute.xlu0 %4870
        %4872 = vrot.lane.b32.xlu0 %v4861, 16
        %v4873 = vpop.permute.xlu0 %4872
        %4878 = vrot.lane.b32.xlu0 %v4726, 32
        %v4879 = vpop.permute.xlu0 %4878
        %4880 = vrot.lane.b32.xlu0 %v4862, 32
        %v4881 = vpop.permute.xlu0 %4880
        %4886 = vrot.lane.b32.xlu0 %v4727, 48
        %v4887 = vpop.permute.xlu0 %4886
        %4888 = vrot.lane.b32.xlu0 %v4863, 48
        %v4889 = vpop.permute.xlu0 %4888
        %4894 = vrot.lane.b32.xlu0 %v4728, 64
        %v4895 = vpop.permute.xlu0 %4894
        %4896 = vrot.lane.b32.xlu0 %v4864, 64
        %v4897 = vpop.permute.xlu0 %4896
        %4902 = vrot.lane.b32.xlu0 %v4729, 80
        %v4903 = vpop.permute.xlu0 %4902
        %4904 = vrot.lane.b32.xlu0 %v4865, 80
        %v4905 = vpop.permute.xlu0 %4904
        %4910 = vrot.lane.b32.xlu0 %v4730, 96
        %v4911 = vpop.permute.xlu0 %4910
        %4912 = vrot.lane.b32.xlu0 %v4866, 96
        %v4913 = vpop.permute.xlu0 %4912
        %4918 = vrot.lane.b32.xlu0 %v4731, 112
        %v4919 = vpop.permute.xlu0 %4918
        %4920 = vrot.lane.b32.xlu0 %v4867, 112
        %v4921 = vpop.permute.xlu0 %4920
        %v4924 = vsel %vm2641, %v4724, %v4871
        %v4925 = vsel %vm2641, %v4860, %v4873
        %vm4926 = vcmask 261120
        %v4927 = vsel %vm4926, %v4924, %v4879
        %v4928 = vsel %vm4926, %v4925, %v4881
        %vm4929 = vcmask 392192
        %v4930 = vsel %vm4929, %v4927, %v4887
        %v4931 = vsel %vm4929, %v4928, %v4889
        %vm4932 = vcmask 523264
        %v4933 = vsel %vm4932, %v4930, %v4895
        %v4934 = vsel %vm4932, %v4931, %v4897
        %vm4935 = vcmask 654336
        %v4936 = vsel %vm4935, %v4933, %v4903
        %v4937 = vsel %vm4935, %v4934, %v4905
        %vm4938 = vcmask 785408
        %v4939 = vsel %vm4938, %v4936, %v4911
        %v4940 = vsel %vm4938, %v4937, %v4913
        %vm4941 = vcmask 916480
        %v4942 = vsel %vm4941, %v4939, %v4919
        %v4943 = vsel %vm4941, %v4940, %v4921
        %v4944 = vld [vmem:[%s471 + $0xc] sm:$0xf]
        %v4945 = vld [vmem:[%s471 + $0x34] sm:$0xf]
        %v4946 = vld [vmem:[%s471 + $0x5c] sm:$0xf]
        %v4947 = vld [vmem:[%s471 + $0x84] sm:$0xf]
        %v4948 = vld [vmem:[%s471 + $0xac] sm:$0xf]
        %v4949 = vld [vmem:[%s471 + $0xd4] sm:$0xf]
        %v4950 = vld [vmem:[%s471 + $0xfc] sm:$0xf]
        %v4951 = vld [vmem:[%s471 + $0x124] sm:$0xf]
        %v4952 = vld [vmem:[%s471 + $0x14c] sm:$0xf]
        %v4953 = vld [vmem:[%s471 + $0x174] sm:$0xf]
        %v4954 = vld [vmem:[%s471 + $0x19c] sm:$0xf]
        %v4955 = vld [vmem:[%s471 + $0x1c4] sm:$0xf]
        %v4956 = vld [vmem:[%s471 + $0x1ec] sm:$0xf]
        %v4957 = vld [vmem:[%s471 + $0x214] sm:$0xf]
        %v4958 = vld [vmem:[%s471 + $0x23c] sm:$0xf]
        %v4959 = vld [vmem:[%s471 + $0x264] sm:$0xf]
        %v4960 = vpack.c.bf16 %v4943, %v4942
        %v4961 = vlaneseq
        %v4962 = vshrl.u32 %v4961, 7
        %v4963 = vsub.s32 3, %v4962
        %v4964 = vrot.slane %v563, %v4963
        %v4981 = vunpack.c.l.b16 %v4944
        %v4982 = vunpack.c.l.b16 %v4945
        %v4983 = vunpack.c.l.b16 %v4946
        %v4984 = vunpack.c.l.b16 %v4947
        %v4985 = vunpack.c.l.b16 %v4948
        %v4986 = vunpack.c.l.b16 %v4949
        %v4987 = vunpack.c.l.b16 %v4950
        %v4988 = vunpack.c.l.b16 %v4951
        %v4989 = vunpack.c.l.b16 %v4952
        %v4990 = vunpack.c.l.b16 %v4953
        %v4991 = vunpack.c.l.b16 %v4954
        %v4992 = vunpack.c.l.b16 %v4955
        %v4993 = vunpack.c.l.b16 %v4956
        %v4994 = vunpack.c.l.b16 %v4957
        %v4995 = vunpack.c.l.b16 %v4958
        %v4996 = vunpack.c.l.b16 %v4959
        %v4997 = vpack.c.b16 %v4982, %v4981
        %v4998 = vpack.c.b16 %v4984, %v4983
        %v4999 = vpack.c.b16 %v4986, %v4985
        %v5000 = vpack.c.b16 %v4988, %v4987
        %v5001 = vpack.c.b16 %v4990, %v4989
        %v5002 = vpack.c.b16 %v4992, %v4991
        %v5003 = vpack.c.b16 %v4994, %v4993
        %v5004 = vpack.c.b16 %v4996, %v4995
        %5013 = vmatprep.subr.bf16.mxu0 0
        %5014 = vmatpush1.bf16.msra.mxu0 %v5004
        %5015 = vmatprep.subr.bf16.mxu0 0
        %5016 = vmatpush1.bf16.msra.mxu0 %v5003
        %5017 = vmatprep.subr.bf16.mxu0 0
        %5018 = vmatpush1.bf16.msra.mxu0 %v5002
        %5019 = vmatprep.subr.bf16.mxu0 0
        %5020 = vmatpush1.bf16.msra.mxu0 %v5001
        %5021 = vmatprep.subr.bf16.mxu0 0
        %5022 = vmatpush1.bf16.msra.mxu0 %v5000
        %5023 = vmatprep.subr.bf16.mxu0 0
        %5024 = vmatpush1.bf16.msra.mxu0 %v4999
        %5025 = vmatprep.subr.bf16.mxu0 0
        %5026 = vmatpush1.bf16.msra.mxu0 %v4998
        %5027 = vmatprep.subr.bf16.mxu0 0
        %5028 = vmatpush1.bf16.msra.mxu0 %v4997
        %5029 = vmatprep.subr.bf16.mxu0 0
        %5030 = vmatpush2.bf16.msra.mxu0 0
        %5031 = vmatprep.subr.bf16.mxu0 0
        %5032 = vmatpush2.bf16.msra.mxu0 0
        %5033 = vmatprep.subr.bf16.mxu0 0
        %5034 = vmatpush2.bf16.msra.mxu0 0
        %5035 = vmatprep.subr.bf16.mxu0 0
        %5036 = vmatpush2.bf16.msra.mxu0 0
        %5037 = vmatprep.subr.bf16.mxu0 0
        %5038 = vmatpush2.bf16.msra.mxu0 0
        %5039 = vmatprep.subr.bf16.mxu0 0
        %5040 = vmatpush2.bf16.msra.mxu0 0
        %5041 = vmatprep.subr.bf16.mxu0 0
        %5042 = vmatpush2.bf16.msra.mxu0 0
        %5043 = vmatprep.subr.bf16.mxu0 0
        %5044 = vmatpush2.bf16.msra.mxu0 0
        %5045 = vmatprep.mubr.bf16.mxu0 0
        %5046 = vmatmul.mubr.bf16.gmra.mxu0 %v4960
        %v5047 = vpop.f32.mrf.mxu0
        %v5048 = vadd.f32 %v4964, %v5047
        %v5049 = vpop.f32.mrf.mxu0
        %v5050 = vpop.f32.mrf.mxu0
        %v5051 = vadd.f32 %v4964, %v5050
        %v5052 = vpop.f32.mrf.mxu0
        %5053 = vdwg.mxu0
        %v5054 = vadd.f32 %v551, %v5048
        %v5055 = vadd.f32 %v552, %v5051
        %5056 = vadd.xlane.f32.xlu0 %v5054
        %v5057 = vpop.xlane.xlu0 %5056
        %5058 = vadd.xlane.f32.xlu0 %v5055
        %v5059 = vpop.xlane.xlu0 %5058
        %v5060 = vrcp.pop 128.0
        %v5061 = vmul.f32 %v5057, %v5060
        %v5062 = vmul.f32 %v5059, %v5060
        %v5063 = vsub.f32 %v5054, %v5061
        %v5064 = vsub.f32 %v5055, %v5062
        %v5065 = vmul.f32 %v5063, %v5063
        %v5066 = vmul.f32 %v5064, %v5064
        %5067 = vadd.xlane.f32.xlu0 %v5065
        %v5068 = vpop.xlane.xlu0 %5067
        %5069 = vadd.xlane.f32.xlu0 %v5066
        %v5070 = vpop.xlane.xlu0 %5069
        %v5071 = vmul.f32 %v5068, %v5060
        %v5072 = vmul.f32 %v5070, %v5060
        %v5073 = vadd.f32 %v5071, 1e-05
        %v5074 = vadd.f32 %v5072, 1e-05
        %v5075 = vrsqrt.pop %v5073
        %v5076 = vrsqrt.pop %v5074
        %v5077 = vmul.f32 %v5063, %v5075
        %v5078 = vmul.f32 %v5064, %v5076
        %v5079 = vlaneseq
        %v5080 = vshrl.u32 %v5079, 7
        %v5081 = vsub.s32 1, %v5080
        %v5082 = vrot.slane %v564, %v5081
        %v5083 = vmul.f32 %v5077, %v5082
        %v5084 = vmul.f32 %v5078, %v5082
        %v5085 = vlaneseq
        %v5086 = vshrl.u32 %v5085, 7
        %v5087 = vsub.s32 2, %v5086
        %v5088 = vrot.slane %v564, %v5087
        %v5089 = vadd.f32 %v5083, %v5088
        %v5090 = vadd.f32 %v5084, %v5088
        %v5091 = vadd.f32 %v5089, %v553
        %v5092 = vadd.f32 %v5090, %v554
        %v5093 = vld [vmem:[%s471 + $0x10] sm:$0xf]
        %v5094 = vld [vmem:[%s471 + $0x38] sm:$0xf]
        %v5095 = vld [vmem:[%s471 + $0x60] sm:$0xf]
        %v5096 = vld [vmem:[%s471 + $0x88] sm:$0xf]
        %v5097 = vld [vmem:[%s471 + $0xb0] sm:$0xf]
        %v5098 = vld [vmem:[%s471 + $0xd8] sm:$0xf]
        %v5099 = vld [vmem:[%s471 + $0x100] sm:$0xf]
        %v5100 = vld [vmem:[%s471 + $0x128] sm:$0xf]
        %v5101 = vld [vmem:[%s471 + $0x150] sm:$0xf]
        %v5102 = vld [vmem:[%s471 + $0x178] sm:$0xf]
        %v5103 = vld [vmem:[%s471 + $0x1a0] sm:$0xf]
        %v5104 = vld [vmem:[%s471 + $0x1c8] sm:$0xf]
        %v5105 = vld [vmem:[%s471 + $0x1f0] sm:$0xf]
        %v5106 = vld [vmem:[%s471 + $0x218] sm:$0xf]
        %v5107 = vld [vmem:[%s471 + $0x240] sm:$0xf]
        %v5108 = vld [vmem:[%s471 + $0x268] sm:$0xf]
        %v5109 = vpack.c.bf16 %v5092, %v5091
        %v5110 = vlaneseq
        %v5111 = vshrl.u32 %v5110, 7
        %v5112 = vsub.s32 4, %v5111
        %v5113 = vrot.slane %v563, %v5112
        %v5130 = vunpack.c.l.b16 %v5093
        %v5131 = vunpack.c.l.b16 %v5094
        %v5132 = vunpack.c.l.b16 %v5095
        %v5133 = vunpack.c.l.b16 %v5096
        %v5134 = vunpack.c.l.b16 %v5097
        %v5135 = vunpack.c.l.b16 %v5098
        %v5136 = vunpack.c.l.b16 %v5099
        %v5137 = vunpack.c.l.b16 %v5100
        %v5138 = vunpack.c.l.b16 %v5101
        %v5139 = vunpack.c.l.b16 %v5102
        %v5140 = vunpack.c.l.b16 %v5103
        %v5141 = vunpack.c.l.b16 %v5104
        %v5142 = vunpack.c.l.b16 %v5105
        %v5143 = vunpack.c.l.b16 %v5106
        %v5144 = vunpack.c.l.b16 %v5107
        %v5145 = vunpack.c.l.b16 %v5108
        %v5146 = vpack.c.b16 %v5131, %v5130
        %v5147 = vpack.c.b16 %v5133, %v5132
        %v5148 = vpack.c.b16 %v5135, %v5134
        %v5149 = vpack.c.b16 %v5137, %v5136
        %v5150 = vpack.c.b16 %v5139, %v5138
        %v5151 = vpack.c.b16 %v5141, %v5140
        %v5152 = vpack.c.b16 %v5143, %v5142
        %v5153 = vpack.c.b16 %v5145, %v5144
        %5162 = vmatprep.subr.bf16.mxu0 0
        %5163 = vmatpush1.bf16.msra.mxu0 %v5153
        %5164 = vmatprep.subr.bf16.mxu0 0
        %5165 = vmatpush1.bf16.msra.mxu0 %v5152
        %5166 = vmatprep.subr.bf16.mxu0 0
        %5167 = vmatpush1.bf16.msra.mxu0 %v5151
        %5168 = vmatprep.subr.bf16.mxu0 0
        %5169 = vmatpush1.bf16.msra.mxu0 %v5150
        %5170 = vmatprep.subr.bf16.mxu0 0
        %5171 = vmatpush1.bf16.msra.mxu0 %v5149
        %5172 = vmatprep.subr.bf16.mxu0 0
        %5173 = vmatpush1.bf16.msra.mxu0 %v5148
        %5174 = vmatprep.subr.bf16.mxu0 0
        %5175 = vmatpush1.bf16.msra.mxu0 %v5147
        %5176 = vmatprep.subr.bf16.mxu0 0
        %5177 = vmatpush1.bf16.msra.mxu0 %v5146
        %5178 = vmatprep.subr.bf16.mxu0 0
        %5179 = vmatpush2.bf16.msra.mxu0 0
        %5180 = vmatprep.subr.bf16.mxu0 0
        %5181 = vmatpush2.bf16.msra.mxu0 0
        %5182 = vmatprep.subr.bf16.mxu0 0
        %5183 = vmatpush2.bf16.msra.mxu0 0
        %5184 = vmatprep.subr.bf16.mxu0 0
        %5185 = vmatpush2.bf16.msra.mxu0 0
        %5186 = vmatprep.subr.bf16.mxu0 0
        %5187 = vmatpush2.bf16.msra.mxu0 0
        %5188 = vmatprep.subr.bf16.mxu0 0
        %5189 = vmatpush2.bf16.msra.mxu0 0
        %5190 = vmatprep.subr.bf16.mxu0 0
        %5191 = vmatpush2.bf16.msra.mxu0 0
        %5192 = vmatprep.subr.bf16.mxu0 0
        %5193 = vmatpush2.bf16.msra.mxu0 0
        %5194 = vmatprep.mubr.bf16.mxu0 0
        %5195 = vmatmul.mubr.bf16.gmra.mxu0 %v5109
        %v5196 = vpop.f32.mrf.mxu0
        %v5197 = vadd.f32 %v5113, %v5196
        %v5198 = vpop.f32.mrf.mxu0
        %v5199 = vpop.f32.mrf.mxu0
        %v5200 = vadd.f32 %v5113, %v5199
        %v5201 = vpop.f32.mrf.mxu0
        %5202 = vdwg.mxu0
        %v5203 = vld [vmem:[%s471 + $0x14] sm:$0xf]
        %v5204 = vld [vmem:[%s471 + $0x3c] sm:$0xf]
        %v5205 = vld [vmem:[%s471 + $0x64] sm:$0xf]
        %v5206 = vld [vmem:[%s471 + $0x8c] sm:$0xf]
        %v5207 = vld [vmem:[%s471 + $0xb4] sm:$0xf]
        %v5208 = vld [vmem:[%s471 + $0xdc] sm:$0xf]
        %v5209 = vld [vmem:[%s471 + $0x104] sm:$0xf]
        %v5210 = vld [vmem:[%s471 + $0x12c] sm:$0xf]
        %v5211 = vld [vmem:[%s471 + $0x154] sm:$0xf]
        %v5212 = vld [vmem:[%s471 + $0x17c] sm:$0xf]
        %v5213 = vld [vmem:[%s471 + $0x1a4] sm:$0xf]
        %v5214 = vld [vmem:[%s471 + $0x1cc] sm:$0xf]
        %v5215 = vld [vmem:[%s471 + $0x1f4] sm:$0xf]
        %v5216 = vld [vmem:[%s471 + $0x21c] sm:$0xf]
        %v5217 = vld [vmem:[%s471 + $0x244] sm:$0xf]
        %v5218 = vld [vmem:[%s471 + $0x26c] sm:$0xf]
        %v5219 = vpack.c.bf16 %v560, %v559
        %v5220 = vpack.c.bf16 %v562, %v561
        %v5221 = vlaneseq
        %v5222 = vshrl.u32 %v5221, 7
        %v5223 = vsub.s32 5, %v5222
        %v5224 = vrot.slane %v563, %v5223
        %v5241 = vunpack.c.l.b16 %v5203
        %v5242 = vunpack.c.l.b16 %v5204
        %v5243 = vunpack.c.l.b16 %v5205
        %v5244 = vunpack.c.l.b16 %v5206
        %v5245 = vunpack.c.l.b16 %v5207
        %v5246 = vunpack.c.l.b16 %v5208
        %v5247 = vunpack.c.l.b16 %v5209
        %v5248 = vunpack.c.l.b16 %v5210
        %v5249 = vunpack.c.l.b16 %v5211
        %v5250 = vunpack.c.l.b16 %v5212
        %v5251 = vunpack.c.l.b16 %v5213
        %v5252 = vunpack.c.l.b16 %v5214
        %v5253 = vunpack.c.l.b16 %v5215
        %v5254 = vunpack.c.l.b16 %v5216
        %v5255 = vunpack.c.l.b16 %v5217
        %v5256 = vunpack.c.l.b16 %v5218
        %v5257 = vpack.c.b16 %v5242, %v5241
        %v5258 = vpack.c.b16 %v5244, %v5243
        %v5259 = vpack.c.b16 %v5246, %v5245
        %v5260 = vpack.c.b16 %v5248, %v5247
        %v5261 = vpack.c.b16 %v5250, %v5249
        %v5262 = vpack.c.b16 %v5252, %v5251
        %v5263 = vpack.c.b16 %v5254, %v5253
        %v5264 = vpack.c.b16 %v5256, %v5255
        %5273 = vmatprep.subr.bf16.mxu0 0
        %5274 = vmatpush1.bf16.msra.mxu0 %v5264
        %5275 = vmatprep.subr.bf16.mxu0 0
        %5276 = vmatpush1.bf16.msra.mxu0 %v5263
        %5277 = vmatprep.subr.bf16.mxu0 0
        %5278 = vmatpush1.bf16.msra.mxu0 %v5262
        %5279 = vmatprep.subr.bf16.mxu0 0
        %5280 = vmatpush1.bf16.msra.mxu0 %v5261
        %5281 = vmatprep.subr.bf16.mxu0 0
        %5282 = vmatpush1.bf16.msra.mxu0 %v5260
        %5283 = vmatprep.subr.bf16.mxu0 0
        %5284 = vmatpush1.bf16.msra.mxu0 %v5259
        %5285 = vmatprep.subr.bf16.mxu0 0
        %5286 = vmatpush1.bf16.msra.mxu0 %v5258
        %5287 = vmatprep.subr.bf16.mxu0 0
        %5288 = vmatpush1.bf16.msra.mxu0 %v5257
        %5289 = vmatprep.subr.bf16.mxu0 0
        %5290 = vmatpush2.bf16.msra.mxu0 0
        %5291 = vmatprep.subr.bf16.mxu0 0
        %5292 = vmatpush2.bf16.msra.mxu0 0
        %5293 = vmatprep.subr.bf16.mxu0 0
        %5294 = vmatpush2.bf16.msra.mxu0 0
        %5295 = vmatprep.subr.bf16.mxu0 0
        %5296 = vmatpush2.bf16.msra.mxu0 0
        %5297 = vmatprep.subr.bf16.mxu0 0
        %5298 = vmatpush2.bf16.msra.mxu0 0
        %5299 = vmatprep.subr.bf16.mxu0 0
        %5300 = vmatpush2.bf16.msra.mxu0 0
        %5301 = vmatprep.subr.bf16.mxu0 0
        %5302 = vmatpush2.bf16.msra.mxu0 0
        %5303 = vmatprep.subr.bf16.mxu0 0
        %5304 = vmatpush2.bf16.msra.mxu0 0
        %5305 = vmatprep.mubr.bf16.mxu0 0
        %5306 = vmatmul.mubr.bf16.gmra.mxu0 %v5219
        %v5307 = vpop.f32.mrf.mxu0
        %v5308 = vadd.f32 %v5224, %v5307
        %v5309 = vpop.f32.mrf.mxu0
        %v5310 = vpop.f32.mrf.mxu0
        %v5311 = vadd.f32 %v5224, %v5310
        %v5312 = vpop.f32.mrf.mxu0
        %5313 = vmatprep.mubr.bf16.mxu0 0
        %5314 = vmatmul.mubr.bf16.gmra.mxu0 %v5220
        %v5315 = vpop.f32.mrf.mxu0
        %v5316 = vadd.f32 %v5224, %v5315
        %v5317 = vpop.f32.mrf.mxu0
        %v5318 = vpop.f32.mrf.mxu0
        %v5319 = vadd.f32 %v5224, %v5318
        %v5320 = vpop.f32.mrf.mxu0
        %5321 = vdwg.mxu0
        %v5322 = vld [vmem:[%s471 + $0x18] sm:$0xf]
        %v5323 = vld [vmem:[%s471 + $0x40] sm:$0xf]
        %v5324 = vld [vmem:[%s471 + $0x68] sm:$0xf]
        %v5325 = vld [vmem:[%s471 + $0x90] sm:$0xf]
        %v5326 = vld [vmem:[%s471 + $0xb8] sm:$0xf]
        %v5327 = vld [vmem:[%s471 + $0xe0] sm:$0xf]
        %v5328 = vld [vmem:[%s471 + $0x108] sm:$0xf]
        %v5329 = vld [vmem:[%s471 + $0x130] sm:$0xf]
        %v5330 = vld [vmem:[%s471 + $0x158] sm:$0xf]
        %v5331 = vld [vmem:[%s471 + $0x180] sm:$0xf]
        %v5332 = vld [vmem:[%s471 + $0x1a8] sm:$0xf]
        %v5333 = vld [vmem:[%s471 + $0x1d0] sm:$0xf]
        %v5334 = vld [vmem:[%s471 + $0x1f8] sm:$0xf]
        %v5335 = vld [vmem:[%s471 + $0x220] sm:$0xf]
        %v5336 = vld [vmem:[%s471 + $0x248] sm:$0xf]
        %v5337 = vld [vmem:[%s471 + $0x270] sm:$0xf]
        %v5338 = vpack.c.bf16 %v556, %v555
        %v5339 = vpack.c.bf16 %v558, %v557
        %v5340 = vlaneseq
        %v5341 = vshrl.u32 %v5340, 7
        %v5342 = vsub.s32 6, %v5341
        %v5343 = vrot.slane %v563, %v5342
        %v5360 = vunpack.c.l.b16 %v5322
        %v5361 = vunpack.c.l.b16 %v5323
        %v5362 = vunpack.c.l.b16 %v5324
        %v5363 = vunpack.c.l.b16 %v5325
        %v5364 = vunpack.c.l.b16 %v5326
        %v5365 = vunpack.c.l.b16 %v5327
        %v5366 = vunpack.c.l.b16 %v5328
        %v5367 = vunpack.c.l.b16 %v5329
        %v5368 = vunpack.c.l.b16 %v5330
        %v5369 = vunpack.c.l.b16 %v5331
        %v5370 = vunpack.c.l.b16 %v5332
        %v5371 = vunpack.c.l.b16 %v5333
        %v5372 = vunpack.c.l.b16 %v5334
        %v5373 = vunpack.c.l.b16 %v5335
        %v5374 = vunpack.c.l.b16 %v5336
        %v5375 = vunpack.c.l.b16 %v5337
        %v5376 = vpack.c.b16 %v5361, %v5360
        %v5377 = vpack.c.b16 %v5363, %v5362
        %v5378 = vpack.c.b16 %v5365, %v5364
        %v5379 = vpack.c.b16 %v5367, %v5366
        %v5380 = vpack.c.b16 %v5369, %v5368
        %v5381 = vpack.c.b16 %v5371, %v5370
        %v5382 = vpack.c.b16 %v5373, %v5372
        %v5383 = vpack.c.b16 %v5375, %v5374
        %5392 = vmatprep.subr.bf16.mxu0 0
        %5393 = vmatpush1.bf16.msra.mxu0 %v5383
        %5394 = vmatprep.subr.bf16.mxu0 0
        %5395 = vmatpush1.bf16.msra.mxu0 %v5382
        %5396 = vmatprep.subr.bf16.mxu0 0
        %5397 = vmatpush1.bf16.msra.mxu0 %v5381
        %5398 = vmatprep.subr.bf16.mxu0 0
        %5399 = vmatpush1.bf16.msra.mxu0 %v5380
        %5400 = vmatprep.subr.bf16.mxu0 0
        %5401 = vmatpush1.bf16.msra.mxu0 %v5379
        %5402 = vmatprep.subr.bf16.mxu0 0
        %5403 = vmatpush1.bf16.msra.mxu0 %v5378
        %5404 = vmatprep.subr.bf16.mxu0 0
        %5405 = vmatpush1.bf16.msra.mxu0 %v5377
        %5406 = vmatprep.subr.bf16.mxu0 0
        %5407 = vmatpush1.bf16.msra.mxu0 %v5376
        %5408 = vmatprep.subr.bf16.mxu0 0
        %5409 = vmatpush2.bf16.msra.mxu0 0
        %5410 = vmatprep.subr.bf16.mxu0 0
        %5411 = vmatpush2.bf16.msra.mxu0 0
        %5412 = vmatprep.subr.bf16.mxu0 0
        %5413 = vmatpush2.bf16.msra.mxu0 0
        %5414 = vmatprep.subr.bf16.mxu0 0
        %5415 = vmatpush2.bf16.msra.mxu0 0
        %5416 = vmatprep.subr.bf16.mxu0 0
        %5417 = vmatpush2.bf16.msra.mxu0 0
        %5418 = vmatprep.subr.bf16.mxu0 0
        %5419 = vmatpush2.bf16.msra.mxu0 0
        %5420 = vmatprep.subr.bf16.mxu0 0
        %5421 = vmatpush2.bf16.msra.mxu0 0
        %5422 = vmatprep.subr.bf16.mxu0 0
        %5423 = vmatpush2.bf16.msra.mxu0 0
        %5424 = vmatprep.mubr.bf16.mxu0 0
        %5425 = vmatmul.mubr.bf16.gmra.mxu0 %v5338
        %v5426 = vpop.f32.mrf.mxu0
        %v5427 = vadd.f32 %v5343, %v5426
        %v5428 = vpop.f32.mrf.mxu0
        %v5429 = vpop.f32.mrf.mxu0
        %v5430 = vadd.f32 %v5343, %v5429
        %v5431 = vpop.f32.mrf.mxu0
        %5432 = vmatprep.mubr.bf16.mxu0 0
        %5433 = vmatmul.mubr.bf16.gmra.mxu0 %v5339
        %v5434 = vpop.f32.mrf.mxu0
        %v5435 = vadd.f32 %v5343, %v5434
        %v5436 = vpop.f32.mrf.mxu0
        %v5437 = vpop.f32.mrf.mxu0
        %v5438 = vadd.f32 %v5343, %v5437
        %v5439 = vpop.f32.mrf.mxu0
        %5440 = vdwg.mxu0
        %5443 = vrot.lane.b32.xlu0 %v5197, 112
        %v5444 = vpop.permute.xlu0 %5443
        %5445 = vrot.lane.b32.xlu0 %v5200, 112
        %v5446 = vpop.permute.xlu0 %5445
        %5449 = vrot.lane.b32.xlu0 %v5197, 96
        %v5450 = vpop.permute.xlu0 %5449
        %5451 = vrot.lane.b32.xlu0 %v5200, 96
        %v5452 = vpop.permute.xlu0 %5451
        %5455 = vrot.lane.b32.xlu0 %v5197, 80
        %v5456 = vpop.permute.xlu0 %5455
        %5457 = vrot.lane.b32.xlu0 %v5200, 80
        %v5458 = vpop.permute.xlu0 %5457
        %5461 = vrot.lane.b32.xlu0 %v5197, 64
        %v5462 = vpop.permute.xlu0 %5461
        %5463 = vrot.lane.b32.xlu0 %v5200, 64
        %v5464 = vpop.permute.xlu0 %5463
        %5467 = vrot.lane.b32.xlu0 %v5197, 48
        %v5468 = vpop.permute.xlu0 %5467
        %5469 = vrot.lane.b32.xlu0 %v5200, 48
        %v5470 = vpop.permute.xlu0 %5469
        %5473 = vrot.lane.b32.xlu0 %v5197, 32
        %v5474 = vpop.permute.xlu0 %5473
        %5475 = vrot.lane.b32.xlu0 %v5200, 32
        %v5476 = vpop.permute.xlu0 %5475
        %5479 = vrot.lane.b32.xlu0 %v5197, 16
        %v5480 = vpop.permute.xlu0 %5479
        %5481 = vrot.lane.b32.xlu0 %v5200, 16
        %v5482 = vpop.permute.xlu0 %5481
        %v5485 = vcombine.low %v5197, %v5450
        %v5486 = vcombine.high %v5197, %v5450
        %v5488 = vunpack.c.l.s4 1983009808
        %v5489 = vunpack.c.0.s8 %v5488
        %v5490 = vlaneseq
        %v5491 = vshrl.u32 %v5490, 7
        %v5492 = vsub.s32 %v5489, %v5491
        %v5493 = vrot.slane %v5485, %v5492
        %v5495 = vunpack.c.l.s4 1983009808
        %v5496 = vunpack.c.0.s8 %v5495
        %v5497 = vlaneseq
        %v5498 = vshrl.u32 %v5497, 7
        %v5499 = vsub.s32 %v5496, %v5498
        %v5500 = vrot.slane %v5486, %v5499
        %v5501 = vcombine.low %v5444, %v5456
        %v5502 = vcombine.high %v5444, %v5456
        %v5504 = vunpack.c.l.s4 1983009808
        %v5505 = vunpack.c.0.s8 %v5504
        %v5506 = vlaneseq
        %v5507 = vshrl.u32 %v5506, 7
        %v5508 = vsub.s32 %v5505, %v5507
        %v5509 = vrot.slane %v5501, %v5508
        %v5511 = vunpack.c.l.s4 1983009808
        %v5512 = vunpack.c.0.s8 %v5511
        %v5513 = vlaneseq
        %v5514 = vshrl.u32 %v5513, 7
        %v5515 = vsub.s32 %v5512, %v5514
        %v5516 = vrot.slane %v5502, %v5515
        %v5517 = vcombine.low %v5462, %v5474
        %v5518 = vcombine.high %v5462, %v5474
        %v5520 = vunpack.c.l.s4 1983009808
        %v5521 = vunpack.c.0.s8 %v5520
        %v5522 = vlaneseq
        %v5523 = vshrl.u32 %v5522, 7
        %v5524 = vsub.s32 %v5521, %v5523
        %v5525 = vrot.slane %v5517, %v5524
        %v5527 = vunpack.c.l.s4 1983009808
        %v5528 = vunpack.c.0.s8 %v5527
        %v5529 = vlaneseq
        %v5530 = vshrl.u32 %v5529, 7
        %v5531 = vsub.s32 %v5528, %v5530
        %v5532 = vrot.slane %v5518, %v5531
        %v5533 = vcombine.low %v5468, %v5480
        %v5534 = vcombine.high %v5468, %v5480
        %v5536 = vunpack.c.l.s4 1983009808
        %v5537 = vunpack.c.0.s8 %v5536
        %v5538 = vlaneseq
        %v5539 = vshrl.u32 %v5538, 7
        %v5540 = vsub.s32 %v5537, %v5539
        %v5541 = vrot.slane %v5533, %v5540
        %v5543 = vunpack.c.l.s4 1983009808
        %v5544 = vunpack.c.0.s8 %v5543
        %v5545 = vlaneseq
        %v5546 = vshrl.u32 %v5545, 7
        %v5547 = vsub.s32 %v5544, %v5546
        %v5548 = vrot.slane %v5534, %v5547
        %v5549 = vcombine.low %v5493, %v5509
        %v5550 = vcombine.high %v5493, %v5509
        %v5552 = vunpack.c.l.s4 1934713408
        %v5553 = vunpack.c.0.s8 %v5552
        %v5554 = vlaneseq
        %v5555 = vshrl.u32 %v5554, 7
        %v5556 = vsub.s32 %v5553, %v5555
        %v5557 = vrot.slane %v5549, %v5556
        %v5559 = vunpack.c.l.s4 1934713408
        %v5560 = vunpack.c.0.s8 %v5559
        %v5561 = vlaneseq
        %v5562 = vshrl.u32 %v5561, 7
        %v5563 = vsub.s32 %v5560, %v5562
        %v5564 = vrot.slane %v5550, %v5563
        %v5565 = vcombine.low %v5500, %v5516
        %v5566 = vcombine.high %v5500, %v5516
        %v5568 = vunpack.c.l.s4 1934713408
        %v5569 = vunpack.c.0.s8 %v5568
        %v5570 = vlaneseq
        %v5571 = vshrl.u32 %v5570, 7
        %v5572 = vsub.s32 %v5569, %v5571
        %v5573 = vrot.slane %v5565, %v5572
        %v5575 = vunpack.c.l.s4 1934713408
        %v5576 = vunpack.c.0.s8 %v5575
        %v5577 = vlaneseq
        %v5578 = vshrl.u32 %v5577, 7
        %v5579 = vsub.s32 %v5576, %v5578
        %v5580 = vrot.slane %v5566, %v5579
        %v5581 = vcombine.low %v5525, %v5541
        %v5582 = vcombine.high %v5525, %v5541
        %v5584 = vunpack.c.l.s4 1934713408
        %v5585 = vunpack.c.0.s8 %v5584
        %v5586 = vlaneseq
        %v5587 = vshrl.u32 %v5586, 7
        %v5588 = vsub.s32 %v5585, %v5587
        %v5589 = vrot.slane %v5581, %v5588
        %v5591 = vunpack.c.l.s4 1934713408
        %v5592 = vunpack.c.0.s8 %v5591
        %v5593 = vlaneseq
        %v5594 = vshrl.u32 %v5593, 7
        %v5595 = vsub.s32 %v5592, %v5594
        %v5596 = vrot.slane %v5582, %v5595
        %v5597 = vcombine.low %v5532, %v5548
        %v5598 = vcombine.high %v5532, %v5548
        %v5600 = vunpack.c.l.s4 1934713408
        %v5601 = vunpack.c.0.s8 %v5600
        %v5602 = vlaneseq
        %v5603 = vshrl.u32 %v5602, 7
        %v5604 = vsub.s32 %v5601, %v5603
        %v5605 = vrot.slane %v5597, %v5604
        %v5607 = vunpack.c.l.s4 1934713408
        %v5608 = vunpack.c.0.s8 %v5607
        %v5609 = vlaneseq
        %v5610 = vshrl.u32 %v5609, 7
        %v5611 = vsub.s32 %v5608, %v5610
        %v5612 = vrot.slane %v5598, %v5611
        %v5613 = vcombine.low %v5557, %v5589
        %v5614 = vcombine.high %v5557, %v5589
        %v5615 = vcombine.low %v5564, %v5596
        %v5616 = vcombine.high %v5564, %v5596
        %v5617 = vcombine.low %v5573, %v5605
        %v5618 = vcombine.high %v5573, %v5605
        %v5619 = vcombine.low %v5580, %v5612
        %v5620 = vcombine.high %v5580, %v5612
        %v5621 = vcombine.low %v5200, %v5452
        %v5622 = vcombine.high %v5200, %v5452
        %v5624 = vunpack.c.l.s4 1983009808
        %v5625 = vunpack.c.0.s8 %v5624
        %v5626 = vlaneseq
        %v5627 = vshrl.u32 %v5626, 7
        %v5628 = vsub.s32 %v5625, %v5627
        %v5629 = vrot.slane %v5621, %v5628
        %v5631 = vunpack.c.l.s4 1983009808
        %v5632 = vunpack.c.0.s8 %v5631
        %v5633 = vlaneseq
        %v5634 = vshrl.u32 %v5633, 7
        %v5635 = vsub.s32 %v5632, %v5634
        %v5636 = vrot.slane %v5622, %v5635
        %v5637 = vcombine.low %v5446, %v5458
        %v5638 = vcombine.high %v5446, %v5458
        %v5640 = vunpack.c.l.s4 1983009808
        %v5641 = vunpack.c.0.s8 %v5640
        %v5642 = vlaneseq
        %v5643 = vshrl.u32 %v5642, 7
        %v5644 = vsub.s32 %v5641, %v5643
        %v5645 = vrot.slane %v5637, %v5644
        %v5647 = vunpack.c.l.s4 1983009808
        %v5648 = vunpack.c.0.s8 %v5647
        %v5649 = vlaneseq
        %v5650 = vshrl.u32 %v5649, 7
        %v5651 = vsub.s32 %v5648, %v5650
        %v5652 = vrot.slane %v5638, %v5651
        %v5653 = vcombine.low %v5464, %v5476
        %v5654 = vcombine.high %v5464, %v5476
        %v5656 = vunpack.c.l.s4 1983009808
        %v5657 = vunpack.c.0.s8 %v5656
        %v5658 = vlaneseq
        %v5659 = vshrl.u32 %v5658, 7
        %v5660 = vsub.s32 %v5657, %v5659
        %v5661 = vrot.slane %v5653, %v5660
        %v5663 = vunpack.c.l.s4 1983009808
        %v5664 = vunpack.c.0.s8 %v5663
        %v5665 = vlaneseq
        %v5666 = vshrl.u32 %v5665, 7
        %v5667 = vsub.s32 %v5664, %v5666
        %v5668 = vrot.slane %v5654, %v5667
        %v5669 = vcombine.low %v5470, %v5482
        %v5670 = vcombine.high %v5470, %v5482
        %v5672 = vunpack.c.l.s4 1983009808
        %v5673 = vunpack.c.0.s8 %v5672
        %v5674 = vlaneseq
        %v5675 = vshrl.u32 %v5674, 7
        %v5676 = vsub.s32 %v5673, %v5675
        %v5677 = vrot.slane %v5669, %v5676
        %v5679 = vunpack.c.l.s4 1983009808
        %v5680 = vunpack.c.0.s8 %v5679
        %v5681 = vlaneseq
        %v5682 = vshrl.u32 %v5681, 7
        %v5683 = vsub.s32 %v5680, %v5682
        %v5684 = vrot.slane %v5670, %v5683
        %v5685 = vcombine.low %v5629, %v5645
        %v5686 = vcombine.high %v5629, %v5645
        %v5688 = vunpack.c.l.s4 1934713408
        %v5689 = vunpack.c.0.s8 %v5688
        %v5690 = vlaneseq
        %v5691 = vshrl.u32 %v5690, 7
        %v5692 = vsub.s32 %v5689, %v5691
        %v5693 = vrot.slane %v5685, %v5692
        %v5695 = vunpack.c.l.s4 1934713408
        %v5696 = vunpack.c.0.s8 %v5695
        %v5697 = vlaneseq
        %v5698 = vshrl.u32 %v5697, 7
        %v5699 = vsub.s32 %v5696, %v5698
        %v5700 = vrot.slane %v5686, %v5699
        %v5701 = vcombine.low %v5636, %v5652
        %v5702 = vcombine.high %v5636, %v5652
        %v5704 = vunpack.c.l.s4 1934713408
        %v5705 = vunpack.c.0.s8 %v5704
        %v5706 = vlaneseq
        %v5707 = vshrl.u32 %v5706, 7
        %v5708 = vsub.s32 %v5705, %v5707
        %v5709 = vrot.slane %v5701, %v5708
        %v5711 = vunpack.c.l.s4 1934713408
        %v5712 = vunpack.c.0.s8 %v5711
        %v5713 = vlaneseq
        %v5714 = vshrl.u32 %v5713, 7
        %v5715 = vsub.s32 %v5712, %v5714
        %v5716 = vrot.slane %v5702, %v5715
        %v5717 = vcombine.low %v5661, %v5677
        %v5718 = vcombine.high %v5661, %v5677
        %v5720 = vunpack.c.l.s4 1934713408
        %v5721 = vunpack.c.0.s8 %v5720
        %v5722 = vlaneseq
        %v5723 = vshrl.u32 %v5722, 7
        %v5724 = vsub.s32 %v5721, %v5723
        %v5725 = vrot.slane %v5717, %v5724
        %v5727 = vunpack.c.l.s4 1934713408
        %v5728 = vunpack.c.0.s8 %v5727
        %v5729 = vlaneseq
        %v5730 = vshrl.u32 %v5729, 7
        %v5731 = vsub.s32 %v5728, %v5730
        %v5732 = vrot.slane %v5718, %v5731
        %v5733 = vcombine.low %v5668, %v5684
        %v5734 = vcombine.high %v5668, %v5684
        %v5736 = vunpack.c.l.s4 1934713408
        %v5737 = vunpack.c.0.s8 %v5736
        %v5738 = vlaneseq
        %v5739 = vshrl.u32 %v5738, 7
        %v5740 = vsub.s32 %v5737, %v5739
        %v5741 = vrot.slane %v5733, %v5740
        %v5743 = vunpack.c.l.s4 1934713408
        %v5744 = vunpack.c.0.s8 %v5743
        %v5745 = vlaneseq
        %v5746 = vshrl.u32 %v5745, 7
        %v5747 = vsub.s32 %v5744, %v5746
        %v5748 = vrot.slane %v5734, %v5747
        %v5749 = vcombine.low %v5693, %v5725
        %v5750 = vcombine.high %v5693, %v5725
        %v5751 = vcombine.low %v5700, %v5732
        %v5752 = vcombine.high %v5700, %v5732
        %v5753 = vcombine.low %v5709, %v5741
        %v5754 = vcombine.high %v5709, %v5741
        %v5755 = vcombine.low %v5716, %v5748
        %v5756 = vcombine.high %v5716, %v5748
        %v5757 = vcombine.low %v5613, %v5615
        %v5758 = vcombine.high %v5613, %v5615
        %v5760 = vunpack.c.l.s4 1983009808
        %v5761 = vunpack.c.0.s8 %v5760
        %v5762 = vlaneseq
        %v5763 = vshrl.u32 %v5762, 7
        %v5764 = vsub.s32 %v5761, %v5763
        %v5765 = vrot.slane %v5757, %v5764
        %v5767 = vunpack.c.l.s4 1983009808
        %v5768 = vunpack.c.0.s8 %v5767
        %v5769 = vlaneseq
        %v5770 = vshrl.u32 %v5769, 7
        %v5771 = vsub.s32 %v5768, %v5770
        %v5772 = vrot.slane %v5758, %v5771
        %v5773 = vcombine.low %v5614, %v5616
        %v5774 = vcombine.high %v5614, %v5616
        %v5776 = vunpack.c.l.s4 1983009808
        %v5777 = vunpack.c.0.s8 %v5776
        %v5778 = vlaneseq
        %v5779 = vshrl.u32 %v5778, 7
        %v5780 = vsub.s32 %v5777, %v5779
        %v5781 = vrot.slane %v5773, %v5780
        %v5783 = vunpack.c.l.s4 1983009808
        %v5784 = vunpack.c.0.s8 %v5783
        %v5785 = vlaneseq
        %v5786 = vshrl.u32 %v5785, 7
        %v5787 = vsub.s32 %v5784, %v5786
        %v5788 = vrot.slane %v5774, %v5787
        %v5789 = vcombine.low %v5617, %v5619
        %v5790 = vcombine.high %v5617, %v5619
        %v5792 = vunpack.c.l.s4 1983009808
        %v5793 = vunpack.c.0.s8 %v5792
        %v5794 = vlaneseq
        %v5795 = vshrl.u32 %v5794, 7
        %v5796 = vsub.s32 %v5793, %v5795
        %v5797 = vrot.slane %v5789, %v5796
        %v5799 = vunpack.c.l.s4 1983009808
        %v5800 = vunpack.c.0.s8 %v5799
        %v5801 = vlaneseq
        %v5802 = vshrl.u32 %v5801, 7
        %v5803 = vsub.s32 %v5800, %v5802
        %v5804 = vrot.slane %v5790, %v5803
        %v5805 = vcombine.low %v5618, %v5620
        %v5806 = vcombine.high %v5618, %v5620
        %v5808 = vunpack.c.l.s4 1983009808
        %v5809 = vunpack.c.0.s8 %v5808
        %v5810 = vlaneseq
        %v5811 = vshrl.u32 %v5810, 7
        %v5812 = vsub.s32 %v5809, %v5811
        %v5813 = vrot.slane %v5805, %v5812
        %v5815 = vunpack.c.l.s4 1983009808
        %v5816 = vunpack.c.0.s8 %v5815
        %v5817 = vlaneseq
        %v5818 = vshrl.u32 %v5817, 7
        %v5819 = vsub.s32 %v5816, %v5818
        %v5820 = vrot.slane %v5806, %v5819
        %v5821 = vcombine.low %v5765, %v5781
        %v5822 = vcombine.high %v5765, %v5781
        %v5824 = vunpack.c.l.s4 1934713408
        %v5825 = vunpack.c.0.s8 %v5824
        %v5826 = vlaneseq
        %v5827 = vshrl.u32 %v5826, 7
        %v5828 = vsub.s32 %v5825, %v5827
        %v5829 = vrot.slane %v5821, %v5828
        %v5831 = vunpack.c.l.s4 1934713408
        %v5832 = vunpack.c.0.s8 %v5831
        %v5833 = vlaneseq
        %v5834 = vshrl.u32 %v5833, 7
        %v5835 = vsub.s32 %v5832, %v5834
        %v5836 = vrot.slane %v5822, %v5835
        %v5837 = vcombine.low %v5772, %v5788
        %v5838 = vcombine.high %v5772, %v5788
        %v5840 = vunpack.c.l.s4 1934713408
        %v5841 = vunpack.c.0.s8 %v5840
        %v5842 = vlaneseq
        %v5843 = vshrl.u32 %v5842, 7
        %v5844 = vsub.s32 %v5841, %v5843
        %v5845 = vrot.slane %v5837, %v5844
        %v5847 = vunpack.c.l.s4 1934713408
        %v5848 = vunpack.c.0.s8 %v5847
        %v5849 = vlaneseq
        %v5850 = vshrl.u32 %v5849, 7
        %v5851 = vsub.s32 %v5848, %v5850
        %v5852 = vrot.slane %v5838, %v5851
        %v5853 = vcombine.low %v5797, %v5813
        %v5854 = vcombine.high %v5797, %v5813
        %v5856 = vunpack.c.l.s4 1934713408
        %v5857 = vunpack.c.0.s8 %v5856
        %v5858 = vlaneseq
        %v5859 = vshrl.u32 %v5858, 7
        %v5860 = vsub.s32 %v5857, %v5859
        %v5861 = vrot.slane %v5853, %v5860
        %v5863 = vunpack.c.l.s4 1934713408
        %v5864 = vunpack.c.0.s8 %v5863
        %v5865 = vlaneseq
        %v5866 = vshrl.u32 %v5865, 7
        %v5867 = vsub.s32 %v5864, %v5866
        %v5868 = vrot.slane %v5854, %v5867
        %v5869 = vcombine.low %v5804, %v5820
        %v5870 = vcombine.high %v5804, %v5820
        %v5872 = vunpack.c.l.s4 1934713408
        %v5873 = vunpack.c.0.s8 %v5872
        %v5874 = vlaneseq
        %v5875 = vshrl.u32 %v5874, 7
        %v5876 = vsub.s32 %v5873, %v5875
        %v5877 = vrot.slane %v5869, %v5876
        %v5879 = vunpack.c.l.s4 1934713408
        %v5880 = vunpack.c.0.s8 %v5879
        %v5881 = vlaneseq
        %v5882 = vshrl.u32 %v5881, 7
        %v5883 = vsub.s32 %v5880, %v5882
        %v5884 = vrot.slane %v5870, %v5883
        %v5885 = vcombine.low %v5829, %v5861
        %v5886 = vcombine.high %v5829, %v5861
        %v5887 = vcombine.low %v5836, %v5868
        %v5888 = vcombine.high %v5836, %v5868
        %v5889 = vcombine.low %v5845, %v5877
        %v5890 = vcombine.high %v5845, %v5877
        %v5891 = vcombine.low %v5852, %v5884
        %v5892 = vcombine.high %v5852, %v5884
        %v5893 = vcombine.low %v5749, %v5751
        %v5894 = vcombine.high %v5749, %v5751
        %v5896 = vunpack.c.l.s4 1983009808
        %v5897 = vunpack.c.0.s8 %v5896
        %v5898 = vlaneseq
        %v5899 = vshrl.u32 %v5898, 7
        %v5900 = vsub.s32 %v5897, %v5899
        %v5901 = vrot.slane %v5893, %v5900
        %v5903 = vunpack.c.l.s4 1983009808
        %v5904 = vunpack.c.0.s8 %v5903
        %v5905 = vlaneseq
        %v5906 = vshrl.u32 %v5905, 7
        %v5907 = vsub.s32 %v5904, %v5906
        %v5908 = vrot.slane %v5894, %v5907
        %v5909 = vcombine.low %v5750, %v5752
        %v5910 = vcombine.high %v5750, %v5752
        %v5912 = vunpack.c.l.s4 1983009808
        %v5913 = vunpack.c.0.s8 %v5912
        %v5914 = vlaneseq
        %v5915 = vshrl.u32 %v5914, 7
        %v5916 = vsub.s32 %v5913, %v5915
        %v5917 = vrot.slane %v5909, %v5916
        %v5919 = vunpack.c.l.s4 1983009808
        %v5920 = vunpack.c.0.s8 %v5919
        %v5921 = vlaneseq
        %v5922 = vshrl.u32 %v5921, 7
        %v5923 = vsub.s32 %v5920, %v5922
        %v5924 = vrot.slane %v5910, %v5923
        %v5925 = vcombine.low %v5753, %v5755
        %v5926 = vcombine.high %v5753, %v5755
        %v5928 = vunpack.c.l.s4 1983009808
        %v5929 = vunpack.c.0.s8 %v5928
        %v5930 = vlaneseq
        %v5931 = vshrl.u32 %v5930, 7
        %v5932 = vsub.s32 %v5929, %v5931
        %v5933 = vrot.slane %v5925, %v5932
        %v5935 = vunpack.c.l.s4 1983009808
        %v5936 = vunpack.c.0.s8 %v5935
        %v5937 = vlaneseq
        %v5938 = vshrl.u32 %v5937, 7
        %v5939 = vsub.s32 %v5936, %v5938
        %v5940 = vrot.slane %v5926, %v5939
        %v5941 = vcombine.low %v5754, %v5756
        %v5942 = vcombine.high %v5754, %v5756
        %v5944 = vunpack.c.l.s4 1983009808
        %v5945 = vunpack.c.0.s8 %v5944
        %v5946 = vlaneseq
        %v5947 = vshrl.u32 %v5946, 7
        %v5948 = vsub.s32 %v5945, %v5947
        %v5949 = vrot.slane %v5941, %v5948
        %v5951 = vunpack.c.l.s4 1983009808
        %v5952 = vunpack.c.0.s8 %v5951
        %v5953 = vlaneseq
        %v5954 = vshrl.u32 %v5953, 7
        %v5955 = vsub.s32 %v5952, %v5954
        %v5956 = vrot.slane %v5942, %v5955
        %v5957 = vcombine.low %v5901, %v5917
        %v5958 = vcombine.high %v5901, %v5917
        %v5960 = vunpack.c.l.s4 1934713408
        %v5961 = vunpack.c.0.s8 %v5960
        %v5962 = vlaneseq
        %v5963 = vshrl.u32 %v5962, 7
        %v5964 = vsub.s32 %v5961, %v5963
        %v5965 = vrot.slane %v5957, %v5964
        %v5967 = vunpack.c.l.s4 1934713408
        %v5968 = vunpack.c.0.s8 %v5967
        %v5969 = vlaneseq
        %v5970 = vshrl.u32 %v5969, 7
        %v5971 = vsub.s32 %v5968, %v5970
        %v5972 = vrot.slane %v5958, %v5971
        %v5973 = vcombine.low %v5908, %v5924
        %v5974 = vcombine.high %v5908, %v5924
        %v5976 = vunpack.c.l.s4 1934713408
        %v5977 = vunpack.c.0.s8 %v5976
        %v5978 = vlaneseq
        %v5979 = vshrl.u32 %v5978, 7
        %v5980 = vsub.s32 %v5977, %v5979
        %v5981 = vrot.slane %v5973, %v5980
        %v5983 = vunpack.c.l.s4 1934713408
        %v5984 = vunpack.c.0.s8 %v5983
        %v5985 = vlaneseq
        %v5986 = vshrl.u32 %v5985, 7
        %v5987 = vsub.s32 %v5984, %v5986
        %v5988 = vrot.slane %v5974, %v5987
        %v5989 = vcombine.low %v5933, %v5949
        %v5990 = vcombine.high %v5933, %v5949
        %v5992 = vunpack.c.l.s4 1934713408
        %v5993 = vunpack.c.0.s8 %v5992
        %v5994 = vlaneseq
        %v5995 = vshrl.u32 %v5994, 7
        %v5996 = vsub.s32 %v5993, %v5995
        %v5997 = vrot.slane %v5989, %v5996
        %v5999 = vunpack.c.l.s4 1934713408
        %v6000 = vunpack.c.0.s8 %v5999
        %v6001 = vlaneseq
        %v6002 = vshrl.u32 %v6001, 7
        %v6003 = vsub.s32 %v6000, %v6002
        %v6004 = vrot.slane %v5990, %v6003
        %v6005 = vcombine.low %v5940, %v5956
        %v6006 = vcombine.high %v5940, %v5956
        %v6008 = vunpack.c.l.s4 1934713408
        %v6009 = vunpack.c.0.s8 %v6008
        %v6010 = vlaneseq
        %v6011 = vshrl.u32 %v6010, 7
        %v6012 = vsub.s32 %v6009, %v6011
        %v6013 = vrot.slane %v6005, %v6012
        %v6015 = vunpack.c.l.s4 1934713408
        %v6016 = vunpack.c.0.s8 %v6015
        %v6017 = vlaneseq
        %v6018 = vshrl.u32 %v6017, 7
        %v6019 = vsub.s32 %v6016, %v6018
        %v6020 = vrot.slane %v6006, %v6019
        %v6021 = vcombine.low %v5965, %v5997
        %v6022 = vcombine.high %v5965, %v5997
        %v6023 = vcombine.low %v5972, %v6004
        %v6024 = vcombine.high %v5972, %v6004
        %v6025 = vcombine.low %v5981, %v6013
        %v6026 = vcombine.high %v5981, %v6013
        %v6027 = vcombine.low %v5988, %v6020
        %v6028 = vcombine.high %v5988, %v6020
        %v6029 = vpack.c.bf16 %v5885, %v5885
        %v6030 = vpack.c.bf16 %v5886, %v5886
        %v6031 = vpack.c.bf16 %v5887, %v5887
        %v6032 = vpack.c.bf16 %v5888, %v5888
        %v6033 = vpack.c.bf16 %v5889, %v5889
        %v6034 = vpack.c.bf16 %v5890, %v5890
        %v6035 = vpack.c.bf16 %v5891, %v5891
        %v6036 = vpack.c.bf16 %v5892, %v5892
        %v6037 = vpack.c.bf16 %v6021, %v6021
        %v6038 = vpack.c.bf16 %v6022, %v6022
        %v6039 = vpack.c.bf16 %v6023, %v6023
        %v6040 = vpack.c.bf16 %v6024, %v6024
        %v6041 = vpack.c.bf16 %v6025, %v6025
        %v6042 = vpack.c.bf16 %v6026, %v6026
        %v6043 = vpack.c.bf16 %v6027, %v6027
        %v6044 = vpack.c.bf16 %v6028, %v6028
        %6049 = vrot.lane.b32.xlu0 %v5308, 112
        %v6050 = vpop.permute.xlu0 %6049
        %6051 = vrot.lane.b32.xlu0 %v5311, 112
        %v6052 = vpop.permute.xlu0 %6051
        %6053 = vrot.lane.b32.xlu0 %v5316, 112
        %v6054 = vpop.permute.xlu0 %6053
        %6055 = vrot.lane.b32.xlu0 %v5319, 112
        %v6056 = vpop.permute.xlu0 %6055
        %6061 = vrot.lane.b32.xlu0 %v5308, 96
        %v6062 = vpop.permute.xlu0 %6061
        %6063 = vrot.lane.b32.xlu0 %v5311, 96
        %v6064 = vpop.permute.xlu0 %6063
        %6065 = vrot.lane.b32.xlu0 %v5316, 96
        %v6066 = vpop.permute.xlu0 %6065
        %6067 = vrot.lane.b32.xlu0 %v5319, 96
        %v6068 = vpop.permute.xlu0 %6067
        %6073 = vrot.lane.b32.xlu0 %v5308, 80
        %v6074 = vpop.permute.xlu0 %6073
        %6075 = vrot.lane.b32.xlu0 %v5311, 80
        %v6076 = vpop.permute.xlu0 %6075
        %6077 = vrot.lane.b32.xlu0 %v5316, 80
        %v6078 = vpop.permute.xlu0 %6077
        %6079 = vrot.lane.b32.xlu0 %v5319, 80
        %v6080 = vpop.permute.xlu0 %6079
        %6085 = vrot.lane.b32.xlu0 %v5308, 64
        %v6086 = vpop.permute.xlu0 %6085
        %6087 = vrot.lane.b32.xlu0 %v5311, 64
        %v6088 = vpop.permute.xlu0 %6087
        %6089 = vrot.lane.b32.xlu0 %v5316, 64
        %v6090 = vpop.permute.xlu0 %6089
        %6091 = vrot.lane.b32.xlu0 %v5319, 64
        %v6092 = vpop.permute.xlu0 %6091
        %6097 = vrot.lane.b32.xlu0 %v5308, 48
        %v6098 = vpop.permute.xlu0 %6097
        %6099 = vrot.lane.b32.xlu0 %v5311, 48
        %v6100 = vpop.permute.xlu0 %6099
        %6101 = vrot.lane.b32.xlu0 %v5316, 48
        %v6102 = vpop.permute.xlu0 %6101
        %6103 = vrot.lane.b32.xlu0 %v5319, 48
        %v6104 = vpop.permute.xlu0 %6103
        %6109 = vrot.lane.b32.xlu0 %v5308, 32
        %v6110 = vpop.permute.xlu0 %6109
        %6111 = vrot.lane.b32.xlu0 %v5311, 32
        %v6112 = vpop.permute.xlu0 %6111
        %6113 = vrot.lane.b32.xlu0 %v5316, 32
        %v6114 = vpop.permute.xlu0 %6113
        %6115 = vrot.lane.b32.xlu0 %v5319, 32
        %v6116 = vpop.permute.xlu0 %6115
        %6121 = vrot.lane.b32.xlu0 %v5308, 16
        %v6122 = vpop.permute.xlu0 %6121
        %6123 = vrot.lane.b32.xlu0 %v5311, 16
        %v6124 = vpop.permute.xlu0 %6123
        %6125 = vrot.lane.b32.xlu0 %v5316, 16
        %v6126 = vpop.permute.xlu0 %6125
        %6127 = vrot.lane.b32.xlu0 %v5319, 16
        %v6128 = vpop.permute.xlu0 %6127
        %v6133 = vcombine.low %v5308, %v6062
        %v6134 = vcombine.high %v5308, %v6062
        %v6136 = vunpack.c.l.s4 1983009808
        %v6137 = vunpack.c.0.s8 %v6136
        %v6138 = vlaneseq
        %v6139 = vshrl.u32 %v6138, 7
        %v6140 = vsub.s32 %v6137, %v6139
        %v6141 = vrot.slane %v6133, %v6140
        %v6143 = vunpack.c.l.s4 1983009808
        %v6144 = vunpack.c.0.s8 %v6143
        %v6145 = vlaneseq
        %v6146 = vshrl.u32 %v6145, 7
        %v6147 = vsub.s32 %v6144, %v6146
        %v6148 = vrot.slane %v6134, %v6147
        %v6149 = vcombine.low %v6050, %v6074
        %v6150 = vcombine.high %v6050, %v6074
        %v6152 = vunpack.c.l.s4 1983009808
        %v6153 = vunpack.c.0.s8 %v6152
        %v6154 = vlaneseq
        %v6155 = vshrl.u32 %v6154, 7
        %v6156 = vsub.s32 %v6153, %v6155
        %v6157 = vrot.slane %v6149, %v6156
        %v6159 = vunpack.c.l.s4 1983009808
        %v6160 = vunpack.c.0.s8 %v6159
        %v6161 = vlaneseq
        %v6162 = vshrl.u32 %v6161, 7
        %v6163 = vsub.s32 %v6160, %v6162
        %v6164 = vrot.slane %v6150, %v6163
        %v6165 = vcombine.low %v6086, %v6110
        %v6166 = vcombine.high %v6086, %v6110
        %v6168 = vunpack.c.l.s4 1983009808
        %v6169 = vunpack.c.0.s8 %v6168
        %v6170 = vlaneseq
        %v6171 = vshrl.u32 %v6170, 7
        %v6172 = vsub.s32 %v6169, %v6171
        %v6173 = vrot.slane %v6165, %v6172
        %v6175 = vunpack.c.l.s4 1983009808
        %v6176 = vunpack.c.0.s8 %v6175
        %v6177 = vlaneseq
        %v6178 = vshrl.u32 %v6177, 7
        %v6179 = vsub.s32 %v6176, %v6178
        %v6180 = vrot.slane %v6166, %v6179
        %v6181 = vcombine.low %v6098, %v6122
        %v6182 = vcombine.high %v6098, %v6122
        %v6184 = vunpack.c.l.s4 1983009808
        %v6185 = vunpack.c.0.s8 %v6184
        %v6186 = vlaneseq
        %v6187 = vshrl.u32 %v6186, 7
        %v6188 = vsub.s32 %v6185, %v6187
        %v6189 = vrot.slane %v6181, %v6188
        %v6191 = vunpack.c.l.s4 1983009808
        %v6192 = vunpack.c.0.s8 %v6191
        %v6193 = vlaneseq
        %v6194 = vshrl.u32 %v6193, 7
        %v6195 = vsub.s32 %v6192, %v6194
        %v6196 = vrot.slane %v6182, %v6195
        %v6197 = vcombine.low %v6141, %v6157
        %v6198 = vcombine.high %v6141, %v6157
        %v6200 = vunpack.c.l.s4 1934713408
        %v6201 = vunpack.c.0.s8 %v6200
        %v6202 = vlaneseq
        %v6203 = vshrl.u32 %v6202, 7
        %v6204 = vsub.s32 %v6201, %v6203
        %v6205 = vrot.slane %v6197, %v6204
        %v6207 = vunpack.c.l.s4 1934713408
        %v6208 = vunpack.c.0.s8 %v6207
        %v6209 = vlaneseq
        %v6210 = vshrl.u32 %v6209, 7
        %v6211 = vsub.s32 %v6208, %v6210
        %v6212 = vrot.slane %v6198, %v6211
        %v6213 = vcombine.low %v6148, %v6164
        %v6214 = vcombine.high %v6148, %v6164
        %v6216 = vunpack.c.l.s4 1934713408
        %v6217 = vunpack.c.0.s8 %v6216
        %v6218 = vlaneseq
        %v6219 = vshrl.u32 %v6218, 7
        %v6220 = vsub.s32 %v6217, %v6219
        %v6221 = vrot.slane %v6213, %v6220
        %v6223 = vunpack.c.l.s4 1934713408
        %v6224 = vunpack.c.0.s8 %v6223
        %v6225 = vlaneseq
        %v6226 = vshrl.u32 %v6225, 7
        %v6227 = vsub.s32 %v6224, %v6226
        %v6228 = vrot.slane %v6214, %v6227
        %v6229 = vcombine.low %v6173, %v6189
        %v6230 = vcombine.high %v6173, %v6189
        %v6232 = vunpack.c.l.s4 1934713408
        %v6233 = vunpack.c.0.s8 %v6232
        %v6234 = vlaneseq
        %v6235 = vshrl.u32 %v6234, 7
        %v6236 = vsub.s32 %v6233, %v6235
        %v6237 = vrot.slane %v6229, %v6236
        %v6239 = vunpack.c.l.s4 1934713408
        %v6240 = vunpack.c.0.s8 %v6239
        %v6241 = vlaneseq
        %v6242 = vshrl.u32 %v6241, 7
        %v6243 = vsub.s32 %v6240, %v6242
        %v6244 = vrot.slane %v6230, %v6243
        %v6245 = vcombine.low %v6180, %v6196
        %v6246 = vcombine.high %v6180, %v6196
        %v6248 = vunpack.c.l.s4 1934713408
        %v6249 = vunpack.c.0.s8 %v6248
        %v6250 = vlaneseq
        %v6251 = vshrl.u32 %v6250, 7
        %v6252 = vsub.s32 %v6249, %v6251
        %v6253 = vrot.slane %v6245, %v6252
        %v6255 = vunpack.c.l.s4 1934713408
        %v6256 = vunpack.c.0.s8 %v6255
        %v6257 = vlaneseq
        %v6258 = vshrl.u32 %v6257, 7
        %v6259 = vsub.s32 %v6256, %v6258
        %v6260 = vrot.slane %v6246, %v6259
        %v6261 = vcombine.low %v6205, %v6237
        %v6262 = vcombine.high %v6205, %v6237
        %v6263 = vcombine.low %v6212, %v6244
        %v6264 = vcombine.high %v6212, %v6244
        %v6265 = vcombine.low %v6221, %v6253
        %v6266 = vcombine.high %v6221, %v6253
        %v6267 = vcombine.low %v6228, %v6260
        %v6268 = vcombine.high %v6228, %v6260
        %v6269 = vcombine.low %v5311, %v6064
        %v6270 = vcombine.high %v5311, %v6064
        %v6272 = vunpack.c.l.s4 1983009808
        %v6273 = vunpack.c.0.s8 %v6272
        %v6274 = vlaneseq
        %v6275 = vshrl.u32 %v6274, 7
        %v6276 = vsub.s32 %v6273, %v6275
        %v6277 = vrot.slane %v6269, %v6276
        %v6279 = vunpack.c.l.s4 1983009808
        %v6280 = vunpack.c.0.s8 %v6279
        %v6281 = vlaneseq
        %v6282 = vshrl.u32 %v6281, 7
        %v6283 = vsub.s32 %v6280, %v6282
        %v6284 = vrot.slane %v6270, %v6283
        %v6285 = vcombine.low %v6052, %v6076
        %v6286 = vcombine.high %v6052, %v6076
        %v6288 = vunpack.c.l.s4 1983009808
        %v6289 = vunpack.c.0.s8 %v6288
        %v6290 = vlaneseq
        %v6291 = vshrl.u32 %v6290, 7
        %v6292 = vsub.s32 %v6289, %v6291
        %v6293 = vrot.slane %v6285, %v6292
        %v6295 = vunpack.c.l.s4 1983009808
        %v6296 = vunpack.c.0.s8 %v6295
        %v6297 = vlaneseq
        %v6298 = vshrl.u32 %v6297, 7
        %v6299 = vsub.s32 %v6296, %v6298
        %v6300 = vrot.slane %v6286, %v6299
        %v6301 = vcombine.low %v6088, %v6112
        %v6302 = vcombine.high %v6088, %v6112
        %v6304 = vunpack.c.l.s4 1983009808
        %v6305 = vunpack.c.0.s8 %v6304
        %v6306 = vlaneseq
        %v6307 = vshrl.u32 %v6306, 7
        %v6308 = vsub.s32 %v6305, %v6307
        %v6309 = vrot.slane %v6301, %v6308
        %v6311 = vunpack.c.l.s4 1983009808
        %v6312 = vunpack.c.0.s8 %v6311
        %v6313 = vlaneseq
        %v6314 = vshrl.u32 %v6313, 7
        %v6315 = vsub.s32 %v6312, %v6314
        %v6316 = vrot.slane %v6302, %v6315
        %v6317 = vcombine.low %v6100, %v6124
        %v6318 = vcombine.high %v6100, %v6124
        %v6320 = vunpack.c.l.s4 1983009808
        %v6321 = vunpack.c.0.s8 %v6320
        %v6322 = vlaneseq
        %v6323 = vshrl.u32 %v6322, 7
        %v6324 = vsub.s32 %v6321, %v6323
        %v6325 = vrot.slane %v6317, %v6324
        %v6327 = vunpack.c.l.s4 1983009808
        %v6328 = vunpack.c.0.s8 %v6327
        %v6329 = vlaneseq
        %v6330 = vshrl.u32 %v6329, 7
        %v6331 = vsub.s32 %v6328, %v6330
        %v6332 = vrot.slane %v6318, %v6331
        %v6333 = vcombine.low %v6277, %v6293
        %v6334 = vcombine.high %v6277, %v6293
        %v6336 = vunpack.c.l.s4 1934713408
        %v6337 = vunpack.c.0.s8 %v6336
        %v6338 = vlaneseq
        %v6339 = vshrl.u32 %v6338, 7
        %v6340 = vsub.s32 %v6337, %v6339
        %v6341 = vrot.slane %v6333, %v6340
        %v6343 = vunpack.c.l.s4 1934713408
        %v6344 = vunpack.c.0.s8 %v6343
        %v6345 = vlaneseq
        %v6346 = vshrl.u32 %v6345, 7
        %v6347 = vsub.s32 %v6344, %v6346
        %v6348 = vrot.slane %v6334, %v6347
        %v6349 = vcombine.low %v6284, %v6300
        %v6350 = vcombine.high %v6284, %v6300
        %v6352 = vunpack.c.l.s4 1934713408
        %v6353 = vunpack.c.0.s8 %v6352
        %v6354 = vlaneseq
        %v6355 = vshrl.u32 %v6354, 7
        %v6356 = vsub.s32 %v6353, %v6355
        %v6357 = vrot.slane %v6349, %v6356
        %v6359 = vunpack.c.l.s4 1934713408
        %v6360 = vunpack.c.0.s8 %v6359
        %v6361 = vlaneseq
        %v6362 = vshrl.u32 %v6361, 7
        %v6363 = vsub.s32 %v6360, %v6362
        %v6364 = vrot.slane %v6350, %v6363
        %v6365 = vcombine.low %v6309, %v6325
        %v6366 = vcombine.high %v6309, %v6325
        %v6368 = vunpack.c.l.s4 1934713408
        %v6369 = vunpack.c.0.s8 %v6368
        %v6370 = vlaneseq
        %v6371 = vshrl.u32 %v6370, 7
        %v6372 = vsub.s32 %v6369, %v6371
        %v6373 = vrot.slane %v6365, %v6372
        %v6375 = vunpack.c.l.s4 1934713408
        %v6376 = vunpack.c.0.s8 %v6375
        %v6377 = vlaneseq
        %v6378 = vshrl.u32 %v6377, 7
        %v6379 = vsub.s32 %v6376, %v6378
        %v6380 = vrot.slane %v6366, %v6379
        %v6381 = vcombine.low %v6316, %v6332
        %v6382 = vcombine.high %v6316, %v6332
        %v6384 = vunpack.c.l.s4 1934713408
        %v6385 = vunpack.c.0.s8 %v6384
        %v6386 = vlaneseq
        %v6387 = vshrl.u32 %v6386, 7
        %v6388 = vsub.s32 %v6385, %v6387
        %v6389 = vrot.slane %v6381, %v6388
        %v6391 = vunpack.c.l.s4 1934713408
        %v6392 = vunpack.c.0.s8 %v6391
        %v6393 = vlaneseq
        %v6394 = vshrl.u32 %v6393, 7
        %v6395 = vsub.s32 %v6392, %v6394
        %v6396 = vrot.slane %v6382, %v6395
        %v6397 = vcombine.low %v6341, %v6373
        %v6398 = vcombine.high %v6341, %v6373
        %v6399 = vcombine.low %v6348, %v6380
        %v6400 = vcombine.high %v6348, %v6380
        %v6401 = vcombine.low %v6357, %v6389
        %v6402 = vcombine.high %v6357, %v6389
        %v6403 = vcombine.low %v6364, %v6396
        %v6404 = vcombine.high %v6364, %v6396
        %v6405 = vcombine.low %v5316, %v6066
        %v6406 = vcombine.high %v5316, %v6066
        %v6408 = vunpack.c.l.s4 1983009808
        %v6409 = vunpack.c.0.s8 %v6408
        %v6410 = vlaneseq
        %v6411 = vshrl.u32 %v6410, 7
        %v6412 = vsub.s32 %v6409, %v6411
        %v6413 = vrot.slane %v6405, %v6412
        %v6415 = vunpack.c.l.s4 1983009808
        %v6416 = vunpack.c.0.s8 %v6415
        %v6417 = vlaneseq
        %v6418 = vshrl.u32 %v6417, 7
        %v6419 = vsub.s32 %v6416, %v6418
        %v6420 = vrot.slane %v6406, %v6419
        %v6421 = vcombine.low %v6054, %v6078
        %v6422 = vcombine.high %v6054, %v6078
        %v6424 = vunpack.c.l.s4 1983009808
        %v6425 = vunpack.c.0.s8 %v6424
        %v6426 = vlaneseq
        %v6427 = vshrl.u32 %v6426, 7
        %v6428 = vsub.s32 %v6425, %v6427
        %v6429 = vrot.slane %v6421, %v6428
        %v6431 = vunpack.c.l.s4 1983009808
        %v6432 = vunpack.c.0.s8 %v6431
        %v6433 = vlaneseq
        %v6434 = vshrl.u32 %v6433, 7
        %v6435 = vsub.s32 %v6432, %v6434
        %v6436 = vrot.slane %v6422, %v6435
        %v6437 = vcombine.low %v6090, %v6114
        %v6438 = vcombine.high %v6090, %v6114
        %v6440 = vunpack.c.l.s4 1983009808
        %v6441 = vunpack.c.0.s8 %v6440
        %v6442 = vlaneseq
        %v6443 = vshrl.u32 %v6442, 7
        %v6444 = vsub.s32 %v6441, %v6443
        %v6445 = vrot.slane %v6437, %v6444
        %v6447 = vunpack.c.l.s4 1983009808
        %v6448 = vunpack.c.0.s8 %v6447
        %v6449 = vlaneseq
        %v6450 = vshrl.u32 %v6449, 7
        %v6451 = vsub.s32 %v6448, %v6450
        %v6452 = vrot.slane %v6438, %v6451
        %v6453 = vcombine.low %v6102, %v6126
        %v6454 = vcombine.high %v6102, %v6126
        %v6456 = vunpack.c.l.s4 1983009808
        %v6457 = vunpack.c.0.s8 %v6456
        %v6458 = vlaneseq
        %v6459 = vshrl.u32 %v6458, 7
        %v6460 = vsub.s32 %v6457, %v6459
        %v6461 = vrot.slane %v6453, %v6460
        %v6463 = vunpack.c.l.s4 1983009808
        %v6464 = vunpack.c.0.s8 %v6463
        %v6465 = vlaneseq
        %v6466 = vshrl.u32 %v6465, 7
        %v6467 = vsub.s32 %v6464, %v6466
        %v6468 = vrot.slane %v6454, %v6467
        %v6469 = vcombine.low %v6413, %v6429
        %v6470 = vcombine.high %v6413, %v6429
        %v6472 = vunpack.c.l.s4 1934713408
        %v6473 = vunpack.c.0.s8 %v6472
        %v6474 = vlaneseq
        %v6475 = vshrl.u32 %v6474, 7
        %v6476 = vsub.s32 %v6473, %v6475
        %v6477 = vrot.slane %v6469, %v6476
        %v6479 = vunpack.c.l.s4 1934713408
        %v6480 = vunpack.c.0.s8 %v6479
        %v6481 = vlaneseq
        %v6482 = vshrl.u32 %v6481, 7
        %v6483 = vsub.s32 %v6480, %v6482
        %v6484 = vrot.slane %v6470, %v6483
        %v6485 = vcombine.low %v6420, %v6436
        %v6486 = vcombine.high %v6420, %v6436
        %v6488 = vunpack.c.l.s4 1934713408
        %v6489 = vunpack.c.0.s8 %v6488
        %v6490 = vlaneseq
        %v6491 = vshrl.u32 %v6490, 7
        %v6492 = vsub.s32 %v6489, %v6491
        %v6493 = vrot.slane %v6485, %v6492
        %v6495 = vunpack.c.l.s4 1934713408
        %v6496 = vunpack.c.0.s8 %v6495
        %v6497 = vlaneseq
        %v6498 = vshrl.u32 %v6497, 7
        %v6499 = vsub.s32 %v6496, %v6498
        %v6500 = vrot.slane %v6486, %v6499
        %v6501 = vcombine.low %v6445, %v6461
        %v6502 = vcombine.high %v6445, %v6461
        %v6504 = vunpack.c.l.s4 1934713408
        %v6505 = vunpack.c.0.s8 %v6504
        %v6506 = vlaneseq
        %v6507 = vshrl.u32 %v6506, 7
        %v6508 = vsub.s32 %v6505, %v6507
        %v6509 = vrot.slane %v6501, %v6508
        %v6511 = vunpack.c.l.s4 1934713408
        %v6512 = vunpack.c.0.s8 %v6511
        %v6513 = vlaneseq
        %v6514 = vshrl.u32 %v6513, 7
        %v6515 = vsub.s32 %v6512, %v6514
        %v6516 = vrot.slane %v6502, %v6515
        %v6517 = vcombine.low %v6452, %v6468
        %v6518 = vcombine.high %v6452, %v6468
        %v6520 = vunpack.c.l.s4 1934713408
        %v6521 = vunpack.c.0.s8 %v6520
        %v6522 = vlaneseq
        %v6523 = vshrl.u32 %v6522, 7
        %v6524 = vsub.s32 %v6521, %v6523
        %v6525 = vrot.slane %v6517, %v6524
        %v6527 = vunpack.c.l.s4 1934713408
        %v6528 = vunpack.c.0.s8 %v6527
        %v6529 = vlaneseq
        %v6530 = vshrl.u32 %v6529, 7
        %v6531 = vsub.s32 %v6528, %v6530
        %v6532 = vrot.slane %v6518, %v6531
        %v6533 = vcombine.low %v6477, %v6509
        %v6534 = vcombine.high %v6477, %v6509
        %v6535 = vcombine.low %v6484, %v6516
        %v6536 = vcombine.high %v6484, %v6516
        %v6537 = vcombine.low %v6493, %v6525
        %v6538 = vcombine.high %v6493, %v6525
        %v6539 = vcombine.low %v6500, %v6532
        %v6540 = vcombine.high %v6500, %v6532
        %v6541 = vcombine.low %v5319, %v6068
        %v6542 = vcombine.high %v5319, %v6068
        %v6544 = vunpack.c.l.s4 1983009808
        %v6545 = vunpack.c.0.s8 %v6544
        %v6546 = vlaneseq
        %v6547 = vshrl.u32 %v6546, 7
        %v6548 = vsub.s32 %v6545, %v6547
        %v6549 = vrot.slane %v6541, %v6548
        %v6551 = vunpack.c.l.s4 1983009808
        %v6552 = vunpack.c.0.s8 %v6551
        %v6553 = vlaneseq
        %v6554 = vshrl.u32 %v6553, 7
        %v6555 = vsub.s32 %v6552, %v6554
        %v6556 = vrot.slane %v6542, %v6555
        %v6557 = vcombine.low %v6056, %v6080
        %v6558 = vcombine.high %v6056, %v6080
        %v6560 = vunpack.c.l.s4 1983009808
        %v6561 = vunpack.c.0.s8 %v6560
        %v6562 = vlaneseq
        %v6563 = vshrl.u32 %v6562, 7
        %v6564 = vsub.s32 %v6561, %v6563
        %v6565 = vrot.slane %v6557, %v6564
        %v6567 = vunpack.c.l.s4 1983009808
        %v6568 = vunpack.c.0.s8 %v6567
        %v6569 = vlaneseq
        %v6570 = vshrl.u32 %v6569, 7
        %v6571 = vsub.s32 %v6568, %v6570
        %v6572 = vrot.slane %v6558, %v6571
        %v6573 = vcombine.low %v6092, %v6116
        %v6574 = vcombine.high %v6092, %v6116
        %v6576 = vunpack.c.l.s4 1983009808
        %v6577 = vunpack.c.0.s8 %v6576
        %v6578 = vlaneseq
        %v6579 = vshrl.u32 %v6578, 7
        %v6580 = vsub.s32 %v6577, %v6579
        %v6581 = vrot.slane %v6573, %v6580
        %v6583 = vunpack.c.l.s4 1983009808
        %v6584 = vunpack.c.0.s8 %v6583
        %v6585 = vlaneseq
        %v6586 = vshrl.u32 %v6585, 7
        %v6587 = vsub.s32 %v6584, %v6586
        %v6588 = vrot.slane %v6574, %v6587
        %v6589 = vcombine.low %v6104, %v6128
        %v6590 = vcombine.high %v6104, %v6128
        %v6592 = vunpack.c.l.s4 1983009808
        %v6593 = vunpack.c.0.s8 %v6592
        %v6594 = vlaneseq
        %v6595 = vshrl.u32 %v6594, 7
        %v6596 = vsub.s32 %v6593, %v6595
        %v6597 = vrot.slane %v6589, %v6596
        %v6599 = vunpack.c.l.s4 1983009808
        %v6600 = vunpack.c.0.s8 %v6599
        %v6601 = vlaneseq
        %v6602 = vshrl.u32 %v6601, 7
        %v6603 = vsub.s32 %v6600, %v6602
        %v6604 = vrot.slane %v6590, %v6603
        %v6605 = vcombine.low %v6549, %v6565
        %v6606 = vcombine.high %v6549, %v6565
        %v6608 = vunpack.c.l.s4 1934713408
        %v6609 = vunpack.c.0.s8 %v6608
        %v6610 = vlaneseq
        %v6611 = vshrl.u32 %v6610, 7
        %v6612 = vsub.s32 %v6609, %v6611
        %v6613 = vrot.slane %v6605, %v6612
        %v6615 = vunpack.c.l.s4 1934713408
        %v6616 = vunpack.c.0.s8 %v6615
        %v6617 = vlaneseq
        %v6618 = vshrl.u32 %v6617, 7
        %v6619 = vsub.s32 %v6616, %v6618
        %v6620 = vrot.slane %v6606, %v6619
        %v6621 = vcombine.low %v6556, %v6572
        %v6622 = vcombine.high %v6556, %v6572
        %v6624 = vunpack.c.l.s4 1934713408
        %v6625 = vunpack.c.0.s8 %v6624
        %v6626 = vlaneseq
        %v6627 = vshrl.u32 %v6626, 7
        %v6628 = vsub.s32 %v6625, %v6627
        %v6629 = vrot.slane %v6621, %v6628
        %v6631 = vunpack.c.l.s4 1934713408
        %v6632 = vunpack.c.0.s8 %v6631
        %v6633 = vlaneseq
        %v6634 = vshrl.u32 %v6633, 7
        %v6635 = vsub.s32 %v6632, %v6634
        %v6636 = vrot.slane %v6622, %v6635
        %v6637 = vcombine.low %v6581, %v6597
        %v6638 = vcombine.high %v6581, %v6597
        %v6640 = vunpack.c.l.s4 1934713408
        %v6641 = vunpack.c.0.s8 %v6640
        %v6642 = vlaneseq
        %v6643 = vshrl.u32 %v6642, 7
        %v6644 = vsub.s32 %v6641, %v6643
        %v6645 = vrot.slane %v6637, %v6644
        %v6647 = vunpack.c.l.s4 1934713408
        %v6648 = vunpack.c.0.s8 %v6647
        %v6649 = vlaneseq
        %v6650 = vshrl.u32 %v6649, 7
        %v6651 = vsub.s32 %v6648, %v6650
        %v6652 = vrot.slane %v6638, %v6651
        %v6653 = vcombine.low %v6588, %v6604
        %v6654 = vcombine.high %v6588, %v6604
        %v6656 = vunpack.c.l.s4 1934713408
        %v6657 = vunpack.c.0.s8 %v6656
        %v6658 = vlaneseq
        %v6659 = vshrl.u32 %v6658, 7
        %v6660 = vsub.s32 %v6657, %v6659
        %v6661 = vrot.slane %v6653, %v6660
        %v6663 = vunpack.c.l.s4 1934713408
        %v6664 = vunpack.c.0.s8 %v6663
        %v6665 = vlaneseq
        %v6666 = vshrl.u32 %v6665, 7
        %v6667 = vsub.s32 %v6664, %v6666
        %v6668 = vrot.slane %v6654, %v6667
        %v6669 = vcombine.low %v6613, %v6645
        %v6670 = vcombine.high %v6613, %v6645
        %v6671 = vcombine.low %v6620, %v6652
        %v6672 = vcombine.high %v6620, %v6652
        %v6673 = vcombine.low %v6629, %v6661
        %v6674 = vcombine.high %v6629, %v6661
        %v6675 = vcombine.low %v6636, %v6668
        %v6676 = vcombine.high %v6636, %v6668
        %v6677 = vcombine.low %v6261, %v6263
        %v6678 = vcombine.high %v6261, %v6263
        %v6680 = vunpack.c.l.s4 1983009808
        %v6681 = vunpack.c.0.s8 %v6680
        %v6682 = vlaneseq
        %v6683 = vshrl.u32 %v6682, 7
        %v6684 = vsub.s32 %v6681, %v6683
        %v6685 = vrot.slane %v6677, %v6684
        %v6687 = vunpack.c.l.s4 1983009808
        %v6688 = vunpack.c.0.s8 %v6687
        %v6689 = vlaneseq
        %v6690 = vshrl.u32 %v6689, 7
        %v6691 = vsub.s32 %v6688, %v6690
        %v6692 = vrot.slane %v6678, %v6691
        %v6693 = vcombine.low %v6262, %v6264
        %v6694 = vcombine.high %v6262, %v6264
        %v6696 = vunpack.c.l.s4 1983009808
        %v6697 = vunpack.c.0.s8 %v6696
        %v6698 = vlaneseq
        %v6699 = vshrl.u32 %v6698, 7
        %v6700 = vsub.s32 %v6697, %v6699
        %v6701 = vrot.slane %v6693, %v6700
        %v6703 = vunpack.c.l.s4 1983009808
        %v6704 = vunpack.c.0.s8 %v6703
        %v6705 = vlaneseq
        %v6706 = vshrl.u32 %v6705, 7
        %v6707 = vsub.s32 %v6704, %v6706
        %v6708 = vrot.slane %v6694, %v6707
        %v6709 = vcombine.low %v6265, %v6267
        %v6710 = vcombine.high %v6265, %v6267
        %v6712 = vunpack.c.l.s4 1983009808
        %v6713 = vunpack.c.0.s8 %v6712
        %v6714 = vlaneseq
        %v6715 = vshrl.u32 %v6714, 7
        %v6716 = vsub.s32 %v6713, %v6715
        %v6717 = vrot.slane %v6709, %v6716
        %v6719 = vunpack.c.l.s4 1983009808
        %v6720 = vunpack.c.0.s8 %v6719
        %v6721 = vlaneseq
        %v6722 = vshrl.u32 %v6721, 7
        %v6723 = vsub.s32 %v6720, %v6722
        %v6724 = vrot.slane %v6710, %v6723
        %v6725 = vcombine.low %v6266, %v6268
        %v6726 = vcombine.high %v6266, %v6268
        %v6728 = vunpack.c.l.s4 1983009808
        %v6729 = vunpack.c.0.s8 %v6728
        %v6730 = vlaneseq
        %v6731 = vshrl.u32 %v6730, 7
        %v6732 = vsub.s32 %v6729, %v6731
        %v6733 = vrot.slane %v6725, %v6732
        %v6735 = vunpack.c.l.s4 1983009808
        %v6736 = vunpack.c.0.s8 %v6735
        %v6737 = vlaneseq
        %v6738 = vshrl.u32 %v6737, 7
        %v6739 = vsub.s32 %v6736, %v6738
        %v6740 = vrot.slane %v6726, %v6739
        %v6741 = vcombine.low %v6685, %v6701
        %v6742 = vcombine.high %v6685, %v6701
        %v6744 = vunpack.c.l.s4 1934713408
        %v6745 = vunpack.c.0.s8 %v6744
        %v6746 = vlaneseq
        %v6747 = vshrl.u32 %v6746, 7
        %v6748 = vsub.s32 %v6745, %v6747
        %v6749 = vrot.slane %v6741, %v6748
        %v6751 = vunpack.c.l.s4 1934713408
        %v6752 = vunpack.c.0.s8 %v6751
        %v6753 = vlaneseq
        %v6754 = vshrl.u32 %v6753, 7
        %v6755 = vsub.s32 %v6752, %v6754
        %v6756 = vrot.slane %v6742, %v6755
        %v6757 = vcombine.low %v6692, %v6708
        %v6758 = vcombine.high %v6692, %v6708
        %v6760 = vunpack.c.l.s4 1934713408
        %v6761 = vunpack.c.0.s8 %v6760
        %v6762 = vlaneseq
        %v6763 = vshrl.u32 %v6762, 7
        %v6764 = vsub.s32 %v6761, %v6763
        %v6765 = vrot.slane %v6757, %v6764
        %v6767 = vunpack.c.l.s4 1934713408
        %v6768 = vunpack.c.0.s8 %v6767
        %v6769 = vlaneseq
        %v6770 = vshrl.u32 %v6769, 7
        %v6771 = vsub.s32 %v6768, %v6770
        %v6772 = vrot.slane %v6758, %v6771
        %v6773 = vcombine.low %v6717, %v6733
        %v6774 = vcombine.high %v6717, %v6733
        %v6776 = vunpack.c.l.s4 1934713408
        %v6777 = vunpack.c.0.s8 %v6776
        %v6778 = vlaneseq
        %v6779 = vshrl.u32 %v6778, 7
        %v6780 = vsub.s32 %v6777, %v6779
        %v6781 = vrot.slane %v6773, %v6780
        %v6783 = vunpack.c.l.s4 1934713408
        %v6784 = vunpack.c.0.s8 %v6783
        %v6785 = vlaneseq
        %v6786 = vshrl.u32 %v6785, 7
        %v6787 = vsub.s32 %v6784, %v6786
        %v6788 = vrot.slane %v6774, %v6787
        %v6789 = vcombine.low %v6724, %v6740
        %v6790 = vcombine.high %v6724, %v6740
        %v6792 = vunpack.c.l.s4 1934713408
        %v6793 = vunpack.c.0.s8 %v6792
        %v6794 = vlaneseq
        %v6795 = vshrl.u32 %v6794, 7
        %v6796 = vsub.s32 %v6793, %v6795
        %v6797 = vrot.slane %v6789, %v6796
        %v6799 = vunpack.c.l.s4 1934713408
        %v6800 = vunpack.c.0.s8 %v6799
        %v6801 = vlaneseq
        %v6802 = vshrl.u32 %v6801, 7
        %v6803 = vsub.s32 %v6800, %v6802
        %v6804 = vrot.slane %v6790, %v6803
        %v6805 = vcombine.low %v6749, %v6781
        %v6806 = vcombine.high %v6749, %v6781
        %v6807 = vcombine.low %v6756, %v6788
        %v6808 = vcombine.high %v6756, %v6788
        %v6809 = vcombine.low %v6765, %v6797
        %v6810 = vcombine.high %v6765, %v6797
        %v6811 = vcombine.low %v6772, %v6804
        %v6812 = vcombine.high %v6772, %v6804
        %v6813 = vcombine.low %v6397, %v6399
        %v6814 = vcombine.high %v6397, %v6399
        %v6816 = vunpack.c.l.s4 1983009808
        %v6817 = vunpack.c.0.s8 %v6816
        %v6818 = vlaneseq
        %v6819 = vshrl.u32 %v6818, 7
        %v6820 = vsub.s32 %v6817, %v6819
        %v6821 = vrot.slane %v6813, %v6820
        %v6823 = vunpack.c.l.s4 1983009808
        %v6824 = vunpack.c.0.s8 %v6823
        %v6825 = vlaneseq
        %v6826 = vshrl.u32 %v6825, 7
        %v6827 = vsub.s32 %v6824, %v6826
        %v6828 = vrot.slane %v6814, %v6827
        %v6829 = vcombine.low %v6398, %v6400
        %v6830 = vcombine.high %v6398, %v6400
        %v6832 = vunpack.c.l.s4 1983009808
        %v6833 = vunpack.c.0.s8 %v6832
        %v6834 = vlaneseq
        %v6835 = vshrl.u32 %v6834, 7
        %v6836 = vsub.s32 %v6833, %v6835
        %v6837 = vrot.slane %v6829, %v6836
        %v6839 = vunpack.c.l.s4 1983009808
        %v6840 = vunpack.c.0.s8 %v6839
        %v6841 = vlaneseq
        %v6842 = vshrl.u32 %v6841, 7
        %v6843 = vsub.s32 %v6840, %v6842
        %v6844 = vrot.slane %v6830, %v6843
        %v6845 = vcombine.low %v6401, %v6403
        %v6846 = vcombine.high %v6401, %v6403
        %v6848 = vunpack.c.l.s4 1983009808
        %v6849 = vunpack.c.0.s8 %v6848
        %v6850 = vlaneseq
        %v6851 = vshrl.u32 %v6850, 7
        %v6852 = vsub.s32 %v6849, %v6851
        %v6853 = vrot.slane %v6845, %v6852
        %v6855 = vunpack.c.l.s4 1983009808
        %v6856 = vunpack.c.0.s8 %v6855
        %v6857 = vlaneseq
        %v6858 = vshrl.u32 %v6857, 7
        %v6859 = vsub.s32 %v6856, %v6858
        %v6860 = vrot.slane %v6846, %v6859
        %v6861 = vcombine.low %v6402, %v6404
        %v6862 = vcombine.high %v6402, %v6404
        %v6864 = vunpack.c.l.s4 1983009808
        %v6865 = vunpack.c.0.s8 %v6864
        %v6866 = vlaneseq
        %v6867 = vshrl.u32 %v6866, 7
        %v6868 = vsub.s32 %v6865, %v6867
        %v6869 = vrot.slane %v6861, %v6868
        %v6871 = vunpack.c.l.s4 1983009808
        %v6872 = vunpack.c.0.s8 %v6871
        %v6873 = vlaneseq
        %v6874 = vshrl.u32 %v6873, 7
        %v6875 = vsub.s32 %v6872, %v6874
        %v6876 = vrot.slane %v6862, %v6875
        %v6877 = vcombine.low %v6821, %v6837
        %v6878 = vcombine.high %v6821, %v6837
        %v6880 = vunpack.c.l.s4 1934713408
        %v6881 = vunpack.c.0.s8 %v6880
        %v6882 = vlaneseq
        %v6883 = vshrl.u32 %v6882, 7
        %v6884 = vsub.s32 %v6881, %v6883
        %v6885 = vrot.slane %v6877, %v6884
        %v6887 = vunpack.c.l.s4 1934713408
        %v6888 = vunpack.c.0.s8 %v6887
        %v6889 = vlaneseq
        %v6890 = vshrl.u32 %v6889, 7
        %v6891 = vsub.s32 %v6888, %v6890
        %v6892 = vrot.slane %v6878, %v6891
        %v6893 = vcombine.low %v6828, %v6844
        %v6894 = vcombine.high %v6828, %v6844
        %v6896 = vunpack.c.l.s4 1934713408
        %v6897 = vunpack.c.0.s8 %v6896
        %v6898 = vlaneseq
        %v6899 = vshrl.u32 %v6898, 7
        %v6900 = vsub.s32 %v6897, %v6899
        %v6901 = vrot.slane %v6893, %v6900
        %v6903 = vunpack.c.l.s4 1934713408
        %v6904 = vunpack.c.0.s8 %v6903
        %v6905 = vlaneseq
        %v6906 = vshrl.u32 %v6905, 7
        %v6907 = vsub.s32 %v6904, %v6906
        %v6908 = vrot.slane %v6894, %v6907
        %v6909 = vcombine.low %v6853, %v6869
        %v6910 = vcombine.high %v6853, %v6869
        %v6912 = vunpack.c.l.s4 1934713408
        %v6913 = vunpack.c.0.s8 %v6912
        %v6914 = vlaneseq
        %v6915 = vshrl.u32 %v6914, 7
        %v6916 = vsub.s32 %v6913, %v6915
        %v6917 = vrot.slane %v6909, %v6916
        %v6919 = vunpack.c.l.s4 1934713408
        %v6920 = vunpack.c.0.s8 %v6919
        %v6921 = vlaneseq
        %v6922 = vshrl.u32 %v6921, 7
        %v6923 = vsub.s32 %v6920, %v6922
        %v6924 = vrot.slane %v6910, %v6923
        %v6925 = vcombine.low %v6860, %v6876
        %v6926 = vcombine.high %v6860, %v6876
        %v6928 = vunpack.c.l.s4 1934713408
        %v6929 = vunpack.c.0.s8 %v6928
        %v6930 = vlaneseq
        %v6931 = vshrl.u32 %v6930, 7
        %v6932 = vsub.s32 %v6929, %v6931
        %v6933 = vrot.slane %v6925, %v6932
        %v6935 = vunpack.c.l.s4 1934713408
        %v6936 = vunpack.c.0.s8 %v6935
        %v6937 = vlaneseq
        %v6938 = vshrl.u32 %v6937, 7
        %v6939 = vsub.s32 %v6936, %v6938
        %v6940 = vrot.slane %v6926, %v6939
        %v6941 = vcombine.low %v6885, %v6917
        %v6942 = vcombine.high %v6885, %v6917
        %v6943 = vcombine.low %v6892, %v6924
        %v6944 = vcombine.high %v6892, %v6924
        %v6945 = vcombine.low %v6901, %v6933
        %v6946 = vcombine.high %v6901, %v6933
        %v6947 = vcombine.low %v6908, %v6940
        %v6948 = vcombine.high %v6908, %v6940
        %v6949 = vcombine.low %v6533, %v6535
        %v6950 = vcombine.high %v6533, %v6535
        %v6952 = vunpack.c.l.s4 1983009808
        %v6953 = vunpack.c.0.s8 %v6952
        %v6954 = vlaneseq
        %v6955 = vshrl.u32 %v6954, 7
        %v6956 = vsub.s32 %v6953, %v6955
        %v6957 = vrot.slane %v6949, %v6956
        %v6959 = vunpack.c.l.s4 1983009808
        %v6960 = vunpack.c.0.s8 %v6959
        %v6961 = vlaneseq
        %v6962 = vshrl.u32 %v6961, 7
        %v6963 = vsub.s32 %v6960, %v6962
        %v6964 = vrot.slane %v6950, %v6963
        %v6965 = vcombine.low %v6534, %v6536
        %v6966 = vcombine.high %v6534, %v6536
        %v6968 = vunpack.c.l.s4 1983009808
        %v6969 = vunpack.c.0.s8 %v6968
        %v6970 = vlaneseq
        %v6971 = vshrl.u32 %v6970, 7
        %v6972 = vsub.s32 %v6969, %v6971
        %v6973 = vrot.slane %v6965, %v6972
        %v6975 = vunpack.c.l.s4 1983009808
        %v6976 = vunpack.c.0.s8 %v6975
        %v6977 = vlaneseq
        %v6978 = vshrl.u32 %v6977, 7
        %v6979 = vsub.s32 %v6976, %v6978
        %v6980 = vrot.slane %v6966, %v6979
        %v6981 = vcombine.low %v6537, %v6539
        %v6982 = vcombine.high %v6537, %v6539
        %v6984 = vunpack.c.l.s4 1983009808
        %v6985 = vunpack.c.0.s8 %v6984
        %v6986 = vlaneseq
        %v6987 = vshrl.u32 %v6986, 7
        %v6988 = vsub.s32 %v6985, %v6987
        %v6989 = vrot.slane %v6981, %v6988
        %v6991 = vunpack.c.l.s4 1983009808
        %v6992 = vunpack.c.0.s8 %v6991
        %v6993 = vlaneseq
        %v6994 = vshrl.u32 %v6993, 7
        %v6995 = vsub.s32 %v6992, %v6994
        %v6996 = vrot.slane %v6982, %v6995
        %v6997 = vcombine.low %v6538, %v6540
        %v6998 = vcombine.high %v6538, %v6540
        %v7000 = vunpack.c.l.s4 1983009808
        %v7001 = vunpack.c.0.s8 %v7000
        %v7002 = vlaneseq
        %v7003 = vshrl.u32 %v7002, 7
        %v7004 = vsub.s32 %v7001, %v7003
        %v7005 = vrot.slane %v6997, %v7004
        %v7007 = vunpack.c.l.s4 1983009808
        %v7008 = vunpack.c.0.s8 %v7007
        %v7009 = vlaneseq
        %v7010 = vshrl.u32 %v7009, 7
        %v7011 = vsub.s32 %v7008, %v7010
        %v7012 = vrot.slane %v6998, %v7011
        %v7013 = vcombine.low %v6957, %v6973
        %v7014 = vcombine.high %v6957, %v6973
        %v7016 = vunpack.c.l.s4 1934713408
        %v7017 = vunpack.c.0.s8 %v7016
        %v7018 = vlaneseq
        %v7019 = vshrl.u32 %v7018, 7
        %v7020 = vsub.s32 %v7017, %v7019
        %v7021 = vrot.slane %v7013, %v7020
        %v7023 = vunpack.c.l.s4 1934713408
        %v7024 = vunpack.c.0.s8 %v7023
        %v7025 = vlaneseq
        %v7026 = vshrl.u32 %v7025, 7
        %v7027 = vsub.s32 %v7024, %v7026
        %v7028 = vrot.slane %v7014, %v7027
        %v7029 = vcombine.low %v6964, %v6980
        %v7030 = vcombine.high %v6964, %v6980
        %v7032 = vunpack.c.l.s4 1934713408
        %v7033 = vunpack.c.0.s8 %v7032
        %v7034 = vlaneseq
        %v7035 = vshrl.u32 %v7034, 7
        %v7036 = vsub.s32 %v7033, %v7035
        %v7037 = vrot.slane %v7029, %v7036
        %v7039 = vunpack.c.l.s4 1934713408
        %v7040 = vunpack.c.0.s8 %v7039
        %v7041 = vlaneseq
        %v7042 = vshrl.u32 %v7041, 7
        %v7043 = vsub.s32 %v7040, %v7042
        %v7044 = vrot.slane %v7030, %v7043
        %v7045 = vcombine.low %v6989, %v7005
        %v7046 = vcombine.high %v6989, %v7005
        %v7048 = vunpack.c.l.s4 1934713408
        %v7049 = vunpack.c.0.s8 %v7048
        %v7050 = vlaneseq
        %v7051 = vshrl.u32 %v7050, 7
        %v7052 = vsub.s32 %v7049, %v7051
        %v7053 = vrot.slane %v7045, %v7052
        %v7055 = vunpack.c.l.s4 1934713408
        %v7056 = vunpack.c.0.s8 %v7055
        %v7057 = vlaneseq
        %v7058 = vshrl.u32 %v7057, 7
        %v7059 = vsub.s32 %v7056, %v7058
        %v7060 = vrot.slane %v7046, %v7059
        %v7061 = vcombine.low %v6996, %v7012
        %v7062 = vcombine.high %v6996, %v7012
        %v7064 = vunpack.c.l.s4 1934713408
        %v7065 = vunpack.c.0.s8 %v7064
        %v7066 = vlaneseq
        %v7067 = vshrl.u32 %v7066, 7
        %v7068 = vsub.s32 %v7065, %v7067
        %v7069 = vrot.slane %v7061, %v7068
        %v7071 = vunpack.c.l.s4 1934713408
        %v7072 = vunpack.c.0.s8 %v7071
        %v7073 = vlaneseq
        %v7074 = vshrl.u32 %v7073, 7
        %v7075 = vsub.s32 %v7072, %v7074
        %v7076 = vrot.slane %v7062, %v7075
        %v7077 = vcombine.low %v7021, %v7053
        %v7078 = vcombine.high %v7021, %v7053
        %v7079 = vcombine.low %v7028, %v7060
        %v7080 = vcombine.high %v7028, %v7060
        %v7081 = vcombine.low %v7037, %v7069
        %v7082 = vcombine.high %v7037, %v7069
        %v7083 = vcombine.low %v7044, %v7076
        %v7084 = vcombine.high %v7044, %v7076
        %v7085 = vcombine.low %v6669, %v6671
        %v7086 = vcombine.high %v6669, %v6671
        %v7088 = vunpack.c.l.s4 1983009808
        %v7089 = vunpack.c.0.s8 %v7088
        %v7090 = vlaneseq
        %v7091 = vshrl.u32 %v7090, 7
        %v7092 = vsub.s32 %v7089, %v7091
        %v7093 = vrot.slane %v7085, %v7092
        %v7095 = vunpack.c.l.s4 1983009808
        %v7096 = vunpack.c.0.s8 %v7095
        %v7097 = vlaneseq
        %v7098 = vshrl.u32 %v7097, 7
        %v7099 = vsub.s32 %v7096, %v7098
        %v7100 = vrot.slane %v7086, %v7099
        %v7101 = vcombine.low %v6670, %v6672
        %v7102 = vcombine.high %v6670, %v6672
        %v7104 = vunpack.c.l.s4 1983009808
        %v7105 = vunpack.c.0.s8 %v7104
        %v7106 = vlaneseq
        %v7107 = vshrl.u32 %v7106, 7
        %v7108 = vsub.s32 %v7105, %v7107
        %v7109 = vrot.slane %v7101, %v7108
        %v7111 = vunpack.c.l.s4 1983009808
        %v7112 = vunpack.c.0.s8 %v7111
        %v7113 = vlaneseq
        %v7114 = vshrl.u32 %v7113, 7
        %v7115 = vsub.s32 %v7112, %v7114
        %v7116 = vrot.slane %v7102, %v7115
        %v7117 = vcombine.low %v6673, %v6675
        %v7118 = vcombine.high %v6673, %v6675
        %v7120 = vunpack.c.l.s4 1983009808
        %v7121 = vunpack.c.0.s8 %v7120
        %v7122 = vlaneseq
        %v7123 = vshrl.u32 %v7122, 7
        %v7124 = vsub.s32 %v7121, %v7123
        %v7125 = vrot.slane %v7117, %v7124
        %v7127 = vunpack.c.l.s4 1983009808
        %v7128 = vunpack.c.0.s8 %v7127
        %v7129 = vlaneseq
        %v7130 = vshrl.u32 %v7129, 7
        %v7131 = vsub.s32 %v7128, %v7130
        %v7132 = vrot.slane %v7118, %v7131
        %v7133 = vcombine.low %v6674, %v6676
        %v7134 = vcombine.high %v6674, %v6676
        %v7136 = vunpack.c.l.s4 1983009808
        %v7137 = vunpack.c.0.s8 %v7136
        %v7138 = vlaneseq
        %v7139 = vshrl.u32 %v7138, 7
        %v7140 = vsub.s32 %v7137, %v7139
        %v7141 = vrot.slane %v7133, %v7140
        %v7143 = vunpack.c.l.s4 1983009808
        %v7144 = vunpack.c.0.s8 %v7143
        %v7145 = vlaneseq
        %v7146 = vshrl.u32 %v7145, 7
        %v7147 = vsub.s32 %v7144, %v7146
        %v7148 = vrot.slane %v7134, %v7147
        %v7149 = vcombine.low %v7093, %v7109
        %v7150 = vcombine.high %v7093, %v7109
        %v7152 = vunpack.c.l.s4 1934713408
        %v7153 = vunpack.c.0.s8 %v7152
        %v7154 = vlaneseq
        %v7155 = vshrl.u32 %v7154, 7
        %v7156 = vsub.s32 %v7153, %v7155
        %v7157 = vrot.slane %v7149, %v7156
        %v7159 = vunpack.c.l.s4 1934713408
        %v7160 = vunpack.c.0.s8 %v7159
        %v7161 = vlaneseq
        %v7162 = vshrl.u32 %v7161, 7
        %v7163 = vsub.s32 %v7160, %v7162
        %v7164 = vrot.slane %v7150, %v7163
        %v7165 = vcombine.low %v7100, %v7116
        %v7166 = vcombine.high %v7100, %v7116
        %v7168 = vunpack.c.l.s4 1934713408
        %v7169 = vunpack.c.0.s8 %v7168
        %v7170 = vlaneseq
        %v7171 = vshrl.u32 %v7170, 7
        %v7172 = vsub.s32 %v7169, %v7171
        %v7173 = vrot.slane %v7165, %v7172
        %v7175 = vunpack.c.l.s4 1934713408
        %v7176 = vunpack.c.0.s8 %v7175
        %v7177 = vlaneseq
        %v7178 = vshrl.u32 %v7177, 7
        %v7179 = vsub.s32 %v7176, %v7178
        %v7180 = vrot.slane %v7166, %v7179
        %v7181 = vcombine.low %v7125, %v7141
        %v7182 = vcombine.high %v7125, %v7141
        %v7184 = vunpack.c.l.s4 1934713408
        %v7185 = vunpack.c.0.s8 %v7184
        %v7186 = vlaneseq
        %v7187 = vshrl.u32 %v7186, 7
        %v7188 = vsub.s32 %v7185, %v7187
        %v7189 = vrot.slane %v7181, %v7188
        %v7191 = vunpack.c.l.s4 1934713408
        %v7192 = vunpack.c.0.s8 %v7191
        %v7193 = vlaneseq
        %v7194 = vshrl.u32 %v7193, 7
        %v7195 = vsub.s32 %v7192, %v7194
        %v7196 = vrot.slane %v7182, %v7195
        %v7197 = vcombine.low %v7132, %v7148
        %v7198 = vcombine.high %v7132, %v7148
        %v7200 = vunpack.c.l.s4 1934713408
        %v7201 = vunpack.c.0.s8 %v7200
        %v7202 = vlaneseq
        %v7203 = vshrl.u32 %v7202, 7
        %v7204 = vsub.s32 %v7201, %v7203
        %v7205 = vrot.slane %v7197, %v7204
        %v7207 = vunpack.c.l.s4 1934713408
        %v7208 = vunpack.c.0.s8 %v7207
        %v7209 = vlaneseq
        %v7210 = vshrl.u32 %v7209, 7
        %v7211 = vsub.s32 %v7208, %v7210
        %v7212 = vrot.slane %v7198, %v7211
        %v7213 = vcombine.low %v7157, %v7189
        %v7214 = vcombine.high %v7157, %v7189
        %v7215 = vcombine.low %v7164, %v7196
        %v7216 = vcombine.high %v7164, %v7196
        %v7217 = vcombine.low %v7173, %v7205
        %v7218 = vcombine.high %v7173, %v7205
        %v7219 = vcombine.low %v7180, %v7212
        %v7220 = vcombine.high %v7180, %v7212
        %v7221 = vpack.c.bf16 %v6941, %v6805
        %v7222 = vpack.c.bf16 %v6942, %v6806
        %v7223 = vpack.c.bf16 %v6943, %v6807
        %v7224 = vpack.c.bf16 %v6944, %v6808
        %v7225 = vpack.c.bf16 %v6945, %v6809
        %v7226 = vpack.c.bf16 %v6946, %v6810
        %v7227 = vpack.c.bf16 %v6947, %v6811
        %v7228 = vpack.c.bf16 %v6948, %v6812
        %v7229 = vpack.c.bf16 %v7213, %v7077
        %v7230 = vpack.c.bf16 %v7214, %v7078
        %v7231 = vpack.c.bf16 %v7215, %v7079
        %v7232 = vpack.c.bf16 %v7216, %v7080
        %v7233 = vpack.c.bf16 %v7217, %v7081
        %v7234 = vpack.c.bf16 %v7218, %v7082
        %v7235 = vpack.c.bf16 %v7219, %v7083
        %v7236 = vpack.c.bf16 %v7220, %v7084
        %7241 = vrot.lane.b32.xlu0 %v5427, 112
        %v7242 = vpop.permute.xlu0 %7241
        %7243 = vrot.lane.b32.xlu0 %v5430, 112
        %v7244 = vpop.permute.xlu0 %7243
        %7245 = vrot.lane.b32.xlu0 %v5435, 112
        %v7246 = vpop.permute.xlu0 %7245
        %7247 = vrot.lane.b32.xlu0 %v5438, 112
        %v7248 = vpop.permute.xlu0 %7247
        %7253 = vrot.lane.b32.xlu0 %v5427, 96
        %v7254 = vpop.permute.xlu0 %7253
        %7255 = vrot.lane.b32.xlu0 %v5430, 96
        %v7256 = vpop.permute.xlu0 %7255
        %7257 = vrot.lane.b32.xlu0 %v5435, 96
        %v7258 = vpop.permute.xlu0 %7257
        %7259 = vrot.lane.b32.xlu0 %v5438, 96
        %v7260 = vpop.permute.xlu0 %7259
        %7265 = vrot.lane.b32.xlu0 %v5427, 80
        %v7266 = vpop.permute.xlu0 %7265
        %7267 = vrot.lane.b32.xlu0 %v5430, 80
        %v7268 = vpop.permute.xlu0 %7267
        %7269 = vrot.lane.b32.xlu0 %v5435, 80
        %v7270 = vpop.permute.xlu0 %7269
        %7271 = vrot.lane.b32.xlu0 %v5438, 80
        %v7272 = vpop.permute.xlu0 %7271
        %7277 = vrot.lane.b32.xlu0 %v5427, 64
        %v7278 = vpop.permute.xlu0 %7277
        %7279 = vrot.lane.b32.xlu0 %v5430, 64
        %v7280 = vpop.permute.xlu0 %7279
        %7281 = vrot.lane.b32.xlu0 %v5435, 64
        %v7282 = vpop.permute.xlu0 %7281
        %7283 = vrot.lane.b32.xlu0 %v5438, 64
        %v7284 = vpop.permute.xlu0 %7283
        %7289 = vrot.lane.b32.xlu0 %v5427, 48
        %v7290 = vpop.permute.xlu0 %7289
        %7291 = vrot.lane.b32.xlu0 %v5430, 48
        %v7292 = vpop.permute.xlu0 %7291
        %7293 = vrot.lane.b32.xlu0 %v5435, 48
        %v7294 = vpop.permute.xlu0 %7293
        %7295 = vrot.lane.b32.xlu0 %v5438, 48
        %v7296 = vpop.permute.xlu0 %7295
        %7301 = vrot.lane.b32.xlu0 %v5427, 32
        %v7302 = vpop.permute.xlu0 %7301
        %7303 = vrot.lane.b32.xlu0 %v5430, 32
        %v7304 = vpop.permute.xlu0 %7303
        %7305 = vrot.lane.b32.xlu0 %v5435, 32
        %v7306 = vpop.permute.xlu0 %7305
        %7307 = vrot.lane.b32.xlu0 %v5438, 32
        %v7308 = vpop.permute.xlu0 %7307
        %7313 = vrot.lane.b32.xlu0 %v5427, 16
        %v7314 = vpop.permute.xlu0 %7313
        %7315 = vrot.lane.b32.xlu0 %v5430, 16
        %v7316 = vpop.permute.xlu0 %7315
        %7317 = vrot.lane.b32.xlu0 %v5435, 16
        %v7318 = vpop.permute.xlu0 %7317
        %7319 = vrot.lane.b32.xlu0 %v5438, 16
        %v7320 = vpop.permute.xlu0 %7319
        %v7325 = vcombine.low %v5427, %v7254
        %v7326 = vcombine.high %v5427, %v7254
        %v7328 = vunpack.c.l.s4 1983009808
        %v7329 = vunpack.c.0.s8 %v7328
        %v7330 = vlaneseq
        %v7331 = vshrl.u32 %v7330, 7
        %v7332 = vsub.s32 %v7329, %v7331
        %v7333 = vrot.slane %v7325, %v7332
        %v7335 = vunpack.c.l.s4 1983009808
        %v7336 = vunpack.c.0.s8 %v7335
        %v7337 = vlaneseq
        %v7338 = vshrl.u32 %v7337, 7
        %v7339 = vsub.s32 %v7336, %v7338
        %v7340 = vrot.slane %v7326, %v7339
        %v7341 = vcombine.low %v7242, %v7266
        %v7342 = vcombine.high %v7242, %v7266
        %v7344 = vunpack.c.l.s4 1983009808
        %v7345 = vunpack.c.0.s8 %v7344
        %v7346 = vlaneseq
        %v7347 = vshrl.u32 %v7346, 7
        %v7348 = vsub.s32 %v7345, %v7347
        %v7349 = vrot.slane %v7341, %v7348
        %v7351 = vunpack.c.l.s4 1983009808
        %v7352 = vunpack.c.0.s8 %v7351
        %v7353 = vlaneseq
        %v7354 = vshrl.u32 %v7353, 7
        %v7355 = vsub.s32 %v7352, %v7354
        %v7356 = vrot.slane %v7342, %v7355
        %v7357 = vcombine.low %v7278, %v7302
        %v7358 = vcombine.high %v7278, %v7302
        %v7360 = vunpack.c.l.s4 1983009808
        %v7361 = vunpack.c.0.s8 %v7360
        %v7362 = vlaneseq
        %v7363 = vshrl.u32 %v7362, 7
        %v7364 = vsub.s32 %v7361, %v7363
        %v7365 = vrot.slane %v7357, %v7364
        %v7367 = vunpack.c.l.s4 1983009808
        %v7368 = vunpack.c.0.s8 %v7367
        %v7369 = vlaneseq
        %v7370 = vshrl.u32 %v7369, 7
        %v7371 = vsub.s32 %v7368, %v7370
        %v7372 = vrot.slane %v7358, %v7371
        %v7373 = vcombine.low %v7290, %v7314
        %v7374 = vcombine.high %v7290, %v7314
        %v7376 = vunpack.c.l.s4 1983009808
        %v7377 = vunpack.c.0.s8 %v7376
        %v7378 = vlaneseq
        %v7379 = vshrl.u32 %v7378, 7
        %v7380 = vsub.s32 %v7377, %v7379
        %v7381 = vrot.slane %v7373, %v7380
        %v7383 = vunpack.c.l.s4 1983009808
        %v7384 = vunpack.c.0.s8 %v7383
        %v7385 = vlaneseq
        %v7386 = vshrl.u32 %v7385, 7
        %v7387 = vsub.s32 %v7384, %v7386
        %v7388 = vrot.slane %v7374, %v7387
        %v7389 = vcombine.low %v7333, %v7349
        %v7390 = vcombine.high %v7333, %v7349
        %v7392 = vunpack.c.l.s4 1934713408
        %v7393 = vunpack.c.0.s8 %v7392
        %v7394 = vlaneseq
        %v7395 = vshrl.u32 %v7394, 7
        %v7396 = vsub.s32 %v7393, %v7395
        %v7397 = vrot.slane %v7389, %v7396
        %v7399 = vunpack.c.l.s4 1934713408
        %v7400 = vunpack.c.0.s8 %v7399
        %v7401 = vlaneseq
        %v7402 = vshrl.u32 %v7401, 7
        %v7403 = vsub.s32 %v7400, %v7402
        %v7404 = vrot.slane %v7390, %v7403
        %v7405 = vcombine.low %v7340, %v7356
        %v7406 = vcombine.high %v7340, %v7356
        %v7408 = vunpack.c.l.s4 1934713408
        %v7409 = vunpack.c.0.s8 %v7408
        %v7410 = vlaneseq
        %v7411 = vshrl.u32 %v7410, 7
        %v7412 = vsub.s32 %v7409, %v7411
        %v7413 = vrot.slane %v7405, %v7412
        %v7415 = vunpack.c.l.s4 1934713408
        %v7416 = vunpack.c.0.s8 %v7415
        %v7417 = vlaneseq
        %v7418 = vshrl.u32 %v7417, 7
        %v7419 = vsub.s32 %v7416, %v7418
        %v7420 = vrot.slane %v7406, %v7419
        %v7421 = vcombine.low %v7365, %v7381
        %v7422 = vcombine.high %v7365, %v7381
        %v7424 = vunpack.c.l.s4 1934713408
        %v7425 = vunpack.c.0.s8 %v7424
        %v7426 = vlaneseq
        %v7427 = vshrl.u32 %v7426, 7
        %v7428 = vsub.s32 %v7425, %v7427
        %v7429 = vrot.slane %v7421, %v7428
        %v7431 = vunpack.c.l.s4 1934713408
        %v7432 = vunpack.c.0.s8 %v7431
        %v7433 = vlaneseq
        %v7434 = vshrl.u32 %v7433, 7
        %v7435 = vsub.s32 %v7432, %v7434
        %v7436 = vrot.slane %v7422, %v7435
        %v7437 = vcombine.low %v7372, %v7388
        %v7438 = vcombine.high %v7372, %v7388
        %v7440 = vunpack.c.l.s4 1934713408
        %v7441 = vunpack.c.0.s8 %v7440
        %v7442 = vlaneseq
        %v7443 = vshrl.u32 %v7442, 7
        %v7444 = vsub.s32 %v7441, %v7443
        %v7445 = vrot.slane %v7437, %v7444
        %v7447 = vunpack.c.l.s4 1934713408
        %v7448 = vunpack.c.0.s8 %v7447
        %v7449 = vlaneseq
        %v7450 = vshrl.u32 %v7449, 7
        %v7451 = vsub.s32 %v7448, %v7450
        %v7452 = vrot.slane %v7438, %v7451
        %v7453 = vcombine.low %v7397, %v7429
        %v7454 = vcombine.high %v7397, %v7429
        %v7455 = vcombine.low %v7404, %v7436
        %v7456 = vcombine.high %v7404, %v7436
        %v7457 = vcombine.low %v7413, %v7445
        %v7458 = vcombine.high %v7413, %v7445
        %v7459 = vcombine.low %v7420, %v7452
        %v7460 = vcombine.high %v7420, %v7452
        %v7461 = vcombine.low %v5430, %v7256
        %v7462 = vcombine.high %v5430, %v7256
        %v7464 = vunpack.c.l.s4 1983009808
        %v7465 = vunpack.c.0.s8 %v7464
        %v7466 = vlaneseq
        %v7467 = vshrl.u32 %v7466, 7
        %v7468 = vsub.s32 %v7465, %v7467
        %v7469 = vrot.slane %v7461, %v7468
        %v7471 = vunpack.c.l.s4 1983009808
        %v7472 = vunpack.c.0.s8 %v7471
        %v7473 = vlaneseq
        %v7474 = vshrl.u32 %v7473, 7
        %v7475 = vsub.s32 %v7472, %v7474
        %v7476 = vrot.slane %v7462, %v7475
        %v7477 = vcombine.low %v7244, %v7268
        %v7478 = vcombine.high %v7244, %v7268
        %v7480 = vunpack.c.l.s4 1983009808
        %v7481 = vunpack.c.0.s8 %v7480
        %v7482 = vlaneseq
        %v7483 = vshrl.u32 %v7482, 7
        %v7484 = vsub.s32 %v7481, %v7483
        %v7485 = vrot.slane %v7477, %v7484
        %v7487 = vunpack.c.l.s4 1983009808
        %v7488 = vunpack.c.0.s8 %v7487
        %v7489 = vlaneseq
        %v7490 = vshrl.u32 %v7489, 7
        %v7491 = vsub.s32 %v7488, %v7490
        %v7492 = vrot.slane %v7478, %v7491
        %v7493 = vcombine.low %v7280, %v7304
        %v7494 = vcombine.high %v7280, %v7304
        %v7496 = vunpack.c.l.s4 1983009808
        %v7497 = vunpack.c.0.s8 %v7496
        %v7498 = vlaneseq
        %v7499 = vshrl.u32 %v7498, 7
        %v7500 = vsub.s32 %v7497, %v7499
        %v7501 = vrot.slane %v7493, %v7500
        %v7503 = vunpack.c.l.s4 1983009808
        %v7504 = vunpack.c.0.s8 %v7503
        %v7505 = vlaneseq
        %v7506 = vshrl.u32 %v7505, 7
        %v7507 = vsub.s32 %v7504, %v7506
        %v7508 = vrot.slane %v7494, %v7507
        %v7509 = vcombine.low %v7292, %v7316
        %v7510 = vcombine.high %v7292, %v7316
        %v7512 = vunpack.c.l.s4 1983009808
        %v7513 = vunpack.c.0.s8 %v7512
        %v7514 = vlaneseq
        %v7515 = vshrl.u32 %v7514, 7
        %v7516 = vsub.s32 %v7513, %v7515
        %v7517 = vrot.slane %v7509, %v7516
        %v7519 = vunpack.c.l.s4 1983009808
        %v7520 = vunpack.c.0.s8 %v7519
        %v7521 = vlaneseq
        %v7522 = vshrl.u32 %v7521, 7
        %v7523 = vsub.s32 %v7520, %v7522
        %v7524 = vrot.slane %v7510, %v7523
        %v7525 = vcombine.low %v7469, %v7485
        %v7526 = vcombine.high %v7469, %v7485
        %v7528 = vunpack.c.l.s4 1934713408
        %v7529 = vunpack.c.0.s8 %v7528
        %v7530 = vlaneseq
        %v7531 = vshrl.u32 %v7530, 7
        %v7532 = vsub.s32 %v7529, %v7531
        %v7533 = vrot.slane %v7525, %v7532
        %v7535 = vunpack.c.l.s4 1934713408
        %v7536 = vunpack.c.0.s8 %v7535
        %v7537 = vlaneseq
        %v7538 = vshrl.u32 %v7537, 7
        %v7539 = vsub.s32 %v7536, %v7538
        %v7540 = vrot.slane %v7526, %v7539
        %v7541 = vcombine.low %v7476, %v7492
        %v7542 = vcombine.high %v7476, %v7492
        %v7544 = vunpack.c.l.s4 1934713408
        %v7545 = vunpack.c.0.s8 %v7544
        %v7546 = vlaneseq
        %v7547 = vshrl.u32 %v7546, 7
        %v7548 = vsub.s32 %v7545, %v7547
        %v7549 = vrot.slane %v7541, %v7548
        %v7551 = vunpack.c.l.s4 1934713408
        %v7552 = vunpack.c.0.s8 %v7551
        %v7553 = vlaneseq
        %v7554 = vshrl.u32 %v7553, 7
        %v7555 = vsub.s32 %v7552, %v7554
        %v7556 = vrot.slane %v7542, %v7555
        %v7557 = vcombine.low %v7501, %v7517
        %v7558 = vcombine.high %v7501, %v7517
        %v7560 = vunpack.c.l.s4 1934713408
        %v7561 = vunpack.c.0.s8 %v7560
        %v7562 = vlaneseq
        %v7563 = vshrl.u32 %v7562, 7
        %v7564 = vsub.s32 %v7561, %v7563
        %v7565 = vrot.slane %v7557, %v7564
        %v7567 = vunpack.c.l.s4 1934713408
        %v7568 = vunpack.c.0.s8 %v7567
        %v7569 = vlaneseq
        %v7570 = vshrl.u32 %v7569, 7
        %v7571 = vsub.s32 %v7568, %v7570
        %v7572 = vrot.slane %v7558, %v7571
        %v7573 = vcombine.low %v7508, %v7524
        %v7574 = vcombine.high %v7508, %v7524
        %v7576 = vunpack.c.l.s4 1934713408
        %v7577 = vunpack.c.0.s8 %v7576
        %v7578 = vlaneseq
        %v7579 = vshrl.u32 %v7578, 7
        %v7580 = vsub.s32 %v7577, %v7579
        %v7581 = vrot.slane %v7573, %v7580
        %v7583 = vunpack.c.l.s4 1934713408
        %v7584 = vunpack.c.0.s8 %v7583
        %v7585 = vlaneseq
        %v7586 = vshrl.u32 %v7585, 7
        %v7587 = vsub.s32 %v7584, %v7586
        %v7588 = vrot.slane %v7574, %v7587
        %v7589 = vcombine.low %v7533, %v7565
        %v7590 = vcombine.high %v7533, %v7565
        %v7591 = vcombine.low %v7540, %v7572
        %v7592 = vcombine.high %v7540, %v7572
        %v7593 = vcombine.low %v7549, %v7581
        %v7594 = vcombine.high %v7549, %v7581
        %v7595 = vcombine.low %v7556, %v7588
        %v7596 = vcombine.high %v7556, %v7588
        %v7597 = vcombine.low %v5435, %v7258
        %v7598 = vcombine.high %v5435, %v7258
        %v7600 = vunpack.c.l.s4 1983009808
        %v7601 = vunpack.c.0.s8 %v7600
        %v7602 = vlaneseq
        %v7603 = vshrl.u32 %v7602, 7
        %v7604 = vsub.s32 %v7601, %v7603
        %v7605 = vrot.slane %v7597, %v7604
        %v7607 = vunpack.c.l.s4 1983009808
        %v7608 = vunpack.c.0.s8 %v7607
        %v7609 = vlaneseq
        %v7610 = vshrl.u32 %v7609, 7
        %v7611 = vsub.s32 %v7608, %v7610
        %v7612 = vrot.slane %v7598, %v7611
        %v7613 = vcombine.low %v7246, %v7270
        %v7614 = vcombine.high %v7246, %v7270
        %v7616 = vunpack.c.l.s4 1983009808
        %v7617 = vunpack.c.0.s8 %v7616
        %v7618 = vlaneseq
        %v7619 = vshrl.u32 %v7618, 7
        %v7620 = vsub.s32 %v7617, %v7619
        %v7621 = vrot.slane %v7613, %v7620
        %v7623 = vunpack.c.l.s4 1983009808
        %v7624 = vunpack.c.0.s8 %v7623
        %v7625 = vlaneseq
        %v7626 = vshrl.u32 %v7625, 7
        %v7627 = vsub.s32 %v7624, %v7626
        %v7628 = vrot.slane %v7614, %v7627
        %v7629 = vcombine.low %v7282, %v7306
        %v7630 = vcombine.high %v7282, %v7306
        %v7632 = vunpack.c.l.s4 1983009808
        %v7633 = vunpack.c.0.s8 %v7632
        %v7634 = vlaneseq
        %v7635 = vshrl.u32 %v7634, 7
        %v7636 = vsub.s32 %v7633, %v7635
        %v7637 = vrot.slane %v7629, %v7636
        %v7639 = vunpack.c.l.s4 1983009808
        %v7640 = vunpack.c.0.s8 %v7639
        %v7641 = vlaneseq
        %v7642 = vshrl.u32 %v7641, 7
        %v7643 = vsub.s32 %v7640, %v7642
        %v7644 = vrot.slane %v7630, %v7643
        %v7645 = vcombine.low %v7294, %v7318
        %v7646 = vcombine.high %v7294, %v7318
        %v7648 = vunpack.c.l.s4 1983009808
        %v7649 = vunpack.c.0.s8 %v7648
        %v7650 = vlaneseq
        %v7651 = vshrl.u32 %v7650, 7
        %v7652 = vsub.s32 %v7649, %v7651
        %v7653 = vrot.slane %v7645, %v7652
        %v7655 = vunpack.c.l.s4 1983009808
        %v7656 = vunpack.c.0.s8 %v7655
        %v7657 = vlaneseq
        %v7658 = vshrl.u32 %v7657, 7
        %v7659 = vsub.s32 %v7656, %v7658
        %v7660 = vrot.slane %v7646, %v7659
        %v7661 = vcombine.low %v7605, %v7621
        %v7662 = vcombine.high %v7605, %v7621
        %v7664 = vunpack.c.l.s4 1934713408
        %v7665 = vunpack.c.0.s8 %v7664
        %v7666 = vlaneseq
        %v7667 = vshrl.u32 %v7666, 7
        %v7668 = vsub.s32 %v7665, %v7667
        %v7669 = vrot.slane %v7661, %v7668
        %v7671 = vunpack.c.l.s4 1934713408
        %v7672 = vunpack.c.0.s8 %v7671
        %v7673 = vlaneseq
        %v7674 = vshrl.u32 %v7673, 7
        %v7675 = vsub.s32 %v7672, %v7674
        %v7676 = vrot.slane %v7662, %v7675
        %v7677 = vcombine.low %v7612, %v7628
        %v7678 = vcombine.high %v7612, %v7628
        %v7680 = vunpack.c.l.s4 1934713408
        %v7681 = vunpack.c.0.s8 %v7680
        %v7682 = vlaneseq
        %v7683 = vshrl.u32 %v7682, 7
        %v7684 = vsub.s32 %v7681, %v7683
        %v7685 = vrot.slane %v7677, %v7684
        %v7687 = vunpack.c.l.s4 1934713408
        %v7688 = vunpack.c.0.s8 %v7687
        %v7689 = vlaneseq
        %v7690 = vshrl.u32 %v7689, 7
        %v7691 = vsub.s32 %v7688, %v7690
        %v7692 = vrot.slane %v7678, %v7691
        %v7693 = vcombine.low %v7637, %v7653
        %v7694 = vcombine.high %v7637, %v7653
        %v7696 = vunpack.c.l.s4 1934713408
        %v7697 = vunpack.c.0.s8 %v7696
        %v7698 = vlaneseq
        %v7699 = vshrl.u32 %v7698, 7
        %v7700 = vsub.s32 %v7697, %v7699
        %v7701 = vrot.slane %v7693, %v7700
        %v7703 = vunpack.c.l.s4 1934713408
        %v7704 = vunpack.c.0.s8 %v7703
        %v7705 = vlaneseq
        %v7706 = vshrl.u32 %v7705, 7
        %v7707 = vsub.s32 %v7704, %v7706
        %v7708 = vrot.slane %v7694, %v7707
        %v7709 = vcombine.low %v7644, %v7660
        %v7710 = vcombine.high %v7644, %v7660
        %v7712 = vunpack.c.l.s4 1934713408
        %v7713 = vunpack.c.0.s8 %v7712
        %v7714 = vlaneseq
        %v7715 = vshrl.u32 %v7714, 7
        %v7716 = vsub.s32 %v7713, %v7715
        %v7717 = vrot.slane %v7709, %v7716
        %v7719 = vunpack.c.l.s4 1934713408
        %v7720 = vunpack.c.0.s8 %v7719
        %v7721 = vlaneseq
        %v7722 = vshrl.u32 %v7721, 7
        %v7723 = vsub.s32 %v7720, %v7722
        %v7724 = vrot.slane %v7710, %v7723
        %v7725 = vcombine.low %v7669, %v7701
        %v7726 = vcombine.high %v7669, %v7701
        %v7727 = vcombine.low %v7676, %v7708
        %v7728 = vcombine.high %v7676, %v7708
        %v7729 = vcombine.low %v7685, %v7717
        %v7730 = vcombine.high %v7685, %v7717
        %v7731 = vcombine.low %v7692, %v7724
        %v7732 = vcombine.high %v7692, %v7724
        %v7733 = vcombine.low %v5438, %v7260
        %v7734 = vcombine.high %v5438, %v7260
        %v7736 = vunpack.c.l.s4 1983009808
        %v7737 = vunpack.c.0.s8 %v7736
        %v7738 = vlaneseq
        %v7739 = vshrl.u32 %v7738, 7
        %v7740 = vsub.s32 %v7737, %v7739
        %v7741 = vrot.slane %v7733, %v7740
        %v7743 = vunpack.c.l.s4 1983009808
        %v7744 = vunpack.c.0.s8 %v7743
        %v7745 = vlaneseq
        %v7746 = vshrl.u32 %v7745, 7
        %v7747 = vsub.s32 %v7744, %v7746
        %v7748 = vrot.slane %v7734, %v7747
        %v7749 = vcombine.low %v7248, %v7272
        %v7750 = vcombine.high %v7248, %v7272
        %v7752 = vunpack.c.l.s4 1983009808
        %v7753 = vunpack.c.0.s8 %v7752
        %v7754 = vlaneseq
        %v7755 = vshrl.u32 %v7754, 7
        %v7756 = vsub.s32 %v7753, %v7755
        %v7757 = vrot.slane %v7749, %v7756
        %v7759 = vunpack.c.l.s4 1983009808
        %v7760 = vunpack.c.0.s8 %v7759
        %v7761 = vlaneseq
        %v7762 = vshrl.u32 %v7761, 7
        %v7763 = vsub.s32 %v7760, %v7762
        %v7764 = vrot.slane %v7750, %v7763
        %v7765 = vcombine.low %v7284, %v7308
        %v7766 = vcombine.high %v7284, %v7308
        %v7768 = vunpack.c.l.s4 1983009808
        %v7769 = vunpack.c.0.s8 %v7768
        %v7770 = vlaneseq
        %v7771 = vshrl.u32 %v7770, 7
        %v7772 = vsub.s32 %v7769, %v7771
        %v7773 = vrot.slane %v7765, %v7772
        %v7775 = vunpack.c.l.s4 1983009808
        %v7776 = vunpack.c.0.s8 %v7775
        %v7777 = vlaneseq
        %v7778 = vshrl.u32 %v7777, 7
        %v7779 = vsub.s32 %v7776, %v7778
        %v7780 = vrot.slane %v7766, %v7779
        %v7781 = vcombine.low %v7296, %v7320
        %v7782 = vcombine.high %v7296, %v7320
        %v7784 = vunpack.c.l.s4 1983009808
        %v7785 = vunpack.c.0.s8 %v7784
        %v7786 = vlaneseq
        %v7787 = vshrl.u32 %v7786, 7
        %v7788 = vsub.s32 %v7785, %v7787
        %v7789 = vrot.slane %v7781, %v7788
        %v7791 = vunpack.c.l.s4 1983009808
        %v7792 = vunpack.c.0.s8 %v7791
        %v7793 = vlaneseq
        %v7794 = vshrl.u32 %v7793, 7
        %v7795 = vsub.s32 %v7792, %v7794
        %v7796 = vrot.slane %v7782, %v7795
        %v7797 = vcombine.low %v7741, %v7757
        %v7798 = vcombine.high %v7741, %v7757
        %v7800 = vunpack.c.l.s4 1934713408
        %v7801 = vunpack.c.0.s8 %v7800
        %v7802 = vlaneseq
        %v7803 = vshrl.u32 %v7802, 7
        %v7804 = vsub.s32 %v7801, %v7803
        %v7805 = vrot.slane %v7797, %v7804
        %v7807 = vunpack.c.l.s4 1934713408
        %v7808 = vunpack.c.0.s8 %v7807
        %v7809 = vlaneseq
        %v7810 = vshrl.u32 %v7809, 7
        %v7811 = vsub.s32 %v7808, %v7810
        %v7812 = vrot.slane %v7798, %v7811
        %v7813 = vcombine.low %v7748, %v7764
        %v7814 = vcombine.high %v7748, %v7764
        %v7816 = vunpack.c.l.s4 1934713408
        %v7817 = vunpack.c.0.s8 %v7816
        %v7818 = vlaneseq
        %v7819 = vshrl.u32 %v7818, 7
        %v7820 = vsub.s32 %v7817, %v7819
        %v7821 = vrot.slane %v7813, %v7820
        %v7823 = vunpack.c.l.s4 1934713408
        %v7824 = vunpack.c.0.s8 %v7823
        %v7825 = vlaneseq
        %v7826 = vshrl.u32 %v7825, 7
        %v7827 = vsub.s32 %v7824, %v7826
        %v7828 = vrot.slane %v7814, %v7827
        %v7829 = vcombine.low %v7773, %v7789
        %v7830 = vcombine.high %v7773, %v7789
        %v7832 = vunpack.c.l.s4 1934713408
        %v7833 = vunpack.c.0.s8 %v7832
        %v7834 = vlaneseq
        %v7835 = vshrl.u32 %v7834, 7
        %v7836 = vsub.s32 %v7833, %v7835
        %v7837 = vrot.slane %v7829, %v7836
        %v7839 = vunpack.c.l.s4 1934713408
        %v7840 = vunpack.c.0.s8 %v7839
        %v7841 = vlaneseq
        %v7842 = vshrl.u32 %v7841, 7
        %v7843 = vsub.s32 %v7840, %v7842
        %v7844 = vrot.slane %v7830, %v7843
        %v7845 = vcombine.low %v7780, %v7796
        %v7846 = vcombine.high %v7780, %v7796
        %v7848 = vunpack.c.l.s4 1934713408
        %v7849 = vunpack.c.0.s8 %v7848
        %v7850 = vlaneseq
        %v7851 = vshrl.u32 %v7850, 7
        %v7852 = vsub.s32 %v7849, %v7851
        %v7853 = vrot.slane %v7845, %v7852
        %v7855 = vunpack.c.l.s4 1934713408
        %v7856 = vunpack.c.0.s8 %v7855
        %v7857 = vlaneseq
        %v7858 = vshrl.u32 %v7857, 7
        %v7859 = vsub.s32 %v7856, %v7858
        %v7860 = vrot.slane %v7846, %v7859
        %v7861 = vcombine.low %v7805, %v7837
        %v7862 = vcombine.high %v7805, %v7837
        %v7863 = vcombine.low %v7812, %v7844
        %v7864 = vcombine.high %v7812, %v7844
        %v7865 = vcombine.low %v7821, %v7853
        %v7866 = vcombine.high %v7821, %v7853
        %v7867 = vcombine.low %v7828, %v7860
        %v7868 = vcombine.high %v7828, %v7860
        %v7869 = vcombine.low %v7453, %v7455
        %v7870 = vcombine.high %v7453, %v7455
        %v7872 = vunpack.c.l.s4 1983009808
        %v7873 = vunpack.c.0.s8 %v7872
        %v7874 = vlaneseq
        %v7875 = vshrl.u32 %v7874, 7
        %v7876 = vsub.s32 %v7873, %v7875
        %v7877 = vrot.slane %v7869, %v7876
        %v7879 = vunpack.c.l.s4 1983009808
        %v7880 = vunpack.c.0.s8 %v7879
        %v7881 = vlaneseq
        %v7882 = vshrl.u32 %v7881, 7
        %v7883 = vsub.s32 %v7880, %v7882
        %v7884 = vrot.slane %v7870, %v7883
        %v7885 = vcombine.low %v7454, %v7456
        %v7886 = vcombine.high %v7454, %v7456
        %v7888 = vunpack.c.l.s4 1983009808
        %v7889 = vunpack.c.0.s8 %v7888
        %v7890 = vlaneseq
        %v7891 = vshrl.u32 %v7890, 7
        %v7892 = vsub.s32 %v7889, %v7891
        %v7893 = vrot.slane %v7885, %v7892
        %v7895 = vunpack.c.l.s4 1983009808
        %v7896 = vunpack.c.0.s8 %v7895
        %v7897 = vlaneseq
        %v7898 = vshrl.u32 %v7897, 7
        %v7899 = vsub.s32 %v7896, %v7898
        %v7900 = vrot.slane %v7886, %v7899
        %v7901 = vcombine.low %v7457, %v7459
        %v7902 = vcombine.high %v7457, %v7459
        %v7904 = vunpack.c.l.s4 1983009808
        %v7905 = vunpack.c.0.s8 %v7904
        %v7906 = vlaneseq
        %v7907 = vshrl.u32 %v7906, 7
        %v7908 = vsub.s32 %v7905, %v7907
        %v7909 = vrot.slane %v7901, %v7908
        %v7911 = vunpack.c.l.s4 1983009808
        %v7912 = vunpack.c.0.s8 %v7911
        %v7913 = vlaneseq
        %v7914 = vshrl.u32 %v7913, 7
        %v7915 = vsub.s32 %v7912, %v7914
        %v7916 = vrot.slane %v7902, %v7915
        %v7917 = vcombine.low %v7458, %v7460
        %v7918 = vcombine.high %v7458, %v7460
        %v7920 = vunpack.c.l.s4 1983009808
        %v7921 = vunpack.c.0.s8 %v7920
        %v7922 = vlaneseq
        %v7923 = vshrl.u32 %v7922, 7
        %v7924 = vsub.s32 %v7921, %v7923
        %v7925 = vrot.slane %v7917, %v7924
        %v7927 = vunpack.c.l.s4 1983009808
        %v7928 = vunpack.c.0.s8 %v7927
        %v7929 = vlaneseq
        %v7930 = vshrl.u32 %v7929, 7
        %v7931 = vsub.s32 %v7928, %v7930
        %v7932 = vrot.slane %v7918, %v7931
        %v7933 = vcombine.low %v7877, %v7893
        %v7934 = vcombine.high %v7877, %v7893
        %v7936 = vunpack.c.l.s4 1934713408
        %v7937 = vunpack.c.0.s8 %v7936
        %v7938 = vlaneseq
        %v7939 = vshrl.u32 %v7938, 7
        %v7940 = vsub.s32 %v7937, %v7939
        %v7941 = vrot.slane %v7933, %v7940
        %v7943 = vunpack.c.l.s4 1934713408
        %v7944 = vunpack.c.0.s8 %v7943
        %v7945 = vlaneseq
        %v7946 = vshrl.u32 %v7945, 7
        %v7947 = vsub.s32 %v7944, %v7946
        %v7948 = vrot.slane %v7934, %v7947
        %v7949 = vcombine.low %v7884, %v7900
        %v7950 = vcombine.high %v7884, %v7900
        %v7952 = vunpack.c.l.s4 1934713408
        %v7953 = vunpack.c.0.s8 %v7952
        %v7954 = vlaneseq
        %v7955 = vshrl.u32 %v7954, 7
        %v7956 = vsub.s32 %v7953, %v7955
        %v7957 = vrot.slane %v7949, %v7956
        %v7959 = vunpack.c.l.s4 1934713408
        %v7960 = vunpack.c.0.s8 %v7959
        %v7961 = vlaneseq
        %v7962 = vshrl.u32 %v7961, 7
        %v7963 = vsub.s32 %v7960, %v7962
        %v7964 = vrot.slane %v7950, %v7963
        %v7965 = vcombine.low %v7909, %v7925
        %v7966 = vcombine.high %v7909, %v7925
        %v7968 = vunpack.c.l.s4 1934713408
        %v7969 = vunpack.c.0.s8 %v7968
        %v7970 = vlaneseq
        %v7971 = vshrl.u32 %v7970, 7
        %v7972 = vsub.s32 %v7969, %v7971
        %v7973 = vrot.slane %v7965, %v7972
        %v7975 = vunpack.c.l.s4 1934713408
        %v7976 = vunpack.c.0.s8 %v7975
        %v7977 = vlaneseq
        %v7978 = vshrl.u32 %v7977, 7
        %v7979 = vsub.s32 %v7976, %v7978
        %v7980 = vrot.slane %v7966, %v7979
        %v7981 = vcombine.low %v7916, %v7932
        %v7982 = vcombine.high %v7916, %v7932
        %v7984 = vunpack.c.l.s4 1934713408
        %v7985 = vunpack.c.0.s8 %v7984
        %v7986 = vlaneseq
        %v7987 = vshrl.u32 %v7986, 7
        %v7988 = vsub.s32 %v7985, %v7987
        %v7989 = vrot.slane %v7981, %v7988
        %v7991 = vunpack.c.l.s4 1934713408
        %v7992 = vunpack.c.0.s8 %v7991
        %v7993 = vlaneseq
        %v7994 = vshrl.u32 %v7993, 7
        %v7995 = vsub.s32 %v7992, %v7994
        %v7996 = vrot.slane %v7982, %v7995
        %v7997 = vcombine.low %v7941, %v7973
        %v7998 = vcombine.high %v7941, %v7973
        %v7999 = vcombine.low %v7948, %v7980
        %v8000 = vcombine.high %v7948, %v7980
        %v8001 = vcombine.low %v7957, %v7989
        %v8002 = vcombine.high %v7957, %v7989
        %v8003 = vcombine.low %v7964, %v7996
        %v8004 = vcombine.high %v7964, %v7996
        %v8005 = vcombine.low %v7589, %v7591
        %v8006 = vcombine.high %v7589, %v7591
        %v8008 = vunpack.c.l.s4 1983009808
        %v8009 = vunpack.c.0.s8 %v8008
        %v8010 = vlaneseq
        %v8011 = vshrl.u32 %v8010, 7
        %v8012 = vsub.s32 %v8009, %v8011
        %v8013 = vrot.slane %v8005, %v8012
        %v8015 = vunpack.c.l.s4 1983009808
        %v8016 = vunpack.c.0.s8 %v8015
        %v8017 = vlaneseq
        %v8018 = vshrl.u32 %v8017, 7
        %v8019 = vsub.s32 %v8016, %v8018
        %v8020 = vrot.slane %v8006, %v8019
        %v8021 = vcombine.low %v7590, %v7592
        %v8022 = vcombine.high %v7590, %v7592
        %v8024 = vunpack.c.l.s4 1983009808
        %v8025 = vunpack.c.0.s8 %v8024
        %v8026 = vlaneseq
        %v8027 = vshrl.u32 %v8026, 7
        %v8028 = vsub.s32 %v8025, %v8027
        %v8029 = vrot.slane %v8021, %v8028
        %v8031 = vunpack.c.l.s4 1983009808
        %v8032 = vunpack.c.0.s8 %v8031
        %v8033 = vlaneseq
        %v8034 = vshrl.u32 %v8033, 7
        %v8035 = vsub.s32 %v8032, %v8034
        %v8036 = vrot.slane %v8022, %v8035
        %v8037 = vcombine.low %v7593, %v7595
        %v8038 = vcombine.high %v7593, %v7595
        %v8040 = vunpack.c.l.s4 1983009808
        %v8041 = vunpack.c.0.s8 %v8040
        %v8042 = vlaneseq
        %v8043 = vshrl.u32 %v8042, 7
        %v8044 = vsub.s32 %v8041, %v8043
        %v8045 = vrot.slane %v8037, %v8044
        %v8047 = vunpack.c.l.s4 1983009808
        %v8048 = vunpack.c.0.s8 %v8047
        %v8049 = vlaneseq
        %v8050 = vshrl.u32 %v8049, 7
        %v8051 = vsub.s32 %v8048, %v8050
        %v8052 = vrot.slane %v8038, %v8051
        %v8053 = vcombine.low %v7594, %v7596
        %v8054 = vcombine.high %v7594, %v7596
        %v8056 = vunpack.c.l.s4 1983009808
        %v8057 = vunpack.c.0.s8 %v8056
        %v8058 = vlaneseq
        %v8059 = vshrl.u32 %v8058, 7
        %v8060 = vsub.s32 %v8057, %v8059
        %v8061 = vrot.slane %v8053, %v8060
        %v8063 = vunpack.c.l.s4 1983009808
        %v8064 = vunpack.c.0.s8 %v8063
        %v8065 = vlaneseq
        %v8066 = vshrl.u32 %v8065, 7
        %v8067 = vsub.s32 %v8064, %v8066
        %v8068 = vrot.slane %v8054, %v8067
        %v8069 = vcombine.low %v8013, %v8029
        %v8070 = vcombine.high %v8013, %v8029
        %v8072 = vunpack.c.l.s4 1934713408
        %v8073 = vunpack.c.0.s8 %v8072
        %v8074 = vlaneseq
        %v8075 = vshrl.u32 %v8074, 7
        %v8076 = vsub.s32 %v8073, %v8075
        %v8077 = vrot.slane %v8069, %v8076
        %v8079 = vunpack.c.l.s4 1934713408
        %v8080 = vunpack.c.0.s8 %v8079
        %v8081 = vlaneseq
        %v8082 = vshrl.u32 %v8081, 7
        %v8083 = vsub.s32 %v8080, %v8082
        %v8084 = vrot.slane %v8070, %v8083
        %v8085 = vcombine.low %v8020, %v8036
        %v8086 = vcombine.high %v8020, %v8036
        %v8088 = vunpack.c.l.s4 1934713408
        %v8089 = vunpack.c.0.s8 %v8088
        %v8090 = vlaneseq
        %v8091 = vshrl.u32 %v8090, 7
        %v8092 = vsub.s32 %v8089, %v8091
        %v8093 = vrot.slane %v8085, %v8092
        %v8095 = vunpack.c.l.s4 1934713408
        %v8096 = vunpack.c.0.s8 %v8095
        %v8097 = vlaneseq
        %v8098 = vshrl.u32 %v8097, 7
        %v8099 = vsub.s32 %v8096, %v8098
        %v8100 = vrot.slane %v8086, %v8099
        %v8101 = vcombine.low %v8045, %v8061
        %v8102 = vcombine.high %v8045, %v8061
        %v8104 = vunpack.c.l.s4 1934713408
        %v8105 = vunpack.c.0.s8 %v8104
        %v8106 = vlaneseq
        %v8107 = vshrl.u32 %v8106, 7
        %v8108 = vsub.s32 %v8105, %v8107
        %v8109 = vrot.slane %v8101, %v8108
        %v8111 = vunpack.c.l.s4 1934713408
        %v8112 = vunpack.c.0.s8 %v8111
        %v8113 = vlaneseq
        %v8114 = vshrl.u32 %v8113, 7
        %v8115 = vsub.s32 %v8112, %v8114
        %v8116 = vrot.slane %v8102, %v8115
        %v8117 = vcombine.low %v8052, %v8068
        %v8118 = vcombine.high %v8052, %v8068
        %v8120 = vunpack.c.l.s4 1934713408
        %v8121 = vunpack.c.0.s8 %v8120
        %v8122 = vlaneseq
        %v8123 = vshrl.u32 %v8122, 7
        %v8124 = vsub.s32 %v8121, %v8123
        %v8125 = vrot.slane %v8117, %v8124
        %v8127 = vunpack.c.l.s4 1934713408
        %v8128 = vunpack.c.0.s8 %v8127
        %v8129 = vlaneseq
        %v8130 = vshrl.u32 %v8129, 7
        %v8131 = vsub.s32 %v8128, %v8130
        %v8132 = vrot.slane %v8118, %v8131
        %v8133 = vcombine.low %v8077, %v8109
        %v8134 = vcombine.high %v8077, %v8109
        %v8135 = vcombine.low %v8084, %v8116
        %v8136 = vcombine.high %v8084, %v8116
        %v8137 = vcombine.low %v8093, %v8125
        %v8138 = vcombine.high %v8093, %v8125
        %v8139 = vcombine.low %v8100, %v8132
        %v8140 = vcombine.high %v8100, %v8132
        %v8141 = vcombine.low %v7725, %v7727
        %v8142 = vcombine.high %v7725, %v7727
        %v8144 = vunpack.c.l.s4 1983009808
        %v8145 = vunpack.c.0.s8 %v8144
        %v8146 = vlaneseq
        %v8147 = vshrl.u32 %v8146, 7
        %v8148 = vsub.s32 %v8145, %v8147
        %v8149 = vrot.slane %v8141, %v8148
        %v8151 = vunpack.c.l.s4 1983009808
        %v8152 = vunpack.c.0.s8 %v8151
        %v8153 = vlaneseq
        %v8154 = vshrl.u32 %v8153, 7
        %v8155 = vsub.s32 %v8152, %v8154
        %v8156 = vrot.slane %v8142, %v8155
        %v8157 = vcombine.low %v7726, %v7728
        %v8158 = vcombine.high %v7726, %v7728
        %v8160 = vunpack.c.l.s4 1983009808
        %v8161 = vunpack.c.0.s8 %v8160
        %v8162 = vlaneseq
        %v8163 = vshrl.u32 %v8162, 7
        %v8164 = vsub.s32 %v8161, %v8163
        %v8165 = vrot.slane %v8157, %v8164
        %v8167 = vunpack.c.l.s4 1983009808
        %v8168 = vunpack.c.0.s8 %v8167
        %v8169 = vlaneseq
        %v8170 = vshrl.u32 %v8169, 7
        %v8171 = vsub.s32 %v8168, %v8170
        %v8172 = vrot.slane %v8158, %v8171
        %v8173 = vcombine.low %v7729, %v7731
        %v8174 = vcombine.high %v7729, %v7731
        %v8176 = vunpack.c.l.s4 1983009808
        %v8177 = vunpack.c.0.s8 %v8176
        %v8178 = vlaneseq
        %v8179 = vshrl.u32 %v8178, 7
        %v8180 = vsub.s32 %v8177, %v8179
        %v8181 = vrot.slane %v8173, %v8180
        %v8183 = vunpack.c.l.s4 1983009808
        %v8184 = vunpack.c.0.s8 %v8183
        %v8185 = vlaneseq
        %v8186 = vshrl.u32 %v8185, 7
        %v8187 = vsub.s32 %v8184, %v8186
        %v8188 = vrot.slane %v8174, %v8187
        %v8189 = vcombine.low %v7730, %v7732
        %v8190 = vcombine.high %v7730, %v7732
        %v8192 = vunpack.c.l.s4 1983009808
        %v8193 = vunpack.c.0.s8 %v8192
        %v8194 = vlaneseq
        %v8195 = vshrl.u32 %v8194, 7
        %v8196 = vsub.s32 %v8193, %v8195
        %v8197 = vrot.slane %v8189, %v8196
        %v8199 = vunpack.c.l.s4 1983009808
        %v8200 = vunpack.c.0.s8 %v8199
        %v8201 = vlaneseq
        %v8202 = vshrl.u32 %v8201, 7
        %v8203 = vsub.s32 %v8200, %v8202
        %v8204 = vrot.slane %v8190, %v8203
        %v8205 = vcombine.low %v8149, %v8165
        %v8206 = vcombine.high %v8149, %v8165
        %v8208 = vunpack.c.l.s4 1934713408
        %v8209 = vunpack.c.0.s8 %v8208
        %v8210 = vlaneseq
        %v8211 = vshrl.u32 %v8210, 7
        %v8212 = vsub.s32 %v8209, %v8211
        %v8213 = vrot.slane %v8205, %v8212
        %v8215 = vunpack.c.l.s4 1934713408
        %v8216 = vunpack.c.0.s8 %v8215
        %v8217 = vlaneseq
        %v8218 = vshrl.u32 %v8217, 7
        %v8219 = vsub.s32 %v8216, %v8218
        %v8220 = vrot.slane %v8206, %v8219
        %v8221 = vcombine.low %v8156, %v8172
        %v8222 = vcombine.high %v8156, %v8172
        %v8224 = vunpack.c.l.s4 1934713408
        %v8225 = vunpack.c.0.s8 %v8224
        %v8226 = vlaneseq
        %v8227 = vshrl.u32 %v8226, 7
        %v8228 = vsub.s32 %v8225, %v8227
        %v8229 = vrot.slane %v8221, %v8228
        %v8231 = vunpack.c.l.s4 1934713408
        %v8232 = vunpack.c.0.s8 %v8231
        %v8233 = vlaneseq
        %v8234 = vshrl.u32 %v8233, 7
        %v8235 = vsub.s32 %v8232, %v8234
        %v8236 = vrot.slane %v8222, %v8235
        %v8237 = vcombine.low %v8181, %v8197
        %v8238 = vcombine.high %v8181, %v8197
        %v8240 = vunpack.c.l.s4 1934713408
        %v8241 = vunpack.c.0.s8 %v8240
        %v8242 = vlaneseq
        %v8243 = vshrl.u32 %v8242, 7
        %v8244 = vsub.s32 %v8241, %v8243
        %v8245 = vrot.slane %v8237, %v8244
        %v8247 = vunpack.c.l.s4 1934713408
        %v8248 = vunpack.c.0.s8 %v8247
        %v8249 = vlaneseq
        %v8250 = vshrl.u32 %v8249, 7
        %v8251 = vsub.s32 %v8248, %v8250
        %v8252 = vrot.slane %v8238, %v8251
        %v8253 = vcombine.low %v8188, %v8204
        %v8254 = vcombine.high %v8188, %v8204
        %v8256 = vunpack.c.l.s4 1934713408
        %v8257 = vunpack.c.0.s8 %v8256
        %v8258 = vlaneseq
        %v8259 = vshrl.u32 %v8258, 7
        %v8260 = vsub.s32 %v8257, %v8259
        %v8261 = vrot.slane %v8253, %v8260
        %v8263 = vunpack.c.l.s4 1934713408
        %v8264 = vunpack.c.0.s8 %v8263
        %v8265 = vlaneseq
        %v8266 = vshrl.u32 %v8265, 7
        %v8267 = vsub.s32 %v8264, %v8266
        %v8268 = vrot.slane %v8254, %v8267
        %v8269 = vcombine.low %v8213, %v8245
        %v8270 = vcombine.high %v8213, %v8245
        %v8271 = vcombine.low %v8220, %v8252
        %v8272 = vcombine.high %v8220, %v8252
        %v8273 = vcombine.low %v8229, %v8261
        %v8274 = vcombine.high %v8229, %v8261
        %v8275 = vcombine.low %v8236, %v8268
        %v8276 = vcombine.high %v8236, %v8268
        %v8277 = vcombine.low %v7861, %v7863
        %v8278 = vcombine.high %v7861, %v7863
        %v8280 = vunpack.c.l.s4 1983009808
        %v8281 = vunpack.c.0.s8 %v8280
        %v8282 = vlaneseq
        %v8283 = vshrl.u32 %v8282, 7
        %v8284 = vsub.s32 %v8281, %v8283
        %v8285 = vrot.slane %v8277, %v8284
        %v8287 = vunpack.c.l.s4 1983009808
        %v8288 = vunpack.c.0.s8 %v8287
        %v8289 = vlaneseq
        %v8290 = vshrl.u32 %v8289, 7
        %v8291 = vsub.s32 %v8288, %v8290
        %v8292 = vrot.slane %v8278, %v8291
        %v8293 = vcombine.low %v7862, %v7864
        %v8294 = vcombine.high %v7862, %v7864
        %v8296 = vunpack.c.l.s4 1983009808
        %v8297 = vunpack.c.0.s8 %v8296
        %v8298 = vlaneseq
        %v8299 = vshrl.u32 %v8298, 7
        %v8300 = vsub.s32 %v8297, %v8299
        %v8301 = vrot.slane %v8293, %v8300
        %v8303 = vunpack.c.l.s4 1983009808
        %v8304 = vunpack.c.0.s8 %v8303
        %v8305 = vlaneseq
        %v8306 = vshrl.u32 %v8305, 7
        %v8307 = vsub.s32 %v8304, %v8306
        %v8308 = vrot.slane %v8294, %v8307
        %v8309 = vcombine.low %v7865, %v7867
        %v8310 = vcombine.high %v7865, %v7867
        %v8312 = vunpack.c.l.s4 1983009808
        %v8313 = vunpack.c.0.s8 %v8312
        %v8314 = vlaneseq
        %v8315 = vshrl.u32 %v8314, 7
        %v8316 = vsub.s32 %v8313, %v8315
        %v8317 = vrot.slane %v8309, %v8316
        %v8319 = vunpack.c.l.s4 1983009808
        %v8320 = vunpack.c.0.s8 %v8319
        %v8321 = vlaneseq
        %v8322 = vshrl.u32 %v8321, 7
        %v8323 = vsub.s32 %v8320, %v8322
        %v8324 = vrot.slane %v8310, %v8323
        %v8325 = vcombine.low %v7866, %v7868
        %v8326 = vcombine.high %v7866, %v7868
        %v8328 = vunpack.c.l.s4 1983009808
        %v8329 = vunpack.c.0.s8 %v8328
        %v8330 = vlaneseq
        %v8331 = vshrl.u32 %v8330, 7
        %v8332 = vsub.s32 %v8329, %v8331
        %v8333 = vrot.slane %v8325, %v8332
        %v8335 = vunpack.c.l.s4 1983009808
        %v8336 = vunpack.c.0.s8 %v8335
        %v8337 = vlaneseq
        %v8338 = vshrl.u32 %v8337, 7
        %v8339 = vsub.s32 %v8336, %v8338
        %v8340 = vrot.slane %v8326, %v8339
        %v8341 = vcombine.low %v8285, %v8301
        %v8342 = vcombine.high %v8285, %v8301
        %v8344 = vunpack.c.l.s4 1934713408
        %v8345 = vunpack.c.0.s8 %v8344
        %v8346 = vlaneseq
        %v8347 = vshrl.u32 %v8346, 7
        %v8348 = vsub.s32 %v8345, %v8347
        %v8349 = vrot.slane %v8341, %v8348
        %v8351 = vunpack.c.l.s4 1934713408
        %v8352 = vunpack.c.0.s8 %v8351
        %v8353 = vlaneseq
        %v8354 = vshrl.u32 %v8353, 7
        %v8355 = vsub.s32 %v8352, %v8354
        %v8356 = vrot.slane %v8342, %v8355
        %v8357 = vcombine.low %v8292, %v8308
        %v8358 = vcombine.high %v8292, %v8308
        %v8360 = vunpack.c.l.s4 1934713408
        %v8361 = vunpack.c.0.s8 %v8360
        %v8362 = vlaneseq
        %v8363 = vshrl.u32 %v8362, 7
        %v8364 = vsub.s32 %v8361, %v8363
        %v8365 = vrot.slane %v8357, %v8364
        %v8367 = vunpack.c.l.s4 1934713408
        %v8368 = vunpack.c.0.s8 %v8367
        %v8369 = vlaneseq
        %v8370 = vshrl.u32 %v8369, 7
        %v8371 = vsub.s32 %v8368, %v8370
        %v8372 = vrot.slane %v8358, %v8371
        %v8373 = vcombine.low %v8317, %v8333
        %v8374 = vcombine.high %v8317, %v8333
        %v8376 = vunpack.c.l.s4 1934713408
        %v8377 = vunpack.c.0.s8 %v8376
        %v8378 = vlaneseq
        %v8379 = vshrl.u32 %v8378, 7
        %v8380 = vsub.s32 %v8377, %v8379
        %v8381 = vrot.slane %v8373, %v8380
        %v8383 = vunpack.c.l.s4 1934713408
        %v8384 = vunpack.c.0.s8 %v8383
        %v8385 = vlaneseq
        %v8386 = vshrl.u32 %v8385, 7
        %v8387 = vsub.s32 %v8384, %v8386
        %v8388 = vrot.slane %v8374, %v8387
        %v8389 = vcombine.low %v8324, %v8340
        %v8390 = vcombine.high %v8324, %v8340
        %v8392 = vunpack.c.l.s4 1934713408
        %v8393 = vunpack.c.0.s8 %v8392
        %v8394 = vlaneseq
        %v8395 = vshrl.u32 %v8394, 7
        %v8396 = vsub.s32 %v8393, %v8395
        %v8397 = vrot.slane %v8389, %v8396
        %v8399 = vunpack.c.l.s4 1934713408
        %v8400 = vunpack.c.0.s8 %v8399
        %v8401 = vlaneseq
        %v8402 = vshrl.u32 %v8401, 7
        %v8403 = vsub.s32 %v8400, %v8402
        %v8404 = vrot.slane %v8390, %v8403
        %v8405 = vcombine.low %v8349, %v8381
        %v8406 = vcombine.high %v8349, %v8381
        %v8407 = vcombine.low %v8356, %v8388
        %v8408 = vcombine.high %v8356, %v8388
        %v8409 = vcombine.low %v8365, %v8397
        %v8410 = vcombine.high %v8365, %v8397
        %v8411 = vcombine.low %v8372, %v8404
        %v8412 = vcombine.high %v8372, %v8404
        %v8413 = vpack.c.bf16 %v8133, %v7997
        %v8414 = vpack.c.bf16 %v8134, %v7998
        %v8415 = vpack.c.bf16 %v8135, %v7999
        %v8416 = vpack.c.bf16 %v8136, %v8000
        %v8417 = vpack.c.bf16 %v8137, %v8001
        %v8418 = vpack.c.bf16 %v8138, %v8002
        %v8419 = vpack.c.bf16 %v8139, %v8003
        %v8420 = vpack.c.bf16 %v8140, %v8004
        %v8421 = vpack.c.bf16 %v8405, %v8269
        %v8422 = vpack.c.bf16 %v8406, %v8270
        %v8423 = vpack.c.bf16 %v8407, %v8271
        %v8424 = vpack.c.bf16 %v8408, %v8272
        %v8425 = vpack.c.bf16 %v8409, %v8273
        %v8426 = vpack.c.bf16 %v8410, %v8274
        %v8427 = vpack.c.bf16 %v8411, %v8275
        %v8428 = vpack.c.bf16 %v8412, %v8276
        %v8430 = vsel %vm2641, %v6029, 0
        %v8433 = vsel %vm2641, %v7221, 0
        %8435 = vmatprep.subr.bf16.mxu0 0
        %8436 = vmatpush1.bf16.xpose.msra.mxu0 0
        %8437 = vmatprep.subr.bf16.mxu0 0
        %8438 = vmatpush1.bf16.xpose.msra.mxu0 0
        %8439 = vmatprep.subr.bf16.mxu0 0
        %8440 = vmatpush1.bf16.xpose.msra.mxu0 0
        %8441 = vmatprep.subr.bf16.mxu0 0
        %8442 = vmatpush1.bf16.xpose.msra.mxu0 0
        %8443 = vmatprep.subr.bf16.mxu0 0
        %8444 = vmatpush1.bf16.xpose.msra.mxu0 0
        %8445 = vmatprep.subr.bf16.mxu0 0
        %8446 = vmatpush1.bf16.xpose.msra.mxu0 0
        %8447 = vmatprep.subr.bf16.mxu0 0
        %8448 = vmatpush1.bf16.xpose.msra.mxu0 0
        %8449 = vmatprep.subr.bf16.mxu0 0
        %8450 = vmatpush1.bf16.xpose.msra.mxu0 %v8433
        %8451 = vmatprep.subr.bf16.mxu0 0
        %8452 = vmatpush2.bf16.xpose.msra.mxu0 0
        %8453 = vmatprep.subr.bf16.mxu0 0
        %8454 = vmatpush2.bf16.xpose.msra.mxu0 0
        %8455 = vmatprep.subr.bf16.mxu0 0
        %8456 = vmatpush2.bf16.xpose.msra.mxu0 0
        %8457 = vmatprep.subr.bf16.mxu0 0
        %8458 = vmatpush2.bf16.xpose.msra.mxu0 0
        %8459 = vmatprep.subr.bf16.mxu0 0
        %8460 = vmatpush2.bf16.xpose.msra.mxu0 0
        %8461 = vmatprep.subr.bf16.mxu0 0
        %8462 = vmatpush2.bf16.xpose.msra.mxu0 0
        %8463 = vmatprep.subr.bf16.mxu0 0
        %8464 = vmatpush2.bf16.xpose.msra.mxu0 0
        %8465 = vmatprep.subr.bf16.mxu0 0
        %8466 = vmatpush2.bf16.xpose.msra.mxu0 0
        %8467 = vmatprep.mubr.bf16.mxu0 0
        %8468 = vmatmul.mubr.bf16.gmra.mxu0 %v8430
        %v8469 = vpop.f32.mrf.mxu0
        %v8470 = vadd.f32 0.0, %v8469
        %v8471 = vpop.f32.mrf.mxu0
        %v8472 = vpop.f32.mrf.mxu0
        %v8473 = vpop.f32.mrf.mxu0
        %8474 = vdwg.mxu0
        %v8476 = vsel %vm2641, %v6030, 0
        %v8479 = vsel %vm2641, %v7222, 0
        %8481 = vmatprep.subr.bf16.mxu0 0
        %8482 = vmatpush1.bf16.xpose.msra.mxu0 0
        %8483 = vmatprep.subr.bf16.mxu0 0
        %8484 = vmatpush1.bf16.xpose.msra.mxu0 0
        %8485 = vmatprep.subr.bf16.mxu0 0
        %8486 = vmatpush1.bf16.xpose.msra.mxu0 0
        %8487 = vmatprep.subr.bf16.mxu0 0
        %8488 = vmatpush1.bf16.xpose.msra.mxu0 0
        %8489 = vmatprep.subr.bf16.mxu0 0
        %8490 = vmatpush1.bf16.xpose.msra.mxu0 0
        %8491 = vmatprep.subr.bf16.mxu0 0
        %8492 = vmatpush1.bf16.xpose.msra.mxu0 0
        %8493 = vmatprep.subr.bf16.mxu0 0
        %8494 = vmatpush1.bf16.xpose.msra.mxu0 0
        %8495 = vmatprep.subr.bf16.mxu0 0
        %8496 = vmatpush1.bf16.xpose.msra.mxu0 %v8479
        %8497 = vmatprep.subr.bf16.mxu0 0
        %8498 = vmatpush2.bf16.xpose.msra.mxu0 0
        %8499 = vmatprep.subr.bf16.mxu0 0
        %8500 = vmatpush2.bf16.xpose.msra.mxu0 0
        %8501 = vmatprep.subr.bf16.mxu0 0
        %8502 = vmatpush2.bf16.xpose.msra.mxu0 0
        %8503 = vmatprep.subr.bf16.mxu0 0
        %8504 = vmatpush2.bf16.xpose.msra.mxu0 0
        %8505 = vmatprep.subr.bf16.mxu0 0
        %8506 = vmatpush2.bf16.xpose.msra.mxu0 0
        %8507 = vmatprep.subr.bf16.mxu0 0
        %8508 = vmatpush2.bf16.xpose.msra.mxu0 0
        %8509 = vmatprep.subr.bf16.mxu0 0
        %8510 = vmatpush2.bf16.xpose.msra.mxu0 0
        %8511 = vmatprep.subr.bf16.mxu0 0
        %8512 = vmatpush2.bf16.xpose.msra.mxu0 0
        %8513 = vmatprep.mubr.bf16.mxu0 0
        %8514 = vmatmul.mubr.bf16.gmra.mxu0 %v8476
        %v8515 = vpop.f32.mrf.mxu0
        %v8516 = vadd.f32 0.0, %v8515
        %v8517 = vpop.f32.mrf.mxu0
        %v8518 = vpop.f32.mrf.mxu0
        %v8519 = vpop.f32.mrf.mxu0
        %8520 = vdwg.mxu0
        %v8522 = vsel %vm2641, %v6031, 0
        %v8525 = vsel %vm2641, %v7223, 0
        %8527 = vmatprep.subr.bf16.mxu0 0
        %8528 = vmatpush1.bf16.xpose.msra.mxu0 0
        %8529 = vmatprep.subr.bf16.mxu0 0
        %8530 = vmatpush1.bf16.xpose.msra.mxu0 0
        %8531 = vmatprep.subr.bf16.mxu0 0
        %8532 = vmatpush1.bf16.xpose.msra.mxu0 0
        %8533 = vmatprep.subr.bf16.mxu0 0
        %8534 = vmatpush1.bf16.xpose.msra.mxu0 0
        %8535 = vmatprep.subr.bf16.mxu0 0
        %8536 = vmatpush1.bf16.xpose.msra.mxu0 0
        %8537 = vmatprep.subr.bf16.mxu0 0
        %8538 = vmatpush1.bf16.xpose.msra.mxu0 0
        %8539 = vmatprep.subr.bf16.mxu0 0
        %8540 = vmatpush1.bf16.xpose.msra.mxu0 0
        %8541 = vmatprep.subr.bf16.mxu0 0
        %8542 = vmatpush1.bf16.xpose.msra.mxu0 %v8525
        %8543 = vmatprep.subr.bf16.mxu0 0
        %8544 = vmatpush2.bf16.xpose.msra.mxu0 0
        %8545 = vmatprep.subr.bf16.mxu0 0
        %8546 = vmatpush2.bf16.xpose.msra.mxu0 0
        %8547 = vmatprep.subr.bf16.mxu0 0
        %8548 = vmatpush2.bf16.xpose.msra.mxu0 0
        %8549 = vmatprep.subr.bf16.mxu0 0
        %8550 = vmatpush2.bf16.xpose.msra.mxu0 0
        %8551 = vmatprep.subr.bf16.mxu0 0
        %8552 = vmatpush2.bf16.xpose.msra.mxu0 0
        %8553 = vmatprep.subr.bf16.mxu0 0
        %8554 = vmatpush2.bf16.xpose.msra.mxu0 0
        %8555 = vmatprep.subr.bf16.mxu0 0
        %8556 = vmatpush2.bf16.xpose.msra.mxu0 0
        %8557 = vmatprep.subr.bf16.mxu0 0
        %8558 = vmatpush2.bf16.xpose.msra.mxu0 0
        %8559 = vmatprep.mubr.bf16.mxu0 0
        %8560 = vmatmul.mubr.bf16.gmra.mxu0 %v8522
        %v8561 = vpop.f32.mrf.mxu0
        %v8562 = vadd.f32 0.0, %v8561
        %v8563 = vpop.f32.mrf.mxu0
        %v8564 = vpop.f32.mrf.mxu0
        %v8565 = vpop.f32.mrf.mxu0
        %8566 = vdwg.mxu0
        %v8568 = vsel %vm2641, %v6032, 0
        %v8571 = vsel %vm2641, %v7224, 0
        %8573 = vmatprep.subr.bf16.mxu0 0
        %8574 = vmatpush1.bf16.xpose.msra.mxu0 0
        %8575 = vmatprep.subr.bf16.mxu0 0
        %8576 = vmatpush1.bf16.xpose.msra.mxu0 0
        %8577 = vmatprep.subr.bf16.mxu0 0
        %8578 = vmatpush1.bf16.xpose.msra.mxu0 0
        %8579 = vmatprep.subr.bf16.mxu0 0
        %8580 = vmatpush1.bf16.xpose.msra.mxu0 0
        %8581 = vmatprep.subr.bf16.mxu0 0
        %8582 = vmatpush1.bf16.xpose.msra.mxu0 0
        %8583 = vmatprep.subr.bf16.mxu0 0
        %8584 = vmatpush1.bf16.xpose.msra.mxu0 0
        %8585 = vmatprep.subr.bf16.mxu0 0
        %8586 = vmatpush1.bf16.xpose.msra.mxu0 0
        %8587 = vmatprep.subr.bf16.mxu0 0
        %8588 = vmatpush1.bf16.xpose.msra.mxu0 %v8571
        %8589 = vmatprep.subr.bf16.mxu0 0
        %8590 = vmatpush2.bf16.xpose.msra.mxu0 0
        %8591 = vmatprep.subr.bf16.mxu0 0
        %8592 = vmatpush2.bf16.xpose.msra.mxu0 0
        %8593 = vmatprep.subr.bf16.mxu0 0
        %8594 = vmatpush2.bf16.xpose.msra.mxu0 0
        %8595 = vmatprep.subr.bf16.mxu0 0
        %8596 = vmatpush2.bf16.xpose.msra.mxu0 0
        %8597 = vmatprep.subr.bf16.mxu0 0
        %8598 = vmatpush2.bf16.xpose.msra.mxu0 0
        %8599 = vmatprep.subr.bf16.mxu0 0
        %8600 = vmatpush2.bf16.xpose.msra.mxu0 0
        %8601 = vmatprep.subr.bf16.mxu0 0
        %8602 = vmatpush2.bf16.xpose.msra.mxu0 0
        %8603 = vmatprep.subr.bf16.mxu0 0
        %8604 = vmatpush2.bf16.xpose.msra.mxu0 0
        %8605 = vmatprep.mubr.bf16.mxu0 0
        %8606 = vmatmul.mubr.bf16.gmra.mxu0 %v8568
        %v8607 = vpop.f32.mrf.mxu0
        %v8608 = vadd.f32 0.0, %v8607
        %v8609 = vpop.f32.mrf.mxu0
        %v8610 = vpop.f32.mrf.mxu0
        %v8611 = vpop.f32.mrf.mxu0
        %8612 = vdwg.mxu0
        %v8614 = vsel %vm2641, %v6033, 0
        %v8617 = vsel %vm2641, %v7225, 0
        %8619 = vmatprep.subr.bf16.mxu0 0
        %8620 = vmatpush1.bf16.xpose.msra.mxu0 0
        %8621 = vmatprep.subr.bf16.mxu0 0
        %8622 = vmatpush1.bf16.xpose.msra.mxu0 0
        %8623 = vmatprep.subr.bf16.mxu0 0
        %8624 = vmatpush1.bf16.xpose.msra.mxu0 0
        %8625 = vmatprep.subr.bf16.mxu0 0
        %8626 = vmatpush1.bf16.xpose.msra.mxu0 0
        %8627 = vmatprep.subr.bf16.mxu0 0
        %8628 = vmatpush1.bf16.xpose.msra.mxu0 0
        %8629 = vmatprep.subr.bf16.mxu0 0
        %8630 = vmatpush1.bf16.xpose.msra.mxu0 0
        %8631 = vmatprep.subr.bf16.mxu0 0
        %8632 = vmatpush1.bf16.xpose.msra.mxu0 0
        %8633 = vmatprep.subr.bf16.mxu0 0
        %8634 = vmatpush1.bf16.xpose.msra.mxu0 %v8617
        %8635 = vmatprep.subr.bf16.mxu0 0
        %8636 = vmatpush2.bf16.xpose.msra.mxu0 0
        %8637 = vmatprep.subr.bf16.mxu0 0
        %8638 = vmatpush2.bf16.xpose.msra.mxu0 0
        %8639 = vmatprep.subr.bf16.mxu0 0
        %8640 = vmatpush2.bf16.xpose.msra.mxu0 0
        %8641 = vmatprep.subr.bf16.mxu0 0
        %8642 = vmatpush2.bf16.xpose.msra.mxu0 0
        %8643 = vmatprep.subr.bf16.mxu0 0
        %8644 = vmatpush2.bf16.xpose.msra.mxu0 0
        %8645 = vmatprep.subr.bf16.mxu0 0
        %8646 = vmatpush2.bf16.xpose.msra.mxu0 0
        %8647 = vmatprep.subr.bf16.mxu0 0
        %8648 = vmatpush2.bf16.xpose.msra.mxu0 0
        %8649 = vmatprep.subr.bf16.mxu0 0
        %8650 = vmatpush2.bf16.xpose.msra.mxu0 0
        %8651 = vmatprep.mubr.bf16.mxu0 0
        %8652 = vmatmul.mubr.bf16.gmra.mxu0 %v8614
        %v8653 = vpop.f32.mrf.mxu0
        %v8654 = vadd.f32 0.0, %v8653
        %v8655 = vpop.f32.mrf.mxu0
        %v8656 = vpop.f32.mrf.mxu0
        %v8657 = vpop.f32.mrf.mxu0
        %8658 = vdwg.mxu0
        %v8660 = vsel %vm2641, %v6034, 0
        %v8663 = vsel %vm2641, %v7226, 0
        %8665 = vmatprep.subr.bf16.mxu0 0
        %8666 = vmatpush1.bf16.xpose.msra.mxu0 0
        %8667 = vmatprep.subr.bf16.mxu0 0
        %8668 = vmatpush1.bf16.xpose.msra.mxu0 0
        %8669 = vmatprep.subr.bf16.mxu0 0
        %8670 = vmatpush1.bf16.xpose.msra.mxu0 0
        %8671 = vmatprep.subr.bf16.mxu0 0
        %8672 = vmatpush1.bf16.xpose.msra.mxu0 0
        %8673 = vmatprep.subr.bf16.mxu0 0
        %8674 = vmatpush1.bf16.xpose.msra.mxu0 0
        %8675 = vmatprep.subr.bf16.mxu0 0
        %8676 = vmatpush1.bf16.xpose.msra.mxu0 0
        %8677 = vmatprep.subr.bf16.mxu0 0
        %8678 = vmatpush1.bf16.xpose.msra.mxu0 0
        %8679 = vmatprep.subr.bf16.mxu0 0
        %8680 = vmatpush1.bf16.xpose.msra.mxu0 %v8663
        %8681 = vmatprep.subr.bf16.mxu0 0
        %8682 = vmatpush2.bf16.xpose.msra.mxu0 0
        %8683 = vmatprep.subr.bf16.mxu0 0
        %8684 = vmatpush2.bf16.xpose.msra.mxu0 0
        %8685 = vmatprep.subr.bf16.mxu0 0
        %8686 = vmatpush2.bf16.xpose.msra.mxu0 0
        %8687 = vmatprep.subr.bf16.mxu0 0
        %8688 = vmatpush2.bf16.xpose.msra.mxu0 0
        %8689 = vmatprep.subr.bf16.mxu0 0
        %8690 = vmatpush2.bf16.xpose.msra.mxu0 0
        %8691 = vmatprep.subr.bf16.mxu0 0
        %8692 = vmatpush2.bf16.xpose.msra.mxu0 0
        %8693 = vmatprep.subr.bf16.mxu0 0
        %8694 = vmatpush2.bf16.xpose.msra.mxu0 0
        %8695 = vmatprep.subr.bf16.mxu0 0
        %8696 = vmatpush2.bf16.xpose.msra.mxu0 0
        %8697 = vmatprep.mubr.bf16.mxu0 0
        %8698 = vmatmul.mubr.bf16.gmra.mxu0 %v8660
        %v8699 = vpop.f32.mrf.mxu0
        %v8700 = vadd.f32 0.0, %v8699
        %v8701 = vpop.f32.mrf.mxu0
        %v8702 = vpop.f32.mrf.mxu0
        %v8703 = vpop.f32.mrf.mxu0
        %8704 = vdwg.mxu0
        %v8706 = vsel %vm2641, %v6035, 0
        %v8709 = vsel %vm2641, %v7227, 0
        %8711 = vmatprep.subr.bf16.mxu0 0
        %8712 = vmatpush1.bf16.xpose.msra.mxu0 0
        %8713 = vmatprep.subr.bf16.mxu0 0
        %8714 = vmatpush1.bf16.xpose.msra.mxu0 0
        %8715 = vmatprep.subr.bf16.mxu0 0
        %8716 = vmatpush1.bf16.xpose.msra.mxu0 0
        %8717 = vmatprep.subr.bf16.mxu0 0
        %8718 = vmatpush1.bf16.xpose.msra.mxu0 0
        %8719 = vmatprep.subr.bf16.mxu0 0
        %8720 = vmatpush1.bf16.xpose.msra.mxu0 0
        %8721 = vmatprep.subr.bf16.mxu0 0
        %8722 = vmatpush1.bf16.xpose.msra.mxu0 0
        %8723 = vmatprep.subr.bf16.mxu0 0
        %8724 = vmatpush1.bf16.xpose.msra.mxu0 0
        %8725 = vmatprep.subr.bf16.mxu0 0
        %8726 = vmatpush1.bf16.xpose.msra.mxu0 %v8709
        %8727 = vmatprep.subr.bf16.mxu0 0
        %8728 = vmatpush2.bf16.xpose.msra.mxu0 0
        %8729 = vmatprep.subr.bf16.mxu0 0
        %8730 = vmatpush2.bf16.xpose.msra.mxu0 0
        %8731 = vmatprep.subr.bf16.mxu0 0
        %8732 = vmatpush2.bf16.xpose.msra.mxu0 0
        %8733 = vmatprep.subr.bf16.mxu0 0
        %8734 = vmatpush2.bf16.xpose.msra.mxu0 0
        %8735 = vmatprep.subr.bf16.mxu0 0
        %8736 = vmatpush2.bf16.xpose.msra.mxu0 0
        %8737 = vmatprep.subr.bf16.mxu0 0
        %8738 = vmatpush2.bf16.xpose.msra.mxu0 0
        %8739 = vmatprep.subr.bf16.mxu0 0
        %8740 = vmatpush2.bf16.xpose.msra.mxu0 0
        %8741 = vmatprep.subr.bf16.mxu0 0
        %8742 = vmatpush2.bf16.xpose.msra.mxu0 0
        %8743 = vmatprep.mubr.bf16.mxu0 0
        %8744 = vmatmul.mubr.bf16.gmra.mxu0 %v8706
        %v8745 = vpop.f32.mrf.mxu0
        %v8746 = vadd.f32 0.0, %v8745
        %v8747 = vpop.f32.mrf.mxu0
        %v8748 = vpop.f32.mrf.mxu0
        %v8749 = vpop.f32.mrf.mxu0
        %8750 = vdwg.mxu0
        %v8752 = vsel %vm2641, %v6036, 0
        %v8755 = vsel %vm2641, %v7228, 0
        %8757 = vmatprep.subr.bf16.mxu0 0
        %8758 = vmatpush1.bf16.xpose.msra.mxu0 0
        %8759 = vmatprep.subr.bf16.mxu0 0
        %8760 = vmatpush1.bf16.xpose.msra.mxu0 0
        %8761 = vmatprep.subr.bf16.mxu0 0
        %8762 = vmatpush1.bf16.xpose.msra.mxu0 0
        %8763 = vmatprep.subr.bf16.mxu0 0
        %8764 = vmatpush1.bf16.xpose.msra.mxu0 0
        %8765 = vmatprep.subr.bf16.mxu0 0
        %8766 = vmatpush1.bf16.xpose.msra.mxu0 0
        %8767 = vmatprep.subr.bf16.mxu0 0
        %8768 = vmatpush1.bf16.xpose.msra.mxu0 0
        %8769 = vmatprep.subr.bf16.mxu0 0
        %8770 = vmatpush1.bf16.xpose.msra.mxu0 0
        %8771 = vmatprep.subr.bf16.mxu0 0
        %8772 = vmatpush1.bf16.xpose.msra.mxu0 %v8755
        %8773 = vmatprep.subr.bf16.mxu0 0
        %8774 = vmatpush2.bf16.xpose.msra.mxu0 0
        %8775 = vmatprep.subr.bf16.mxu0 0
        %8776 = vmatpush2.bf16.xpose.msra.mxu0 0
        %8777 = vmatprep.subr.bf16.mxu0 0
        %8778 = vmatpush2.bf16.xpose.msra.mxu0 0
        %8779 = vmatprep.subr.bf16.mxu0 0
        %8780 = vmatpush2.bf16.xpose.msra.mxu0 0
        %8781 = vmatprep.subr.bf16.mxu0 0
        %8782 = vmatpush2.bf16.xpose.msra.mxu0 0
        %8783 = vmatprep.subr.bf16.mxu0 0
        %8784 = vmatpush2.bf16.xpose.msra.mxu0 0
        %8785 = vmatprep.subr.bf16.mxu0 0
        %8786 = vmatpush2.bf16.xpose.msra.mxu0 0
        %8787 = vmatprep.subr.bf16.mxu0 0
        %8788 = vmatpush2.bf16.xpose.msra.mxu0 0
        %8789 = vmatprep.mubr.bf16.mxu0 0
        %8790 = vmatmul.mubr.bf16.gmra.mxu0 %v8752
        %v8791 = vpop.f32.mrf.mxu0
        %v8792 = vadd.f32 0.0, %v8791
        %v8793 = vpop.f32.mrf.mxu0
        %v8794 = vpop.f32.mrf.mxu0
        %v8795 = vpop.f32.mrf.mxu0
        %8796 = vdwg.mxu0
        %v8798 = vsel %vm2641, %v6037, 0
        %v8801 = vsel %vm2641, %v7229, 0
        %8803 = vmatprep.subr.bf16.mxu0 0
        %8804 = vmatpush1.bf16.xpose.msra.mxu0 0
        %8805 = vmatprep.subr.bf16.mxu0 0
        %8806 = vmatpush1.bf16.xpose.msra.mxu0 0
        %8807 = vmatprep.subr.bf16.mxu0 0
        %8808 = vmatpush1.bf16.xpose.msra.mxu0 0
        %8809 = vmatprep.subr.bf16.mxu0 0
        %8810 = vmatpush1.bf16.xpose.msra.mxu0 0
        %8811 = vmatprep.subr.bf16.mxu0 0
        %8812 = vmatpush1.bf16.xpose.msra.mxu0 0
        %8813 = vmatprep.subr.bf16.mxu0 0
        %8814 = vmatpush1.bf16.xpose.msra.mxu0 0
        %8815 = vmatprep.subr.bf16.mxu0 0
        %8816 = vmatpush1.bf16.xpose.msra.mxu0 0
        %8817 = vmatprep.subr.bf16.mxu0 0
        %8818 = vmatpush1.bf16.xpose.msra.mxu0 %v8801
        %8819 = vmatprep.subr.bf16.mxu0 0
        %8820 = vmatpush2.bf16.xpose.msra.mxu0 0
        %8821 = vmatprep.subr.bf16.mxu0 0
        %8822 = vmatpush2.bf16.xpose.msra.mxu0 0
        %8823 = vmatprep.subr.bf16.mxu0 0
        %8824 = vmatpush2.bf16.xpose.msra.mxu0 0
        %8825 = vmatprep.subr.bf16.mxu0 0
        %8826 = vmatpush2.bf16.xpose.msra.mxu0 0
        %8827 = vmatprep.subr.bf16.mxu0 0
        %8828 = vmatpush2.bf16.xpose.msra.mxu0 0
        %8829 = vmatprep.subr.bf16.mxu0 0
        %8830 = vmatpush2.bf16.xpose.msra.mxu0 0
        %8831 = vmatprep.subr.bf16.mxu0 0
        %8832 = vmatpush2.bf16.xpose.msra.mxu0 0
        %8833 = vmatprep.subr.bf16.mxu0 0
        %8834 = vmatpush2.bf16.xpose.msra.mxu0 0
        %8835 = vmatprep.mubr.bf16.mxu0 0
        %8836 = vmatmul.mubr.bf16.gmra.mxu0 %v8798
        %v8837 = vpop.f32.mrf.mxu0
        %v8838 = vadd.f32 0.0, %v8837
        %v8839 = vpop.f32.mrf.mxu0
        %v8840 = vpop.f32.mrf.mxu0
        %v8841 = vpop.f32.mrf.mxu0
        %8842 = vdwg.mxu0
        %v8844 = vsel %vm2641, %v6038, 0
        %v8847 = vsel %vm2641, %v7230, 0
        %8849 = vmatprep.subr.bf16.mxu0 0
        %8850 = vmatpush1.bf16.xpose.msra.mxu0 0
        %8851 = vmatprep.subr.bf16.mxu0 0
        %8852 = vmatpush1.bf16.xpose.msra.mxu0 0
        %8853 = vmatprep.subr.bf16.mxu0 0
        %8854 = vmatpush1.bf16.xpose.msra.mxu0 0
        %8855 = vmatprep.subr.bf16.mxu0 0
        %8856 = vmatpush1.bf16.xpose.msra.mxu0 0
        %8857 = vmatprep.subr.bf16.mxu0 0
        %8858 = vmatpush1.bf16.xpose.msra.mxu0 0
        %8859 = vmatprep.subr.bf16.mxu0 0
        %8860 = vmatpush1.bf16.xpose.msra.mxu0 0
        %8861 = vmatprep.subr.bf16.mxu0 0
        %8862 = vmatpush1.bf16.xpose.msra.mxu0 0
        %8863 = vmatprep.subr.bf16.mxu0 0
        %8864 = vmatpush1.bf16.xpose.msra.mxu0 %v8847
        %8865 = vmatprep.subr.bf16.mxu0 0
        %8866 = vmatpush2.bf16.xpose.msra.mxu0 0
        %8867 = vmatprep.subr.bf16.mxu0 0
        %8868 = vmatpush2.bf16.xpose.msra.mxu0 0
        %8869 = vmatprep.subr.bf16.mxu0 0
        %8870 = vmatpush2.bf16.xpose.msra.mxu0 0
        %8871 = vmatprep.subr.bf16.mxu0 0
        %8872 = vmatpush2.bf16.xpose.msra.mxu0 0
        %8873 = vmatprep.subr.bf16.mxu0 0
        %8874 = vmatpush2.bf16.xpose.msra.mxu0 0
        %8875 = vmatprep.subr.bf16.mxu0 0
        %8876 = vmatpush2.bf16.xpose.msra.mxu0 0
        %8877 = vmatprep.subr.bf16.mxu0 0
        %8878 = vmatpush2.bf16.xpose.msra.mxu0 0
        %8879 = vmatprep.subr.bf16.mxu0 0
        %8880 = vmatpush2.bf16.xpose.msra.mxu0 0
        %8881 = vmatprep.mubr.bf16.mxu0 0
        %8882 = vmatmul.mubr.bf16.gmra.mxu0 %v8844
        %v8883 = vpop.f32.mrf.mxu0
        %v8884 = vadd.f32 0.0, %v8883
        %v8885 = vpop.f32.mrf.mxu0
        %v8886 = vpop.f32.mrf.mxu0
        %v8887 = vpop.f32.mrf.mxu0
        %8888 = vdwg.mxu0
        %v8890 = vsel %vm2641, %v6039, 0
        %v8893 = vsel %vm2641, %v7231, 0
        %8895 = vmatprep.subr.bf16.mxu0 0
        %8896 = vmatpush1.bf16.xpose.msra.mxu0 0
        %8897 = vmatprep.subr.bf16.mxu0 0
        %8898 = vmatpush1.bf16.xpose.msra.mxu0 0
        %8899 = vmatprep.subr.bf16.mxu0 0
        %8900 = vmatpush1.bf16.xpose.msra.mxu0 0
        %8901 = vmatprep.subr.bf16.mxu0 0
        %8902 = vmatpush1.bf16.xpose.msra.mxu0 0
        %8903 = vmatprep.subr.bf16.mxu0 0
        %8904 = vmatpush1.bf16.xpose.msra.mxu0 0
        %8905 = vmatprep.subr.bf16.mxu0 0
        %8906 = vmatpush1.bf16.xpose.msra.mxu0 0
        %8907 = vmatprep.subr.bf16.mxu0 0
        %8908 = vmatpush1.bf16.xpose.msra.mxu0 0
        %8909 = vmatprep.subr.bf16.mxu0 0
        %8910 = vmatpush1.bf16.xpose.msra.mxu0 %v8893
        %8911 = vmatprep.subr.bf16.mxu0 0
        %8912 = vmatpush2.bf16.xpose.msra.mxu0 0
        %8913 = vmatprep.subr.bf16.mxu0 0
        %8914 = vmatpush2.bf16.xpose.msra.mxu0 0
        %8915 = vmatprep.subr.bf16.mxu0 0
        %8916 = vmatpush2.bf16.xpose.msra.mxu0 0
        %8917 = vmatprep.subr.bf16.mxu0 0
        %8918 = vmatpush2.bf16.xpose.msra.mxu0 0
        %8919 = vmatprep.subr.bf16.mxu0 0
        %8920 = vmatpush2.bf16.xpose.msra.mxu0 0
        %8921 = vmatprep.subr.bf16.mxu0 0
        %8922 = vmatpush2.bf16.xpose.msra.mxu0 0
        %8923 = vmatprep.subr.bf16.mxu0 0
        %8924 = vmatpush2.bf16.xpose.msra.mxu0 0
        %8925 = vmatprep.subr.bf16.mxu0 0
        %8926 = vmatpush2.bf16.xpose.msra.mxu0 0
        %8927 = vmatprep.mubr.bf16.mxu0 0
        %8928 = vmatmul.mubr.bf16.gmra.mxu0 %v8890
        %v8929 = vpop.f32.mrf.mxu0
        %v8930 = vadd.f32 0.0, %v8929
        %v8931 = vpop.f32.mrf.mxu0
        %v8932 = vpop.f32.mrf.mxu0
        %v8933 = vpop.f32.mrf.mxu0
        %8934 = vdwg.mxu0
        %v8936 = vsel %vm2641, %v6040, 0
        %v8939 = vsel %vm2641, %v7232, 0
        %8941 = vmatprep.subr.bf16.mxu0 0
        %8942 = vmatpush1.bf16.xpose.msra.mxu0 0
        %8943 = vmatprep.subr.bf16.mxu0 0
        %8944 = vmatpush1.bf16.xpose.msra.mxu0 0
        %8945 = vmatprep.subr.bf16.mxu0 0
        %8946 = vmatpush1.bf16.xpose.msra.mxu0 0
        %8947 = vmatprep.subr.bf16.mxu0 0
        %8948 = vmatpush1.bf16.xpose.msra.mxu0 0
        %8949 = vmatprep.subr.bf16.mxu0 0
        %8950 = vmatpush1.bf16.xpose.msra.mxu0 0
        %8951 = vmatprep.subr.bf16.mxu0 0
        %8952 = vmatpush1.bf16.xpose.msra.mxu0 0
        %8953 = vmatprep.subr.bf16.mxu0 0
        %8954 = vmatpush1.bf16.xpose.msra.mxu0 0
        %8955 = vmatprep.subr.bf16.mxu0 0
        %8956 = vmatpush1.bf16.xpose.msra.mxu0 %v8939
        %8957 = vmatprep.subr.bf16.mxu0 0
        %8958 = vmatpush2.bf16.xpose.msra.mxu0 0
        %8959 = vmatprep.subr.bf16.mxu0 0
        %8960 = vmatpush2.bf16.xpose.msra.mxu0 0
        %8961 = vmatprep.subr.bf16.mxu0 0
        %8962 = vmatpush2.bf16.xpose.msra.mxu0 0
        %8963 = vmatprep.subr.bf16.mxu0 0
        %8964 = vmatpush2.bf16.xpose.msra.mxu0 0
        %8965 = vmatprep.subr.bf16.mxu0 0
        %8966 = vmatpush2.bf16.xpose.msra.mxu0 0
        %8967 = vmatprep.subr.bf16.mxu0 0
        %8968 = vmatpush2.bf16.xpose.msra.mxu0 0
        %8969 = vmatprep.subr.bf16.mxu0 0
        %8970 = vmatpush2.bf16.xpose.msra.mxu0 0
        %8971 = vmatprep.subr.bf16.mxu0 0
        %8972 = vmatpush2.bf16.xpose.msra.mxu0 0
        %8973 = vmatprep.mubr.bf16.mxu0 0
        %8974 = vmatmul.mubr.bf16.gmra.mxu0 %v8936
        %v8975 = vpop.f32.mrf.mxu0
        %v8976 = vadd.f32 0.0, %v8975
        %v8977 = vpop.f32.mrf.mxu0
        %v8978 = vpop.f32.mrf.mxu0
        %v8979 = vpop.f32.mrf.mxu0
        %8980 = vdwg.mxu0
        %v8982 = vsel %vm2641, %v6041, 0
        %v8985 = vsel %vm2641, %v7233, 0
        %8987 = vmatprep.subr.bf16.mxu0 0
        %8988 = vmatpush1.bf16.xpose.msra.mxu0 0
        %8989 = vmatprep.subr.bf16.mxu0 0
        %8990 = vmatpush1.bf16.xpose.msra.mxu0 0
        %8991 = vmatprep.subr.bf16.mxu0 0
        %8992 = vmatpush1.bf16.xpose.msra.mxu0 0
        %8993 = vmatprep.subr.bf16.mxu0 0
        %8994 = vmatpush1.bf16.xpose.msra.mxu0 0
        %8995 = vmatprep.subr.bf16.mxu0 0
        %8996 = vmatpush1.bf16.xpose.msra.mxu0 0
        %8997 = vmatprep.subr.bf16.mxu0 0
        %8998 = vmatpush1.bf16.xpose.msra.mxu0 0
        %8999 = vmatprep.subr.bf16.mxu0 0
        %9000 = vmatpush1.bf16.xpose.msra.mxu0 0
        %9001 = vmatprep.subr.bf16.mxu0 0
        %9002 = vmatpush1.bf16.xpose.msra.mxu0 %v8985
        %9003 = vmatprep.subr.bf16.mxu0 0
        %9004 = vmatpush2.bf16.xpose.msra.mxu0 0
        %9005 = vmatprep.subr.bf16.mxu0 0
        %9006 = vmatpush2.bf16.xpose.msra.mxu0 0
        %9007 = vmatprep.subr.bf16.mxu0 0
        %9008 = vmatpush2.bf16.xpose.msra.mxu0 0
        %9009 = vmatprep.subr.bf16.mxu0 0
        %9010 = vmatpush2.bf16.xpose.msra.mxu0 0
        %9011 = vmatprep.subr.bf16.mxu0 0
        %9012 = vmatpush2.bf16.xpose.msra.mxu0 0
        %9013 = vmatprep.subr.bf16.mxu0 0
        %9014 = vmatpush2.bf16.xpose.msra.mxu0 0
        %9015 = vmatprep.subr.bf16.mxu0 0
        %9016 = vmatpush2.bf16.xpose.msra.mxu0 0
        %9017 = vmatprep.subr.bf16.mxu0 0
        %9018 = vmatpush2.bf16.xpose.msra.mxu0 0
        %9019 = vmatprep.mubr.bf16.mxu0 0
        %9020 = vmatmul.mubr.bf16.gmra.mxu0 %v8982
        %v9021 = vpop.f32.mrf.mxu0
        %v9022 = vadd.f32 0.0, %v9021
        %v9023 = vpop.f32.mrf.mxu0
        %v9024 = vpop.f32.mrf.mxu0
        %v9025 = vpop.f32.mrf.mxu0
        %9026 = vdwg.mxu0
        %v9028 = vsel %vm2641, %v6042, 0
        %v9031 = vsel %vm2641, %v7234, 0
        %9033 = vmatprep.subr.bf16.mxu0 0
        %9034 = vmatpush1.bf16.xpose.msra.mxu0 0
        %9035 = vmatprep.subr.bf16.mxu0 0
        %9036 = vmatpush1.bf16.xpose.msra.mxu0 0
        %9037 = vmatprep.subr.bf16.mxu0 0
        %9038 = vmatpush1.bf16.xpose.msra.mxu0 0
        %9039 = vmatprep.subr.bf16.mxu0 0
        %9040 = vmatpush1.bf16.xpose.msra.mxu0 0
        %9041 = vmatprep.subr.bf16.mxu0 0
        %9042 = vmatpush1.bf16.xpose.msra.mxu0 0
        %9043 = vmatprep.subr.bf16.mxu0 0
        %9044 = vmatpush1.bf16.xpose.msra.mxu0 0
        %9045 = vmatprep.subr.bf16.mxu0 0
        %9046 = vmatpush1.bf16.xpose.msra.mxu0 0
        %9047 = vmatprep.subr.bf16.mxu0 0
        %9048 = vmatpush1.bf16.xpose.msra.mxu0 %v9031
        %9049 = vmatprep.subr.bf16.mxu0 0
        %9050 = vmatpush2.bf16.xpose.msra.mxu0 0
        %9051 = vmatprep.subr.bf16.mxu0 0
        %9052 = vmatpush2.bf16.xpose.msra.mxu0 0
        %9053 = vmatprep.subr.bf16.mxu0 0
        %9054 = vmatpush2.bf16.xpose.msra.mxu0 0
        %9055 = vmatprep.subr.bf16.mxu0 0
        %9056 = vmatpush2.bf16.xpose.msra.mxu0 0
        %9057 = vmatprep.subr.bf16.mxu0 0
        %9058 = vmatpush2.bf16.xpose.msra.mxu0 0
        %9059 = vmatprep.subr.bf16.mxu0 0
        %9060 = vmatpush2.bf16.xpose.msra.mxu0 0
        %9061 = vmatprep.subr.bf16.mxu0 0
        %9062 = vmatpush2.bf16.xpose.msra.mxu0 0
        %9063 = vmatprep.subr.bf16.mxu0 0
        %9064 = vmatpush2.bf16.xpose.msra.mxu0 0
        %9065 = vmatprep.mubr.bf16.mxu0 0
        %9066 = vmatmul.mubr.bf16.gmra.mxu0 %v9028
        %v9067 = vpop.f32.mrf.mxu0
        %v9068 = vadd.f32 0.0, %v9067
        %v9069 = vpop.f32.mrf.mxu0
        %v9070 = vpop.f32.mrf.mxu0
        %v9071 = vpop.f32.mrf.mxu0
        %9072 = vdwg.mxu0
        %v9074 = vsel %vm2641, %v6043, 0
        %v9077 = vsel %vm2641, %v7235, 0
        %9079 = vmatprep.subr.bf16.mxu0 0
        %9080 = vmatpush1.bf16.xpose.msra.mxu0 0
        %9081 = vmatprep.subr.bf16.mxu0 0
        %9082 = vmatpush1.bf16.xpose.msra.mxu0 0
        %9083 = vmatprep.subr.bf16.mxu0 0
        %9084 = vmatpush1.bf16.xpose.msra.mxu0 0
        %9085 = vmatprep.subr.bf16.mxu0 0
        %9086 = vmatpush1.bf16.xpose.msra.mxu0 0
        %9087 = vmatprep.subr.bf16.mxu0 0
        %9088 = vmatpush1.bf16.xpose.msra.mxu0 0
        %9089 = vmatprep.subr.bf16.mxu0 0
        %9090 = vmatpush1.bf16.xpose.msra.mxu0 0
        %9091 = vmatprep.subr.bf16.mxu0 0
        %9092 = vmatpush1.bf16.xpose.msra.mxu0 0
        %9093 = vmatprep.subr.bf16.mxu0 0
        %9094 = vmatpush1.bf16.xpose.msra.mxu0 %v9077
        %9095 = vmatprep.subr.bf16.mxu0 0
        %9096 = vmatpush2.bf16.xpose.msra.mxu0 0
        %9097 = vmatprep.subr.bf16.mxu0 0
        %9098 = vmatpush2.bf16.xpose.msra.mxu0 0
        %9099 = vmatprep.subr.bf16.mxu0 0
        %9100 = vmatpush2.bf16.xpose.msra.mxu0 0
        %9101 = vmatprep.subr.bf16.mxu0 0
        %9102 = vmatpush2.bf16.xpose.msra.mxu0 0
        %9103 = vmatprep.subr.bf16.mxu0 0
        %9104 = vmatpush2.bf16.xpose.msra.mxu0 0
        %9105 = vmatprep.subr.bf16.mxu0 0
        %9106 = vmatpush2.bf16.xpose.msra.mxu0 0
        %9107 = vmatprep.subr.bf16.mxu0 0
        %9108 = vmatpush2.bf16.xpose.msra.mxu0 0
        %9109 = vmatprep.subr.bf16.mxu0 0
        %9110 = vmatpush2.bf16.xpose.msra.mxu0 0
        %9111 = vmatprep.mubr.bf16.mxu0 0
        %9112 = vmatmul.mubr.bf16.gmra.mxu0 %v9074
        %v9113 = vpop.f32.mrf.mxu0
        %v9114 = vadd.f32 0.0, %v9113
        %v9115 = vpop.f32.mrf.mxu0
        %v9116 = vpop.f32.mrf.mxu0
        %v9117 = vpop.f32.mrf.mxu0
        %9118 = vdwg.mxu0
        %v9120 = vsel %vm2641, %v6044, 0
        %v9123 = vsel %vm2641, %v7236, 0
        %9125 = vmatprep.subr.bf16.mxu0 0
        %9126 = vmatpush1.bf16.xpose.msra.mxu0 0
        %9127 = vmatprep.subr.bf16.mxu0 0
        %9128 = vmatpush1.bf16.xpose.msra.mxu0 0
        %9129 = vmatprep.subr.bf16.mxu0 0
        %9130 = vmatpush1.bf16.xpose.msra.mxu0 0
        %9131 = vmatprep.subr.bf16.mxu0 0
        %9132 = vmatpush1.bf16.xpose.msra.mxu0 0
        %9133 = vmatprep.subr.bf16.mxu0 0
        %9134 = vmatpush1.bf16.xpose.msra.mxu0 0
        %9135 = vmatprep.subr.bf16.mxu0 0
        %9136 = vmatpush1.bf16.xpose.msra.mxu0 0
        %9137 = vmatprep.subr.bf16.mxu0 0
        %9138 = vmatpush1.bf16.xpose.msra.mxu0 0
        %9139 = vmatprep.subr.bf16.mxu0 0
        %9140 = vmatpush1.bf16.xpose.msra.mxu0 %v9123
        %9141 = vmatprep.subr.bf16.mxu0 0
        %9142 = vmatpush2.bf16.xpose.msra.mxu0 0
        %9143 = vmatprep.subr.bf16.mxu0 0
        %9144 = vmatpush2.bf16.xpose.msra.mxu0 0
        %9145 = vmatprep.subr.bf16.mxu0 0
        %9146 = vmatpush2.bf16.xpose.msra.mxu0 0
        %9147 = vmatprep.subr.bf16.mxu0 0
        %9148 = vmatpush2.bf16.xpose.msra.mxu0 0
        %9149 = vmatprep.subr.bf16.mxu0 0
        %9150 = vmatpush2.bf16.xpose.msra.mxu0 0
        %9151 = vmatprep.subr.bf16.mxu0 0
        %9152 = vmatpush2.bf16.xpose.msra.mxu0 0
        %9153 = vmatprep.subr.bf16.mxu0 0
        %9154 = vmatpush2.bf16.xpose.msra.mxu0 0
        %9155 = vmatprep.subr.bf16.mxu0 0
        %9156 = vmatpush2.bf16.xpose.msra.mxu0 0
        %9157 = vmatprep.mubr.bf16.mxu0 0
        %9158 = vmatmul.mubr.bf16.gmra.mxu0 %v9120
        %v9159 = vpop.f32.mrf.mxu0
        %v9160 = vadd.f32 0.0, %v9159
        %v9161 = vpop.f32.mrf.mxu0
        %v9162 = vpop.f32.mrf.mxu0
        %v9163 = vpop.f32.mrf.mxu0
        %9164 = vdwg.mxu0
        %v9165 = vmul.f32 %v8470, 0.25
        %v9166 = vmul.f32 %v8516, 0.25
        %v9167 = vmul.f32 %v8562, 0.25
        %v9168 = vmul.f32 %v8608, 0.25
        %v9169 = vmul.f32 %v8654, 0.25
        %v9170 = vmul.f32 %v8700, 0.25
        %v9171 = vmul.f32 %v8746, 0.25
        %v9172 = vmul.f32 %v8792, 0.25
        %v9173 = vmul.f32 %v8838, 0.25
        %v9174 = vmul.f32 %v8884, 0.25
        %v9175 = vmul.f32 %v8930, 0.25
        %v9176 = vmul.f32 %v8976, 0.25
        %v9177 = vmul.f32 %v9022, 0.25
        %v9178 = vmul.f32 %v9068, 0.25
        %v9179 = vmul.f32 %v9114, 0.25
        %v9180 = vmul.f32 %v9160, 0.25
        %v9181 = vsel %vm2641, %v9165, -inf
        %9182 = vmax.xlane.f32.xlu0 %v9181
        %v9183 = vpop.xlane.xlu0 %9182
        %v9184 = vsel %vm2641, %v9166, -inf
        %9185 = vmax.xlane.f32.xlu0 %v9184
        %v9186 = vpop.xlane.xlu0 %9185
        %v9187 = vsel %vm2641, %v9167, -inf
        %9188 = vmax.xlane.f32.xlu0 %v9187
        %v9189 = vpop.xlane.xlu0 %9188
        %v9190 = vsel %vm2641, %v9168, -inf
        %9191 = vmax.xlane.f32.xlu0 %v9190
        %v9192 = vpop.xlane.xlu0 %9191
        %v9193 = vsel %vm2641, %v9169, -inf
        %9194 = vmax.xlane.f32.xlu0 %v9193
        %v9195 = vpop.xlane.xlu0 %9194
        %v9196 = vsel %vm2641, %v9170, -inf
        %9197 = vmax.xlane.f32.xlu0 %v9196
        %v9198 = vpop.xlane.xlu0 %9197
        %v9199 = vsel %vm2641, %v9171, -inf
        %9200 = vmax.xlane.f32.xlu0 %v9199
        %v9201 = vpop.xlane.xlu0 %9200
        %v9202 = vsel %vm2641, %v9172, -inf
        %9203 = vmax.xlane.f32.xlu0 %v9202
        %v9204 = vpop.xlane.xlu0 %9203
        %v9205 = vsel %vm2641, %v9173, -inf
        %9206 = vmax.xlane.f32.xlu0 %v9205
        %v9207 = vpop.xlane.xlu0 %9206
        %v9208 = vsel %vm2641, %v9174, -inf
        %9209 = vmax.xlane.f32.xlu0 %v9208
        %v9210 = vpop.xlane.xlu0 %9209
        %v9211 = vsel %vm2641, %v9175, -inf
        %9212 = vmax.xlane.f32.xlu0 %v9211
        %v9213 = vpop.xlane.xlu0 %9212
        %v9214 = vsel %vm2641, %v9176, -inf
        %9215 = vmax.xlane.f32.xlu0 %v9214
        %v9216 = vpop.xlane.xlu0 %9215
        %v9217 = vsel %vm2641, %v9177, -inf
        %9218 = vmax.xlane.f32.xlu0 %v9217
        %v9219 = vpop.xlane.xlu0 %9218
        %v9220 = vsel %vm2641, %v9178, -inf
        %9221 = vmax.xlane.f32.xlu0 %v9220
        %v9222 = vpop.xlane.xlu0 %9221
        %v9223 = vsel %vm2641, %v9179, -inf
        %9224 = vmax.xlane.f32.xlu0 %v9223
        %v9225 = vpop.xlane.xlu0 %9224
        %v9226 = vsel %vm2641, %v9180, -inf
        %9227 = vmax.xlane.f32.xlu0 %v9226
        %v9228 = vpop.xlane.xlu0 %9227
        %v9229 = vsub.f32 %v9165, %v9183
        %v9230 = vsub.f32 %v9166, %v9186
        %v9231 = vsub.f32 %v9167, %v9189
        %v9232 = vsub.f32 %v9168, %v9192
        %v9233 = vsub.f32 %v9169, %v9195
        %v9234 = vsub.f32 %v9170, %v9198
        %v9235 = vsub.f32 %v9171, %v9201
        %v9236 = vsub.f32 %v9172, %v9204
        %v9237 = vsub.f32 %v9173, %v9207
        %v9238 = vsub.f32 %v9174, %v9210
        %v9239 = vsub.f32 %v9175, %v9213
        %v9240 = vsub.f32 %v9176, %v9216
        %v9241 = vsub.f32 %v9177, %v9219
        %v9242 = vsub.f32 %v9178, %v9222
        %v9243 = vsub.f32 %v9179, %v9225
        %v9244 = vsub.f32 %v9180, %v9228
        %v9245 = vmul.f32 %v9229, 1.442695
        %v9246 = vpow.pop %v9245
        %v9247 = vmul.f32 %v9230, 1.442695
        %v9248 = vpow.pop %v9247
        %v9249 = vmul.f32 %v9231, 1.442695
        %v9250 = vpow.pop %v9249
        %v9251 = vmul.f32 %v9232, 1.442695
        %v9252 = vpow.pop %v9251
        %v9253 = vmul.f32 %v9233, 1.442695
        %v9254 = vpow.pop %v9253
        %v9255 = vmul.f32 %v9234, 1.442695
        %v9256 = vpow.pop %v9255
        %v9257 = vmul.f32 %v9235, 1.442695
        %v9258 = vpow.pop %v9257
        %v9259 = vmul.f32 %v9236, 1.442695
        %v9260 = vpow.pop %v9259
        %v9261 = vmul.f32 %v9237, 1.442695
        %v9262 = vpow.pop %v9261
        %v9263 = vmul.f32 %v9238, 1.442695
        %v9264 = vpow.pop %v9263
        %v9265 = vmul.f32 %v9239, 1.442695
        %v9266 = vpow.pop %v9265
        %v9267 = vmul.f32 %v9240, 1.442695
        %v9268 = vpow.pop %v9267
        %v9269 = vmul.f32 %v9241, 1.442695
        %v9270 = vpow.pop %v9269
        %v9271 = vmul.f32 %v9242, 1.442695
        %v9272 = vpow.pop %v9271
        %v9273 = vmul.f32 %v9243, 1.442695
        %v9274 = vpow.pop %v9273
        %v9275 = vmul.f32 %v9244, 1.442695
        %v9276 = vpow.pop %v9275
        %v9277 = vsel %vm2641, %v9246, 0.0
        %9278 = vadd.xlane.f32.xlu0 %v9277
        %v9279 = vpop.xlane.xlu0 %9278
        %v9280 = vsel %vm2641, %v9248, 0.0
        %9281 = vadd.xlane.f32.xlu0 %v9280
        %v9282 = vpop.xlane.xlu0 %9281
        %v9283 = vsel %vm2641, %v9250, 0.0
        %9284 = vadd.xlane.f32.xlu0 %v9283
        %v9285 = vpop.xlane.xlu0 %9284
        %v9286 = vsel %vm2641, %v9252, 0.0
        %9287 = vadd.xlane.f32.xlu0 %v9286
        %v9288 = vpop.xlane.xlu0 %9287
        %v9289 = vsel %vm2641, %v9254, 0.0
        %9290 = vadd.xlane.f32.xlu0 %v9289
        %v9291 = vpop.xlane.xlu0 %9290
        %v9292 = vsel %vm2641, %v9256, 0.0
        %9293 = vadd.xlane.f32.xlu0 %v9292
        %v9294 = vpop.xlane.xlu0 %9293
        %v9295 = vsel %vm2641, %v9258, 0.0
        %9296 = vadd.xlane.f32.xlu0 %v9295
        %v9297 = vpop.xlane.xlu0 %9296
        %v9298 = vsel %vm2641, %v9260, 0.0
        %9299 = vadd.xlane.f32.xlu0 %v9298
        %v9300 = vpop.xlane.xlu0 %9299
        %v9301 = vsel %vm2641, %v9262, 0.0
        %9302 = vadd.xlane.f32.xlu0 %v9301
        %v9303 = vpop.xlane.xlu0 %9302
        %v9304 = vsel %vm2641, %v9264, 0.0
        %9305 = vadd.xlane.f32.xlu0 %v9304
        %v9306 = vpop.xlane.xlu0 %9305
        %v9307 = vsel %vm2641, %v9266, 0.0
        %9308 = vadd.xlane.f32.xlu0 %v9307
        %v9309 = vpop.xlane.xlu0 %9308
        %v9310 = vsel %vm2641, %v9268, 0.0
        %9311 = vadd.xlane.f32.xlu0 %v9310
        %v9312 = vpop.xlane.xlu0 %9311
        %v9313 = vsel %vm2641, %v9270, 0.0
        %9314 = vadd.xlane.f32.xlu0 %v9313
        %v9315 = vpop.xlane.xlu0 %9314
        %v9316 = vsel %vm2641, %v9272, 0.0
        %9317 = vadd.xlane.f32.xlu0 %v9316
        %v9318 = vpop.xlane.xlu0 %9317
        %v9319 = vsel %vm2641, %v9274, 0.0
        %9320 = vadd.xlane.f32.xlu0 %v9319
        %v9321 = vpop.xlane.xlu0 %9320
        %v9322 = vsel %vm2641, %v9276, 0.0
        %9323 = vadd.xlane.f32.xlu0 %v9322
        %v9324 = vpop.xlane.xlu0 %9323
        %v9325 = vrcp.pop %v9279
        %v9326 = vmul.f32 %v9246, %v9325
        %v9327 = vrcp.pop %v9282
        %v9328 = vmul.f32 %v9248, %v9327
        %v9329 = vrcp.pop %v9285
        %v9330 = vmul.f32 %v9250, %v9329
        %v9331 = vrcp.pop %v9288
        %v9332 = vmul.f32 %v9252, %v9331
        %v9333 = vrcp.pop %v9291
        %v9334 = vmul.f32 %v9254, %v9333
        %v9335 = vrcp.pop %v9294
        %v9336 = vmul.f32 %v9256, %v9335
        %v9337 = vrcp.pop %v9297
        %v9338 = vmul.f32 %v9258, %v9337
        %v9339 = vrcp.pop %v9300
        %v9340 = vmul.f32 %v9260, %v9339
        %v9341 = vrcp.pop %v9303
        %v9342 = vmul.f32 %v9262, %v9341
        %v9343 = vrcp.pop %v9306
        %v9344 = vmul.f32 %v9264, %v9343
        %v9345 = vrcp.pop %v9309
        %v9346 = vmul.f32 %v9266, %v9345
        %v9347 = vrcp.pop %v9312
        %v9348 = vmul.f32 %v9268, %v9347
        %v9349 = vrcp.pop %v9315
        %v9350 = vmul.f32 %v9270, %v9349
        %v9351 = vrcp.pop %v9318
        %v9352 = vmul.f32 %v9272, %v9351
        %v9353 = vrcp.pop %v9321
        %v9354 = vmul.f32 %v9274, %v9353
        %v9355 = vrcp.pop %v9324
        %v9356 = vmul.f32 %v9276, %v9355
        %v9357 = vpack.c.bf16 %v9326, %v9326
        %v9358 = vpack.c.bf16 %v9328, %v9328
        %v9359 = vpack.c.bf16 %v9330, %v9330
        %v9360 = vpack.c.bf16 %v9332, %v9332
        %v9361 = vpack.c.bf16 %v9334, %v9334
        %v9362 = vpack.c.bf16 %v9336, %v9336
        %v9363 = vpack.c.bf16 %v9338, %v9338
        %v9364 = vpack.c.bf16 %v9340, %v9340
        %v9365 = vpack.c.bf16 %v9342, %v9342
        %v9366 = vpack.c.bf16 %v9344, %v9344
        %v9367 = vpack.c.bf16 %v9346, %v9346
        %v9368 = vpack.c.bf16 %v9348, %v9348
        %v9369 = vpack.c.bf16 %v9350, %v9350
        %v9370 = vpack.c.bf16 %v9352, %v9352
        %v9371 = vpack.c.bf16 %v9354, %v9354
        %v9372 = vpack.c.bf16 %v9356, %v9356
        %v9374 = vsel %vm2641, %v9357, 0
        %9376 = vmatprep.subr.bf16.mxu0 0
        %9377 = vmatpush1.bf16.msra.mxu0 0
        %9378 = vmatprep.subr.bf16.mxu0 0
        %9379 = vmatpush1.bf16.msra.mxu0 0
        %9380 = vmatprep.subr.bf16.mxu0 0
        %9381 = vmatpush1.bf16.msra.mxu0 0
        %9382 = vmatprep.subr.bf16.mxu0 0
        %9383 = vmatpush1.bf16.msra.mxu0 0
        %9384 = vmatprep.subr.bf16.mxu0 0
        %9385 = vmatpush1.bf16.msra.mxu0 0
        %9386 = vmatprep.subr.bf16.mxu0 0
        %9387 = vmatpush1.bf16.msra.mxu0 0
        %9388 = vmatprep.subr.bf16.mxu0 0
        %9389 = vmatpush1.bf16.msra.mxu0 0
        %9390 = vmatprep.subr.bf16.mxu0 0
        %9391 = vmatpush1.bf16.msra.mxu0 %v8413
        %9392 = vmatprep.subr.bf16.mxu0 0
        %9393 = vmatpush2.bf16.msra.mxu0 0
        %9394 = vmatprep.subr.bf16.mxu0 0
        %9395 = vmatpush2.bf16.msra.mxu0 0
        %9396 = vmatprep.subr.bf16.mxu0 0
        %9397 = vmatpush2.bf16.msra.mxu0 0
        %9398 = vmatprep.subr.bf16.mxu0 0
        %9399 = vmatpush2.bf16.msra.mxu0 0
        %9400 = vmatprep.subr.bf16.mxu0 0
        %9401 = vmatpush2.bf16.msra.mxu0 0
        %9402 = vmatprep.subr.bf16.mxu0 0
        %9403 = vmatpush2.bf16.msra.mxu0 0
        %9404 = vmatprep.subr.bf16.mxu0 0
        %9405 = vmatpush2.bf16.msra.mxu0 0
        %9406 = vmatprep.subr.bf16.mxu0 0
        %9407 = vmatpush2.bf16.msra.mxu0 0
        %9408 = vmatprep.mubr.bf16.mxu0 0
        %9409 = vmatmul.mubr.bf16.gmra.mxu0 %v9374
        %v9410 = vpop.f32.mrf.mxu0
        %v9411 = vadd.f32 0.0, %v9410
        %v9412 = vpop.f32.mrf.mxu0
        %v9413 = vpop.f32.mrf.mxu0
        %v9414 = vpop.f32.mrf.mxu0
        %9415 = vdwg.mxu0
        %v9417 = vsel %vm2641, %v9358, 0
        %9419 = vmatprep.subr.bf16.mxu0 0
        %9420 = vmatpush1.bf16.msra.mxu0 0
        %9421 = vmatprep.subr.bf16.mxu0 0
        %9422 = vmatpush1.bf16.msra.mxu0 0
        %9423 = vmatprep.subr.bf16.mxu0 0
        %9424 = vmatpush1.bf16.msra.mxu0 0
        %9425 = vmatprep.subr.bf16.mxu0 0
        %9426 = vmatpush1.bf16.msra.mxu0 0
        %9427 = vmatprep.subr.bf16.mxu0 0
        %9428 = vmatpush1.bf16.msra.mxu0 0
        %9429 = vmatprep.subr.bf16.mxu0 0
        %9430 = vmatpush1.bf16.msra.mxu0 0
        %9431 = vmatprep.subr.bf16.mxu0 0
        %9432 = vmatpush1.bf16.msra.mxu0 0
        %9433 = vmatprep.subr.bf16.mxu0 0
        %9434 = vmatpush1.bf16.msra.mxu0 %v8414
        %9435 = vmatprep.subr.bf16.mxu0 0
        %9436 = vmatpush2.bf16.msra.mxu0 0
        %9437 = vmatprep.subr.bf16.mxu0 0
        %9438 = vmatpush2.bf16.msra.mxu0 0
        %9439 = vmatprep.subr.bf16.mxu0 0
        %9440 = vmatpush2.bf16.msra.mxu0 0
        %9441 = vmatprep.subr.bf16.mxu0 0
        %9442 = vmatpush2.bf16.msra.mxu0 0
        %9443 = vmatprep.subr.bf16.mxu0 0
        %9444 = vmatpush2.bf16.msra.mxu0 0
        %9445 = vmatprep.subr.bf16.mxu0 0
        %9446 = vmatpush2.bf16.msra.mxu0 0
        %9447 = vmatprep.subr.bf16.mxu0 0
        %9448 = vmatpush2.bf16.msra.mxu0 0
        %9449 = vmatprep.subr.bf16.mxu0 0
        %9450 = vmatpush2.bf16.msra.mxu0 0
        %9451 = vmatprep.mubr.bf16.mxu0 0
        %9452 = vmatmul.mubr.bf16.gmra.mxu0 %v9417
        %v9453 = vpop.f32.mrf.mxu0
        %v9454 = vadd.f32 0.0, %v9453
        %v9455 = vpop.f32.mrf.mxu0
        %v9456 = vpop.f32.mrf.mxu0
        %v9457 = vpop.f32.mrf.mxu0
        %9458 = vdwg.mxu0
        %v9460 = vsel %vm2641, %v9359, 0
        %9462 = vmatprep.subr.bf16.mxu0 0
        %9463 = vmatpush1.bf16.msra.mxu0 0
        %9464 = vmatprep.subr.bf16.mxu0 0
        %9465 = vmatpush1.bf16.msra.mxu0 0
        %9466 = vmatprep.subr.bf16.mxu0 0
        %9467 = vmatpush1.bf16.msra.mxu0 0
        %9468 = vmatprep.subr.bf16.mxu0 0
        %9469 = vmatpush1.bf16.msra.mxu0 0
        %9470 = vmatprep.subr.bf16.mxu0 0
        %9471 = vmatpush1.bf16.msra.mxu0 0
        %9472 = vmatprep.subr.bf16.mxu0 0
        %9473 = vmatpush1.bf16.msra.mxu0 0
        %9474 = vmatprep.subr.bf16.mxu0 0
        %9475 = vmatpush1.bf16.msra.mxu0 0
        %9476 = vmatprep.subr.bf16.mxu0 0
        %9477 = vmatpush1.bf16.msra.mxu0 %v8415
        %9478 = vmatprep.subr.bf16.mxu0 0
        %9479 = vmatpush2.bf16.msra.mxu0 0
        %9480 = vmatprep.subr.bf16.mxu0 0
        %9481 = vmatpush2.bf16.msra.mxu0 0
        %9482 = vmatprep.subr.bf16.mxu0 0
        %9483 = vmatpush2.bf16.msra.mxu0 0
        %9484 = vmatprep.subr.bf16.mxu0 0
        %9485 = vmatpush2.bf16.msra.mxu0 0
        %9486 = vmatprep.subr.bf16.mxu0 0
        %9487 = vmatpush2.bf16.msra.mxu0 0
        %9488 = vmatprep.subr.bf16.mxu0 0
        %9489 = vmatpush2.bf16.msra.mxu0 0
        %9490 = vmatprep.subr.bf16.mxu0 0
        %9491 = vmatpush2.bf16.msra.mxu0 0
        %9492 = vmatprep.subr.bf16.mxu0 0
        %9493 = vmatpush2.bf16.msra.mxu0 0
        %9494 = vmatprep.mubr.bf16.mxu0 0
        %9495 = vmatmul.mubr.bf16.gmra.mxu0 %v9460
        %v9496 = vpop.f32.mrf.mxu0
        %v9497 = vadd.f32 0.0, %v9496
        %v9498 = vpop.f32.mrf.mxu0
        %v9499 = vpop.f32.mrf.mxu0
        %v9500 = vpop.f32.mrf.mxu0
        %9501 = vdwg.mxu0
        %v9503 = vsel %vm2641, %v9360, 0
        %9505 = vmatprep.subr.bf16.mxu0 0
        %9506 = vmatpush1.bf16.msra.mxu0 0
        %9507 = vmatprep.subr.bf16.mxu0 0
        %9508 = vmatpush1.bf16.msra.mxu0 0
        %9509 = vmatprep.subr.bf16.mxu0 0
        %9510 = vmatpush1.bf16.msra.mxu0 0
        %9511 = vmatprep.subr.bf16.mxu0 0
        %9512 = vmatpush1.bf16.msra.mxu0 0
        %9513 = vmatprep.subr.bf16.mxu0 0
        %9514 = vmatpush1.bf16.msra.mxu0 0
        %9515 = vmatprep.subr.bf16.mxu0 0
        %9516 = vmatpush1.bf16.msra.mxu0 0
        %9517 = vmatprep.subr.bf16.mxu0 0
        %9518 = vmatpush1.bf16.msra.mxu0 0
        %9519 = vmatprep.subr.bf16.mxu0 0
        %9520 = vmatpush1.bf16.msra.mxu0 %v8416
        %9521 = vmatprep.subr.bf16.mxu0 0
        %9522 = vmatpush2.bf16.msra.mxu0 0
        %9523 = vmatprep.subr.bf16.mxu0 0
        %9524 = vmatpush2.bf16.msra.mxu0 0
        %9525 = vmatprep.subr.bf16.mxu0 0
        %9526 = vmatpush2.bf16.msra.mxu0 0
        %9527 = vmatprep.subr.bf16.mxu0 0
        %9528 = vmatpush2.bf16.msra.mxu0 0
        %9529 = vmatprep.subr.bf16.mxu0 0
        %9530 = vmatpush2.bf16.msra.mxu0 0
        %9531 = vmatprep.subr.bf16.mxu0 0
        %9532 = vmatpush2.bf16.msra.mxu0 0
        %9533 = vmatprep.subr.bf16.mxu0 0
        %9534 = vmatpush2.bf16.msra.mxu0 0
        %9535 = vmatprep.subr.bf16.mxu0 0
        %9536 = vmatpush2.bf16.msra.mxu0 0
        %9537 = vmatprep.mubr.bf16.mxu0 0
        %9538 = vmatmul.mubr.bf16.gmra.mxu0 %v9503
        %v9539 = vpop.f32.mrf.mxu0
        %v9540 = vadd.f32 0.0, %v9539
        %v9541 = vpop.f32.mrf.mxu0
        %v9542 = vpop.f32.mrf.mxu0
        %v9543 = vpop.f32.mrf.mxu0
        %9544 = vdwg.mxu0
        %v9546 = vsel %vm2641, %v9361, 0
        %9548 = vmatprep.subr.bf16.mxu0 0
        %9549 = vmatpush1.bf16.msra.mxu0 0
        %9550 = vmatprep.subr.bf16.mxu0 0
        %9551 = vmatpush1.bf16.msra.mxu0 0
        %9552 = vmatprep.subr.bf16.mxu0 0
        %9553 = vmatpush1.bf16.msra.mxu0 0
        %9554 = vmatprep.subr.bf16.mxu0 0
        %9555 = vmatpush1.bf16.msra.mxu0 0
        %9556 = vmatprep.subr.bf16.mxu0 0
        %9557 = vmatpush1.bf16.msra.mxu0 0
        %9558 = vmatprep.subr.bf16.mxu0 0
        %9559 = vmatpush1.bf16.msra.mxu0 0
        %9560 = vmatprep.subr.bf16.mxu0 0
        %9561 = vmatpush1.bf16.msra.mxu0 0
        %9562 = vmatprep.subr.bf16.mxu0 0
        %9563 = vmatpush1.bf16.msra.mxu0 %v8417
        %9564 = vmatprep.subr.bf16.mxu0 0
        %9565 = vmatpush2.bf16.msra.mxu0 0
        %9566 = vmatprep.subr.bf16.mxu0 0
        %9567 = vmatpush2.bf16.msra.mxu0 0
        %9568 = vmatprep.subr.bf16.mxu0 0
        %9569 = vmatpush2.bf16.msra.mxu0 0
        %9570 = vmatprep.subr.bf16.mxu0 0
        %9571 = vmatpush2.bf16.msra.mxu0 0
        %9572 = vmatprep.subr.bf16.mxu0 0
        %9573 = vmatpush2.bf16.msra.mxu0 0
        %9574 = vmatprep.subr.bf16.mxu0 0
        %9575 = vmatpush2.bf16.msra.mxu0 0
        %9576 = vmatprep.subr.bf16.mxu0 0
        %9577 = vmatpush2.bf16.msra.mxu0 0
        %9578 = vmatprep.subr.bf16.mxu0 0
        %9579 = vmatpush2.bf16.msra.mxu0 0
        %9580 = vmatprep.mubr.bf16.mxu0 0
        %9581 = vmatmul.mubr.bf16.gmra.mxu0 %v9546
        %v9582 = vpop.f32.mrf.mxu0
        %v9583 = vadd.f32 0.0, %v9582
        %v9584 = vpop.f32.mrf.mxu0
        %v9585 = vpop.f32.mrf.mxu0
        %v9586 = vpop.f32.mrf.mxu0
        %9587 = vdwg.mxu0
        %v9589 = vsel %vm2641, %v9362, 0
        %9591 = vmatprep.subr.bf16.mxu0 0
        %9592 = vmatpush1.bf16.msra.mxu0 0
        %9593 = vmatprep.subr.bf16.mxu0 0
        %9594 = vmatpush1.bf16.msra.mxu0 0
        %9595 = vmatprep.subr.bf16.mxu0 0
        %9596 = vmatpush1.bf16.msra.mxu0 0
        %9597 = vmatprep.subr.bf16.mxu0 0
        %9598 = vmatpush1.bf16.msra.mxu0 0
        %9599 = vmatprep.subr.bf16.mxu0 0
        %9600 = vmatpush1.bf16.msra.mxu0 0
        %9601 = vmatprep.subr.bf16.mxu0 0
        %9602 = vmatpush1.bf16.msra.mxu0 0
        %9603 = vmatprep.subr.bf16.mxu0 0
        %9604 = vmatpush1.bf16.msra.mxu0 0
        %9605 = vmatprep.subr.bf16.mxu0 0
        %9606 = vmatpush1.bf16.msra.mxu0 %v8418
        %9607 = vmatprep.subr.bf16.mxu0 0
        %9608 = vmatpush2.bf16.msra.mxu0 0
        %9609 = vmatprep.subr.bf16.mxu0 0
        %9610 = vmatpush2.bf16.msra.mxu0 0
        %9611 = vmatprep.subr.bf16.mxu0 0
        %9612 = vmatpush2.bf16.msra.mxu0 0
        %9613 = vmatprep.subr.bf16.mxu0 0
        %9614 = vmatpush2.bf16.msra.mxu0 0
        %9615 = vmatprep.subr.bf16.mxu0 0
        %9616 = vmatpush2.bf16.msra.mxu0 0
        %9617 = vmatprep.subr.bf16.mxu0 0
        %9618 = vmatpush2.bf16.msra.mxu0 0
        %9619 = vmatprep.subr.bf16.mxu0 0
        %9620 = vmatpush2.bf16.msra.mxu0 0
        %9621 = vmatprep.subr.bf16.mxu0 0
        %9622 = vmatpush2.bf16.msra.mxu0 0
        %9623 = vmatprep.mubr.bf16.mxu0 0
        %9624 = vmatmul.mubr.bf16.gmra.mxu0 %v9589
        %v9625 = vpop.f32.mrf.mxu0
        %v9626 = vadd.f32 0.0, %v9625
        %v9627 = vpop.f32.mrf.mxu0
        %v9628 = vpop.f32.mrf.mxu0
        %v9629 = vpop.f32.mrf.mxu0
        %9630 = vdwg.mxu0
        %v9632 = vsel %vm2641, %v9363, 0
        %9634 = vmatprep.subr.bf16.mxu0 0
        %9635 = vmatpush1.bf16.msra.mxu0 0
        %9636 = vmatprep.subr.bf16.mxu0 0
        %9637 = vmatpush1.bf16.msra.mxu0 0
        %9638 = vmatprep.subr.bf16.mxu0 0
        %9639 = vmatpush1.bf16.msra.mxu0 0
        %9640 = vmatprep.subr.bf16.mxu0 0
        %9641 = vmatpush1.bf16.msra.mxu0 0
        %9642 = vmatprep.subr.bf16.mxu0 0
        %9643 = vmatpush1.bf16.msra.mxu0 0
        %9644 = vmatprep.subr.bf16.mxu0 0
        %9645 = vmatpush1.bf16.msra.mxu0 0
        %9646 = vmatprep.subr.bf16.mxu0 0
        %9647 = vmatpush1.bf16.msra.mxu0 0
        %9648 = vmatprep.subr.bf16.mxu0 0
        %9649 = vmatpush1.bf16.msra.mxu0 %v8419
        %9650 = vmatprep.subr.bf16.mxu0 0
        %9651 = vmatpush2.bf16.msra.mxu0 0
        %9652 = vmatprep.subr.bf16.mxu0 0
        %9653 = vmatpush2.bf16.msra.mxu0 0
        %9654 = vmatprep.subr.bf16.mxu0 0
        %9655 = vmatpush2.bf16.msra.mxu0 0
        %9656 = vmatprep.subr.bf16.mxu0 0
        %9657 = vmatpush2.bf16.msra.mxu0 0
        %9658 = vmatprep.subr.bf16.mxu0 0
        %9659 = vmatpush2.bf16.msra.mxu0 0
        %9660 = vmatprep.subr.bf16.mxu0 0
        %9661 = vmatpush2.bf16.msra.mxu0 0
        %9662 = vmatprep.subr.bf16.mxu0 0
        %9663 = vmatpush2.bf16.msra.mxu0 0
        %9664 = vmatprep.subr.bf16.mxu0 0
        %9665 = vmatpush2.bf16.msra.mxu0 0
        %9666 = vmatprep.mubr.bf16.mxu0 0
        %9667 = vmatmul.mubr.bf16.gmra.mxu0 %v9632
        %v9668 = vpop.f32.mrf.mxu0
        %v9669 = vadd.f32 0.0, %v9668
        %v9670 = vpop.f32.mrf.mxu0
        %v9671 = vpop.f32.mrf.mxu0
        %v9672 = vpop.f32.mrf.mxu0
        %9673 = vdwg.mxu0
        %v9675 = vsel %vm2641, %v9364, 0
        %9677 = vmatprep.subr.bf16.mxu0 0
        %9678 = vmatpush1.bf16.msra.mxu0 0
        %9679 = vmatprep.subr.bf16.mxu0 0
        %9680 = vmatpush1.bf16.msra.mxu0 0
        %9681 = vmatprep.subr.bf16.mxu0 0
        %9682 = vmatpush1.bf16.msra.mxu0 0
        %9683 = vmatprep.subr.bf16.mxu0 0
        %9684 = vmatpush1.bf16.msra.mxu0 0
        %9685 = vmatprep.subr.bf16.mxu0 0
        %9686 = vmatpush1.bf16.msra.mxu0 0
        %9687 = vmatprep.subr.bf16.mxu0 0
        %9688 = vmatpush1.bf16.msra.mxu0 0
        %9689 = vmatprep.subr.bf16.mxu0 0
        %9690 = vmatpush1.bf16.msra.mxu0 0
        %9691 = vmatprep.subr.bf16.mxu0 0
        %9692 = vmatpush1.bf16.msra.mxu0 %v8420
        %9693 = vmatprep.subr.bf16.mxu0 0
        %9694 = vmatpush2.bf16.msra.mxu0 0
        %9695 = vmatprep.subr.bf16.mxu0 0
        %9696 = vmatpush2.bf16.msra.mxu0 0
        %9697 = vmatprep.subr.bf16.mxu0 0
        %9698 = vmatpush2.bf16.msra.mxu0 0
        %9699 = vmatprep.subr.bf16.mxu0 0
        %9700 = vmatpush2.bf16.msra.mxu0 0
        %9701 = vmatprep.subr.bf16.mxu0 0
        %9702 = vmatpush2.bf16.msra.mxu0 0
        %9703 = vmatprep.subr.bf16.mxu0 0
        %9704 = vmatpush2.bf16.msra.mxu0 0
        %9705 = vmatprep.subr.bf16.mxu0 0
        %9706 = vmatpush2.bf16.msra.mxu0 0
        %9707 = vmatprep.subr.bf16.mxu0 0
        %9708 = vmatpush2.bf16.msra.mxu0 0
        %9709 = vmatprep.mubr.bf16.mxu0 0
        %9710 = vmatmul.mubr.bf16.gmra.mxu0 %v9675
        %v9711 = vpop.f32.mrf.mxu0
        %v9712 = vadd.f32 0.0, %v9711
        %v9713 = vpop.f32.mrf.mxu0
        %v9714 = vpop.f32.mrf.mxu0
        %v9715 = vpop.f32.mrf.mxu0
        %9716 = vdwg.mxu0
        %v9718 = vsel %vm2641, %v9365, 0
        %9720 = vmatprep.subr.bf16.mxu0 0
        %9721 = vmatpush1.bf16.msra.mxu0 0
        %9722 = vmatprep.subr.bf16.mxu0 0
        %9723 = vmatpush1.bf16.msra.mxu0 0
        %9724 = vmatprep.subr.bf16.mxu0 0
        %9725 = vmatpush1.bf16.msra.mxu0 0
        %9726 = vmatprep.subr.bf16.mxu0 0
        %9727 = vmatpush1.bf16.msra.mxu0 0
        %9728 = vmatprep.subr.bf16.mxu0 0
        %9729 = vmatpush1.bf16.msra.mxu0 0
        %9730 = vmatprep.subr.bf16.mxu0 0
        %9731 = vmatpush1.bf16.msra.mxu0 0
        %9732 = vmatprep.subr.bf16.mxu0 0
        %9733 = vmatpush1.bf16.msra.mxu0 0
        %9734 = vmatprep.subr.bf16.mxu0 0
        %9735 = vmatpush1.bf16.msra.mxu0 %v8421
        %9736 = vmatprep.subr.bf16.mxu0 0
        %9737 = vmatpush2.bf16.msra.mxu0 0
        %9738 = vmatprep.subr.bf16.mxu0 0
        %9739 = vmatpush2.bf16.msra.mxu0 0
        %9740 = vmatprep.subr.bf16.mxu0 0
        %9741 = vmatpush2.bf16.msra.mxu0 0
        %9742 = vmatprep.subr.bf16.mxu0 0
        %9743 = vmatpush2.bf16.msra.mxu0 0
        %9744 = vmatprep.subr.bf16.mxu0 0
        %9745 = vmatpush2.bf16.msra.mxu0 0
        %9746 = vmatprep.subr.bf16.mxu0 0
        %9747 = vmatpush2.bf16.msra.mxu0 0
        %9748 = vmatprep.subr.bf16.mxu0 0
        %9749 = vmatpush2.bf16.msra.mxu0 0
        %9750 = vmatprep.subr.bf16.mxu0 0
        %9751 = vmatpush2.bf16.msra.mxu0 0
        %9752 = vmatprep.mubr.bf16.mxu0 0
        %9753 = vmatmul.mubr.bf16.gmra.mxu0 %v9718
        %v9754 = vpop.f32.mrf.mxu0
        %v9755 = vadd.f32 0.0, %v9754
        %v9756 = vpop.f32.mrf.mxu0
        %v9757 = vpop.f32.mrf.mxu0
        %v9758 = vpop.f32.mrf.mxu0
        %9759 = vdwg.mxu0
        %v9761 = vsel %vm2641, %v9366, 0
        %9763 = vmatprep.subr.bf16.mxu0 0
        %9764 = vmatpush1.bf16.msra.mxu0 0
        %9765 = vmatprep.subr.bf16.mxu0 0
        %9766 = vmatpush1.bf16.msra.mxu0 0
        %9767 = vmatprep.subr.bf16.mxu0 0
        %9768 = vmatpush1.bf16.msra.mxu0 0
        %9769 = vmatprep.subr.bf16.mxu0 0
        %9770 = vmatpush1.bf16.msra.mxu0 0
        %9771 = vmatprep.subr.bf16.mxu0 0
        %9772 = vmatpush1.bf16.msra.mxu0 0
        %9773 = vmatprep.subr.bf16.mxu0 0
        %9774 = vmatpush1.bf16.msra.mxu0 0
        %9775 = vmatprep.subr.bf16.mxu0 0
        %9776 = vmatpush1.bf16.msra.mxu0 0
        %9777 = vmatprep.subr.bf16.mxu0 0
        %9778 = vmatpush1.bf16.msra.mxu0 %v8422
        %9779 = vmatprep.subr.bf16.mxu0 0
        %9780 = vmatpush2.bf16.msra.mxu0 0
        %9781 = vmatprep.subr.bf16.mxu0 0
        %9782 = vmatpush2.bf16.msra.mxu0 0
        %9783 = vmatprep.subr.bf16.mxu0 0
        %9784 = vmatpush2.bf16.msra.mxu0 0
        %9785 = vmatprep.subr.bf16.mxu0 0
        %9786 = vmatpush2.bf16.msra.mxu0 0
        %9787 = vmatprep.subr.bf16.mxu0 0
        %9788 = vmatpush2.bf16.msra.mxu0 0
        %9789 = vmatprep.subr.bf16.mxu0 0
        %9790 = vmatpush2.bf16.msra.mxu0 0
        %9791 = vmatprep.subr.bf16.mxu0 0
        %9792 = vmatpush2.bf16.msra.mxu0 0
        %9793 = vmatprep.subr.bf16.mxu0 0
        %9794 = vmatpush2.bf16.msra.mxu0 0
        %9795 = vmatprep.mubr.bf16.mxu0 0
        %9796 = vmatmul.mubr.bf16.gmra.mxu0 %v9761
        %v9797 = vpop.f32.mrf.mxu0
        %v9798 = vadd.f32 0.0, %v9797
        %v9799 = vpop.f32.mrf.mxu0
        %v9800 = vpop.f32.mrf.mxu0
        %v9801 = vpop.f32.mrf.mxu0
        %9802 = vdwg.mxu0
        %v9804 = vsel %vm2641, %v9367, 0
        %9806 = vmatprep.subr.bf16.mxu0 0
        %9807 = vmatpush1.bf16.msra.mxu0 0
        %9808 = vmatprep.subr.bf16.mxu0 0
        %9809 = vmatpush1.bf16.msra.mxu0 0
        %9810 = vmatprep.subr.bf16.mxu0 0
        %9811 = vmatpush1.bf16.msra.mxu0 0
        %9812 = vmatprep.subr.bf16.mxu0 0
        %9813 = vmatpush1.bf16.msra.mxu0 0
        %9814 = vmatprep.subr.bf16.mxu0 0
        %9815 = vmatpush1.bf16.msra.mxu0 0
        %9816 = vmatprep.subr.bf16.mxu0 0
        %9817 = vmatpush1.bf16.msra.mxu0 0
        %9818 = vmatprep.subr.bf16.mxu0 0
        %9819 = vmatpush1.bf16.msra.mxu0 0
        %9820 = vmatprep.subr.bf16.mxu0 0
        %9821 = vmatpush1.bf16.msra.mxu0 %v8423
        %9822 = vmatprep.subr.bf16.mxu0 0
        %9823 = vmatpush2.bf16.msra.mxu0 0
        %9824 = vmatprep.subr.bf16.mxu0 0
        %9825 = vmatpush2.bf16.msra.mxu0 0
        %9826 = vmatprep.subr.bf16.mxu0 0
        %9827 = vmatpush2.bf16.msra.mxu0 0
        %9828 = vmatprep.subr.bf16.mxu0 0
        %9829 = vmatpush2.bf16.msra.mxu0 0
        %9830 = vmatprep.subr.bf16.mxu0 0
        %9831 = vmatpush2.bf16.msra.mxu0 0
        %9832 = vmatprep.subr.bf16.mxu0 0
        %9833 = vmatpush2.bf16.msra.mxu0 0
        %9834 = vmatprep.subr.bf16.mxu0 0
        %9835 = vmatpush2.bf16.msra.mxu0 0
        %9836 = vmatprep.subr.bf16.mxu0 0
        %9837 = vmatpush2.bf16.msra.mxu0 0
        %9838 = vmatprep.mubr.bf16.mxu0 0
        %9839 = vmatmul.mubr.bf16.gmra.mxu0 %v9804
        %v9840 = vpop.f32.mrf.mxu0
        %v9841 = vadd.f32 0.0, %v9840
        %v9842 = vpop.f32.mrf.mxu0
        %v9843 = vpop.f32.mrf.mxu0
        %v9844 = vpop.f32.mrf.mxu0
        %9845 = vdwg.mxu0
        %v9847 = vsel %vm2641, %v9368, 0
        %9849 = vmatprep.subr.bf16.mxu0 0
        %9850 = vmatpush1.bf16.msra.mxu0 0
        %9851 = vmatprep.subr.bf16.mxu0 0
        %9852 = vmatpush1.bf16.msra.mxu0 0
        %9853 = vmatprep.subr.bf16.mxu0 0
        %9854 = vmatpush1.bf16.msra.mxu0 0
        %9855 = vmatprep.subr.bf16.mxu0 0
        %9856 = vmatpush1.bf16.msra.mxu0 0
        %9857 = vmatprep.subr.bf16.mxu0 0
        %9858 = vmatpush1.bf16.msra.mxu0 0
        %9859 = vmatprep.subr.bf16.mxu0 0
        %9860 = vmatpush1.bf16.msra.mxu0 0
        %9861 = vmatprep.subr.bf16.mxu0 0
        %9862 = vmatpush1.bf16.msra.mxu0 0
        %9863 = vmatprep.subr.bf16.mxu0 0
        %9864 = vmatpush1.bf16.msra.mxu0 %v8424
        %9865 = vmatprep.subr.bf16.mxu0 0
        %9866 = vmatpush2.bf16.msra.mxu0 0
        %9867 = vmatprep.subr.bf16.mxu0 0
        %9868 = vmatpush2.bf16.msra.mxu0 0
        %9869 = vmatprep.subr.bf16.mxu0 0
        %9870 = vmatpush2.bf16.msra.mxu0 0
        %9871 = vmatprep.subr.bf16.mxu0 0
        %9872 = vmatpush2.bf16.msra.mxu0 0
        %9873 = vmatprep.subr.bf16.mxu0 0
        %9874 = vmatpush2.bf16.msra.mxu0 0
        %9875 = vmatprep.subr.bf16.mxu0 0
        %9876 = vmatpush2.bf16.msra.mxu0 0
        %9877 = vmatprep.subr.bf16.mxu0 0
        %9878 = vmatpush2.bf16.msra.mxu0 0
        %9879 = vmatprep.subr.bf16.mxu0 0
        %9880 = vmatpush2.bf16.msra.mxu0 0
        %9881 = vmatprep.mubr.bf16.mxu0 0
        %9882 = vmatmul.mubr.bf16.gmra.mxu0 %v9847
        %v9883 = vpop.f32.mrf.mxu0
        %v9884 = vadd.f32 0.0, %v9883
        %v9885 = vpop.f32.mrf.mxu0
        %v9886 = vpop.f32.mrf.mxu0
        %v9887 = vpop.f32.mrf.mxu0
        %9888 = vdwg.mxu0
        %v9890 = vsel %vm2641, %v9369, 0
        %9892 = vmatprep.subr.bf16.mxu0 0
        %9893 = vmatpush1.bf16.msra.mxu0 0
        %9894 = vmatprep.subr.bf16.mxu0 0
        %9895 = vmatpush1.bf16.msra.mxu0 0
        %9896 = vmatprep.subr.bf16.mxu0 0
        %9897 = vmatpush1.bf16.msra.mxu0 0
        %9898 = vmatprep.subr.bf16.mxu0 0
        %9899 = vmatpush1.bf16.msra.mxu0 0
        %9900 = vmatprep.subr.bf16.mxu0 0
        %9901 = vmatpush1.bf16.msra.mxu0 0
        %9902 = vmatprep.subr.bf16.mxu0 0
        %9903 = vmatpush1.bf16.msra.mxu0 0
        %9904 = vmatprep.subr.bf16.mxu0 0
        %9905 = vmatpush1.bf16.msra.mxu0 0
        %9906 = vmatprep.subr.bf16.mxu0 0
        %9907 = vmatpush1.bf16.msra.mxu0 %v8425
        %9908 = vmatprep.subr.bf16.mxu0 0
        %9909 = vmatpush2.bf16.msra.mxu0 0
        %9910 = vmatprep.subr.bf16.mxu0 0
        %9911 = vmatpush2.bf16.msra.mxu0 0
        %9912 = vmatprep.subr.bf16.mxu0 0
        %9913 = vmatpush2.bf16.msra.mxu0 0
        %9914 = vmatprep.subr.bf16.mxu0 0
        %9915 = vmatpush2.bf16.msra.mxu0 0
        %9916 = vmatprep.subr.bf16.mxu0 0
        %9917 = vmatpush2.bf16.msra.mxu0 0
        %9918 = vmatprep.subr.bf16.mxu0 0
        %9919 = vmatpush2.bf16.msra.mxu0 0
        %9920 = vmatprep.subr.bf16.mxu0 0
        %9921 = vmatpush2.bf16.msra.mxu0 0
        %9922 = vmatprep.subr.bf16.mxu0 0
        %9923 = vmatpush2.bf16.msra.mxu0 0
        %9924 = vmatprep.mubr.bf16.mxu0 0
        %9925 = vmatmul.mubr.bf16.gmra.mxu0 %v9890
        %v9926 = vpop.f32.mrf.mxu0
        %v9927 = vadd.f32 0.0, %v9926
        %v9928 = vpop.f32.mrf.mxu0
        %v9929 = vpop.f32.mrf.mxu0
        %v9930 = vpop.f32.mrf.mxu0
        %9931 = vdwg.mxu0
        %v9933 = vsel %vm2641, %v9370, 0
        %9935 = vmatprep.subr.bf16.mxu0 0
        %9936 = vmatpush1.bf16.msra.mxu0 0
        %9937 = vmatprep.subr.bf16.mxu0 0
        %9938 = vmatpush1.bf16.msra.mxu0 0
        %9939 = vmatprep.subr.bf16.mxu0 0
        %9940 = vmatpush1.bf16.msra.mxu0 0
        %9941 = vmatprep.subr.bf16.mxu0 0
        %9942 = vmatpush1.bf16.msra.mxu0 0
        %9943 = vmatprep.subr.bf16.mxu0 0
        %9944 = vmatpush1.bf16.msra.mxu0 0
        %9945 = vmatprep.subr.bf16.mxu0 0
        %9946 = vmatpush1.bf16.msra.mxu0 0
        %9947 = vmatprep.subr.bf16.mxu0 0
        %9948 = vmatpush1.bf16.msra.mxu0 0
        %9949 = vmatprep.subr.bf16.mxu0 0
        %9950 = vmatpush1.bf16.msra.mxu0 %v8426
        %9951 = vmatprep.subr.bf16.mxu0 0
        %9952 = vmatpush2.bf16.msra.mxu0 0
        %9953 = vmatprep.subr.bf16.mxu0 0
        %9954 = vmatpush2.bf16.msra.mxu0 0
        %9955 = vmatprep.subr.bf16.mxu0 0
        %9956 = vmatpush2.bf16.msra.mxu0 0
        %9957 = vmatprep.subr.bf16.mxu0 0
        %9958 = vmatpush2.bf16.msra.mxu0 0
        %9959 = vmatprep.subr.bf16.mxu0 0
        %9960 = vmatpush2.bf16.msra.mxu0 0
        %9961 = vmatprep.subr.bf16.mxu0 0
        %9962 = vmatpush2.bf16.msra.mxu0 0
        %9963 = vmatprep.subr.bf16.mxu0 0
        %9964 = vmatpush2.bf16.msra.mxu0 0
        %9965 = vmatprep.subr.bf16.mxu0 0
        %9966 = vmatpush2.bf16.msra.mxu0 0
        %9967 = vmatprep.mubr.bf16.mxu0 0
        %9968 = vmatmul.mubr.bf16.gmra.mxu0 %v9933
        %v9969 = vpop.f32.mrf.mxu0
        %v9970 = vadd.f32 0.0, %v9969
        %v9971 = vpop.f32.mrf.mxu0
        %v9972 = vpop.f32.mrf.mxu0
        %v9973 = vpop.f32.mrf.mxu0
        %9974 = vdwg.mxu0
        %v9976 = vsel %vm2641, %v9371, 0
        %9978 = vmatprep.subr.bf16.mxu0 0
        %9979 = vmatpush1.bf16.msra.mxu0 0
        %9980 = vmatprep.subr.bf16.mxu0 0
        %9981 = vmatpush1.bf16.msra.mxu0 0
        %9982 = vmatprep.subr.bf16.mxu0 0
        %9983 = vmatpush1.bf16.msra.mxu0 0
        %9984 = vmatprep.subr.bf16.mxu0 0
        %9985 = vmatpush1.bf16.msra.mxu0 0
        %9986 = vmatprep.subr.bf16.mxu0 0
        %9987 = vmatpush1.bf16.msra.mxu0 0
        %9988 = vmatprep.subr.bf16.mxu0 0
        %9989 = vmatpush1.bf16.msra.mxu0 0
        %9990 = vmatprep.subr.bf16.mxu0 0
        %9991 = vmatpush1.bf16.msra.mxu0 0
        %9992 = vmatprep.subr.bf16.mxu0 0
        %9993 = vmatpush1.bf16.msra.mxu0 %v8427
        %9994 = vmatprep.subr.bf16.mxu0 0
        %9995 = vmatpush2.bf16.msra.mxu0 0
        %9996 = vmatprep.subr.bf16.mxu0 0
        %9997 = vmatpush2.bf16.msra.mxu0 0
        %9998 = vmatprep.subr.bf16.mxu0 0
        %9999 = vmatpush2.bf16.msra.mxu0 0
        %10000 = vmatprep.subr.bf16.mxu0 0
        %10001 = vmatpush2.bf16.msra.mxu0 0
        %10002 = vmatprep.subr.bf16.mxu0 0
        %10003 = vmatpush2.bf16.msra.mxu0 0
        %10004 = vmatprep.subr.bf16.mxu0 0
        %10005 = vmatpush2.bf16.msra.mxu0 0
        %10006 = vmatprep.subr.bf16.mxu0 0
        %10007 = vmatpush2.bf16.msra.mxu0 0
        %10008 = vmatprep.subr.bf16.mxu0 0
        %10009 = vmatpush2.bf16.msra.mxu0 0
        %10010 = vmatprep.mubr.bf16.mxu0 0
        %10011 = vmatmul.mubr.bf16.gmra.mxu0 %v9976
        %v10012 = vpop.f32.mrf.mxu0
        %v10013 = vadd.f32 0.0, %v10012
        %v10014 = vpop.f32.mrf.mxu0
        %v10015 = vpop.f32.mrf.mxu0
        %v10016 = vpop.f32.mrf.mxu0
        %10017 = vdwg.mxu0
        %v10019 = vsel %vm2641, %v9372, 0
        %10021 = vmatprep.subr.bf16.mxu0 0
        %10022 = vmatpush1.bf16.msra.mxu0 0
        %10023 = vmatprep.subr.bf16.mxu0 0
        %10024 = vmatpush1.bf16.msra.mxu0 0
        %10025 = vmatprep.subr.bf16.mxu0 0
        %10026 = vmatpush1.bf16.msra.mxu0 0
        %10027 = vmatprep.subr.bf16.mxu0 0
        %10028 = vmatpush1.bf16.msra.mxu0 0
        %10029 = vmatprep.subr.bf16.mxu0 0
        %10030 = vmatpush1.bf16.msra.mxu0 0
        %10031 = vmatprep.subr.bf16.mxu0 0
        %10032 = vmatpush1.bf16.msra.mxu0 0
        %10033 = vmatprep.subr.bf16.mxu0 0
        %10034 = vmatpush1.bf16.msra.mxu0 0
        %10035 = vmatprep.subr.bf16.mxu0 0
        %10036 = vmatpush1.bf16.msra.mxu0 %v8428
        %10037 = vmatprep.subr.bf16.mxu0 0
        %10038 = vmatpush2.bf16.msra.mxu0 0
        %10039 = vmatprep.subr.bf16.mxu0 0
        %10040 = vmatpush2.bf16.msra.mxu0 0
        %10041 = vmatprep.subr.bf16.mxu0 0
        %10042 = vmatpush2.bf16.msra.mxu0 0
        %10043 = vmatprep.subr.bf16.mxu0 0
        %10044 = vmatpush2.bf16.msra.mxu0 0
        %10045 = vmatprep.subr.bf16.mxu0 0
        %10046 = vmatpush2.bf16.msra.mxu0 0
        %10047 = vmatprep.subr.bf16.mxu0 0
        %10048 = vmatpush2.bf16.msra.mxu0 0
        %10049 = vmatprep.subr.bf16.mxu0 0
        %10050 = vmatpush2.bf16.msra.mxu0 0
        %10051 = vmatprep.subr.bf16.mxu0 0
        %10052 = vmatpush2.bf16.msra.mxu0 0
        %10053 = vmatprep.mubr.bf16.mxu0 0
        %10054 = vmatmul.mubr.bf16.gmra.mxu0 %v10019
        %v10055 = vpop.f32.mrf.mxu0
        %v10056 = vadd.f32 0.0, %v10055
        %v10057 = vpop.f32.mrf.mxu0
        %v10058 = vpop.f32.mrf.mxu0
        %v10059 = vpop.f32.mrf.mxu0
        %10060 = vdwg.mxu0
        %v10061 = vcombine.low %v9411, %v9497
        %v10062 = vcombine.high %v9411, %v9497
        %v10064 = vunpack.c.l.s4 1983009808
        %v10065 = vunpack.c.0.s8 %v10064
        %v10066 = vlaneseq
        %v10067 = vshrl.u32 %v10066, 7
        %v10068 = vsub.s32 %v10065, %v10067
        %v10069 = vrot.slane %v10061, %v10068
        %v10071 = vunpack.c.l.s4 1983009808
        %v10072 = vunpack.c.0.s8 %v10071
        %v10073 = vlaneseq
        %v10074 = vshrl.u32 %v10073, 7
        %v10075 = vsub.s32 %v10072, %v10074
        %v10076 = vrot.slane %v10062, %v10075
        %v10077 = vcombine.low %v9454, %v9540
        %v10078 = vcombine.high %v9454, %v9540
        %v10080 = vunpack.c.l.s4 1983009808
        %v10081 = vunpack.c.0.s8 %v10080
        %v10082 = vlaneseq
        %v10083 = vshrl.u32 %v10082, 7
        %v10084 = vsub.s32 %v10081, %v10083
        %v10085 = vrot.slane %v10077, %v10084
        %v10087 = vunpack.c.l.s4 1983009808
        %v10088 = vunpack.c.0.s8 %v10087
        %v10089 = vlaneseq
        %v10090 = vshrl.u32 %v10089, 7
        %v10091 = vsub.s32 %v10088, %v10090
        %v10092 = vrot.slane %v10078, %v10091
        %v10093 = vcombine.low %v9583, %v9669
        %v10094 = vcombine.high %v9583, %v9669
        %v10096 = vunpack.c.l.s4 1983009808
        %v10097 = vunpack.c.0.s8 %v10096
        %v10098 = vlaneseq
        %v10099 = vshrl.u32 %v10098, 7
        %v10100 = vsub.s32 %v10097, %v10099
        %v10101 = vrot.slane %v10093, %v10100
        %v10103 = vunpack.c.l.s4 1983009808
        %v10104 = vunpack.c.0.s8 %v10103
        %v10105 = vlaneseq
        %v10106 = vshrl.u32 %v10105, 7
        %v10107 = vsub.s32 %v10104, %v10106
        %v10108 = vrot.slane %v10094, %v10107
        %v10109 = vcombine.low %v9626, %v9712
        %v10110 = vcombine.high %v9626, %v9712
        %v10112 = vunpack.c.l.s4 1983009808
        %v10113 = vunpack.c.0.s8 %v10112
        %v10114 = vlaneseq
        %v10115 = vshrl.u32 %v10114, 7
        %v10116 = vsub.s32 %v10113, %v10115
        %v10117 = vrot.slane %v10109, %v10116
        %v10119 = vunpack.c.l.s4 1983009808
        %v10120 = vunpack.c.0.s8 %v10119
        %v10121 = vlaneseq
        %v10122 = vshrl.u32 %v10121, 7
        %v10123 = vsub.s32 %v10120, %v10122
        %v10124 = vrot.slane %v10110, %v10123
        %v10125 = vcombine.low %v10069, %v10085
        %v10126 = vcombine.high %v10069, %v10085
        %v10128 = vunpack.c.l.s4 1934713408
        %v10129 = vunpack.c.0.s8 %v10128
        %v10130 = vlaneseq
        %v10131 = vshrl.u32 %v10130, 7
        %v10132 = vsub.s32 %v10129, %v10131
        %v10133 = vrot.slane %v10125, %v10132
        %v10135 = vunpack.c.l.s4 1934713408
        %v10136 = vunpack.c.0.s8 %v10135
        %v10137 = vlaneseq
        %v10138 = vshrl.u32 %v10137, 7
        %v10139 = vsub.s32 %v10136, %v10138
        %v10140 = vrot.slane %v10126, %v10139
        %v10141 = vcombine.low %v10076, %v10092
        %v10142 = vcombine.high %v10076, %v10092
        %v10144 = vunpack.c.l.s4 1934713408
        %v10145 = vunpack.c.0.s8 %v10144
        %v10146 = vlaneseq
        %v10147 = vshrl.u32 %v10146, 7
        %v10148 = vsub.s32 %v10145, %v10147
        %v10149 = vrot.slane %v10141, %v10148
        %v10151 = vunpack.c.l.s4 1934713408
        %v10152 = vunpack.c.0.s8 %v10151
        %v10153 = vlaneseq
        %v10154 = vshrl.u32 %v10153, 7
        %v10155 = vsub.s32 %v10152, %v10154
        %v10156 = vrot.slane %v10142, %v10155
        %v10157 = vcombine.low %v10101, %v10117
        %v10158 = vcombine.high %v10101, %v10117
        %v10160 = vunpack.c.l.s4 1934713408
        %v10161 = vunpack.c.0.s8 %v10160
        %v10162 = vlaneseq
        %v10163 = vshrl.u32 %v10162, 7
        %v10164 = vsub.s32 %v10161, %v10163
        %v10165 = vrot.slane %v10157, %v10164
        %v10167 = vunpack.c.l.s4 1934713408
        %v10168 = vunpack.c.0.s8 %v10167
        %v10169 = vlaneseq
        %v10170 = vshrl.u32 %v10169, 7
        %v10171 = vsub.s32 %v10168, %v10170
        %v10172 = vrot.slane %v10158, %v10171
        %v10173 = vcombine.low %v10108, %v10124
        %v10174 = vcombine.high %v10108, %v10124
        %v10176 = vunpack.c.l.s4 1934713408
        %v10177 = vunpack.c.0.s8 %v10176
        %v10178 = vlaneseq
        %v10179 = vshrl.u32 %v10178, 7
        %v10180 = vsub.s32 %v10177, %v10179
        %v10181 = vrot.slane %v10173, %v10180
        %v10183 = vunpack.c.l.s4 1934713408
        %v10184 = vunpack.c.0.s8 %v10183
        %v10185 = vlaneseq
        %v10186 = vshrl.u32 %v10185, 7
        %v10187 = vsub.s32 %v10184, %v10186
        %v10188 = vrot.slane %v10174, %v10187
        %v10189 = vcombine.low %v10133, %v10165
        %v10190 = vcombine.high %v10133, %v10165
        %v10191 = vcombine.low %v10140, %v10172
        %v10192 = vcombine.high %v10140, %v10172
        %v10193 = vcombine.low %v10149, %v10181
        %v10194 = vcombine.high %v10149, %v10181
        %v10195 = vcombine.low %v10156, %v10188
        %v10196 = vcombine.high %v10156, %v10188
        %v10197 = vcombine.low %v9755, %v9841
        %v10198 = vcombine.high %v9755, %v9841
        %v10200 = vunpack.c.l.s4 1983009808
        %v10201 = vunpack.c.0.s8 %v10200
        %v10202 = vlaneseq
        %v10203 = vshrl.u32 %v10202, 7
        %v10204 = vsub.s32 %v10201, %v10203
        %v10205 = vrot.slane %v10197, %v10204
        %v10207 = vunpack.c.l.s4 1983009808
        %v10208 = vunpack.c.0.s8 %v10207
        %v10209 = vlaneseq
        %v10210 = vshrl.u32 %v10209, 7
        %v10211 = vsub.s32 %v10208, %v10210
        %v10212 = vrot.slane %v10198, %v10211
        %v10213 = vcombine.low %v9798, %v9884
        %v10214 = vcombine.high %v9798, %v9884
        %v10216 = vunpack.c.l.s4 1983009808
        %v10217 = vunpack.c.0.s8 %v10216
        %v10218 = vlaneseq
        %v10219 = vshrl.u32 %v10218, 7
        %v10220 = vsub.s32 %v10217, %v10219
        %v10221 = vrot.slane %v10213, %v10220
        %v10223 = vunpack.c.l.s4 1983009808
        %v10224 = vunpack.c.0.s8 %v10223
        %v10225 = vlaneseq
        %v10226 = vshrl.u32 %v10225, 7
        %v10227 = vsub.s32 %v10224, %v10226
        %v10228 = vrot.slane %v10214, %v10227
        %v10229 = vcombine.low %v9927, %v10013
        %v10230 = vcombine.high %v9927, %v10013
        %v10232 = vunpack.c.l.s4 1983009808
        %v10233 = vunpack.c.0.s8 %v10232
        %v10234 = vlaneseq
        %v10235 = vshrl.u32 %v10234, 7
        %v10236 = vsub.s32 %v10233, %v10235
        %v10237 = vrot.slane %v10229, %v10236
        %v10239 = vunpack.c.l.s4 1983009808
        %v10240 = vunpack.c.0.s8 %v10239
        %v10241 = vlaneseq
        %v10242 = vshrl.u32 %v10241, 7
        %v10243 = vsub.s32 %v10240, %v10242
        %v10244 = vrot.slane %v10230, %v10243
        %v10245 = vcombine.low %v9970, %v10056
        %v10246 = vcombine.high %v9970, %v10056
        %v10248 = vunpack.c.l.s4 1983009808
        %v10249 = vunpack.c.0.s8 %v10248
        %v10250 = vlaneseq
        %v10251 = vshrl.u32 %v10250, 7
        %v10252 = vsub.s32 %v10249, %v10251
        %v10253 = vrot.slane %v10245, %v10252
        %v10255 = vunpack.c.l.s4 1983009808
        %v10256 = vunpack.c.0.s8 %v10255
        %v10257 = vlaneseq
        %v10258 = vshrl.u32 %v10257, 7
        %v10259 = vsub.s32 %v10256, %v10258
        %v10260 = vrot.slane %v10246, %v10259
        %v10261 = vcombine.low %v10205, %v10221
        %v10262 = vcombine.high %v10205, %v10221
        %v10264 = vunpack.c.l.s4 1934713408
        %v10265 = vunpack.c.0.s8 %v10264
        %v10266 = vlaneseq
        %v10267 = vshrl.u32 %v10266, 7
        %v10268 = vsub.s32 %v10265, %v10267
        %v10269 = vrot.slane %v10261, %v10268
        %v10271 = vunpack.c.l.s4 1934713408
        %v10272 = vunpack.c.0.s8 %v10271
        %v10273 = vlaneseq
        %v10274 = vshrl.u32 %v10273, 7
        %v10275 = vsub.s32 %v10272, %v10274
        %v10276 = vrot.slane %v10262, %v10275
        %v10277 = vcombine.low %v10212, %v10228
        %v10278 = vcombine.high %v10212, %v10228
        %v10280 = vunpack.c.l.s4 1934713408
        %v10281 = vunpack.c.0.s8 %v10280
        %v10282 = vlaneseq
        %v10283 = vshrl.u32 %v10282, 7
        %v10284 = vsub.s32 %v10281, %v10283
        %v10285 = vrot.slane %v10277, %v10284
        %v10287 = vunpack.c.l.s4 1934713408
        %v10288 = vunpack.c.0.s8 %v10287
        %v10289 = vlaneseq
        %v10290 = vshrl.u32 %v10289, 7
        %v10291 = vsub.s32 %v10288, %v10290
        %v10292 = vrot.slane %v10278, %v10291
        %v10293 = vcombine.low %v10237, %v10253
        %v10294 = vcombine.high %v10237, %v10253
        %v10296 = vunpack.c.l.s4 1934713408
        %v10297 = vunpack.c.0.s8 %v10296
        %v10298 = vlaneseq
        %v10299 = vshrl.u32 %v10298, 7
        %v10300 = vsub.s32 %v10297, %v10299
        %v10301 = vrot.slane %v10293, %v10300
        %v10303 = vunpack.c.l.s4 1934713408
        %v10304 = vunpack.c.0.s8 %v10303
        %v10305 = vlaneseq
        %v10306 = vshrl.u32 %v10305, 7
        %v10307 = vsub.s32 %v10304, %v10306
        %v10308 = vrot.slane %v10294, %v10307
        %v10309 = vcombine.low %v10244, %v10260
        %v10310 = vcombine.high %v10244, %v10260
        %v10312 = vunpack.c.l.s4 1934713408
        %v10313 = vunpack.c.0.s8 %v10312
        %v10314 = vlaneseq
        %v10315 = vshrl.u32 %v10314, 7
        %v10316 = vsub.s32 %v10313, %v10315
        %v10317 = vrot.slane %v10309, %v10316
        %v10319 = vunpack.c.l.s4 1934713408
        %v10320 = vunpack.c.0.s8 %v10319
        %v10321 = vlaneseq
        %v10322 = vshrl.u32 %v10321, 7
        %v10323 = vsub.s32 %v10320, %v10322
        %v10324 = vrot.slane %v10310, %v10323
        %v10325 = vcombine.low %v10269, %v10301
        %v10326 = vcombine.high %v10269, %v10301
        %v10327 = vcombine.low %v10276, %v10308
        %v10328 = vcombine.high %v10276, %v10308
        %v10329 = vcombine.low %v10285, %v10317
        %v10330 = vcombine.high %v10285, %v10317
        %v10331 = vcombine.low %v10292, %v10324
        %v10332 = vcombine.high %v10292, %v10324
        %v10333 = vcombine.low %v10189, %v10191
        %v10334 = vcombine.high %v10189, %v10191
        %v10336 = vunpack.c.l.s4 1983009808
        %v10337 = vunpack.c.0.s8 %v10336
        %v10338 = vlaneseq
        %v10339 = vshrl.u32 %v10338, 7
        %v10340 = vsub.s32 %v10337, %v10339
        %v10341 = vrot.slane %v10333, %v10340
        %v10343 = vunpack.c.l.s4 1983009808
        %v10344 = vunpack.c.0.s8 %v10343
        %v10345 = vlaneseq
        %v10346 = vshrl.u32 %v10345, 7
        %v10347 = vsub.s32 %v10344, %v10346
        %v10348 = vrot.slane %v10334, %v10347
        %v10349 = vcombine.low %v10190, %v10192
        %v10350 = vcombine.high %v10190, %v10192
        %v10352 = vunpack.c.l.s4 1983009808
        %v10353 = vunpack.c.0.s8 %v10352
        %v10354 = vlaneseq
        %v10355 = vshrl.u32 %v10354, 7
        %v10356 = vsub.s32 %v10353, %v10355
        %v10357 = vrot.slane %v10349, %v10356
        %v10359 = vunpack.c.l.s4 1983009808
        %v10360 = vunpack.c.0.s8 %v10359
        %v10361 = vlaneseq
        %v10362 = vshrl.u32 %v10361, 7
        %v10363 = vsub.s32 %v10360, %v10362
        %v10364 = vrot.slane %v10350, %v10363
        %v10365 = vcombine.low %v10193, %v10195
        %v10366 = vcombine.high %v10193, %v10195
        %v10368 = vunpack.c.l.s4 1983009808
        %v10369 = vunpack.c.0.s8 %v10368
        %v10370 = vlaneseq
        %v10371 = vshrl.u32 %v10370, 7
        %v10372 = vsub.s32 %v10369, %v10371
        %v10373 = vrot.slane %v10365, %v10372
        %v10375 = vunpack.c.l.s4 1983009808
        %v10376 = vunpack.c.0.s8 %v10375
        %v10377 = vlaneseq
        %v10378 = vshrl.u32 %v10377, 7
        %v10379 = vsub.s32 %v10376, %v10378
        %v10380 = vrot.slane %v10366, %v10379
        %v10381 = vcombine.low %v10194, %v10196
        %v10382 = vcombine.high %v10194, %v10196
        %v10384 = vunpack.c.l.s4 1983009808
        %v10385 = vunpack.c.0.s8 %v10384
        %v10386 = vlaneseq
        %v10387 = vshrl.u32 %v10386, 7
        %v10388 = vsub.s32 %v10385, %v10387
        %v10389 = vrot.slane %v10381, %v10388
        %v10391 = vunpack.c.l.s4 1983009808
        %v10392 = vunpack.c.0.s8 %v10391
        %v10393 = vlaneseq
        %v10394 = vshrl.u32 %v10393, 7
        %v10395 = vsub.s32 %v10392, %v10394
        %v10396 = vrot.slane %v10382, %v10395
        %v10397 = vcombine.low %v10341, %v10357
        %v10398 = vcombine.high %v10341, %v10357
        %v10400 = vunpack.c.l.s4 1934713408
        %v10401 = vunpack.c.0.s8 %v10400
        %v10402 = vlaneseq
        %v10403 = vshrl.u32 %v10402, 7
        %v10404 = vsub.s32 %v10401, %v10403
        %v10405 = vrot.slane %v10397, %v10404
        %v10407 = vunpack.c.l.s4 1934713408
        %v10408 = vunpack.c.0.s8 %v10407
        %v10409 = vlaneseq
        %v10410 = vshrl.u32 %v10409, 7
        %v10411 = vsub.s32 %v10408, %v10410
        %v10412 = vrot.slane %v10398, %v10411
        %v10413 = vcombine.low %v10348, %v10364
        %v10414 = vcombine.high %v10348, %v10364
        %v10416 = vunpack.c.l.s4 1934713408
        %v10417 = vunpack.c.0.s8 %v10416
        %v10418 = vlaneseq
        %v10419 = vshrl.u32 %v10418, 7
        %v10420 = vsub.s32 %v10417, %v10419
        %v10421 = vrot.slane %v10413, %v10420
        %v10423 = vunpack.c.l.s4 1934713408
        %v10424 = vunpack.c.0.s8 %v10423
        %v10425 = vlaneseq
        %v10426 = vshrl.u32 %v10425, 7
        %v10427 = vsub.s32 %v10424, %v10426
        %v10428 = vrot.slane %v10414, %v10427
        %v10429 = vcombine.low %v10373, %v10389
        %v10430 = vcombine.high %v10373, %v10389
        %v10432 = vunpack.c.l.s4 1934713408
        %v10433 = vunpack.c.0.s8 %v10432
        %v10434 = vlaneseq
        %v10435 = vshrl.u32 %v10434, 7
        %v10436 = vsub.s32 %v10433, %v10435
        %v10437 = vrot.slane %v10429, %v10436
        %v10439 = vunpack.c.l.s4 1934713408
        %v10440 = vunpack.c.0.s8 %v10439
        %v10441 = vlaneseq
        %v10442 = vshrl.u32 %v10441, 7
        %v10443 = vsub.s32 %v10440, %v10442
        %v10444 = vrot.slane %v10430, %v10443
        %v10445 = vcombine.low %v10380, %v10396
        %v10446 = vcombine.high %v10380, %v10396
        %v10448 = vunpack.c.l.s4 1934713408
        %v10449 = vunpack.c.0.s8 %v10448
        %v10450 = vlaneseq
        %v10451 = vshrl.u32 %v10450, 7
        %v10452 = vsub.s32 %v10449, %v10451
        %v10453 = vrot.slane %v10445, %v10452
        %v10455 = vunpack.c.l.s4 1934713408
        %v10456 = vunpack.c.0.s8 %v10455
        %v10457 = vlaneseq
        %v10458 = vshrl.u32 %v10457, 7
        %v10459 = vsub.s32 %v10456, %v10458
        %v10460 = vrot.slane %v10446, %v10459
        %v10461 = vcombine.low %v10405, %v10437
        %v10462 = vcombine.high %v10405, %v10437
        %v10463 = vcombine.low %v10412, %v10444
        %v10464 = vcombine.high %v10412, %v10444
        %v10465 = vcombine.low %v10421, %v10453
        %v10466 = vcombine.high %v10421, %v10453
        %v10467 = vcombine.low %v10428, %v10460
        %v10468 = vcombine.high %v10428, %v10460
        %v10469 = vcombine.low %v10325, %v10327
        %v10470 = vcombine.high %v10325, %v10327
        %v10472 = vunpack.c.l.s4 1983009808
        %v10473 = vunpack.c.0.s8 %v10472
        %v10474 = vlaneseq
        %v10475 = vshrl.u32 %v10474, 7
        %v10476 = vsub.s32 %v10473, %v10475
        %v10477 = vrot.slane %v10469, %v10476
        %v10479 = vunpack.c.l.s4 1983009808
        %v10480 = vunpack.c.0.s8 %v10479
        %v10481 = vlaneseq
        %v10482 = vshrl.u32 %v10481, 7
        %v10483 = vsub.s32 %v10480, %v10482
        %v10484 = vrot.slane %v10470, %v10483
        %v10485 = vcombine.low %v10326, %v10328
        %v10486 = vcombine.high %v10326, %v10328
        %v10488 = vunpack.c.l.s4 1983009808
        %v10489 = vunpack.c.0.s8 %v10488
        %v10490 = vlaneseq
        %v10491 = vshrl.u32 %v10490, 7
        %v10492 = vsub.s32 %v10489, %v10491
        %v10493 = vrot.slane %v10485, %v10492
        %v10495 = vunpack.c.l.s4 1983009808
        %v10496 = vunpack.c.0.s8 %v10495
        %v10497 = vlaneseq
        %v10498 = vshrl.u32 %v10497, 7
        %v10499 = vsub.s32 %v10496, %v10498
        %v10500 = vrot.slane %v10486, %v10499
        %v10501 = vcombine.low %v10329, %v10331
        %v10502 = vcombine.high %v10329, %v10331
        %v10504 = vunpack.c.l.s4 1983009808
        %v10505 = vunpack.c.0.s8 %v10504
        %v10506 = vlaneseq
        %v10507 = vshrl.u32 %v10506, 7
        %v10508 = vsub.s32 %v10505, %v10507
        %v10509 = vrot.slane %v10501, %v10508
        %v10511 = vunpack.c.l.s4 1983009808
        %v10512 = vunpack.c.0.s8 %v10511
        %v10513 = vlaneseq
        %v10514 = vshrl.u32 %v10513, 7
        %v10515 = vsub.s32 %v10512, %v10514
        %v10516 = vrot.slane %v10502, %v10515
        %v10517 = vcombine.low %v10330, %v10332
        %v10518 = vcombine.high %v10330, %v10332
        %v10520 = vunpack.c.l.s4 1983009808
        %v10521 = vunpack.c.0.s8 %v10520
        %v10522 = vlaneseq
        %v10523 = vshrl.u32 %v10522, 7
        %v10524 = vsub.s32 %v10521, %v10523
        %v10525 = vrot.slane %v10517, %v10524
        %v10527 = vunpack.c.l.s4 1983009808
        %v10528 = vunpack.c.0.s8 %v10527
        %v10529 = vlaneseq
        %v10530 = vshrl.u32 %v10529, 7
        %v10531 = vsub.s32 %v10528, %v10530
        %v10532 = vrot.slane %v10518, %v10531
        %v10533 = vcombine.low %v10477, %v10493
        %v10534 = vcombine.high %v10477, %v10493
        %v10536 = vunpack.c.l.s4 1934713408
        %v10537 = vunpack.c.0.s8 %v10536
        %v10538 = vlaneseq
        %v10539 = vshrl.u32 %v10538, 7
        %v10540 = vsub.s32 %v10537, %v10539
        %v10541 = vrot.slane %v10533, %v10540
        %v10543 = vunpack.c.l.s4 1934713408
        %v10544 = vunpack.c.0.s8 %v10543
        %v10545 = vlaneseq
        %v10546 = vshrl.u32 %v10545, 7
        %v10547 = vsub.s32 %v10544, %v10546
        %v10548 = vrot.slane %v10534, %v10547
        %v10549 = vcombine.low %v10484, %v10500
        %v10550 = vcombine.high %v10484, %v10500
        %v10552 = vunpack.c.l.s4 1934713408
        %v10553 = vunpack.c.0.s8 %v10552
        %v10554 = vlaneseq
        %v10555 = vshrl.u32 %v10554, 7
        %v10556 = vsub.s32 %v10553, %v10555
        %v10557 = vrot.slane %v10549, %v10556
        %v10559 = vunpack.c.l.s4 1934713408
        %v10560 = vunpack.c.0.s8 %v10559
        %v10561 = vlaneseq
        %v10562 = vshrl.u32 %v10561, 7
        %v10563 = vsub.s32 %v10560, %v10562
        %v10564 = vrot.slane %v10550, %v10563
        %v10565 = vcombine.low %v10509, %v10525
        %v10566 = vcombine.high %v10509, %v10525
        %v10568 = vunpack.c.l.s4 1934713408
        %v10569 = vunpack.c.0.s8 %v10568
        %v10570 = vlaneseq
        %v10571 = vshrl.u32 %v10570, 7
        %v10572 = vsub.s32 %v10569, %v10571
        %v10573 = vrot.slane %v10565, %v10572
        %v10575 = vunpack.c.l.s4 1934713408
        %v10576 = vunpack.c.0.s8 %v10575
        %v10577 = vlaneseq
        %v10578 = vshrl.u32 %v10577, 7
        %v10579 = vsub.s32 %v10576, %v10578
        %v10580 = vrot.slane %v10566, %v10579
        %v10581 = vcombine.low %v10516, %v10532
        %v10582 = vcombine.high %v10516, %v10532
        %v10584 = vunpack.c.l.s4 1934713408
        %v10585 = vunpack.c.0.s8 %v10584
        %v10586 = vlaneseq
        %v10587 = vshrl.u32 %v10586, 7
        %v10588 = vsub.s32 %v10585, %v10587
        %v10589 = vrot.slane %v10581, %v10588
        %v10591 = vunpack.c.l.s4 1934713408
        %v10592 = vunpack.c.0.s8 %v10591
        %v10593 = vlaneseq
        %v10594 = vshrl.u32 %v10593, 7
        %v10595 = vsub.s32 %v10592, %v10594
        %v10596 = vrot.slane %v10582, %v10595
        %v10597 = vcombine.low %v10541, %v10573
        %v10598 = vcombine.high %v10541, %v10573
        %v10599 = vcombine.low %v10548, %v10580
        %v10600 = vcombine.high %v10548, %v10580
        %v10601 = vcombine.low %v10557, %v10589
        %v10602 = vcombine.high %v10557, %v10589
        %v10603 = vcombine.low %v10564, %v10596
        %v10604 = vcombine.high %v10564, %v10596
        %10607 = vrot.lane.b32.xlu0 %v10462, 16
        %v10608 = vpop.permute.xlu0 %10607
        %10609 = vrot.lane.b32.xlu0 %v10598, 16
        %v10610 = vpop.permute.xlu0 %10609
        %10615 = vrot.lane.b32.xlu0 %v10463, 32
        %v10616 = vpop.permute.xlu0 %10615
        %10617 = vrot.lane.b32.xlu0 %v10599, 32
        %v10618 = vpop.permute.xlu0 %10617
        %10623 = vrot.lane.b32.xlu0 %v10464, 48
        %v10624 = vpop.permute.xlu0 %10623
        %10625 = vrot.lane.b32.xlu0 %v10600, 48
        %v10626 = vpop.permute.xlu0 %10625
        %10631 = vrot.lane.b32.xlu0 %v10465, 64
        %v10632 = vpop.permute.xlu0 %10631
        %10633 = vrot.lane.b32.xlu0 %v10601, 64
        %v10634 = vpop.permute.xlu0 %10633
        %10639 = vrot.lane.b32.xlu0 %v10466, 80
        %v10640 = vpop.permute.xlu0 %10639
        %10641 = vrot.lane.b32.xlu0 %v10602, 80
        %v10642 = vpop.permute.xlu0 %10641
        %10647 = vrot.lane.b32.xlu0 %v10467, 96
        %v10648 = vpop.permute.xlu0 %10647
        %10649 = vrot.lane.b32.xlu0 %v10603, 96
        %v10650 = vpop.permute.xlu0 %10649
        %10655 = vrot.lane.b32.xlu0 %v10468, 112
        %v10656 = vpop.permute.xlu0 %10655
        %10657 = vrot.lane.b32.xlu0 %v10604, 112
        %v10658 = vpop.permute.xlu0 %10657
        %v10661 = vsel %vm2641, %v10461, %v10608
        %v10662 = vsel %vm2641, %v10597, %v10610
        %v10663 = vsel %vm4926, %v10661, %v10616
        %v10664 = vsel %vm4926, %v10662, %v10618
        %v10665 = vsel %vm4929, %v10663, %v10624
        %v10666 = vsel %vm4929, %v10664, %v10626
        %v10667 = vsel %vm4932, %v10665, %v10632
        %v10668 = vsel %vm4932, %v10666, %v10634
        %v10669 = vsel %vm4935, %v10667, %v10640
        %v10670 = vsel %vm4935, %v10668, %v10642
        %v10671 = vsel %vm4938, %v10669, %v10648
        %v10672 = vsel %vm4938, %v10670, %v10650
        %v10673 = vsel %vm4941, %v10671, %v10656
        %v10674 = vsel %vm4941, %v10672, %v10658
        %v10675 = vld [vmem:[%s471 + $0x1c] sm:$0xf]
        %v10676 = vld [vmem:[%s471 + $0x44] sm:$0xf]
        %v10677 = vld [vmem:[%s471 + $0x6c] sm:$0xf]
        %v10678 = vld [vmem:[%s471 + $0x94] sm:$0xf]
        %v10679 = vld [vmem:[%s471 + $0xbc] sm:$0xf]
        %v10680 = vld [vmem:[%s471 + $0xe4] sm:$0xf]
        %v10681 = vld [vmem:[%s471 + $0x10c] sm:$0xf]
        %v10682 = vld [vmem:[%s471 + $0x134] sm:$0xf]
        %v10683 = vld [vmem:[%s471 + $0x15c] sm:$0xf]
        %v10684 = vld [vmem:[%s471 + $0x184] sm:$0xf]
        %v10685 = vld [vmem:[%s471 + $0x1ac] sm:$0xf]
        %v10686 = vld [vmem:[%s471 + $0x1d4] sm:$0xf]
        %v10687 = vld [vmem:[%s471 + $0x1fc] sm:$0xf]
        %v10688 = vld [vmem:[%s471 + $0x224] sm:$0xf]
        %v10689 = vld [vmem:[%s471 + $0x24c] sm:$0xf]
        %v10690 = vld [vmem:[%s471 + $0x274] sm:$0xf]
        %v10691 = vpack.c.bf16 %v10674, %v10673
        %v10692 = vlaneseq
        %v10693 = vshrl.u32 %v10692, 7
        %v10694 = vsub.s32 7, %v10693
        %v10695 = vrot.slane %v563, %v10694
        %v10712 = vunpack.c.l.b16 %v10675
        %v10713 = vunpack.c.l.b16 %v10676
        %v10714 = vunpack.c.l.b16 %v10677
        %v10715 = vunpack.c.l.b16 %v10678
        %v10716 = vunpack.c.l.b16 %v10679
        %v10717 = vunpack.c.l.b16 %v10680
        %v10718 = vunpack.c.l.b16 %v10681
        %v10719 = vunpack.c.l.b16 %v10682
        %v10720 = vunpack.c.l.b16 %v10683
        %v10721 = vunpack.c.l.b16 %v10684
        %v10722 = vunpack.c.l.b16 %v10685
        %v10723 = vunpack.c.l.b16 %v10686
        %v10724 = vunpack.c.l.b16 %v10687
        %v10725 = vunpack.c.l.b16 %v10688
        %v10726 = vunpack.c.l.b16 %v10689
        %v10727 = vunpack.c.l.b16 %v10690
        %v10728 = vpack.c.b16 %v10713, %v10712
        %v10729 = vpack.c.b16 %v10715, %v10714
        %v10730 = vpack.c.b16 %v10717, %v10716
        %v10731 = vpack.c.b16 %v10719, %v10718
        %v10732 = vpack.c.b16 %v10721, %v10720
        %v10733 = vpack.c.b16 %v10723, %v10722
        %v10734 = vpack.c.b16 %v10725, %v10724
        %v10735 = vpack.c.b16 %v10727, %v10726
        %10744 = vmatprep.subr.bf16.mxu0 0
        %10745 = vmatpush1.bf16.msra.mxu0 %v10735
        %10746 = vmatprep.subr.bf16.mxu0 0
        %10747 = vmatpush1.bf16.msra.mxu0 %v10734
        %10748 = vmatprep.subr.bf16.mxu0 0
        %10749 = vmatpush1.bf16.msra.mxu0 %v10733
        %10750 = vmatprep.subr.bf16.mxu0 0
        %10751 = vmatpush1.bf16.msra.mxu0 %v10732
        %10752 = vmatprep.subr.bf16.mxu0 0
        %10753 = vmatpush1.bf16.msra.mxu0 %v10731
        %10754 = vmatprep.subr.bf16.mxu0 0
        %10755 = vmatpush1.bf16.msra.mxu0 %v10730
        %10756 = vmatprep.subr.bf16.mxu0 0
        %10757 = vmatpush1.bf16.msra.mxu0 %v10729
        %10758 = vmatprep.subr.bf16.mxu0 0
        %10759 = vmatpush1.bf16.msra.mxu0 %v10728
        %10760 = vmatprep.subr.bf16.mxu0 0
        %10761 = vmatpush2.bf16.msra.mxu0 0
        %10762 = vmatprep.subr.bf16.mxu0 0
        %10763 = vmatpush2.bf16.msra.mxu0 0
        %10764 = vmatprep.subr.bf16.mxu0 0
        %10765 = vmatpush2.bf16.msra.mxu0 0
        %10766 = vmatprep.subr.bf16.mxu0 0
        %10767 = vmatpush2.bf16.msra.mxu0 0
        %10768 = vmatprep.subr.bf16.mxu0 0
        %10769 = vmatpush2.bf16.msra.mxu0 0
        %10770 = vmatprep.subr.bf16.mxu0 0
        %10771 = vmatpush2.bf16.msra.mxu0 0
        %10772 = vmatprep.subr.bf16.mxu0 0
        %10773 = vmatpush2.bf16.msra.mxu0 0
        %10774 = vmatprep.subr.bf16.mxu0 0
        %10775 = vmatpush2.bf16.msra.mxu0 0
        %10776 = vmatprep.mubr.bf16.mxu0 0
        %10777 = vmatmul.mubr.bf16.gmra.mxu0 %v10691
        %v10778 = vpop.f32.mrf.mxu0
        %v10779 = vadd.f32 %v10695, %v10778
        %v10780 = vpop.f32.mrf.mxu0
        %v10781 = vpop.f32.mrf.mxu0
        %v10782 = vadd.f32 %v10695, %v10781
        %v10783 = vpop.f32.mrf.mxu0
        %10784 = vdwg.mxu0
        %v10785 = vadd.f32 %v5089, %v10779
        %v10786 = vadd.f32 %v5090, %v10782
        %10787 = vadd.xlane.f32.xlu0 %v10785
        %v10788 = vpop.xlane.xlu0 %10787
        %10789 = vadd.xlane.f32.xlu0 %v10786
        %v10790 = vpop.xlane.xlu0 %10789
        %v10791 = vmul.f32 %v10788, %v5060
        %v10792 = vmul.f32 %v10790, %v5060
        %v10793 = vsub.f32 %v10785, %v10791
        %v10794 = vsub.f32 %v10786, %v10792
        %v10795 = vmul.f32 %v10793, %v10793
        %v10796 = vmul.f32 %v10794, %v10794
        %10797 = vadd.xlane.f32.xlu0 %v10795
        %v10798 = vpop.xlane.xlu0 %10797
        %10799 = vadd.xlane.f32.xlu0 %v10796
        %v10800 = vpop.xlane.xlu0 %10799
        %v10801 = vmul.f32 %v10798, %v5060
        %v10802 = vmul.f32 %v10800, %v5060
        %v10803 = vadd.f32 %v10801, 1e-05
        %v10804 = vadd.f32 %v10802, 1e-05
        %v10805 = vrsqrt.pop %v10803
        %v10806 = vrsqrt.pop %v10804
        %v10807 = vmul.f32 %v10793, %v10805
        %v10808 = vmul.f32 %v10794, %v10806
        %v10809 = vlaneseq
        %v10810 = vshrl.u32 %v10809, 7
        %v10811 = vsub.s32 3, %v10810
        %v10812 = vrot.slane %v564, %v10811
        %v10813 = vmul.f32 %v10807, %v10812
        %v10814 = vmul.f32 %v10808, %v10812
        %v10815 = vlaneseq
        %v10816 = vshrl.u32 %v10815, 7
        %v10817 = vsub.s32 4, %v10816
        %v10818 = vrot.slane %v564, %v10817
        %v10819 = vadd.f32 %v10813, %v10818
        %v10820 = vadd.f32 %v10814, %v10818
        %v10821 = vld [vmem:[%s471 + $0x20] sm:$0xff]
        %v10822 = vld [vmem:[%s471 + $0x48] sm:$0xff]
        %v10823 = vld [vmem:[%s471 + $0x70] sm:$0xff]
        %v10824 = vld [vmem:[%s471 + $0x98] sm:$0xff]
        %v10825 = vld [vmem:[%s471 + $0xc0] sm:$0xff]
        %v10826 = vld [vmem:[%s471 + $0xe8] sm:$0xff]
        %v10827 = vld [vmem:[%s471 + $0x110] sm:$0xff]
        %v10828 = vld [vmem:[%s471 + $0x138] sm:$0xff]
        %v10829 = vld [vmem:[%s471 + $0x160] sm:$0xff]
        %v10830 = vld [vmem:[%s471 + $0x188] sm:$0xff]
        %v10831 = vld [vmem:[%s471 + $0x1b0] sm:$0xff]
        %v10832 = vld [vmem:[%s471 + $0x1d8] sm:$0xff]
        %v10833 = vld [vmem:[%s471 + $0x200] sm:$0xff]
        %v10834 = vld [vmem:[%s471 + $0x228] sm:$0xff]
        %v10835 = vld [vmem:[%s471 + $0x250] sm:$0xff]
        %v10836 = vld [vmem:[%s471 + $0x278] sm:$0xff]
        %v10837 = vpack.c.bf16 %v10820, %v10819
        %v10838 = vld [vmem:[%s540] sm:$0x3]
        %v10840 = vlaneseq
        %v10841 = vshrl.u32 %v10840, 7
        %v10842 = vsub.s32 0, %v10841
        %v10843 = vrot.slane %v10838, %v10842
        %v10844 = vlaneseq
        %v10845 = vshrl.u32 %v10844, 7
        %v10846 = vsub.s32 1, %v10845
        %v10847 = vrot.slane %v10838, %v10846
        %v10866 = vunpack.c.l.b16 %v10821
        %v10867 = vunpack.c.h.b16 %v10821
        %v10868 = vunpack.c.l.b16 %v10822
        %v10869 = vunpack.c.h.b16 %v10822
        %v10870 = vunpack.c.l.b16 %v10823
        %v10871 = vunpack.c.h.b16 %v10823
        %v10872 = vunpack.c.l.b16 %v10824
        %v10873 = vunpack.c.h.b16 %v10824
        %v10874 = vunpack.c.l.b16 %v10825
        %v10875 = vunpack.c.h.b16 %v10825
        %v10876 = vunpack.c.l.b16 %v10826
        %v10877 = vunpack.c.h.b16 %v10826
        %v10878 = vunpack.c.l.b16 %v10827
        %v10879 = vunpack.c.h.b16 %v10827
        %v10880 = vunpack.c.l.b16 %v10828
        %v10881 = vunpack.c.h.b16 %v10828
        %v10882 = vunpack.c.l.b16 %v10829
        %v10883 = vunpack.c.h.b16 %v10829
        %v10884 = vunpack.c.l.b16 %v10830
        %v10885 = vunpack.c.h.b16 %v10830
        %v10886 = vunpack.c.l.b16 %v10831
        %v10887 = vunpack.c.h.b16 %v10831
        %v10888 = vunpack.c.l.b16 %v10832
        %v10889 = vunpack.c.h.b16 %v10832
        %v10890 = vunpack.c.l.b16 %v10833
        %v10891 = vunpack.c.h.b16 %v10833
        %v10892 = vunpack.c.l.b16 %v10834
        %v10893 = vunpack.c.h.b16 %v10834
        %v10894 = vunpack.c.l.b16 %v10835
        %v10895 = vunpack.c.h.b16 %v10835
        %v10896 = vunpack.c.l.b16 %v10836
        %v10897 = vunpack.c.h.b16 %v10836
        %v10898 = vpack.c.b16 %v10868, %v10866
        %v10899 = vpack.c.b16 %v10869, %v10867
        %v10900 = vpack.c.b16 %v10872, %v10870
        %v10901 = vpack.c.b16 %v10873, %v10871
        %v10902 = vpack.c.b16 %v10876, %v10874
        %v10903 = vpack.c.b16 %v10877, %v10875
        %v10904 = vpack.c.b16 %v10880, %v10878
        %v10905 = vpack.c.b16 %v10881, %v10879
        %v10906 = vpack.c.b16 %v10884, %v10882
        %v10907 = vpack.c.b16 %v10885, %v10883
        %v10908 = vpack.c.b16 %v10888, %v10886
        %v10909 = vpack.c.b16 %v10889, %v10887
        %v10910 = vpack.c.b16 %v10892, %v10890
        %v10911 = vpack.c.b16 %v10893, %v10891
        %v10912 = vpack.c.b16 %v10896, %v10894
        %v10913 = vpack.c.b16 %v10897, %v10895
        %10930 = vmatprep.subr.bf16.mxu0 %v10913
        %10931 = vmatpush1.bf16.msra.mxu0 %v10912
        %10932 = vmatprep.subr.bf16.mxu0 %v10911
        %10933 = vmatpush1.bf16.msra.mxu0 %v10910
        %10934 = vmatprep.subr.bf16.mxu0 %v10909
        %10935 = vmatpush1.bf16.msra.mxu0 %v10908
        %10936 = vmatprep.subr.bf16.mxu0 %v10907
        %10937 = vmatpush1.bf16.msra.mxu0 %v10906
        %10938 = vmatprep.subr.bf16.mxu0 %v10905
        %10939 = vmatpush1.bf16.msra.mxu0 %v10904
        %10940 = vmatprep.subr.bf16.mxu0 %v10903
        %10941 = vmatpush1.bf16.msra.mxu0 %v10902
        %10942 = vmatprep.subr.bf16.mxu0 %v10901
        %10943 = vmatpush1.bf16.msra.mxu0 %v10900
        %10944 = vmatprep.subr.bf16.mxu0 %v10899
        %10945 = vmatpush1.bf16.msra.mxu0 %v10898
        %10946 = vmatprep.subr.bf16.mxu0 0
        %10947 = vmatpush2.bf16.msra.mxu0 0
        %10948 = vmatprep.subr.bf16.mxu0 0
        %10949 = vmatpush2.bf16.msra.mxu0 0
        %10950 = vmatprep.subr.bf16.mxu0 0
        %10951 = vmatpush2.bf16.msra.mxu0 0
        %10952 = vmatprep.subr.bf16.mxu0 0
        %10953 = vmatpush2.bf16.msra.mxu0 0
        %10954 = vmatprep.subr.bf16.mxu0 0
        %10955 = vmatpush2.bf16.msra.mxu0 0
        %10956 = vmatprep.subr.bf16.mxu0 0
        %10957 = vmatpush2.bf16.msra.mxu0 0
        %10958 = vmatprep.subr.bf16.mxu0 0
        %10959 = vmatpush2.bf16.msra.mxu0 0
        %10960 = vmatprep.subr.bf16.mxu0 0
        %10961 = vmatpush2.bf16.msra.mxu0 0
        %10962 = vmatprep.mubr.bf16.mxu0 0
        %10963 = vmatmul.mubr.bf16.gmra.mxu0 %v10837
        %v10964 = vpop.f32.mrf.mxu0
        %v10965 = vadd.f32 %v10843, %v10964
        %v10966 = vpop.f32.mrf.mxu0
        %v10967 = vadd.f32 %v10847, %v10966
        %v10968 = vpop.f32.mrf.mxu0
        %v10969 = vadd.f32 %v10843, %v10968
        %v10970 = vpop.f32.mrf.mxu0
        %v10971 = vadd.f32 %v10847, %v10970
        %10972 = vdwg.mxu0
        %v10973 = vmax.f32 %v10965, 0.0
        %v10974 = vmax.f32 %v10967, 0.0
        %v10975 = vmax.f32 %v10969, 0.0
        %v10976 = vmax.f32 %v10971, 0.0
        %v10977 = vld [vmem:[%s480] sm:$0xf]
        %v10978 = vld [vmem:[%s480 + $0x4] sm:$0xf]
        %v10979 = vld [vmem:[%s480 + $0x8] sm:$0xf]
        %v10980 = vld [vmem:[%s480 + $0xc] sm:$0xf]
        %v10981 = vld [vmem:[%s480 + $0x10] sm:$0xf]
        %v10982 = vld [vmem:[%s480 + $0x14] sm:$0xf]
        %v10983 = vld [vmem:[%s480 + $0x18] sm:$0xf]
        %v10984 = vld [vmem:[%s480 + $0x1c] sm:$0xf]
        %v10985 = vld [vmem:[%s480 + $0x20] sm:$0xf]
        %v10986 = vld [vmem:[%s480 + $0x24] sm:$0xf]
        %v10987 = vld [vmem:[%s480 + $0x28] sm:$0xf]
        %v10988 = vld [vmem:[%s480 + $0x2c] sm:$0xf]
        %v10989 = vld [vmem:[%s480 + $0x30] sm:$0xf]
        %v10990 = vld [vmem:[%s480 + $0x34] sm:$0xf]
        %v10991 = vld [vmem:[%s480 + $0x38] sm:$0xf]
        %v10992 = vld [vmem:[%s480 + $0x3c] sm:$0xf]
        %v10993 = vld [vmem:[%s480 + $0x40] sm:$0xf]
        %v10994 = vld [vmem:[%s480 + $0x44] sm:$0xf]
        %v10995 = vld [vmem:[%s480 + $0x48] sm:$0xf]
        %v10996 = vld [vmem:[%s480 + $0x4c] sm:$0xf]
        %v10997 = vld [vmem:[%s480 + $0x50] sm:$0xf]
        %v10998 = vld [vmem:[%s480 + $0x54] sm:$0xf]
        %v10999 = vld [vmem:[%s480 + $0x58] sm:$0xf]
        %v11000 = vld [vmem:[%s480 + $0x5c] sm:$0xf]
        %v11001 = vld [vmem:[%s480 + $0x60] sm:$0xf]
        %v11002 = vld [vmem:[%s480 + $0x64] sm:$0xf]
        %v11003 = vld [vmem:[%s480 + $0x68] sm:$0xf]
        %v11004 = vld [vmem:[%s480 + $0x6c] sm:$0xf]
        %v11005 = vld [vmem:[%s480 + $0x70] sm:$0xf]
        %v11006 = vld [vmem:[%s480 + $0x74] sm:$0xf]
        %v11007 = vld [vmem:[%s480 + $0x78] sm:$0xf]
        %v11008 = vld [vmem:[%s480 + $0x7c] sm:$0xf]
        %v11009 = vpack.c.bf16 %v10975, %v10973
        %v11010 = vpack.c.bf16 %v10976, %v10974
        %v11043 = vunpack.c.l.b16 %v10977
        %v11044 = vunpack.c.l.b16 %v10978
        %v11045 = vunpack.c.l.b16 %v10979
        %v11046 = vunpack.c.l.b16 %v10980
        %v11047 = vunpack.c.l.b16 %v10981
        %v11048 = vunpack.c.l.b16 %v10982
        %v11049 = vunpack.c.l.b16 %v10983
        %v11050 = vunpack.c.l.b16 %v10984
        %v11051 = vunpack.c.l.b16 %v10985
        %v11052 = vunpack.c.l.b16 %v10986
        %v11053 = vunpack.c.l.b16 %v10987
        %v11054 = vunpack.c.l.b16 %v10988
        %v11055 = vunpack.c.l.b16 %v10989
        %v11056 = vunpack.c.l.b16 %v10990
        %v11057 = vunpack.c.l.b16 %v10991
        %v11058 = vunpack.c.l.b16 %v10992
        %v11059 = vunpack.c.l.b16 %v10993
        %v11060 = vunpack.c.l.b16 %v10994
        %v11061 = vunpack.c.l.b16 %v10995
        %v11062 = vunpack.c.l.b16 %v10996
        %v11063 = vunpack.c.l.b16 %v10997
        %v11064 = vunpack.c.l.b16 %v10998
        %v11065 = vunpack.c.l.b16 %v10999
        %v11066 = vunpack.c.l.b16 %v11000
        %v11067 = vunpack.c.l.b16 %v11001
        %v11068 = vunpack.c.l.b16 %v11002
        %v11069 = vunpack.c.l.b16 %v11003
        %v11070 = vunpack.c.l.b16 %v11004
        %v11071 = vunpack.c.l.b16 %v11005
        %v11072 = vunpack.c.l.b16 %v11006
        %v11073 = vunpack.c.l.b16 %v11007
        %v11074 = vunpack.c.l.b16 %v11008
        %v11075 = vpack.c.b16 %v11044, %v11043
        %v11076 = vpack.c.b16 %v11046, %v11045
        %v11077 = vpack.c.b16 %v11048, %v11047
        %v11078 = vpack.c.b16 %v11050, %v11049
        %v11079 = vpack.c.b16 %v11052, %v11051
        %v11080 = vpack.c.b16 %v11054, %v11053
        %v11081 = vpack.c.b16 %v11056, %v11055
        %v11082 = vpack.c.b16 %v11058, %v11057
        %v11083 = vpack.c.b16 %v11060, %v11059
        %v11084 = vpack.c.b16 %v11062, %v11061
        %v11085 = vpack.c.b16 %v11064, %v11063
        %v11086 = vpack.c.b16 %v11066, %v11065
        %v11087 = vpack.c.b16 %v11068, %v11067
        %v11088 = vpack.c.b16 %v11070, %v11069
        %v11089 = vpack.c.b16 %v11072, %v11071
        %v11090 = vpack.c.b16 %v11074, %v11073
        %11107 = vmatprep.subr.bf16.mxu0 0
        %11108 = vmatpush1.bf16.msra.mxu0 %v11082
        %11109 = vmatprep.subr.bf16.mxu0 0
        %11110 = vmatpush1.bf16.msra.mxu0 %v11081
        %11111 = vmatprep.subr.bf16.mxu0 0
        %11112 = vmatpush1.bf16.msra.mxu0 %v11080
        %11113 = vmatprep.subr.bf16.mxu0 0
        %11114 = vmatpush1.bf16.msra.mxu0 %v11079
        %11115 = vmatprep.subr.bf16.mxu0 0
        %11116 = vmatpush1.bf16.msra.mxu0 %v11078
        %11117 = vmatprep.subr.bf16.mxu0 0
        %11118 = vmatpush1.bf16.msra.mxu0 %v11077
        %11119 = vmatprep.subr.bf16.mxu0 0
        %11120 = vmatpush1.bf16.msra.mxu0 %v11076
        %11121 = vmatprep.subr.bf16.mxu0 0
        %11122 = vmatpush1.bf16.msra.mxu0 %v11075
        %11123 = vmatprep.subr.bf16.mxu0 0
        %11124 = vmatpush2.bf16.msra.mxu0 %v11090
        %11125 = vmatprep.subr.bf16.mxu0 0
        %11126 = vmatpush2.bf16.msra.mxu0 %v11089
        %11127 = vmatprep.subr.bf16.mxu0 0
        %11128 = vmatpush2.bf16.msra.mxu0 %v11088
        %11129 = vmatprep.subr.bf16.mxu0 0
        %11130 = vmatpush2.bf16.msra.mxu0 %v11087
        %11131 = vmatprep.subr.bf16.mxu0 0
        %11132 = vmatpush2.bf16.msra.mxu0 %v11086
        %11133 = vmatprep.subr.bf16.mxu0 0
        %11134 = vmatpush2.bf16.msra.mxu0 %v11085
        %11135 = vmatprep.subr.bf16.mxu0 0
        %11136 = vmatpush2.bf16.msra.mxu0 %v11084
        %11137 = vmatprep.subr.bf16.mxu0 0
        %11138 = vmatpush2.bf16.msra.mxu0 %v11083
        %11139 = vmatprep.mubr.bf16.mxu0 %v11010
        %11140 = vmatmul.mubr.bf16.gmra.mxu0 %v11009
        %v11141 = vpop.f32.mrf.mxu0
        %v11142 = vadd.f32 0.0, %v11141
        %v11143 = vpop.f32.mrf.mxu0
        %v11144 = vpop.f32.mrf.mxu0
        %v11145 = vadd.f32 0.0, %v11144
        %v11146 = vpop.f32.mrf.mxu0
        %11147 = vdwg.mxu0
        %v11148 = vadd.f32 %v10819, %v11142
        %v11149 = vadd.f32 %v10820, %v11145
        %v11150 = vlaneseq
        %v11151 = vshrl.u32 %v11150, 7
        %v11152 = vsub.s32 0, %v11151
        %v11153 = vrot.slane %v564, %v11152
        %v11154 = vadd.f32 %v11148, %v11153
        %v11155 = vadd.f32 %v11149, %v11153
        %11156 = vadd.xlane.f32.xlu0 %v11154
        %v11157 = vpop.xlane.xlu0 %11156
        %11158 = vadd.xlane.f32.xlu0 %v11155
        %v11159 = vpop.xlane.xlu0 %11158
        %v11160 = vmul.f32 %v11157, %v5060
        %v11161 = vmul.f32 %v11159, %v5060
        %v11162 = vsub.f32 %v11154, %v11160
        %v11163 = vsub.f32 %v11155, %v11161
        %v11164 = vmul.f32 %v11162, %v11162
        %v11165 = vmul.f32 %v11163, %v11163
        %11166 = vadd.xlane.f32.xlu0 %v11164
        %v11167 = vpop.xlane.xlu0 %11166
        %11168 = vadd.xlane.f32.xlu0 %v11165
        %v11169 = vpop.xlane.xlu0 %11168
        %v11170 = vmul.f32 %v11167, %v5060
        %v11171 = vmul.f32 %v11169, %v5060
        %v11172 = vadd.f32 %v11170, 1e-05
        %v11173 = vadd.f32 %v11171, 1e-05
        %v11174 = vrsqrt.pop %v11172
        %v11175 = vrsqrt.pop %v11173
        %v11176 = vmul.f32 %v11162, %v11174
        %v11177 = vmul.f32 %v11163, %v11175
        %v11178 = vlaneseq
        %v11179 = vshrl.u32 %v11178, 7
        %v11180 = vsub.s32 5, %v11179
        %v11181 = vrot.slane %v564, %v11180
        %v11182 = vmul.f32 %v11176, %v11181
        %v11183 = vmul.f32 %v11177, %v11181
        %v11184 = vlaneseq
        %v11185 = vshrl.u32 %v11184, 7
        %v11186 = vsub.s32 6, %v11185
        %v11187 = vrot.slane %v564, %v11186
        %v11188 = vadd.f32 %v11182, %v11187
        %v11189 = vadd.f32 %v11183, %v11187
        %11190 = vst [vmem:[#allocation2] sm:$0xff] %v11188
        %11191 = vst [vmem:[#allocation2 + $0x8] sm:$0xff] %v11189
        %p11192 = scmp.eq.s32.totalorder %s29, 1
        // Predicated region
        $region89: #{tpu_custom_call.1} parent=55 // pred_check
          %p11193 = pneg %p11192
        $region90: #{tpu_custom_call.1} parent=55 // pred_check_branch
          %11195 = sbr.rel (%p11193) target = $region92
        $region91: #{tpu_custom_call.1} parent=55 // pred_region
          %v11196 = vld [vmem:[%s8] sm:$0x3]
          %11197 = vadd.xlane.f32.xlu0 %v11188
          %v11198 = vpop.xlane.xlu0 %11197
          %11199 = vadd.xlane.f32.xlu0 %v11189
          %v11200 = vpop.xlane.xlu0 %11199
          %v11201 = vmul.f32 %v11198, %v5060
          %v11202 = vmul.f32 %v11200, %v5060
          %v11203 = vsub.f32 %v11188, %v11201
          %v11204 = vsub.f32 %v11189, %v11202
          %v11205 = vmul.f32 %v11203, %v11203
          %v11206 = vmul.f32 %v11204, %v11204
          %11207 = vadd.xlane.f32.xlu0 %v11205
          %v11208 = vpop.xlane.xlu0 %11207
          %11209 = vadd.xlane.f32.xlu0 %v11206
          %v11210 = vpop.xlane.xlu0 %11209
          %v11211 = vmul.f32 %v11208, %v5060
          %v11212 = vmul.f32 %v11210, %v5060
          %v11213 = vadd.f32 %v11211, 1e-05
          %v11214 = vadd.f32 %v11212, 1e-05
          %v11215 = vrsqrt.pop %v11213
          %v11216 = vrsqrt.pop %v11214
          %v11217 = vmul.f32 %v11203, %v11215
          %v11218 = vmul.f32 %v11204, %v11216
          %v11219 = vlaneseq
          %v11220 = vshrl.u32 %v11219, 7
          %v11221 = vsub.s32 0, %v11220
          %v11222 = vrot.slane %v11196, %v11221
          %v11223 = vmul.f32 %v11217, %v11222
          %v11224 = vmul.f32 %v11218, %v11222
          %v11225 = vlaneseq
          %v11226 = vshrl.u32 %v11225, 7
          %v11227 = vsub.s32 1, %v11226
          %v11228 = vrot.slane %v11196, %v11227
          %v11229 = vadd.f32 %v11223, %v11228
          %v11230 = vadd.f32 %v11224, %v11228
          %11231 = vst [vmem:[#allocation14] sm:$0xff] %v11229
          %11232 = vst [vmem:[#allocation14 + $0x8] sm:$0xff] %v11230
        $region92: #{tpu_custom_call.1} parent=55 // pred_fallthru
          _
        // Predicated region
        $region93: #{tpu_custom_call.1} parent=55 // pred_check
          %p11233 = pneg %p283
        $region94: #{tpu_custom_call.1} parent=55 // pred_check_branch
          %11235 = sbr.rel (%p11233) target = $region96
        $region95: #{tpu_custom_call.1} parent=55 // pred_region
          %s11236 = smul.u32 2, %s28
          %s11238 = ssub.s32 256, 256
          %11239 = vsyncadd [#allocation5], %s11238
          %s11240 = smul.addr %s11236, 128
          %s11241 = scalar_lea.hbm %s9, %s11240
          %s11242 = sshll.u32 [#allocation14], 4
          %s11243 = int_to_ptr.vmem [resolvable:$true] %s11242
          %11248 = dma.vmem_to_hbm [thread:$0]  %s11243, 256, %s11241, [#allocation5], 128, 128, 8
        $region96: #{tpu_custom_call.1} parent=55 // pred_fallthru
          _
        // Predicated region
        $region97: #{tpu_custom_call.1} parent=55 // pred_check
          %p11249 = pneg %p283
        $region98: #{tpu_custom_call.1} parent=55 // pred_check_branch
          %11251 = sbr.rel (%p11249) target = $region100
        $region99: #{tpu_custom_call.1} parent=55 // pred_region
          %11252 = dma.done [#allocation5], 256
        $region100: #{tpu_custom_call.1} parent=55 // pred_fallthru
          _
      $region56: #{tpu_custom_call.1} parent=5 // pred_fallthru
        _
      %p11253 = scmp.le.s32.totalorder 2, %s19
      // Predicated region
      $region101: #{tpu_custom_call.1} parent=5 // pred_check
        %p11254 = pneg %p11253
      $region102: #{tpu_custom_call.1} parent=5 // pred_check_branch
        %11256 = sbr.rel (%p11254) target = $region104
      $region103: #{tpu_custom_call.1} parent=5 // pred_region
        %s11257 = ssub.s32 %s19, 2
      $region104: #{tpu_custom_call.1} parent=5 // pred_fallthru
        _
    $region6: #{tpu_custom_call.1} parent=1 // loop_footer
      %s23 = sadd.s32 1, %s19
    $region7: #{tpu_custom_call.1} parent=1 // loop_footer_branch
      %18 = sbr.rel target = $region3
    $region8: #{tpu_custom_call.1} parent=1 // loop_exit
      _
    %11258 = vsyncpa [#allocation4], 1
    %s11259 = scalar_lea.sflag [#allocation4], 1
    %11260 = vsyncpa %s11259, 1
    %11261 = vsyncpa [#allocation7], 1
    %11262 = vsyncpa [#allocation10], 1
    %11263 = vsyncpa [#allocation5], 1
    %s11264 = scalar_lea.sflag [#allocation5], 1
    %11265 = vsyncpa %s11264, 1

</llo_original>
